<compile_context>
chip_gen: v6e
topology: v6e:2x2x1
jax: 0.10.0
libtpu: 0.0.40
codegen_flags: <defaults>
</compile_context>

<pallas_src>
import functools
import math

import jax
import jax.numpy as jnp
import numpy as np
from jax.experimental import pallas as pl
from jax.experimental.pallas import tpu as pltpu  # noqa: F401  (TPU backend)


# ----------------------------- Pallas kernels ------------------------------

def _tap_accum(xp_ref, w_taps, masks, *, W, d, S, M):
    """Accumulate the 9 taps of a (dilated) 3x3 conv as shifted-window matmuls.

    xp_ref : Ref[(Cin, M + 2*S)] bf16, lane-axis end-padded activation
    w_taps : (9, Cout, Cin) bf16  (tap-major)
    masks  : (9, 1, M) bf16 {0,1} image-border validity per tap
    returns (Cout, M) float32
    """
    cout = w_taps.shape[1]
    acc = jnp.zeros((cout, M), jnp.float32)
    t = 0
    for kh in range(3):
        for kw in range(3):
            shift = (kh - 1) * d * W + (kw - 1) * d
            win = xp_ref[:, pl.ds(S + shift, M)]            # (Cin, M) bf16
            acc = acc + jnp.dot(w_taps[t], win * masks[t],
                                preferred_element_type=jnp.float32)
            t += 1
    return acc


def _convbn_kernel(xp_ref, w_ref, mask_ref, scale_ref, shift_ref, slope_ref,
                   o_ref, *, W, d, S, M, prelu):
    acc = _tap_accum(xp_ref, w_ref[...], mask_ref[...], W=W, d=d, S=S, M=M)
    y = acc * scale_ref[...] + shift_ref[...]
    if prelu:
        a = slope_ref[...]                                  # (1, 1) f32
        y = jnp.where(y > 0, y, a * y)
    o_ref[...] = y.astype(o_ref.dtype)


def _convbn_res_kernel(xp_ref, w_ref, mask_ref, scale_ref, shift_ref,
                       slope_ref, res_ref, o_ref, *, W, d, S, M, prelu):
    acc = _tap_accum(xp_ref, w_ref[...], mask_ref[...], W=W, d=d, S=S, M=M)
    y = acc * scale_ref[...] + shift_ref[...] + res_ref[...].astype(jnp.float32)
    if prelu:
        a = slope_ref[...]
        y = jnp.where(y > 0, y, a * y)
    o_ref[...] = y.astype(o_ref.dtype)


def _dilate_cat_kernel(xp_ref, w_ref, mask_ref, scale_ref, shift_ref, o_ref,
                       *, W, S, M, dilations):
    """Three dilated convbn branches fused + channel concat (no activation)."""
    w_all = w_ref[...]                                      # (3, 9, C, C)
    m_all = mask_ref[...]                                   # (3, 9, 1, M)
    outs = []
    for b, d in enumerate(dilations):
        acc = _tap_accum(xp_ref, w_all[b], m_all[b], W=W, d=d, S=S, M=M)
        outs.append(acc * scale_ref[b] + shift_ref[b])
    o_ref[...] = jnp.concatenate(outs, axis=0).astype(o_ref.dtype)


def _dwsep_skip_kernel(ap_ref, xsk_ref, mask_ref, wdw_ref, bdw_ref, wpw_ref,
                       bpw_ref, wsk_ref, bsk_ref, o_ref, *, W, S, M):
    """Fused conv5 (depthwise 3x3 + pointwise 1x1) + 1x1 strided skip add."""
    masks = mask_ref[...]                                   # (9, 1, M) bf16
    wdw = wdw_ref[...]                                      # (9, Cm, 1) bf16
    cm = wdw.shape[1]
    acc = jnp.zeros((cm, M), jnp.float32)
    t = 0
    for kh in range(3):
        for kw in range(3):
            shift = (kh - 1) * W + (kw - 1)
            win = ap_ref[:, pl.ds(S + shift, M)]            # (Cm, M) bf16
            acc = acc + (wdw[t].astype(jnp.float32)
                         * (win * masks[t]).astype(jnp.float32))
            t += 1
    dw = (acc + bdw_ref[...]).astype(jnp.bfloat16)          # depthwise + bias
    out = jnp.dot(wpw_ref[...], dw, preferred_element_type=jnp.float32)
    out = out + bpw_ref[...]
    out = out + jnp.dot(wsk_ref[...], xsk_ref[...],
                        preferred_element_type=jnp.float32) + bsk_ref[...]
    o_ref[...] = out.astype(o_ref.dtype)


# ------------------------------ JAX glue code ------------------------------

def _fold_bn(bn, eps=1e-5):
    gamma, beta, mean, var = bn
    scale = gamma / jnp.sqrt(var + eps)
    return scale.astype(jnp.float32), (beta - mean * scale).astype(jnp.float32)


def _w_taps(w):
    """(Cout, Cin, 3, 3) torch conv weight -> (9, Cout, Cin) bf16, tap-major."""
    cout, cin = w.shape[0], w.shape[1]
    return jnp.transpose(w, (2, 3, 0, 1)).reshape(9, cout, cin).astype(jnp.bfloat16)


def _border_masks(N, H, W, d):
    """(9, 1, N*H*W) {0,1} bf16 validity masks for a 3x3 conv with dilation d."""
    hh = np.arange(H)[:, None]
    ww = np.arange(W)[None, :]
    out = []
    for kh in range(3):
        for kw in range(3):
            dh, dw = (kh - 1) * d, (kw - 1) * d
            m = ((hh + dh >= 0) & (hh + dh < H) & (ww + dw >= 0) & (ww + dw < W))
            out.append(np.broadcast_to(m[None], (N, H, W)).reshape(1, N * H * W))
    return jnp.asarray(np.stack(out, 0).astype(np.float32)).astype(jnp.bfloat16)


def _pad_lanes(x, S):
    """End-pad the flattened-spatial (lane) axis so shifted windows stay in range."""
    return jnp.pad(x, ((0, 0), (S, S)))


def _conv_bn_act(x, w, bn, slope, *, N, H, W, d, residual=None):
    """Fused dilated 3x3 conv + folded BN (+residual) (+PReLU).  x: (Cin, M) bf16."""
    cout = w.shape[0]
    M = x.shape[1]
    S = d * (W + 1)
    scale, shift = _fold_bn(bn)
    args = [_pad_lanes(x, S), _w_taps(w), _border_masks(N, H, W, d),
            scale.reshape(cout, 1), shift.reshape(cout, 1),
            jnp.full((1, 1), 0.0 if slope is None else slope, jnp.float32)]
    if residual is None:
        kern = functools.partial(_convbn_kernel, W=W, d=d, S=S, M=M,
                                 prelu=slope is not None)
    else:
        kern = functools.partial(_convbn_res_kernel, W=W, d=d, S=S, M=M,
                                 prelu=slope is not None)
        args.append(residual)
    return pl.pallas_call(
        kern, out_shape=jax.ShapeDtypeStruct((cout, M), jnp.bfloat16))(*args)


def _dilate_cat(x, wds, bnds, *, N, H, W):
    """The 3 dilated convbn branches of DPBlock + channel concat, one kernel."""
    C, M = x.shape
    dils = (1, 3, 5)
    S = max(dils) * (W + 1)
    wt = jnp.stack([_w_taps(w) for w in wds], 0)                      # (3,9,C,C)
    masks = jnp.stack([_border_masks(N, H, W, d) for d in dils], 0)   # (3,9,1,M)
    sc, sh = zip(*(_fold_bn(b) for b in bnds))
    scale = jnp.stack(sc, 0)[..., None]                               # (3,C,1)
    shift = jnp.stack(sh, 0)[..., None]
    return pl.pallas_call(
        functools.partial(_dilate_cat_kernel, W=W, S=S, M=M, dilations=dils),
        out_shape=jax.ShapeDtypeStruct((3 * C, M), jnp.bfloat16),
    )(_pad_lanes(x, S), wt, masks, scale, shift)


def _dwsep_skip(a, x_skip, p, *, N, H, W):
    """conv5 (depthwise+pointwise) fused with the conv_skip 1x1 add."""
    Cm, M = a.shape
    C = x_skip.shape[0]
    S = W + 1
    wdw = jnp.transpose(p['w_dw'], (2, 3, 0, 1)).reshape(9, Cm, 1).astype(jnp.bfloat16)
    wpw = p['w_pw'].reshape(Cm, Cm).astype(jnp.bfloat16)
    wsk = p['w_sk'].reshape(Cm, C).astype(jnp.bfloat16)
    bdw = p['b_dw'].reshape(Cm, 1).astype(jnp.float32)
    bpw = p['b_pw'].reshape(Cm, 1).astype(jnp.float32)
    bsk = p['b_sk'].reshape(Cm, 1).astype(jnp.float32)
    return pl.pallas_call(
        functools.partial(_dwsep_skip_kernel, W=W, S=S, M=M),
        out_shape=jax.ShapeDtypeStruct((Cm, M), jnp.float32),
    )(_pad_lanes(a, S), x_skip, _border_masks(N, H, W, 1),
      wdw, bdw, wpw, bpw, wsk, bsk)


def dpblock_forward(params, x, *, ratio_s, ratio_t):
    """x: (N, C, H, W) f32.  Returns (N, ratio_t*C, ceil(H/s), ceil(W/s)) f32."""
    N, C, H, W = x.shape
    Cm = ratio_t * C
    M = N * H * W

    # NCHW -> channels-major, lane-dense flattened spatial (C, N*H*W), bf16.
    xf = jnp.transpose(x, (1, 0, 2, 3)).reshape(C, M).astype(jnp.bfloat16)

    out1 = _conv_bn_act(xf, params['w1'], params['bn1'], params['a1'],
                        N=N, H=H, W=W, d=1)                              # conv1
    out2 = _conv_bn_act(out1, params['w2'], params['bn2'], params['a2'],
                        N=N, H=H, W=W, d=1)                              # conv2
    cat = _dilate_cat(out2, params['wd'], params['bnd'], N=N, H=H, W=W)  # dilate+cat
    out = _conv_bn_act(cat, params['w3'], params['bn3'], params['a_main'],
                       N=N, H=H, W=W, d=1, residual=out1)                # conv3 + res + prelu
    out4 = _conv_bn_act(out, params['w4'], params['bn4'], params['a4'],
                        N=N, H=H, W=W, d=2)                              # conv4 (stride-1 form)

    # stride ratio_s of conv4 / conv_skip realised by exact subsampling.
    s = ratio_s
    Ho, Wo = (H - 1) // s + 1, (W - 1) // s + 1
    out4 = out4.reshape(Cm, N, H, W)[:, :, ::s, ::s].reshape(Cm, N * Ho * Wo)
    xsk = xf.reshape(C, N, H, W)[:, :, ::s, ::s].reshape(C, N * Ho * Wo)

    out = _dwsep_skip(out4, xsk, params, N=N, H=Ho, W=Wo)                # conv5 + skip
    return jnp.transpose(out.reshape(Cm, N, Ho, Wo), (1, 0, 2, 3))


# ------------------------- deterministic parameters -------------------------

def init_params(key, inplanes, ratio_t, reluw=0.05):
    C, Cm = inplanes, ratio_t * inplanes
    keys = iter(jax.random.split(key, 24))

    def conv_w(cout, cin, k=3):
        fan = cin * k * k
        return jax.random.normal(next(keys), (cout, cin, k, k),
                                 jnp.float32) * math.sqrt(2.0 / fan)

    def bn(c):
        k1, k2, k3, k4 = jax.random.split(next(keys), 4)
        return (1.0 + 0.1 * jax.random.normal(k1, (c,), jnp.float32),
                0.1 * jax.random.normal(k2, (c,), jnp.float32),
                0.1 * jax.random.normal(k3, (c,), jnp.float32),
                jax.random.uniform(k4, (c,), jnp.float32, minval=0.5, maxval=1.5))

    def bias(c):
        return 0.1 * jax.random.normal(next(keys), (c,), jnp.float32)

    return {
        'w1': conv_w(C, C), 'bn1': bn(C), 'a1': reluw,
        'w2': conv_w(C, C), 'bn2': bn(C), 'a2': reluw,
        'wd': [conv_w(C, C) for _ in range(3)],
        'bnd': [bn(C) for _ in range(3)],
        'w3': conv_w(C, 3 * C), 'bn3': bn(C), 'a_main': reluw,
        'w4': conv_w(Cm, C), 'bn4': bn(Cm), 'a4': reluw,
        'w_dw': conv_w(Cm, 1), 'b_dw': bias(Cm),
        'w_pw': conv_w(Cm, Cm, k=1), 'b_pw': bias(Cm),
        'w_sk': conv_w(Cm, C, k=1), 'b_sk': bias(Cm),
    }


# --------------------------- pure-JAX reference -----------------------------

def _ref_forward(params, x, *, ratio_s, ratio_t, eps=1e-5):
    """lax.conv reference mirroring the kernel dtype policy (bf16 ops, f32 accum)."""
    f32, bf16 = jnp.float32, jnp.bfloat16

    def conv(x_, w, *, stride=1, dil=1, pad=0, groups=1):
        return jax.lax.conv_general_dilated(
            x_.astype(bf16), w.astype(bf16), (stride, stride),
            [(pad, pad), (pad, pad)], rhs_dilation=(dil, dil),
            dimension_numbers=('NCHW', 'OIHW', 'NCHW'),
            feature_group_count=groups, preferred_element_type=f32)

    def bn(y, b):
        g, bt, m, v = b
        sc = g / jnp.sqrt(v + eps)
        return y * sc[None, :, None, None] + (bt - m * sc)[None, :, None, None]

    def prelu(y, a):
        return jnp.where(y > 0, y, a * y)

    out1 = prelu(bn(conv(x, params['w1'], pad=1), params['bn1']),
                 params['a1']).astype(bf16)
    out2 = prelu(bn(conv(out1, params['w2'], pad=1), params['bn2']),
                 params['a2']).astype(bf16)
    cat = jnp.concatenate(
        [bn(conv(out2, params['wd'][i], dil=2 * i + 1, pad=2 * i + 1),
            params['bnd'][i]).astype(bf16) for i in range(3)], axis=1)
    out = prelu(bn(conv(cat, params['w3'], pad=1), params['bn3'])
                + out1.astype(f32), params['a_main']).astype(bf16)
    out = prelu(bn(conv(out, params['w4'], stride=ratio_s, dil=2, pad=2),
                   params['bn4']), params['a4']).astype(bf16)
    dw = conv(out, params['w_dw'], pad=1, groups=out.shape[1]) \
        + params['b_dw'][None, :, None, None]
    pw = conv(dw, params['w_pw']) + params['b_pw'][None, :, None, None]
    sk = conv(x, params['w_sk'], stride=ratio_s) \
        + params['b_sk'][None, :, None, None]
    return pw + sk


# ---------------------------------- main ------------------------------------

if __name__ == "__main__":
    inplanes, ratio_s, ratio_t, reluw = 4, 2, 2, 0.05
    N, H, W = 2, 16, 16

    key = jax.random.PRNGKey(0)
    kp, kx = jax.random.split(key)
    params = init_params(kp, inplanes, ratio_t, reluw)
    x = jax.random.normal(kx, (N, inplanes, H, W), jnp.float32)

    fwd = jax.jit(functools.partial(dpblock_forward, params,
                                    ratio_s=ratio_s, ratio_t=ratio_t))
    out = fwd(x)
    jax.block_until_ready(out)

    Ho, Wo = (H - 1) // ratio_s + 1, (W - 1) // ratio_s + 1
    assert out.shape == (N, ratio_t * inplanes, Ho, Wo)

    # correctness check vs dtype-matched pure-JAX reference
    ref = _ref_forward(params, x, ratio_s=ratio_s, ratio_t=ratio_t)
    err = float(jnp.max(jnp.abs(out - ref)))
    assert jnp.allclose(out, ref, rtol=3e-2, atol=3e-2), err

    print("KERNEL_OK")
</pallas_src>

<mosaic_0001>
module attributes {stable_mosaic.version = 11 : i64} {
  func.func @_convbn_kernel(%arg0: memref<4x546xbf16, #tpu.memory_space<vmem>>, %arg1: memref<9x4x4xbf16, #tpu.memory_space<vmem>>, %arg2: memref<9x1x512xbf16, #tpu.memory_space<vmem>>, %arg3: memref<4x1xf32, #tpu.memory_space<vmem>>, %arg4: memref<4x1xf32, #tpu.memory_space<vmem>>, %arg5: memref<1x1xf32, #tpu.memory_space<vmem>>, %arg6: memref<4x512xbf16, #tpu.memory_space<vmem>>) attributes {dimension_semantics = [], scalar_prefetch = 0 : i64, scratch_operands = 0 : i64, tpu.core_type = #tpu.core_type<tc>} {
    %c0 = arith.constant 0 : index
    %c0_0 = arith.constant 0 : index
    %c0_1 = arith.constant 0 : index
    %0 = vector.load %arg1[%c0, %c0_0, %c0_1] : memref<9x4x4xbf16, #tpu.memory_space<vmem>>, vector<9x4x4xbf16>
    %c0_2 = arith.constant 0 : index
    %c0_3 = arith.constant 0 : index
    %c0_4 = arith.constant 0 : index
    %1 = vector.load %arg2[%c0_2, %c0_3, %c0_4] : memref<9x1x512xbf16, #tpu.memory_space<vmem>>, vector<9x1x512xbf16>
    %cst = arith.constant 0.000000e+00 : f32
    %2 = vector.broadcast %cst : f32 to vector<4x512xf32>
    %c0_5 = arith.constant 0 : index
    %c0_6 = arith.constant 0 : index
    %3 = vector.load %arg0[%c0_5, %c0_6] : memref<4x546xbf16, #tpu.memory_space<vmem>>, vector<4x512xbf16>
    %4 = vector.extract_strided_slice %0 {offsets = [0, 0, 0], sizes = [1, 4, 4], strides = [1, 1, 1]} : vector<9x4x4xbf16> to vector<1x4x4xbf16>
    %5 = vector.shape_cast %4 : vector<1x4x4xbf16> to vector<4x4xbf16>
    %6 = vector.extract_strided_slice %1 {offsets = [0, 0, 0], sizes = [1, 1, 512], strides = [1, 1, 1]} : vector<9x1x512xbf16> to vector<1x1x512xbf16>
    %7 = vector.shape_cast %6 : vector<1x1x512xbf16> to vector<1x512xbf16>
    %8 = vector.broadcast %7 : vector<1x512xbf16> to vector<4x512xbf16>
    %9 = arith.mulf %3, %8 : vector<4x512xbf16>
    %cst_7 = arith.constant dense<0.000000e+00> : vector<4x512xf32>
    %10 = tpu.matmul %5, %9, %cst_7 {dimension_numbers = #tpu.dot_dimension_numbers<[1], [0], [0], [1], [0, 0, 1, 1], [], []>} : vector<4x4xbf16>, vector<4x512xbf16>, vector<4x512xf32> -> vector<4x512xf32>
    %11 = arith.addf %2, %10 : vector<4x512xf32>
    %c0_8 = arith.constant 0 : index
    %c1 = arith.constant 1 : index
    %12 = vector.load %arg0[%c0_8, %c1] : memref<4x546xbf16, #tpu.memory_space<vmem>>, vector<4x512xbf16>
    %13 = vector.extract_strided_slice %0 {offsets = [1, 0, 0], sizes = [1, 4, 4], strides = [1, 1, 1]} : vector<9x4x4xbf16> to vector<1x4x4xbf16>
    %14 = vector.shape_cast %13 : vector<1x4x4xbf16> to vector<4x4xbf16>
    %15 = vector.extract_strided_slice %1 {offsets = [1, 0, 0], sizes = [1, 1, 512], strides = [1, 1, 1]} : vector<9x1x512xbf16> to vector<1x1x512xbf16>
    %16 = vector.shape_cast %15 : vector<1x1x512xbf16> to vector<1x512xbf16>
    %17 = vector.broadcast %16 : vector<1x512xbf16> to vector<4x512xbf16>
    %18 = arith.mulf %12, %17 : vector<4x512xbf16>
    %cst_9 = arith.constant dense<0.000000e+00> : vector<4x512xf32>
    %19 = tpu.matmul %14, %18, %cst_9 {dimension_numbers = #tpu.dot_dimension_numbers<[1], [0], [0], [1], [0, 0, 1, 1], [], []>} : vector<4x4xbf16>, vector<4x512xbf16>, vector<4x512xf32> -> vector<4x512xf32>
    %20 = arith.addf %11, %19 : vector<4x512xf32>
    %c0_10 = arith.constant 0 : index
    %c2 = arith.constant 2 : index
    %21 = vector.load %arg0[%c0_10, %c2] : memref<4x546xbf16, #tpu.memory_space<vmem>>, vector<4x512xbf16>
    %22 = vector.extract_strided_slice %0 {offsets = [2, 0, 0], sizes = [1, 4, 4], strides = [1, 1, 1]} : vector<9x4x4xbf16> to vector<1x4x4xbf16>
    %23 = vector.shape_cast %22 : vector<1x4x4xbf16> to vector<4x4xbf16>
    %24 = vector.extract_strided_slice %1 {offsets = [2, 0, 0], sizes = [1, 1, 512], strides = [1, 1, 1]} : vector<9x1x512xbf16> to vector<1x1x512xbf16>
    %25 = vector.shape_cast %24 : vector<1x1x512xbf16> to vector<1x512xbf16>
    %26 = vector.broadcast %25 : vector<1x512xbf16> to vector<4x512xbf16>
    %27 = arith.mulf %21, %26 : vector<4x512xbf16>
    %cst_11 = arith.constant dense<0.000000e+00> : vector<4x512xf32>
    %28 = tpu.matmul %23, %27, %cst_11 {dimension_numbers = #tpu.dot_dimension_numbers<[1], [0], [0], [1], [0, 0, 1, 1], [], []>} : vector<4x4xbf16>, vector<4x512xbf16>, vector<4x512xf32> -> vector<4x512xf32>
    %29 = arith.addf %20, %28 : vector<4x512xf32>
    %c0_12 = arith.constant 0 : index
    %c16 = arith.constant 16 : index
    %30 = vector.load %arg0[%c0_12, %c16] : memref<4x546xbf16, #tpu.memory_space<vmem>>, vector<4x512xbf16>
    %31 = vector.extract_strided_slice %0 {offsets = [3, 0, 0], sizes = [1, 4, 4], strides = [1, 1, 1]} : vector<9x4x4xbf16> to vector<1x4x4xbf16>
    %32 = vector.shape_cast %31 : vector<1x4x4xbf16> to vector<4x4xbf16>
    %33 = vector.extract_strided_slice %1 {offsets = [3, 0, 0], sizes = [1, 1, 512], strides = [1, 1, 1]} : vector<9x1x512xbf16> to vector<1x1x512xbf16>
    %34 = vector.shape_cast %33 : vector<1x1x512xbf16> to vector<1x512xbf16>
    %35 = vector.broadcast %34 : vector<1x512xbf16> to vector<4x512xbf16>
    %36 = arith.mulf %30, %35 : vector<4x512xbf16>
    %cst_13 = arith.constant dense<0.000000e+00> : vector<4x512xf32>
    %37 = tpu.matmul %32, %36, %cst_13 {dimension_numbers = #tpu.dot_dimension_numbers<[1], [0], [0], [1], [0, 0, 1, 1], [], []>} : vector<4x4xbf16>, vector<4x512xbf16>, vector<4x512xf32> -> vector<4x512xf32>
    %38 = arith.addf %29, %37 : vector<4x512xf32>
    %c0_14 = arith.constant 0 : index
    %c17 = arith.constant 17 : index
    %39 = vector.load %arg0[%c0_14, %c17] : memref<4x546xbf16, #tpu.memory_space<vmem>>, vector<4x512xbf16>
    %40 = vector.extract_strided_slice %0 {offsets = [4, 0, 0], sizes = [1, 4, 4], strides = [1, 1, 1]} : vector<9x4x4xbf16> to vector<1x4x4xbf16>
    %41 = vector.shape_cast %40 : vector<1x4x4xbf16> to vector<4x4xbf16>
    %42 = vector.extract_strided_slice %1 {offsets = [4, 0, 0], sizes = [1, 1, 512], strides = [1, 1, 1]} : vector<9x1x512xbf16> to vector<1x1x512xbf16>
    %43 = vector.shape_cast %42 : vector<1x1x512xbf16> to vector<1x512xbf16>
    %44 = vector.broadcast %43 : vector<1x512xbf16> to vector<4x512xbf16>
    %45 = arith.mulf %39, %44 : vector<4x512xbf16>
    %cst_15 = arith.constant dense<0.000000e+00> : vector<4x512xf32>
    %46 = tpu.matmul %41, %45, %cst_15 {dimension_numbers = #tpu.dot_dimension_numbers<[1], [0], [0], [1], [0, 0, 1, 1], [], []>} : vector<4x4xbf16>, vector<4x512xbf16>, vector<4x512xf32> -> vector<4x512xf32>
    %47 = arith.addf %38, %46 : vector<4x512xf32>
    %c0_16 = arith.constant 0 : index
    %c18 = arith.constant 18 : index
    %48 = vector.load %arg0[%c0_16, %c18] : memref<4x546xbf16, #tpu.memory_space<vmem>>, vector<4x512xbf16>
    %49 = vector.extract_strided_slice %0 {offsets = [5, 0, 0], sizes = [1, 4, 4], strides = [1, 1, 1]} : vector<9x4x4xbf16> to vector<1x4x4xbf16>
    %50 = vector.shape_cast %49 : vector<1x4x4xbf16> to vector<4x4xbf16>
    %51 = vector.extract_strided_slice %1 {offsets = [5, 0, 0], sizes = [1, 1, 512], strides = [1, 1, 1]} : vector<9x1x512xbf16> to vector<1x1x512xbf16>
    %52 = vector.shape_cast %51 : vector<1x1x512xbf16> to vector<1x512xbf16>
    %53 = vector.broadcast %52 : vector<1x512xbf16> to vector<4x512xbf16>
    %54 = arith.mulf %48, %53 : vector<4x512xbf16>
    %cst_17 = arith.constant dense<0.000000e+00> : vector<4x512xf32>
    %55 = tpu.matmul %50, %54, %cst_17 {dimension_numbers = #tpu.dot_dimension_numbers<[1], [0], [0], [1], [0, 0, 1, 1], [], []>} : vector<4x4xbf16>, vector<4x512xbf16>, vector<4x512xf32> -> vector<4x512xf32>
    %56 = arith.addf %47, %55 : vector<4x512xf32>
    %c0_18 = arith.constant 0 : index
    %c32 = arith.constant 32 : index
    %57 = vector.load %arg0[%c0_18, %c32] : memref<4x546xbf16, #tpu.memory_space<vmem>>, vector<4x512xbf16>
    %58 = vector.extract_strided_slice %0 {offsets = [6, 0, 0], sizes = [1, 4, 4], strides = [1, 1, 1]} : vector<9x4x4xbf16> to vector<1x4x4xbf16>
    %59 = vector.shape_cast %58 : vector<1x4x4xbf16> to vector<4x4xbf16>
    %60 = vector.extract_strided_slice %1 {offsets = [6, 0, 0], sizes = [1, 1, 512], strides = [1, 1, 1]} : vector<9x1x512xbf16> to vector<1x1x512xbf16>
    %61 = vector.shape_cast %60 : vector<1x1x512xbf16> to vector<1x512xbf16>
    %62 = vector.broadcast %61 : vector<1x512xbf16> to vector<4x512xbf16>
    %63 = arith.mulf %57, %62 : vector<4x512xbf16>
    %cst_19 = arith.constant dense<0.000000e+00> : vector<4x512xf32>
    %64 = tpu.matmul %59, %63, %cst_19 {dimension_numbers = #tpu.dot_dimension_numbers<[1], [0], [0], [1], [0, 0, 1, 1], [], []>} : vector<4x4xbf16>, vector<4x512xbf16>, vector<4x512xf32> -> vector<4x512xf32>
    %65 = arith.addf %56, %64 : vector<4x512xf32>
    %c0_20 = arith.constant 0 : index
    %c33 = arith.constant 33 : index
    %66 = vector.load %arg0[%c0_20, %c33] : memref<4x546xbf16, #tpu.memory_space<vmem>>, vector<4x512xbf16>
    %67 = vector.extract_strided_slice %0 {offsets = [7, 0, 0], sizes = [1, 4, 4], strides = [1, 1, 1]} : vector<9x4x4xbf16> to vector<1x4x4xbf16>
    %68 = vector.shape_cast %67 : vector<1x4x4xbf16> to vector<4x4xbf16>
    %69 = vector.extract_strided_slice %1 {offsets = [7, 0, 0], sizes = [1, 1, 512], strides = [1, 1, 1]} : vector<9x1x512xbf16> to vector<1x1x512xbf16>
    %70 = vector.shape_cast %69 : vector<1x1x512xbf16> to vector<1x512xbf16>
    %71 = vector.broadcast %70 : vector<1x512xbf16> to vector<4x512xbf16>
    %72 = arith.mulf %66, %71 : vector<4x512xbf16>
    %cst_21 = arith.constant dense<0.000000e+00> : vector<4x512xf32>
    %73 = tpu.matmul %68, %72, %cst_21 {dimension_numbers = #tpu.dot_dimension_numbers<[1], [0], [0], [1], [0, 0, 1, 1], [], []>} : vector<4x4xbf16>, vector<4x512xbf16>, vector<4x512xf32> -> vector<4x512xf32>
    %74 = arith.addf %65, %73 : vector<4x512xf32>
    %c0_22 = arith.constant 0 : index
    %c34 = arith.constant 34 : index
    %75 = vector.load %arg0[%c0_22, %c34] : memref<4x546xbf16, #tpu.memory_space<vmem>>, vector<4x512xbf16>
    %76 = vector.extract_strided_slice %0 {offsets = [8, 0, 0], sizes = [1, 4, 4], strides = [1, 1, 1]} : vector<9x4x4xbf16> to vector<1x4x4xbf16>
    %77 = vector.shape_cast %76 : vector<1x4x4xbf16> to vector<4x4xbf16>
    %78 = vector.extract_strided_slice %1 {offsets = [8, 0, 0], sizes = [1, 1, 512], strides = [1, 1, 1]} : vector<9x1x512xbf16> to vector<1x1x512xbf16>
    %79 = vector.shape_cast %78 : vector<1x1x512xbf16> to vector<1x512xbf16>
    %80 = vector.broadcast %79 : vector<1x512xbf16> to vector<4x512xbf16>
    %81 = arith.mulf %75, %80 : vector<4x512xbf16>
    %cst_23 = arith.constant dense<0.000000e+00> : vector<4x512xf32>
    %82 = tpu.matmul %77, %81, %cst_23 {dimension_numbers = #tpu.dot_dimension_numbers<[1], [0], [0], [1], [0, 0, 1, 1], [], []>} : vector<4x4xbf16>, vector<4x512xbf16>, vector<4x512xf32> -> vector<4x512xf32>
    %83 = arith.addf %74, %82 : vector<4x512xf32>
    %c0_24 = arith.constant 0 : index
    %c0_25 = arith.constant 0 : index
    %84 = vector.load %arg3[%c0_24, %c0_25] : memref<4x1xf32, #tpu.memory_space<vmem>>, vector<4x1xf32>
    %85 = vector.broadcast %84 : vector<4x1xf32> to vector<4x512xf32>
    %86 = arith.mulf %83, %85 : vector<4x512xf32>
    %c0_26 = arith.constant 0 : index
    %c0_27 = arith.constant 0 : index
    %87 = vector.load %arg4[%c0_26, %c0_27] : memref<4x1xf32, #tpu.memory_space<vmem>>, vector<4x1xf32>
    %88 = vector.broadcast %87 : vector<4x1xf32> to vector<4x512xf32>
    %89 = arith.addf %86, %88 : vector<4x512xf32>
    %c0_28 = arith.constant 0 : index
    %c0_29 = arith.constant 0 : index
    %90 = vector.load %arg5[%c0_28, %c0_29] : memref<1x1xf32, #tpu.memory_space<vmem>>, vector<1x1xf32>
    %cst_30 = arith.constant 0.000000e+00 : f32
    %91 = vector.broadcast %cst_30 : f32 to vector<4x512xf32>
    %92 = arith.cmpf ogt, %89, %91 : vector<4x512xf32>
    %93 = vector.broadcast %90 : vector<1x1xf32> to vector<4x512xf32>
    %94 = arith.mulf %93, %89 : vector<4x512xf32>
    %95 = arith.select %92, %89, %94 : vector<4x512xi1>, vector<4x512xf32>
    %96 = arith.truncf %95 : vector<4x512xf32> to vector<4x512xbf16>
    %c0_31 = arith.constant 0 : index
    %c0_32 = arith.constant 0 : index
    %97 = vector.load %arg6[%c0_31, %c0_32] : memref<4x512xbf16, #tpu.memory_space<vmem>>, vector<4x512xbf16>
    tpu.vector_store %arg6[%c0_31, %c0_32], %96 {strides = array<i32>} : memref<4x512xbf16, #tpu.memory_space<vmem>>, vector<4x512xbf16>,
    return
  }
}

module attributes {stable_mosaic.version = 11 : i64} {
  func.func @_dilate_cat_kernel(%arg0: memref<4x682xbf16, #tpu.memory_space<vmem>>, %arg1: memref<3x9x4x4xbf16, #tpu.memory_space<vmem>>, %arg2: memref<3x9x1x512xbf16, #tpu.memory_space<vmem>>, %arg3: memref<3x4x1xf32, #tpu.memory_space<vmem>>, %arg4: memref<3x4x1xf32, #tpu.memory_space<vmem>>, %arg5: memref<12x512xbf16, #tpu.memory_space<vmem>>) attributes {dimension_semantics = [], scalar_prefetch = 0 : i64, scratch_operands = 0 : i64, tpu.core_type = #tpu.core_type<tc>} {
    %c0 = arith.constant 0 : index
    %c0_0 = arith.constant 0 : index
    %c0_1 = arith.constant 0 : index
    %c0_2 = arith.constant 0 : index
    %0 = vector.load %arg1[%c0, %c0_0, %c0_1, %c0_2] : memref<3x9x4x4xbf16, #tpu.memory_space<vmem>>, vector<3x9x4x4xbf16>
    %c0_3 = arith.constant 0 : index
    %c0_4 = arith.constant 0 : index
    %c0_5 = arith.constant 0 : index
    %c0_6 = arith.constant 0 : index
    %1 = vector.load %arg2[%c0_3, %c0_4, %c0_5, %c0_6] : memref<3x9x1x512xbf16, #tpu.memory_space<vmem>>, vector<3x9x1x512xbf16>
    %2 = vector.extract_strided_slice %0 {offsets = [0, 0, 0, 0], sizes = [1, 9, 4, 4], strides = [1, 1, 1, 1]} : vector<3x9x4x4xbf16> to vector<1x9x4x4xbf16>
    %3 = vector.shape_cast %2 : vector<1x9x4x4xbf16> to vector<9x4x4xbf16>
    %4 = vector.extract_strided_slice %1 {offsets = [0, 0, 0, 0], sizes = [1, 9, 1, 512], strides = [1, 1, 1, 1]} : vector<3x9x1x512xbf16> to vector<1x9x1x512xbf16>
    %5 = vector.shape_cast %4 : vector<1x9x1x512xbf16> to vector<9x1x512xbf16>
    %cst = arith.constant 0.000000e+00 : f32
    %6 = vector.broadcast %cst : f32 to vector<4x512xf32>
    %c0_7 = arith.constant 0 : index
    %c68 = arith.constant 68 : index
    %7 = vector.load %arg0[%c0_7, %c68] : memref<4x682xbf16, #tpu.memory_space<vmem>>, vector<4x512xbf16>
    %8 = vector.extract_strided_slice %3 {offsets = [0, 0, 0], sizes = [1, 4, 4], strides = [1, 1, 1]} : vector<9x4x4xbf16> to vector<1x4x4xbf16>
    %9 = vector.shape_cast %8 : vector<1x4x4xbf16> to vector<4x4xbf16>
    %10 = vector.extract_strided_slice %5 {offsets = [0, 0, 0], sizes = [1, 1, 512], strides = [1, 1, 1]} : vector<9x1x512xbf16> to vector<1x1x512xbf16>
    %11 = vector.shape_cast %10 : vector<1x1x512xbf16> to vector<1x512xbf16>
    %12 = vector.broadcast %11 : vector<1x512xbf16> to vector<4x512xbf16>
    %13 = arith.mulf %7, %12 : vector<4x512xbf16>
    %cst_8 = arith.constant dense<0.000000e+00> : vector<4x512xf32>
    %14 = tpu.matmul %9, %13, %cst_8 {dimension_numbers = #tpu.dot_dimension_numbers<[1], [0], [0], [1], [0, 0, 1, 1], [], []>} : vector<4x4xbf16>, vector<4x512xbf16>, vector<4x512xf32> -> vector<4x512xf32>
    %15 = arith.addf %6, %14 : vector<4x512xf32>
    %c0_9 = arith.constant 0 : index
    %c69 = arith.constant 69 : index
    %16 = vector.load %arg0[%c0_9, %c69] : memref<4x682xbf16, #tpu.memory_space<vmem>>, vector<4x512xbf16>
    %17 = vector.extract_strided_slice %3 {offsets = [1, 0, 0], sizes = [1, 4, 4], strides = [1, 1, 1]} : vector<9x4x4xbf16> to vector<1x4x4xbf16>
    %18 = vector.shape_cast %17 : vector<1x4x4xbf16> to vector<4x4xbf16>
    %19 = vector.extract_strided_slice %5 {offsets = [1, 0, 0], sizes = [1, 1, 512], strides = [1, 1, 1]} : vector<9x1x512xbf16> to vector<1x1x512xbf16>
    %20 = vector.shape_cast %19 : vector<1x1x512xbf16> to vector<1x512xbf16>
    %21 = vector.broadcast %20 : vector<1x512xbf16> to vector<4x512xbf16>
    %22 = arith.mulf %16, %21 : vector<4x512xbf16>
    %cst_10 = arith.constant dense<0.000000e+00> : vector<4x512xf32>
    %23 = tpu.matmul %18, %22, %cst_10 {dimension_numbers = #tpu.dot_dimension_numbers<[1], [0], [0], [1], [0, 0, 1, 1], [], []>} : vector<4x4xbf16>, vector<4x512xbf16>, vector<4x512xf32> -> vector<4x512xf32>
    %24 = arith.addf %15, %23 : vector<4x512xf32>
    %c0_11 = arith.constant 0 : index
    %c70 = arith.constant 70 : index
    %25 = vector.load %arg0[%c0_11, %c70] : memref<4x682xbf16, #tpu.memory_space<vmem>>, vector<4x512xbf16>
    %26 = vector.extract_strided_slice %3 {offsets = [2, 0, 0], sizes = [1, 4, 4], strides = [1, 1, 1]} : vector<9x4x4xbf16> to vector<1x4x4xbf16>
    %27 = vector.shape_cast %26 : vector<1x4x4xbf16> to vector<4x4xbf16>
    %28 = vector.extract_strided_slice %5 {offsets = [2, 0, 0], sizes = [1, 1, 512], strides = [1, 1, 1]} : vector<9x1x512xbf16> to vector<1x1x512xbf16>
    %29 = vector.shape_cast %28 : vector<1x1x512xbf16> to vector<1x512xbf16>
    %30 = vector.broadcast %29 : vector<1x512xbf16> to vector<4x512xbf16>
    %31 = arith.mulf %25, %30 : vector<4x512xbf16>
    %cst_12 = arith.constant dense<0.000000e+00> : vector<4x512xf32>
    %32 = tpu.matmul %27, %31, %cst_12 {dimension_numbers = #tpu.dot_dimension_numbers<[1], [0], [0], [1], [0, 0, 1, 1], [], []>} : vector<4x4xbf16>, vector<4x512xbf16>, vector<4x512xf32> -> vector<4x512xf32>
    %33 = arith.addf %24, %32 : vector<4x512xf32>
    %c0_13 = arith.constant 0 : index
    %c84 = arith.constant 84 : index
    %34 = vector.load %arg0[%c0_13, %c84] : memref<4x682xbf16, #tpu.memory_space<vmem>>, vector<4x512xbf16>
    %35 = vector.extract_strided_slice %3 {offsets = [3, 0, 0], sizes = [1, 4, 4], strides = [1, 1, 1]} : vector<9x4x4xbf16> to vector<1x4x4xbf16>
    %36 = vector.shape_cast %35 : vector<1x4x4xbf16> to vector<4x4xbf16>
    %37 = vector.extract_strided_slice %5 {offsets = [3, 0, 0], sizes = [1, 1, 512], strides = [1, 1, 1]} : vector<9x1x512xbf16> to vector<1x1x512xbf16>
    %38 = vector.shape_cast %37 : vector<1x1x512xbf16> to vector<1x512xbf16>
    %39 = vector.broadcast %38 : vector<1x512xbf16> to vector<4x512xbf16>
    %40 = arith.mulf %34, %39 : vector<4x512xbf16>
    %cst_14 = arith.constant dense<0.000000e+00> : vector<4x512xf32>
    %41 = tpu.matmul %36, %40, %cst_14 {dimension_numbers = #tpu.dot_dimension_numbers<[1], [0], [0], [1], [0, 0, 1, 1], [], []>} : vector<4x4xbf16>, vector<4x512xbf16>, vector<4x512xf32> -> vector<4x512xf32>
    %42 = arith.addf %33, %41 : vector<4x512xf32>
    %c0_15 = arith.constant 0 : index
    %c85 = arith.constant 85 : index
    %43 = vector.load %arg0[%c0_15, %c85] : memref<4x682xbf16, #tpu.memory_space<vmem>>, vector<4x512xbf16>
    %44 = vector.extract_strided_slice %3 {offsets = [4, 0, 0], sizes = [1, 4, 4], strides = [1, 1, 1]} : vector<9x4x4xbf16> to vector<1x4x4xbf16>
    %45 = vector.shape_cast %44 : vector<1x4x4xbf16> to vector<4x4xbf16>
    %46 = vector.extract_strided_slice %5 {offsets = [4, 0, 0], sizes = [1, 1, 512], strides = [1, 1, 1]} : vector<9x1x512xbf16> to vector<1x1x512xbf16>
    %47 = vector.shape_cast %46 : vector<1x1x512xbf16> to vector<1x512xbf16>
    %48 = vector.broadcast %47 : vector<1x512xbf16> to vector<4x512xbf16>
    %49 = arith.mulf %43, %48 : vector<4x512xbf16>
    %cst_16 = arith.constant dense<0.000000e+00> : vector<4x512xf32>
    %50 = tpu.matmul %45, %49, %cst_16 {dimension_numbers = #tpu.dot_dimension_numbers<[1], [0], [0], [1], [0, 0, 1, 1], [], []>} : vector<4x4xbf16>, vector<4x512xbf16>, vector<4x512xf32> -> vector<4x512xf32>
    %51 = arith.addf %42, %50 : vector<4x512xf32>
    %c0_17 = arith.constant 0 : index
    %c86 = arith.constant 86 : index
    %52 = vector.load %arg0[%c0_17, %c86] : memref<4x682xbf16, #tpu.memory_space<vmem>>, vector<4x512xbf16>
    %53 = vector.extract_strided_slice %3 {offsets = [5, 0, 0], sizes = [1, 4, 4], strides = [1, 1, 1]} : vector<9x4x4xbf16> to vector<1x4x4xbf16>
    %54 = vector.shape_cast %53 : vector<1x4x4xbf16> to vector<4x4xbf16>
    %55 = vector.extract_strided_slice %5 {offsets = [5, 0, 0], sizes = [1, 1, 512], strides = [1, 1, 1]} : vector<9x1x512xbf16> to vector<1x1x512xbf16>
    %56 = vector.shape_cast %55 : vector<1x1x512xbf16> to vector<1x512xbf16>
    %57 = vector.broadcast %56 : vector<1x512xbf16> to vector<4x512xbf16>
    %58 = arith.mulf %52, %57 : vector<4x512xbf16>
    %cst_18 = arith.constant dense<0.000000e+00> : vector<4x512xf32>
    %59 = tpu.matmul %54, %58, %cst_18 {dimension_numbers = #tpu.dot_dimension_numbers<[1], [0], [0], [1], [0, 0, 1, 1], [], []>} : vector<4x4xbf16>, vector<4x512xbf16>, vector<4x512xf32> -> vector<4x512xf32>
    %60 = arith.addf %51, %59 : vector<4x512xf32>
    %c0_19 = arith.constant 0 : index
    %c100 = arith.constant 100 : index
    %61 = vector.load %arg0[%c0_19, %c100] : memref<4x682xbf16, #tpu.memory_space<vmem>>, vector<4x512xbf16>
    %62 = vector.extract_strided_slice %3 {offsets = [6, 0, 0], sizes = [1, 4, 4], strides = [1, 1, 1]} : vector<9x4x4xbf16> to vector<1x4x4xbf16>
    %63 = vector.shape_cast %62 : vector<1x4x4xbf16> to vector<4x4xbf16>
    %64 = vector.extract_strided_slice %5 {offsets = [6, 0, 0], sizes = [1, 1, 512], strides = [1, 1, 1]} : vector<9x1x512xbf16> to vector<1x1x512xbf16>
    %65 = vector.shape_cast %64 : vector<1x1x512xbf16> to vector<1x512xbf16>
    %66 = vector.broadcast %65 : vector<1x512xbf16> to vector<4x512xbf16>
    %67 = arith.mulf %61, %66 : vector<4x512xbf16>
    %cst_20 = arith.constant dense<0.000000e+00> : vector<4x512xf32>
    %68 = tpu.matmul %63, %67, %cst_20 {dimension_numbers = #tpu.dot_dimension_numbers<[1], [0], [0], [1], [0, 0, 1, 1], [], []>} : vector<4x4xbf16>, vector<4x512xbf16>, vector<4x512xf32> -> vector<4x512xf32>
    %69 = arith.addf %60, %68 : vector<4x512xf32>
    %c0_21 = arith.constant 0 : index
    %c101 = arith.constant 101 : index
    %70 = vector.load %arg0[%c0_21, %c101] : memref<4x682xbf16, #tpu.memory_space<vmem>>, vector<4x512xbf16>
    %71 = vector.extract_strided_slice %3 {offsets = [7, 0, 0], sizes = [1, 4, 4], strides = [1, 1, 1]} : vector<9x4x4xbf16> to vector<1x4x4xbf16>
    %72 = vector.shape_cast %71 : vector<1x4x4xbf16> to vector<4x4xbf16>
    %73 = vector.extract_strided_slice %5 {offsets = [7, 0, 0], sizes = [1, 1, 512], strides = [1, 1, 1]} : vector<9x1x512xbf16> to vector<1x1x512xbf16>
    %74 = vector.shape_cast %73 : vector<1x1x512xbf16> to vector<1x512xbf16>
    %75 = vector.broadcast %74 : vector<1x512xbf16> to vector<4x512xbf16>
    %76 = arith.mulf %70, %75 : vector<4x512xbf16>
    %cst_22 = arith.constant dense<0.000000e+00> : vector<4x512xf32>
    %77 = tpu.matmul %72, %76, %cst_22 {dimension_numbers = #tpu.dot_dimension_numbers<[1], [0], [0], [1], [0, 0, 1, 1], [], []>} : vector<4x4xbf16>, vector<4x512xbf16>, vector<4x512xf32> -> vector<4x512xf32>
    %78 = arith.addf %69, %77 : vector<4x512xf32>
    %c0_23 = arith.constant 0 : index
    %c102 = arith.constant 102 : index
    %79 = vector.load %arg0[%c0_23, %c102] : memref<4x682xbf16, #tpu.memory_space<vmem>>, vector<4x512xbf16>
    %80 = vector.extract_strided_slice %3 {offsets = [8, 0, 0], sizes = [1, 4, 4], strides = [1, 1, 1]} : vector<9x4x4xbf16> to vector<1x4x4xbf16>
    %81 = vector.shape_cast %80 : vector<1x4x4xbf16> to vector<4x4xbf16>
    %82 = vector.extract_strided_slice %5 {offsets = [8, 0, 0], sizes = [1, 1, 512], strides = [1, 1, 1]} : vector<9x1x512xbf16> to vector<1x1x512xbf16>
    %83 = vector.shape_cast %82 : vector<1x1x512xbf16> to vector<1x512xbf16>
    %84 = vector.broadcast %83 : vector<1x512xbf16> to vector<4x512xbf16>
    %85 = arith.mulf %79, %84 : vector<4x512xbf16>
    %cst_24 = arith.constant dense<0.000000e+00> : vector<4x512xf32>
    %86 = tpu.matmul %81, %85, %cst_24 {dimension_numbers = #tpu.dot_dimension_numbers<[1], [0], [0], [1], [0, 0, 1, 1], [], []>} : vector<4x4xbf16>, vector<4x512xbf16>, vector<4x512xf32> -> vector<4x512xf32>
    %87 = arith.addf %78, %86 : vector<4x512xf32>
    %c0_25 = arith.constant 0 : index
    %c0_26 = arith.constant 0 : index
    %c0_27 = arith.constant 0 : index
    %88 = vector.load %arg3[%c0_25, %c0_26, %c0_27] : memref<3x4x1xf32, #tpu.memory_space<vmem>>, vector<1x4x1xf32>
    %89 = vector.shape_cast %88 : vector<1x4x1xf32> to vector<4x1xf32>
    %90 = vector.broadcast %89 : vector<4x1xf32> to vector<4x512xf32>
    %91 = arith.mulf %87, %90 : vector<4x512xf32>
    %c0_28 = arith.constant 0 : index
    %c0_29 = arith.constant 0 : index
    %c0_30 = arith.constant 0 : index
    %92 = vector.load %arg4[%c0_28, %c0_29, %c0_30] : memref<3x4x1xf32, #tpu.memory_space<vmem>>, vector<1x4x1xf32>
    %93 = vector.shape_cast %92 : vector<1x4x1xf32> to vector<4x1xf32>
    %94 = vector.broadcast %93 : vector<4x1xf32> to vector<4x512xf32>
    %95 = arith.addf %91, %94 : vector<4x512xf32>
    %96 = vector.extract_strided_slice %0 {offsets = [1, 0, 0, 0], sizes = [1, 9, 4, 4], strides = [1, 1, 1, 1]} : vector<3x9x4x4xbf16> to vector<1x9x4x4xbf16>
    %97 = vector.shape_cast %96 : vector<1x9x4x4xbf16> to vector<9x4x4xbf16>
    %98 = vector.extract_strided_slice %1 {offsets = [1, 0, 0, 0], sizes = [1, 9, 1, 512], strides = [1, 1, 1, 1]} : vector<3x9x1x512xbf16> to vector<1x9x1x512xbf16>
    %99 = vector.shape_cast %98 : vector<1x9x1x512xbf16> to vector<9x1x512xbf16>
    %cst_31 = arith.constant 0.000000e+00 : f32
    %100 = vector.broadcast %cst_31 : f32 to vector<4x512xf32>
    %c0_32 = arith.constant 0 : index
    %c34 = arith.constant 34 : index
    %101 = vector.load %arg0[%c0_32, %c34] : memref<4x682xbf16, #tpu.memory_space<vmem>>, vector<4x512xbf16>
    %102 = vector.extract_strided_slice %97 {offsets = [0, 0, 0], sizes = [1, 4, 4], strides = [1, 1, 1]} : vector<9x4x4xbf16> to vector<1x4x4xbf16>
    %103 = vector.shape_cast %102 : vector<1x4x4xbf16> to vector<4x4xbf16>
    %104 = vector.extract_strided_slice %99 {offsets = [0, 0, 0], sizes = [1, 1, 512], strides = [1, 1, 1]} : vector<9x1x512xbf16> to vector<1x1x512xbf16>
    %105 = vector.shape_cast %104 : vector<1x1x512xbf16> to vector<1x512xbf16>
    %106 = vector.broadcast %105 : vector<1x512xbf16> to vector<4x512xbf16>
    %107 = arith.mulf %101, %106 : vector<4x512xbf16>
    %cst_33 = arith.constant dense<0.000000e+00> : vector<4x512xf32>
    %108 = tpu.matmul %103, %107, %cst_33 {dimension_numbers = #tpu.dot_dimension_numbers<[1], [0], [0], [1], [0, 0, 1, 1], [], []>} : vector<4x4xbf16>, vector<4x512xbf16>, vector<4x512xf32> -> vector<4x512xf32>
    %109 = arith.addf %100, %108 : vector<4x512xf32>
    %c0_34 = arith.constant 0 : index
    %c37 = arith.constant 37 : index
    %110 = vector.load %arg0[%c0_34, %c37] : memref<4x682xbf16, #tpu.memory_space<vmem>>, vector<4x512xbf16>
    %111 = vector.extract_strided_slice %97 {offsets = [1, 0, 0], sizes = [1, 4, 4], strides = [1, 1, 1]} : vector<9x4x4xbf16> to vector<1x4x4xbf16>
    %112 = vector.shape_cast %111 : vector<1x4x4xbf16> to vector<4x4xbf16>
    %113 = vector.extract_strided_slice %99 {offsets = [1, 0, 0], sizes = [1, 1, 512], strides = [1, 1, 1]} : vector<9x1x512xbf16> to vector<1x1x512xbf16>
    %114 = vector.shape_cast %113 : vector<1x1x512xbf16> to vector<1x512xbf16>
    %115 = vector.broadcast %114 : vector<1x512xbf16> to vector<4x512xbf16>
    %116 = arith.mulf %110, %115 : vector<4x512xbf16>
    %cst_35 = arith.constant dense<0.000000e+00> : vector<4x512xf32>
    %117 = tpu.matmul %112, %116, %cst_35 {dimension_numbers = #tpu.dot_dimension_numbers<[1], [0], [0], [1], [0, 0, 1, 1], [], []>} : vector<4x4xbf16>, vector<4x512xbf16>, vector<4x512xf32> -> vector<4x512xf32>
    %118 = arith.addf %109, %117 : vector<4x512xf32>
    %c0_36 = arith.constant 0 : index
    %c40 = arith.constant 40 : index
    %119 = vector.load %arg0[%c0_36, %c40] : memref<4x682xbf16, #tpu.memory_space<vmem>>, vector<4x512xbf16>
    %120 = vector.extract_strided_slice %97 {offsets = [2, 0, 0], sizes = [1, 4, 4], strides = [1, 1, 1]} : vector<9x4x4xbf16> to vector<1x4x4xbf16>
    %121 = vector.shape_cast %120 : vector<1x4x4xbf16> to vector<4x4xbf16>
    %122 = vector.extract_strided_slice %99 {offsets = [2, 0, 0], sizes = [1, 1, 512], strides = [1, 1, 1]} : vector<9x1x512xbf16> to vector<1x1x512xbf16>
    %123 = vector.shape_cast %122 : vector<1x1x512xbf16> to vector<1x512xbf16>
    %124 = vector.broadcast %123 : vector<1x512xbf16> to vector<4x512xbf16>
    %125 = arith.mulf %119, %124 : vector<4x512xbf16>
    %cst_37 = arith.constant dense<0.000000e+00> : vector<4x512xf32>
    %126 = tpu.matmul %121, %125, %cst_37 {dimension_numbers = #tpu.dot_dimension_numbers<[1], [0], [0], [1], [0, 0, 1, 1], [], []>} : vector<4x4xbf16>, vector<4x512xbf16>, vector<4x512xf32> -> vector<4x512xf32>
    %127 = arith.addf %118, %126 : vector<4x512xf32>
    %c0_38 = arith.constant 0 : index
    %c82 = arith.constant 82 : index
    %128 = vector.load %arg0[%c0_38, %c82] : memref<4x682xbf16, #tpu.memory_space<vmem>>, vector<4x512xbf16>
    %129 = vector.extract_strided_slice %97 {offsets = [3, 0, 0], sizes = [1, 4, 4], strides = [1, 1, 1]} : vector<9x4x4xbf16> to vector<1x4x4xbf16>
    %130 = vector.shape_cast %129 : vector<1x4x4xbf16> to vector<4x4xbf16>
    %131 = vector.extract_strided_slice %99 {offsets = [3, 0, 0], sizes = [1, 1, 512], strides = [1, 1, 1]} : vector<9x1x512xbf16> to vector<1x1x512xbf16>
    %132 = vector.shape_cast %131 : vector<1x1x512xbf16> to vector<1x512xbf16>
    %133 = vector.broadcast %132 : vector<1x512xbf16> to vector<4x512xbf16>
    %134 = arith.mulf %128, %133 : vector<4x512xbf16>
    %cst_39 = arith.constant dense<0.000000e+00> : vector<4x512xf32>
    %135 = tpu.matmul %130, %134, %cst_39 {dimension_numbers = #tpu.dot_dimension_numbers<[1], [0], [0], [1], [0, 0, 1, 1], [], []>} : vector<4x4xbf16>, vector<4x512xbf16>, vector<4x512xf32> -> vector<4x512xf32>
    %136 = arith.addf %127, %135 : vector<4x512xf32>
    %c0_40 = arith.constant 0 : index
    %c85_41 = arith.constant 85 : index
    %137 = vector.load %arg0[%c0_40, %c85_41] : memref<4x682xbf16, #tpu.memory_space<vmem>>, vector<4x512xbf16>
    %138 = vector.extract_strided_slice %97 {offsets = [4, 0, 0], sizes = [1, 4, 4], strides = [1, 1, 1]} : vector<9x4x4xbf16> to vector<1x4x4xbf16>
    %139 = vector.shape_cast %138 : vector<1x4x4xbf16> to vector<4x4xbf16>
    %140 = vector.extract_strided_slice %99 {offsets = [4, 0, 0], sizes = [1, 1, 512], strides = [1, 1, 1]} : vector<9x1x512xbf16> to vector<1x1x512xbf16>
    %141 = vector.shape_cast %140 : vector<1x1x512xbf16> to vector<1x512xbf16>
    %142 = vector.broadcast %141 : vector<1x512xbf16> to vector<4x512xbf16>
    %143 = arith.mulf %137, %142 : vector<4x512xbf16>
    %cst_42 = arith.constant dense<0.000000e+00> : vector<4x512xf32>
    %144 = tpu.matmul %139, %143, %cst_42 {dimension_numbers = #tpu.dot_dimension_numbers<[1], [0], [0], [1], [0, 0, 1, 1], [], []>} : vector<4x4xbf16>, vector<4x512xbf16>, vector<4x512xf32> -> vector<4x512xf32>
    %145 = arith.addf %136, %144 : vector<4x512xf32>
    %c0_43 = arith.constant 0 : index
    %c88 = arith.constant 88 : index
    %146 = vector.load %arg0[%c0_43, %c88] : memref<4x682xbf16, #tpu.memory_space<vmem>>, vector<4x512xbf16>
    %147 = vector.extract_strided_slice %97 {offsets = [5, 0, 0], sizes = [1, 4, 4], strides = [1, 1, 1]} : vector<9x4x4xbf16> to vector<1x4x4xbf16>
    %148 = vector.shape_cast %147 : vector<1x4x4xbf16> to vector<4x4xbf16>
    %149 = vector.extract_strided_slice %99 {offsets = [5, 0, 0], sizes = [1, 1, 512], strides = [1, 1, 1]} : vector<9x1x512xbf16> to vector<1x1x512xbf16>
    %150 = vector.shape_cast %149 : vector<1x1x512xbf16> to vector<1x512xbf16>
    %151 = vector.broadcast %150 : vector<1x512xbf16> to vector<4x512xbf16>
    %152 = arith.mulf %146, %151 : vector<4x512xbf16>
    %cst_44 = arith.constant dense<0.000000e+00> : vector<4x512xf32>
    %153 = tpu.matmul %148, %152, %cst_44 {dimension_numbers = #tpu.dot_dimension_numbers<[1], [0], [0], [1], [0, 0, 1, 1], [], []>} : vector<4x4xbf16>, vector<4x512xbf16>, vector<4x512xf32> -> vector<4x512xf32>
    %154 = arith.addf %145, %153 : vector<4x512xf32>
    %c0_45 = arith.constant 0 : index
    %c130 = arith.constant 130 : index
    %155 = vector.load %arg0[%c0_45, %c130] : memref<4x682xbf16, #tpu.memory_space<vmem>>, vector<4x512xbf16>
    %156 = vector.extract_strided_slice %97 {offsets = [6, 0, 0], sizes = [1, 4, 4], strides = [1, 1, 1]} : vector<9x4x4xbf16> to vector<1x4x4xbf16>
    %157 = vector.shape_cast %156 : vector<1x4x4xbf16> to vector<4x4xbf16>
    %158 = vector.extract_strided_slice %99 {offsets = [6, 0, 0], sizes = [1, 1, 512], strides = [1, 1, 1]} : vector<9x1x512xbf16> to vector<1x1x512xbf16>
    %159 = vector.shape_cast %158 : vector<1x1x512xbf16> to vector<1x512xbf16>
    %160 = vector.broadcast %159 : vector<1x512xbf16> to vector<4x512xbf16>
    %161 = arith.mulf %155, %160 : vector<4x512xbf16>
    %cst_46 = arith.constant dense<0.000000e+00> : vector<4x512xf32>
    %162 = tpu.matmul %157, %161, %cst_46 {dimension_numbers = #tpu.dot_dimension_numbers<[1], [0], [0], [1], [0, 0, 1, 1], [], []>} : vector<4x4xbf16>, vector<4x512xbf16>, vector<4x512xf32> -> vector<4x512xf32>
    %163 = arith.addf %154, %162 : vector<4x512xf32>
    %c0_47 = arith.constant 0 : index
    %c133 = arith.constant 133 : index
    %164 = vector.load %arg0[%c0_47, %c133] : memref<4x682xbf16, #tpu.memory_space<vmem>>, vector<4x512xbf16>
    %165 = vector.extract_strided_slice %97 {offsets = [7, 0, 0], sizes = [1, 4, 4], strides = [1, 1, 1]} : vector<9x4x4xbf16> to vector<1x4x4xbf16>
    %166 = vector.shape_cast %165 : vector<1x4x4xbf16> to vector<4x4xbf16>
    %167 = vector.extract_strided_slice %99 {offsets = [7, 0, 0], sizes = [1, 1, 512], strides = [1, 1, 1]} : vector<9x1x512xbf16> to vector<1x1x512xbf16>
    %168 = vector.shape_cast %167 : vector<1x1x512xbf16> to vector<1x512xbf16>
    %169 = vector.broadcast %168 : vector<1x512xbf16> to vector<4x512xbf16>
    %170 = arith.mulf %164, %169 : vector<4x512xbf16>
    %cst_48 = arith.constant dense<0.000000e+00> : vector<4x512xf32>
    %171 = tpu.matmul %166, %170, %cst_48 {dimension_numbers = #tpu.dot_dimension_numbers<[1], [0], [0], [1], [0, 0, 1, 1], [], []>} : vector<4x4xbf16>, vector<4x512xbf16>, vector<4x512xf32> -> vector<4x512xf32>
    %172 = arith.addf %163, %171 : vector<4x512xf32>
    %c0_49 = arith.constant 0 : index
    %c136 = arith.constant 136 : index
    %173 = vector.load %arg0[%c0_49, %c136] : memref<4x682xbf16, #tpu.memory_space<vmem>>, vector<4x512xbf16>
    %174 = vector.extract_strided_slice %97 {offsets = [8, 0, 0], sizes = [1, 4, 4], strides = [1, 1, 1]} : vector<9x4x4xbf16> to vector<1x4x4xbf16>
    %175 = vector.shape_cast %174 : vector<1x4x4xbf16> to vector<4x4xbf16>
    %176 = vector.extract_strided_slice %99 {offsets = [8, 0, 0], sizes = [1, 1, 512], strides = [1, 1, 1]} : vector<9x1x512xbf16> to vector<1x1x512xbf16>
    %177 = vector.shape_cast %176 : vector<1x1x512xbf16> to vector<1x512xbf16>
    %178 = vector.broadcast %177 : vector<1x512xbf16> to vector<4x512xbf16>
    %179 = arith.mulf %173, %178 : vector<4x512xbf16>
    %cst_50 = arith.constant dense<0.000000e+00> : vector<4x512xf32>
    %180 = tpu.matmul %175, %179, %cst_50 {dimension_numbers = #tpu.dot_dimension_numbers<[1], [0], [0], [1], [0, 0, 1, 1], [], []>} : vector<4x4xbf16>, vector<4x512xbf16>, vector<4x512xf32> -> vector<4x512xf32>
    %181 = arith.addf %172, %180 : vector<4x512xf32>
    %c1 = arith.constant 1 : index
    %c0_51 = arith.constant 0 : index
    %c0_52 = arith.constant 0 : index
    %182 = vector.load %arg3[%c1, %c0_51, %c0_52] : memref<3x4x1xf32, #tpu.memory_space<vmem>>, vector<1x4x1xf32>
    %183 = vector.shape_cast %182 : vector<1x4x1xf32> to vector<4x1xf32>
    %184 = vector.broadcast %183 : vector<4x1xf32> to vector<4x512xf32>
    %185 = arith.mulf %181, %184 : vector<4x512xf32>
    %c1_53 = arith.constant 1 : index
    %c0_54 = arith.constant 0 : index
    %c0_55 = arith.constant 0 : index
    %186 = vector.load %arg4[%c1_53, %c0_54, %c0_55] : memref<3x4x1xf32, #tpu.memory_space<vmem>>, vector<1x4x1xf32>
    %187 = vector.shape_cast %186 : vector<1x4x1xf32> to vector<4x1xf32>
    %188 = vector.broadcast %187 : vector<4x1xf32> to vector<4x512xf32>
    %189 = arith.addf %185, %188 : vector<4x512xf32>
    %190 = vector.extract_strided_slice %0 {offsets = [2, 0, 0, 0], sizes = [1, 9, 4, 4], strides = [1, 1, 1, 1]} : vector<3x9x4x4xbf16> to vector<1x9x4x4xbf16>
    %191 = vector.shape_cast %190 : vector<1x9x4x4xbf16> to vector<9x4x4xbf16>
    %192 = vector.extract_strided_slice %1 {offsets = [2, 0, 0, 0], sizes = [1, 9, 1, 512], strides = [1, 1, 1, 1]} : vector<3x9x1x512xbf16> to vector<1x9x1x512xbf16>
    %193 = vector.shape_cast %192 : vector<1x9x1x512xbf16> to vector<9x1x512xbf16>
    %cst_56 = arith.constant 0.000000e+00 : f32
    %194 = vector.broadcast %cst_56 : f32 to vector<4x512xf32>
    %c0_57 = arith.constant 0 : index
    %c0_58 = arith.constant 0 : index
    %195 = vector.load %arg0[%c0_57, %c0_58] : memref<4x682xbf16, #tpu.memory_space<vmem>>, vector<4x512xbf16>
    %196 = vector.extract_strided_slice %191 {offsets = [0, 0, 0], sizes = [1, 4, 4], strides = [1, 1, 1]} : vector<9x4x4xbf16> to vector<1x4x4xbf16>
    %197 = vector.shape_cast %196 : vector<1x4x4xbf16> to vector<4x4xbf16>
    %198 = vector.extract_strided_slice %193 {offsets = [0, 0, 0], sizes = [1, 1, 512], strides = [1, 1, 1]} : vector<9x1x512xbf16> to vector<1x1x512xbf16>
    %199 = vector.shape_cast %198 : vector<1x1x512xbf16> to vector<1x512xbf16>
    %200 = vector.broadcast %199 : vector<1x512xbf16> to vector<4x512xbf16>
    %201 = arith.mulf %195, %200 : vector<4x512xbf16>
    %cst_59 = arith.constant dense<0.000000e+00> : vector<4x512xf32>
    %202 = tpu.matmul %197, %201, %cst_59 {dimension_numbers = #tpu.dot_dimension_numbers<[1], [0], [0], [1], [0, 0, 1, 1], [], []>} : vector<4x4xbf16>, vector<4x512xbf16>, vector<4x512xf32> -> vector<4x512xf32>
    %203 = arith.addf %194, %202 : vector<4x512xf32>
    %c0_60 = arith.constant 0 : index
    %c5 = arith.constant 5 : index
    %204 = vector.load %arg0[%c0_60, %c5] : memref<4x682xbf16, #tpu.memory_space<vmem>>, vector<4x512xbf16>
    %205 = vector.extract_strided_slice %191 {offsets = [1, 0, 0], sizes = [1, 4, 4], strides = [1, 1, 1]} : vector<9x4x4xbf16> to vector<1x4x4xbf16>
    %206 = vector.shape_cast %205 : vector<1x4x4xbf16> to vector<4x4xbf16>
    %207 = vector.extract_strided_slice %193 {offsets = [1, 0, 0], sizes = [1, 1, 512], strides = [1, 1, 1]} : vector<9x1x512xbf16> to vector<1x1x512xbf16>
    %208 = vector.shape_cast %207 : vector<1x1x512xbf16> to vector<1x512xbf16>
    %209 = vector.broadcast %208 : vector<1x512xbf16> to vector<4x512xbf16>
    %210 = arith.mulf %204, %209 : vector<4x512xbf16>
    %cst_61 = arith.constant dense<0.000000e+00> : vector<4x512xf32>
    %211 = tpu.matmul %206, %210, %cst_61 {dimension_numbers = #tpu.dot_dimension_numbers<[1], [0], [0], [1], [0, 0, 1, 1], [], []>} : vector<4x4xbf16>, vector<4x512xbf16>, vector<4x512xf32> -> vector<4x512xf32>
    %212 = arith.addf %203, %211 : vector<4x512xf32>
    %c0_62 = arith.constant 0 : index
    %c10 = arith.constant 10 : index
    %213 = vector.load %arg0[%c0_62, %c10] : memref<4x682xbf16, #tpu.memory_space<vmem>>, vector<4x512xbf16>
    %214 = vector.extract_strided_slice %191 {offsets = [2, 0, 0], sizes = [1, 4, 4], strides = [1, 1, 1]} : vector<9x4x4xbf16> to vector<1x4x4xbf16>
    %215 = vector.shape_cast %214 : vector<1x4x4xbf16> to vector<4x4xbf16>
    %216 = vector.extract_strided_slice %193 {offsets = [2, 0, 0], sizes = [1, 1, 512], strides = [1, 1, 1]} : vector<9x1x512xbf16> to vector<1x1x512xbf16>
    %217 = vector.shape_cast %216 : vector<1x1x512xbf16> to vector<1x512xbf16>
    %218 = vector.broadcast %217 : vector<1x512xbf16> to vector<4x512xbf16>
    %219 = arith.mulf %213, %218 : vector<4x512xbf16>
    %cst_63 = arith.constant dense<0.000000e+00> : vector<4x512xf32>
    %220 = tpu.matmul %215, %219, %cst_63 {dimension_numbers = #tpu.dot_dimension_numbers<[1], [0], [0], [1], [0, 0, 1, 1], [], []>} : vector<4x4xbf16>, vector<4x512xbf16>, vector<4x512xf32> -> vector<4x512xf32>
    %221 = arith.addf %212, %220 : vector<4x512xf32>
    %c0_64 = arith.constant 0 : index
    %c80 = arith.constant 80 : index
    %222 = vector.load %arg0[%c0_64, %c80] : memref<4x682xbf16, #tpu.memory_space<vmem>>, vector<4x512xbf16>
    %223 = vector.extract_strided_slice %191 {offsets = [3, 0, 0], sizes = [1, 4, 4], strides = [1, 1, 1]} : vector<9x4x4xbf16> to vector<1x4x4xbf16>
    %224 = vector.shape_cast %223 : vector<1x4x4xbf16> to vector<4x4xbf16>
    %225 = vector.extract_strided_slice %193 {offsets = [3, 0, 0], sizes = [1, 1, 512], strides = [1, 1, 1]} : vector<9x1x512xbf16> to vector<1x1x512xbf16>
    %226 = vector.shape_cast %225 : vector<1x1x512xbf16> to vector<1x512xbf16>
    %227 = vector.broadcast %226 : vector<1x512xbf16> to vector<4x512xbf16>
    %228 = arith.mulf %222, %227 : vector<4x512xbf16>
    %cst_65 = arith.constant dense<0.000000e+00> : vector<4x512xf32>
    %229 = tpu.matmul %224, %228, %cst_65 {dimension_numbers = #tpu.dot_dimension_numbers<[1], [0], [0], [1], [0, 0, 1, 1], [], []>} : vector<4x4xbf16>, vector<4x512xbf16>, vector<4x512xf32> -> vector<4x512xf32>
    %230 = arith.addf %221, %229 : vector<4x512xf32>
    %c0_66 = arith.constant 0 : index
    %c85_67 = arith.constant 85 : index
    %231 = vector.load %arg0[%c0_66, %c85_67] : memref<4x682xbf16, #tpu.memory_space<vmem>>, vector<4x512xbf16>
    %232 = vector.extract_strided_slice %191 {offsets = [4, 0, 0], sizes = [1, 4, 4], strides = [1, 1, 1]} : vector<9x4x4xbf16> to vector<1x4x4xbf16>
    %233 = vector.shape_cast %232 : vector<1x4x4xbf16> to vector<4x4xbf16>
    %234 = vector.extract_strided_slice %193 {offsets = [4, 0, 0], sizes = [1, 1, 512], strides = [1, 1, 1]} : vector<9x1x512xbf16> to vector<1x1x512xbf16>
    %235 = vector.shape_cast %234 : vector<1x1x512xbf16> to vector<1x512xbf16>
    %236 = vector.broadcast %235 : vector<1x512xbf16> to vector<4x512xbf16>
    %237 = arith.mulf %231, %236 : vector<4x512xbf16>
    %cst_68 = arith.constant dense<0.000000e+00> : vector<4x512xf32>
    %238 = tpu.matmul %233, %237, %cst_68 {dimension_numbers = #tpu.dot_dimension_numbers<[1], [0], [0], [1], [0, 0, 1, 1], [], []>} : vector<4x4xbf16>, vector<4x512xbf16>, vector<4x512xf32> -> vector<4x512xf32>
    %239 = arith.addf %230, %238 : vector<4x512xf32>
    %c0_69 = arith.constant 0 : index
    %c90 = arith.constant 90 : index
    %240 = vector.load %arg0[%c0_69, %c90] : memref<4x682xbf16, #tpu.memory_space<vmem>>, vector<4x512xbf16>
    %241 = vector.extract_strided_slice %191 {offsets = [5, 0, 0], sizes = [1, 4, 4], strides = [1, 1, 1]} : vector<9x4x4xbf16> to vector<1x4x4xbf16>
    %242 = vector.shape_cast %241 : vector<1x4x4xbf16> to vector<4x4xbf16>
    %243 = vector.extract_strided_slice %193 {offsets = [5, 0, 0], sizes = [1, 1, 512], strides = [1, 1, 1]} : vector<9x1x512xbf16> to vector<1x1x512xbf16>
    %244 = vector.shape_cast %243 : vector<1x1x512xbf16> to vector<1x512xbf16>
    %245 = vector.broadcast %244 : vector<1x512xbf16> to vector<4x512xbf16>
    %246 = arith.mulf %240, %245 : vector<4x512xbf16>
    %cst_70 = arith.constant dense<0.000000e+00> : vector<4x512xf32>
    %247 = tpu.matmul %242, %246, %cst_70 {dimension_numbers = #tpu.dot_dimension_numbers<[1], [0], [0], [1], [0, 0, 1, 1], [], []>} : vector<4x4xbf16>, vector<4x512xbf16>, vector<4x512xf32> -> vector<4x512xf32>
    %248 = arith.addf %239, %247 : vector<4x512xf32>
    %c0_71 = arith.constant 0 : index
    %c160 = arith.constant 160 : index
    %249 = vector.load %arg0[%c0_71, %c160] : memref<4x682xbf16, #tpu.memory_space<vmem>>, vector<4x512xbf16>
    %250 = vector.extract_strided_slice %191 {offsets = [6, 0, 0], sizes = [1, 4, 4], strides = [1, 1, 1]} : vector<9x4x4xbf16> to vector<1x4x4xbf16>
    %251 = vector.shape_cast %250 : vector<1x4x4xbf16> to vector<4x4xbf16>
    %252 = vector.extract_strided_slice %193 {offsets = [6, 0, 0], sizes = [1, 1, 512], strides = [1, 1, 1]} : vector<9x1x512xbf16> to vector<1x1x512xbf16>
    %253 = vector.shape_cast %252 : vector<1x1x512xbf16> to vector<1x512xbf16>
    %254 = vector.broadcast %253 : vector<1x512xbf16> to vector<4x512xbf16>
    %255 = arith.mulf %249, %254 : vector<4x512xbf16>
    %cst_72 = arith.constant dense<0.000000e+00> : vector<4x512xf32>
    %256 = tpu.matmul %251, %255, %cst_72 {dimension_numbers = #tpu.dot_dimension_numbers<[1], [0], [0], [1], [0, 0, 1, 1], [], []>} : vector<4x4xbf16>, vector<4x512xbf16>, vector<4x512xf32> -> vector<4x512xf32>
    %257 = arith.addf %248, %256 : vector<4x512xf32>
    %c0_73 = arith.constant 0 : index
    %c165 = arith.constant 165 : index
    %258 = vector.load %arg0[%c0_73, %c165] : memref<4x682xbf16, #tpu.memory_space<vmem>>, vector<4x512xbf16>
    %259 = vector.extract_strided_slice %191 {offsets = [7, 0, 0], sizes = [1, 4, 4], strides = [1, 1, 1]} : vector<9x4x4xbf16> to vector<1x4x4xbf16>
    %260 = vector.shape_cast %259 : vector<1x4x4xbf16> to vector<4x4xbf16>
    %261 = vector.extract_strided_slice %193 {offsets = [7, 0, 0], sizes = [1, 1, 512], strides = [1, 1, 1]} : vector<9x1x512xbf16> to vector<1x1x512xbf16>
    %262 = vector.shape_cast %261 : vector<1x1x512xbf16> to vector<1x512xbf16>
    %263 = vector.broadcast %262 : vector<1x512xbf16> to vector<4x512xbf16>
    %264 = arith.mulf %258, %263 : vector<4x512xbf16>
    %cst_74 = arith.constant dense<0.000000e+00> : vector<4x512xf32>
    %265 = tpu.matmul %260, %264, %cst_74 {dimension_numbers = #tpu.dot_dimension_numbers<[1], [0], [0], [1], [0, 0, 1, 1], [], []>} : vector<4x4xbf16>, vector<4x512xbf16>, vector<4x512xf32> -> vector<4x512xf32>
    %266 = arith.addf %257, %265 : vector<4x512xf32>
    %c0_75 = arith.constant 0 : index
    %c170 = arith.constant 170 : index
    %267 = vector.load %arg0[%c0_75, %c170] : memref<4x682xbf16, #tpu.memory_space<vmem>>, vector<4x512xbf16>
    %268 = vector.extract_strided_slice %191 {offsets = [8, 0, 0], sizes = [1, 4, 4], strides = [1, 1, 1]} : vector<9x4x4xbf16> to vector<1x4x4xbf16>
    %269 = vector.shape_cast %268 : vector<1x4x4xbf16> to vector<4x4xbf16>
    %270 = vector.extract_strided_slice %193 {offsets = [8, 0, 0], sizes = [1, 1, 512], strides = [1, 1, 1]} : vector<9x1x512xbf16> to vector<1x1x512xbf16>
    %271 = vector.shape_cast %270 : vector<1x1x512xbf16> to vector<1x512xbf16>
    %272 = vector.broadcast %271 : vector<1x512xbf16> to vector<4x512xbf16>
    %273 = arith.mulf %267, %272 : vector<4x512xbf16>
    %cst_76 = arith.constant dense<0.000000e+00> : vector<4x512xf32>
    %274 = tpu.matmul %269, %273, %cst_76 {dimension_numbers = #tpu.dot_dimension_numbers<[1], [0], [0], [1], [0, 0, 1, 1], [], []>} : vector<4x4xbf16>, vector<4x512xbf16>, vector<4x512xf32> -> vector<4x512xf32>
    %275 = arith.addf %266, %274 : vector<4x512xf32>
    %c2 = arith.constant 2 : index
    %c0_77 = arith.constant 0 : index
    %c0_78 = arith.constant 0 : index
    %276 = vector.load %arg3[%c2, %c0_77, %c0_78] : memref<3x4x1xf32, #tpu.memory_space<vmem>>, vector<1x4x1xf32>
    %277 = vector.shape_cast %276 : vector<1x4x1xf32> to vector<4x1xf32>
    %278 = vector.broadcast %277 : vector<4x1xf32> to vector<4x512xf32>
    %279 = arith.mulf %275, %278 : vector<4x512xf32>
    %c2_79 = arith.constant 2 : index
    %c0_80 = arith.constant 0 : index
    %c0_81 = arith.constant 0 : index
    %280 = vector.load %arg4[%c2_79, %c0_80, %c0_81] : memref<3x4x1xf32, #tpu.memory_space<vmem>>, vector<1x4x1xf32>
    %281 = vector.shape_cast %280 : vector<1x4x1xf32> to vector<4x1xf32>
    %282 = vector.broadcast %281 : vector<4x1xf32> to vector<4x512xf32>
    %283 = arith.addf %279, %282 : vector<4x512xf32>
    %284 = tpu.concatenate %95, %189, %283 in 0 : vector<4x512xf32>, vector<4x512xf32>, vector<4x512xf32> -> vector<12x512xf32>
    %285 = arith.truncf %284 : vector<12x512xf32> to vector<12x512xbf16>
    %c0_82 = arith.constant 0 : index
    %c0_83 = arith.constant 0 : index
    %286 = vector.load %arg5[%c0_82, %c0_83] : memref<12x512xbf16, #tpu.memory_space<vmem>>, vector<12x512xbf16>
    tpu.vector_store %arg5[%c0_82, %c0_83], %285 {strides = array<i32>} : memref<12x512xbf16, #tpu.memory_space<vmem>>, vector<12x512xbf16>,
    return
  }
}

module attributes {stable_mosaic.version = 11 : i64} {
  func.func @_convbn_res_kernel(%arg0: memref<12x546xbf16, #tpu.memory_space<vmem>>, %arg1: memref<9x4x12xbf16, #tpu.memory_space<vmem>>, %arg2: memref<9x1x512xbf16, #tpu.memory_space<vmem>>, %arg3: memref<4x1xf32, #tpu.memory_space<vmem>>, %arg4: memref<4x1xf32, #tpu.memory_space<vmem>>, %arg5: memref<1x1xf32, #tpu.memory_space<vmem>>, %arg6: memref<4x512xbf16, #tpu.memory_space<vmem>>, %arg7: memref<4x512xbf16, #tpu.memory_space<vmem>>) attributes {dimension_semantics = [], scalar_prefetch = 0 : i64, scratch_operands = 0 : i64, tpu.core_type = #tpu.core_type<tc>} {
    %c0 = arith.constant 0 : index
    %c0_0 = arith.constant 0 : index
    %c0_1 = arith.constant 0 : index
    %0 = vector.load %arg1[%c0, %c0_0, %c0_1] : memref<9x4x12xbf16, #tpu.memory_space<vmem>>, vector<9x4x12xbf16>
    %c0_2 = arith.constant 0 : index
    %c0_3 = arith.constant 0 : index
    %c0_4 = arith.constant 0 : index
    %1 = vector.load %arg2[%c0_2, %c0_3, %c0_4] : memref<9x1x512xbf16, #tpu.memory_space<vmem>>, vector<9x1x512xbf16>
    %cst = arith.constant 0.000000e+00 : f32
    %2 = vector.broadcast %cst : f32 to vector<4x512xf32>
    %c0_5 = arith.constant 0 : index
    %c0_6 = arith.constant 0 : index
    %3 = vector.load %arg0[%c0_5, %c0_6] : memref<12x546xbf16, #tpu.memory_space<vmem>>, vector<12x512xbf16>
    %4 = vector.extract_strided_slice %0 {offsets = [0, 0, 0], sizes = [1, 4, 12], strides = [1, 1, 1]} : vector<9x4x12xbf16> to vector<1x4x12xbf16>
    %5 = vector.shape_cast %4 : vector<1x4x12xbf16> to vector<4x12xbf16>
    %6 = vector.extract_strided_slice %1 {offsets = [0, 0, 0], sizes = [1, 1, 512], strides = [1, 1, 1]} : vector<9x1x512xbf16> to vector<1x1x512xbf16>
    %7 = vector.shape_cast %6 : vector<1x1x512xbf16> to vector<1x512xbf16>
    %8 = vector.broadcast %7 : vector<1x512xbf16> to vector<12x512xbf16>
    %9 = arith.mulf %3, %8 : vector<12x512xbf16>
    %cst_7 = arith.constant dense<0.000000e+00> : vector<4x512xf32>
    %10 = tpu.matmul %5, %9, %cst_7 {dimension_numbers = #tpu.dot_dimension_numbers<[1], [0], [0], [1], [0, 0, 1, 1], [], []>} : vector<4x12xbf16>, vector<12x512xbf16>, vector<4x512xf32> -> vector<4x512xf32>
    %11 = arith.addf %2, %10 : vector<4x512xf32>
    %c0_8 = arith.constant 0 : index
    %c1 = arith.constant 1 : index
    %12 = vector.load %arg0[%c0_8, %c1] : memref<12x546xbf16, #tpu.memory_space<vmem>>, vector<12x512xbf16>
    %13 = vector.extract_strided_slice %0 {offsets = [1, 0, 0], sizes = [1, 4, 12], strides = [1, 1, 1]} : vector<9x4x12xbf16> to vector<1x4x12xbf16>
    %14 = vector.shape_cast %13 : vector<1x4x12xbf16> to vector<4x12xbf16>
    %15 = vector.extract_strided_slice %1 {offsets = [1, 0, 0], sizes = [1, 1, 512], strides = [1, 1, 1]} : vector<9x1x512xbf16> to vector<1x1x512xbf16>
    %16 = vector.shape_cast %15 : vector<1x1x512xbf16> to vector<1x512xbf16>
    %17 = vector.broadcast %16 : vector<1x512xbf16> to vector<12x512xbf16>
    %18 = arith.mulf %12, %17 : vector<12x512xbf16>
    %cst_9 = arith.constant dense<0.000000e+00> : vector<4x512xf32>
    %19 = tpu.matmul %14, %18, %cst_9 {dimension_numbers = #tpu.dot_dimension_numbers<[1], [0], [0], [1], [0, 0, 1, 1], [], []>} : vector<4x12xbf16>, vector<12x512xbf16>, vector<4x512xf32> -> vector<4x512xf32>
    %20 = arith.addf %11, %19 : vector<4x512xf32>
    %c0_10 = arith.constant 0 : index
    %c2 = arith.constant 2 : index
    %21 = vector.load %arg0[%c0_10, %c2] : memref<12x546xbf16, #tpu.memory_space<vmem>>, vector<12x512xbf16>
    %22 = vector.extract_strided_slice %0 {offsets = [2, 0, 0], sizes = [1, 4, 12], strides = [1, 1, 1]} : vector<9x4x12xbf16> to vector<1x4x12xbf16>
    %23 = vector.shape_cast %22 : vector<1x4x12xbf16> to vector<4x12xbf16>
    %24 = vector.extract_strided_slice %1 {offsets = [2, 0, 0], sizes = [1, 1, 512], strides = [1, 1, 1]} : vector<9x1x512xbf16> to vector<1x1x512xbf16>
    %25 = vector.shape_cast %24 : vector<1x1x512xbf16> to vector<1x512xbf16>
    %26 = vector.broadcast %25 : vector<1x512xbf16> to vector<12x512xbf16>
    %27 = arith.mulf %21, %26 : vector<12x512xbf16>
    %cst_11 = arith.constant dense<0.000000e+00> : vector<4x512xf32>
    %28 = tpu.matmul %23, %27, %cst_11 {dimension_numbers = #tpu.dot_dimension_numbers<[1], [0], [0], [1], [0, 0, 1, 1], [], []>} : vector<4x12xbf16>, vector<12x512xbf16>, vector<4x512xf32> -> vector<4x512xf32>
    %29 = arith.addf %20, %28 : vector<4x512xf32>
    %c0_12 = arith.constant 0 : index
    %c16 = arith.constant 16 : index
    %30 = vector.load %arg0[%c0_12, %c16] : memref<12x546xbf16, #tpu.memory_space<vmem>>, vector<12x512xbf16>
    %31 = vector.extract_strided_slice %0 {offsets = [3, 0, 0], sizes = [1, 4, 12], strides = [1, 1, 1]} : vector<9x4x12xbf16> to vector<1x4x12xbf16>
    %32 = vector.shape_cast %31 : vector<1x4x12xbf16> to vector<4x12xbf16>
    %33 = vector.extract_strided_slice %1 {offsets = [3, 0, 0], sizes = [1, 1, 512], strides = [1, 1, 1]} : vector<9x1x512xbf16> to vector<1x1x512xbf16>
    %34 = vector.shape_cast %33 : vector<1x1x512xbf16> to vector<1x512xbf16>
    %35 = vector.broadcast %34 : vector<1x512xbf16> to vector<12x512xbf16>
    %36 = arith.mulf %30, %35 : vector<12x512xbf16>
    %cst_13 = arith.constant dense<0.000000e+00> : vector<4x512xf32>
    %37 = tpu.matmul %32, %36, %cst_13 {dimension_numbers = #tpu.dot_dimension_numbers<[1], [0], [0], [1], [0, 0, 1, 1], [], []>} : vector<4x12xbf16>, vector<12x512xbf16>, vector<4x512xf32> -> vector<4x512xf32>
    %38 = arith.addf %29, %37 : vector<4x512xf32>
    %c0_14 = arith.constant 0 : index
    %c17 = arith.constant 17 : index
    %39 = vector.load %arg0[%c0_14, %c17] : memref<12x546xbf16, #tpu.memory_space<vmem>>, vector<12x512xbf16>
    %40 = vector.extract_strided_slice %0 {offsets = [4, 0, 0], sizes = [1, 4, 12], strides = [1, 1, 1]} : vector<9x4x12xbf16> to vector<1x4x12xbf16>
    %41 = vector.shape_cast %40 : vector<1x4x12xbf16> to vector<4x12xbf16>
    %42 = vector.extract_strided_slice %1 {offsets = [4, 0, 0], sizes = [1, 1, 512], strides = [1, 1, 1]} : vector<9x1x512xbf16> to vector<1x1x512xbf16>
    %43 = vector.shape_cast %42 : vector<1x1x512xbf16> to vector<1x512xbf16>
    %44 = vector.broadcast %43 : vector<1x512xbf16> to vector<12x512xbf16>
    %45 = arith.mulf %39, %44 : vector<12x512xbf16>
    %cst_15 = arith.constant dense<0.000000e+00> : vector<4x512xf32>
    %46 = tpu.matmul %41, %45, %cst_15 {dimension_numbers = #tpu.dot_dimension_numbers<[1], [0], [0], [1], [0, 0, 1, 1], [], []>} : vector<4x12xbf16>, vector<12x512xbf16>, vector<4x512xf32> -> vector<4x512xf32>
    %47 = arith.addf %38, %46 : vector<4x512xf32>
    %c0_16 = arith.constant 0 : index
    %c18 = arith.constant 18 : index
    %48 = vector.load %arg0[%c0_16, %c18] : memref<12x546xbf16, #tpu.memory_space<vmem>>, vector<12x512xbf16>
    %49 = vector.extract_strided_slice %0 {offsets = [5, 0, 0], sizes = [1, 4, 12], strides = [1, 1, 1]} : vector<9x4x12xbf16> to vector<1x4x12xbf16>
    %50 = vector.shape_cast %49 : vector<1x4x12xbf16> to vector<4x12xbf16>
    %51 = vector.extract_strided_slice %1 {offsets = [5, 0, 0], sizes = [1, 1, 512], strides = [1, 1, 1]} : vector<9x1x512xbf16> to vector<1x1x512xbf16>
    %52 = vector.shape_cast %51 : vector<1x1x512xbf16> to vector<1x512xbf16>
    %53 = vector.broadcast %52 : vector<1x512xbf16> to vector<12x512xbf16>
    %54 = arith.mulf %48, %53 : vector<12x512xbf16>
    %cst_17 = arith.constant dense<0.000000e+00> : vector<4x512xf32>
    %55 = tpu.matmul %50, %54, %cst_17 {dimension_numbers = #tpu.dot_dimension_numbers<[1], [0], [0], [1], [0, 0, 1, 1], [], []>} : vector<4x12xbf16>, vector<12x512xbf16>, vector<4x512xf32> -> vector<4x512xf32>
    %56 = arith.addf %47, %55 : vector<4x512xf32>
    %c0_18 = arith.constant 0 : index
    %c32 = arith.constant 32 : index
    %57 = vector.load %arg0[%c0_18, %c32] : memref<12x546xbf16, #tpu.memory_space<vmem>>, vector<12x512xbf16>
    %58 = vector.extract_strided_slice %0 {offsets = [6, 0, 0], sizes = [1, 4, 12], strides = [1, 1, 1]} : vector<9x4x12xbf16> to vector<1x4x12xbf16>
    %59 = vector.shape_cast %58 : vector<1x4x12xbf16> to vector<4x12xbf16>
    %60 = vector.extract_strided_slice %1 {offsets = [6, 0, 0], sizes = [1, 1, 512], strides = [1, 1, 1]} : vector<9x1x512xbf16> to vector<1x1x512xbf16>
    %61 = vector.shape_cast %60 : vector<1x1x512xbf16> to vector<1x512xbf16>
    %62 = vector.broadcast %61 : vector<1x512xbf16> to vector<12x512xbf16>
    %63 = arith.mulf %57, %62 : vector<12x512xbf16>
    %cst_19 = arith.constant dense<0.000000e+00> : vector<4x512xf32>
    %64 = tpu.matmul %59, %63, %cst_19 {dimension_numbers = #tpu.dot_dimension_numbers<[1], [0], [0], [1], [0, 0, 1, 1], [], []>} : vector<4x12xbf16>, vector<12x512xbf16>, vector<4x512xf32> -> vector<4x512xf32>
    %65 = arith.addf %56, %64 : vector<4x512xf32>
    %c0_20 = arith.constant 0 : index
    %c33 = arith.constant 33 : index
    %66 = vector.load %arg0[%c0_20, %c33] : memref<12x546xbf16, #tpu.memory_space<vmem>>, vector<12x512xbf16>
    %67 = vector.extract_strided_slice %0 {offsets = [7, 0, 0], sizes = [1, 4, 12], strides = [1, 1, 1]} : vector<9x4x12xbf16> to vector<1x4x12xbf16>
    %68 = vector.shape_cast %67 : vector<1x4x12xbf16> to vector<4x12xbf16>
    %69 = vector.extract_strided_slice %1 {offsets = [7, 0, 0], sizes = [1, 1, 512], strides = [1, 1, 1]} : vector<9x1x512xbf16> to vector<1x1x512xbf16>
    %70 = vector.shape_cast %69 : vector<1x1x512xbf16> to vector<1x512xbf16>
    %71 = vector.broadcast %70 : vector<1x512xbf16> to vector<12x512xbf16>
    %72 = arith.mulf %66, %71 : vector<12x512xbf16>
    %cst_21 = arith.constant dense<0.000000e+00> : vector<4x512xf32>
    %73 = tpu.matmul %68, %72, %cst_21 {dimension_numbers = #tpu.dot_dimension_numbers<[1], [0], [0], [1], [0, 0, 1, 1], [], []>} : vector<4x12xbf16>, vector<12x512xbf16>, vector<4x512xf32> -> vector<4x512xf32>
    %74 = arith.addf %65, %73 : vector<4x512xf32>
    %c0_22 = arith.constant 0 : index
    %c34 = arith.constant 34 : index
    %75 = vector.load %arg0[%c0_22, %c34] : memref<12x546xbf16, #tpu.memory_space<vmem>>, vector<12x512xbf16>
    %76 = vector.extract_strided_slice %0 {offsets = [8, 0, 0], sizes = [1, 4, 12], strides = [1, 1, 1]} : vector<9x4x12xbf16> to vector<1x4x12xbf16>
    %77 = vector.shape_cast %76 : vector<1x4x12xbf16> to vector<4x12xbf16>
    %78 = vector.extract_strided_slice %1 {offsets = [8, 0, 0], sizes = [1, 1, 512], strides = [1, 1, 1]} : vector<9x1x512xbf16> to vector<1x1x512xbf16>
    %79 = vector.shape_cast %78 : vector<1x1x512xbf16> to vector<1x512xbf16>
    %80 = vector.broadcast %79 : vector<1x512xbf16> to vector<12x512xbf16>
    %81 = arith.mulf %75, %80 : vector<12x512xbf16>
    %cst_23 = arith.constant dense<0.000000e+00> : vector<4x512xf32>
    %82 = tpu.matmul %77, %81, %cst_23 {dimension_numbers = #tpu.dot_dimension_numbers<[1], [0], [0], [1], [0, 0, 1, 1], [], []>} : vector<4x12xbf16>, vector<12x512xbf16>, vector<4x512xf32> -> vector<4x512xf32>
    %83 = arith.addf %74, %82 : vector<4x512xf32>
    %c0_24 = arith.constant 0 : index
    %c0_25 = arith.constant 0 : index
    %84 = vector.load %arg3[%c0_24, %c0_25] : memref<4x1xf32, #tpu.memory_space<vmem>>, vector<4x1xf32>
    %85 = vector.broadcast %84 : vector<4x1xf32> to vector<4x512xf32>
    %86 = arith.mulf %83, %85 : vector<4x512xf32>
    %c0_26 = arith.constant 0 : index
    %c0_27 = arith.constant 0 : index
    %87 = vector.load %arg4[%c0_26, %c0_27] : memref<4x1xf32, #tpu.memory_space<vmem>>, vector<4x1xf32>
    %88 = vector.broadcast %87 : vector<4x1xf32> to vector<4x512xf32>
    %89 = arith.addf %86, %88 : vector<4x512xf32>
    %c0_28 = arith.constant 0 : index
    %c0_29 = arith.constant 0 : index
    %90 = vector.load %arg6[%c0_28, %c0_29] : memref<4x512xbf16, #tpu.memory_space<vmem>>, vector<4x512xbf16>
    %91 = arith.extf %90 : vector<4x512xbf16> to vector<4x512xf32>
    %92 = arith.addf %89, %91 : vector<4x512xf32>
    %c0_30 = arith.constant 0 : index
    %c0_31 = arith.constant 0 : index
    %93 = vector.load %arg5[%c0_30, %c0_31] : memref<1x1xf32, #tpu.memory_space<vmem>>, vector<1x1xf32>
    %cst_32 = arith.constant 0.000000e+00 : f32
    %94 = vector.broadcast %cst_32 : f32 to vector<4x512xf32>
    %95 = arith.cmpf ogt, %92, %94 : vector<4x512xf32>
    %96 = vector.broadcast %93 : vector<1x1xf32> to vector<4x512xf32>
    %97 = arith.mulf %96, %92 : vector<4x512xf32>
    %98 = arith.select %95, %92, %97 : vector<4x512xi1>, vector<4x512xf32>
    %99 = arith.truncf %98 : vector<4x512xf32> to vector<4x512xbf16>
    %c0_33 = arith.constant 0 : index
    %c0_34 = arith.constant 0 : index
    %100 = vector.load %arg7[%c0_33, %c0_34] : memref<4x512xbf16, #tpu.memory_space<vmem>>, vector<4x512xbf16>
    tpu.vector_store %arg7[%c0_33, %c0_34], %99 {strides = array<i32>} : memref<4x512xbf16, #tpu.memory_space<vmem>>, vector<4x512xbf16>,
    return
  }
}

module attributes {stable_mosaic.version = 11 : i64} {
  func.func @_convbn_kernel(%arg0: memref<4x580xbf16, #tpu.memory_space<vmem>>, %arg1: memref<9x8x4xbf16, #tpu.memory_space<vmem>>, %arg2: memref<9x1x512xbf16, #tpu.memory_space<vmem>>, %arg3: memref<8x1xf32, #tpu.memory_space<vmem>>, %arg4: memref<8x1xf32, #tpu.memory_space<vmem>>, %arg5: memref<1x1xf32, #tpu.memory_space<vmem>>, %arg6: memref<8x512xbf16, #tpu.memory_space<vmem>>) attributes {dimension_semantics = [], scalar_prefetch = 0 : i64, scratch_operands = 0 : i64, tpu.core_type = #tpu.core_type<tc>} {
    %c0 = arith.constant 0 : index
    %c0_0 = arith.constant 0 : index
    %c0_1 = arith.constant 0 : index
    %0 = vector.load %arg1[%c0, %c0_0, %c0_1] : memref<9x8x4xbf16, #tpu.memory_space<vmem>>, vector<9x8x4xbf16>
    %c0_2 = arith.constant 0 : index
    %c0_3 = arith.constant 0 : index
    %c0_4 = arith.constant 0 : index
    %1 = vector.load %arg2[%c0_2, %c0_3, %c0_4] : memref<9x1x512xbf16, #tpu.memory_space<vmem>>, vector<9x1x512xbf16>
    %cst = arith.constant 0.000000e+00 : f32
    %2 = vector.broadcast %cst : f32 to vector<8x512xf32>
    %c0_5 = arith.constant 0 : index
    %c0_6 = arith.constant 0 : index
    %3 = vector.load %arg0[%c0_5, %c0_6] : memref<4x580xbf16, #tpu.memory_space<vmem>>, vector<4x512xbf16>
    %4 = vector.extract_strided_slice %0 {offsets = [0, 0, 0], sizes = [1, 8, 4], strides = [1, 1, 1]} : vector<9x8x4xbf16> to vector<1x8x4xbf16>
    %5 = vector.shape_cast %4 : vector<1x8x4xbf16> to vector<8x4xbf16>
    %6 = vector.extract_strided_slice %1 {offsets = [0, 0, 0], sizes = [1, 1, 512], strides = [1, 1, 1]} : vector<9x1x512xbf16> to vector<1x1x512xbf16>
    %7 = vector.shape_cast %6 : vector<1x1x512xbf16> to vector<1x512xbf16>
    %8 = vector.broadcast %7 : vector<1x512xbf16> to vector<4x512xbf16>
    %9 = arith.mulf %3, %8 : vector<4x512xbf16>
    %cst_7 = arith.constant dense<0.000000e+00> : vector<8x512xf32>
    %10 = tpu.matmul %5, %9, %cst_7 {dimension_numbers = #tpu.dot_dimension_numbers<[1], [0], [0], [1], [0, 0, 1, 1], [], []>} : vector<8x4xbf16>, vector<4x512xbf16>, vector<8x512xf32> -> vector<8x512xf32>
    %11 = arith.addf %2, %10 : vector<8x512xf32>
    %c0_8 = arith.constant 0 : index
    %c2 = arith.constant 2 : index
    %12 = vector.load %arg0[%c0_8, %c2] : memref<4x580xbf16, #tpu.memory_space<vmem>>, vector<4x512xbf16>
    %13 = vector.extract_strided_slice %0 {offsets = [1, 0, 0], sizes = [1, 8, 4], strides = [1, 1, 1]} : vector<9x8x4xbf16> to vector<1x8x4xbf16>
    %14 = vector.shape_cast %13 : vector<1x8x4xbf16> to vector<8x4xbf16>
    %15 = vector.extract_strided_slice %1 {offsets = [1, 0, 0], sizes = [1, 1, 512], strides = [1, 1, 1]} : vector<9x1x512xbf16> to vector<1x1x512xbf16>
    %16 = vector.shape_cast %15 : vector<1x1x512xbf16> to vector<1x512xbf16>
    %17 = vector.broadcast %16 : vector<1x512xbf16> to vector<4x512xbf16>
    %18 = arith.mulf %12, %17 : vector<4x512xbf16>
    %cst_9 = arith.constant dense<0.000000e+00> : vector<8x512xf32>
    %19 = tpu.matmul %14, %18, %cst_9 {dimension_numbers = #tpu.dot_dimension_numbers<[1], [0], [0], [1], [0, 0, 1, 1], [], []>} : vector<8x4xbf16>, vector<4x512xbf16>, vector<8x512xf32> -> vector<8x512xf32>
    %20 = arith.addf %11, %19 : vector<8x512xf32>
    %c0_10 = arith.constant 0 : index
    %c4 = arith.constant 4 : index
    %21 = vector.load %arg0[%c0_10, %c4] : memref<4x580xbf16, #tpu.memory_space<vmem>>, vector<4x512xbf16>
    %22 = vector.extract_strided_slice %0 {offsets = [2, 0, 0], sizes = [1, 8, 4], strides = [1, 1, 1]} : vector<9x8x4xbf16> to vector<1x8x4xbf16>
    %23 = vector.shape_cast %22 : vector<1x8x4xbf16> to vector<8x4xbf16>
    %24 = vector.extract_strided_slice %1 {offsets = [2, 0, 0], sizes = [1, 1, 512], strides = [1, 1, 1]} : vector<9x1x512xbf16> to vector<1x1x512xbf16>
    %25 = vector.shape_cast %24 : vector<1x1x512xbf16> to vector<1x512xbf16>
    %26 = vector.broadcast %25 : vector<1x512xbf16> to vector<4x512xbf16>
    %27 = arith.mulf %21, %26 : vector<4x512xbf16>
    %cst_11 = arith.constant dense<0.000000e+00> : vector<8x512xf32>
    %28 = tpu.matmul %23, %27, %cst_11 {dimension_numbers = #tpu.dot_dimension_numbers<[1], [0], [0], [1], [0, 0, 1, 1], [], []>} : vector<8x4xbf16>, vector<4x512xbf16>, vector<8x512xf32> -> vector<8x512xf32>
    %29 = arith.addf %20, %28 : vector<8x512xf32>
    %c0_12 = arith.constant 0 : index
    %c32 = arith.constant 32 : index
    %30 = vector.load %arg0[%c0_12, %c32] : memref<4x580xbf16, #tpu.memory_space<vmem>>, vector<4x512xbf16>
    %31 = vector.extract_strided_slice %0 {offsets = [3, 0, 0], sizes = [1, 8, 4], strides = [1, 1, 1]} : vector<9x8x4xbf16> to vector<1x8x4xbf16>
    %32 = vector.shape_cast %31 : vector<1x8x4xbf16> to vector<8x4xbf16>
    %33 = vector.extract_strided_slice %1 {offsets = [3, 0, 0], sizes = [1, 1, 512], strides = [1, 1, 1]} : vector<9x1x512xbf16> to vector<1x1x512xbf16>
    %34 = vector.shape_cast %33 : vector<1x1x512xbf16> to vector<1x512xbf16>
    %35 = vector.broadcast %34 : vector<1x512xbf16> to vector<4x512xbf16>
    %36 = arith.mulf %30, %35 : vector<4x512xbf16>
    %cst_13 = arith.constant dense<0.000000e+00> : vector<8x512xf32>
    %37 = tpu.matmul %32, %36, %cst_13 {dimension_numbers = #tpu.dot_dimension_numbers<[1], [0], [0], [1], [0, 0, 1, 1], [], []>} : vector<8x4xbf16>, vector<4x512xbf16>, vector<8x512xf32> -> vector<8x512xf32>
    %38 = arith.addf %29, %37 : vector<8x512xf32>
    %c0_14 = arith.constant 0 : index
    %c34 = arith.constant 34 : index
    %39 = vector.load %arg0[%c0_14, %c34] : memref<4x580xbf16, #tpu.memory_space<vmem>>, vector<4x512xbf16>
    %40 = vector.extract_strided_slice %0 {offsets = [4, 0, 0], sizes = [1, 8, 4], strides = [1, 1, 1]} : vector<9x8x4xbf16> to vector<1x8x4xbf16>
    %41 = vector.shape_cast %40 : vector<1x8x4xbf16> to vector<8x4xbf16>
    %42 = vector.extract_strided_slice %1 {offsets = [4, 0, 0], sizes = [1, 1, 512], strides = [1, 1, 1]} : vector<9x1x512xbf16> to vector<1x1x512xbf16>
    %43 = vector.shape_cast %42 : vector<1x1x512xbf16> to vector<1x512xbf16>
    %44 = vector.broadcast %43 : vector<1x512xbf16> to vector<4x512xbf16>
    %45 = arith.mulf %39, %44 : vector<4x512xbf16>
    %cst_15 = arith.constant dense<0.000000e+00> : vector<8x512xf32>
    %46 = tpu.matmul %41, %45, %cst_15 {dimension_numbers = #tpu.dot_dimension_numbers<[1], [0], [0], [1], [0, 0, 1, 1], [], []>} : vector<8x4xbf16>, vector<4x512xbf16>, vector<8x512xf32> -> vector<8x512xf32>
    %47 = arith.addf %38, %46 : vector<8x512xf32>
    %c0_16 = arith.constant 0 : index
    %c36 = arith.constant 36 : index
    %48 = vector.load %arg0[%c0_16, %c36] : memref<4x580xbf16, #tpu.memory_space<vmem>>, vector<4x512xbf16>
    %49 = vector.extract_strided_slice %0 {offsets = [5, 0, 0], sizes = [1, 8, 4], strides = [1, 1, 1]} : vector<9x8x4xbf16> to vector<1x8x4xbf16>
    %50 = vector.shape_cast %49 : vector<1x8x4xbf16> to vector<8x4xbf16>
    %51 = vector.extract_strided_slice %1 {offsets = [5, 0, 0], sizes = [1, 1, 512], strides = [1, 1, 1]} : vector<9x1x512xbf16> to vector<1x1x512xbf16>
    %52 = vector.shape_cast %51 : vector<1x1x512xbf16> to vector<1x512xbf16>
    %53 = vector.broadcast %52 : vector<1x512xbf16> to vector<4x512xbf16>
    %54 = arith.mulf %48, %53 : vector<4x512xbf16>
    %cst_17 = arith.constant dense<0.000000e+00> : vector<8x512xf32>
    %55 = tpu.matmul %50, %54, %cst_17 {dimension_numbers = #tpu.dot_dimension_numbers<[1], [0], [0], [1], [0, 0, 1, 1], [], []>} : vector<8x4xbf16>, vector<4x512xbf16>, vector<8x512xf32> -> vector<8x512xf32>
    %56 = arith.addf %47, %55 : vector<8x512xf32>
    %c0_18 = arith.constant 0 : index
    %c64 = arith.constant 64 : index
    %57 = vector.load %arg0[%c0_18, %c64] : memref<4x580xbf16, #tpu.memory_space<vmem>>, vector<4x512xbf16>
    %58 = vector.extract_strided_slice %0 {offsets = [6, 0, 0], sizes = [1, 8, 4], strides = [1, 1, 1]} : vector<9x8x4xbf16> to vector<1x8x4xbf16>
    %59 = vector.shape_cast %58 : vector<1x8x4xbf16> to vector<8x4xbf16>
    %60 = vector.extract_strided_slice %1 {offsets = [6, 0, 0], sizes = [1, 1, 512], strides = [1, 1, 1]} : vector<9x1x512xbf16> to vector<1x1x512xbf16>
    %61 = vector.shape_cast %60 : vector<1x1x512xbf16> to vector<1x512xbf16>
    %62 = vector.broadcast %61 : vector<1x512xbf16> to vector<4x512xbf16>
    %63 = arith.mulf %57, %62 : vector<4x512xbf16>
    %cst_19 = arith.constant dense<0.000000e+00> : vector<8x512xf32>
    %64 = tpu.matmul %59, %63, %cst_19 {dimension_numbers = #tpu.dot_dimension_numbers<[1], [0], [0], [1], [0, 0, 1, 1], [], []>} : vector<8x4xbf16>, vector<4x512xbf16>, vector<8x512xf32> -> vector<8x512xf32>
    %65 = arith.addf %56, %64 : vector<8x512xf32>
    %c0_20 = arith.constant 0 : index
    %c66 = arith.constant 66 : index
    %66 = vector.load %arg0[%c0_20, %c66] : memref<4x580xbf16, #tpu.memory_space<vmem>>, vector<4x512xbf16>
    %67 = vector.extract_strided_slice %0 {offsets = [7, 0, 0], sizes = [1, 8, 4], strides = [1, 1, 1]} : vector<9x8x4xbf16> to vector<1x8x4xbf16>
    %68 = vector.shape_cast %67 : vector<1x8x4xbf16> to vector<8x4xbf16>
    %69 = vector.extract_strided_slice %1 {offsets = [7, 0, 0], sizes = [1, 1, 512], strides = [1, 1, 1]} : vector<9x1x512xbf16> to vector<1x1x512xbf16>
    %70 = vector.shape_cast %69 : vector<1x1x512xbf16> to vector<1x512xbf16>
    %71 = vector.broadcast %70 : vector<1x512xbf16> to vector<4x512xbf16>
    %72 = arith.mulf %66, %71 : vector<4x512xbf16>
    %cst_21 = arith.constant dense<0.000000e+00> : vector<8x512xf32>
    %73 = tpu.matmul %68, %72, %cst_21 {dimension_numbers = #tpu.dot_dimension_numbers<[1], [0], [0], [1], [0, 0, 1, 1], [], []>} : vector<8x4xbf16>, vector<4x512xbf16>, vector<8x512xf32> -> vector<8x512xf32>
    %74 = arith.addf %65, %73 : vector<8x512xf32>
    %c0_22 = arith.constant 0 : index
    %c68 = arith.constant 68 : index
    %75 = vector.load %arg0[%c0_22, %c68] : memref<4x580xbf16, #tpu.memory_space<vmem>>, vector<4x512xbf16>
    %76 = vector.extract_strided_slice %0 {offsets = [8, 0, 0], sizes = [1, 8, 4], strides = [1, 1, 1]} : vector<9x8x4xbf16> to vector<1x8x4xbf16>
    %77 = vector.shape_cast %76 : vector<1x8x4xbf16> to vector<8x4xbf16>
    %78 = vector.extract_strided_slice %1 {offsets = [8, 0, 0], sizes = [1, 1, 512], strides = [1, 1, 1]} : vector<9x1x512xbf16> to vector<1x1x512xbf16>
    %79 = vector.shape_cast %78 : vector<1x1x512xbf16> to vector<1x512xbf16>
    %80 = vector.broadcast %79 : vector<1x512xbf16> to vector<4x512xbf16>
    %81 = arith.mulf %75, %80 : vector<4x512xbf16>
    %cst_23 = arith.constant dense<0.000000e+00> : vector<8x512xf32>
    %82 = tpu.matmul %77, %81, %cst_23 {dimension_numbers = #tpu.dot_dimension_numbers<[1], [0], [0], [1], [0, 0, 1, 1], [], []>} : vector<8x4xbf16>, vector<4x512xbf16>, vector<8x512xf32> -> vector<8x512xf32>
    %83 = arith.addf %74, %82 : vector<8x512xf32>
    %c0_24 = arith.constant 0 : index
    %c0_25 = arith.constant 0 : index
    %84 = vector.load %arg3[%c0_24, %c0_25] : memref<8x1xf32, #tpu.memory_space<vmem>>, vector<8x1xf32>
    %85 = vector.broadcast %84 : vector<8x1xf32> to vector<8x512xf32>
    %86 = arith.mulf %83, %85 : vector<8x512xf32>
    %c0_26 = arith.constant 0 : index
    %c0_27 = arith.constant 0 : index
    %87 = vector.load %arg4[%c0_26, %c0_27] : memref<8x1xf32, #tpu.memory_space<vmem>>, vector<8x1xf32>
    %88 = vector.broadcast %87 : vector<8x1xf32> to vector<8x512xf32>
    %89 = arith.addf %86, %88 : vector<8x512xf32>
    %c0_28 = arith.constant 0 : index
    %c0_29 = arith.constant 0 : index
    %90 = vector.load %arg5[%c0_28, %c0_29] : memref<1x1xf32, #tpu.memory_space<vmem>>, vector<1x1xf32>
    %cst_30 = arith.constant 0.000000e+00 : f32
    %91 = vector.broadcast %cst_30 : f32 to vector<8x512xf32>
    %92 = arith.cmpf ogt, %89, %91 : vector<8x512xf32>
    %93 = vector.broadcast %90 : vector<1x1xf32> to vector<8x512xf32>
    %94 = arith.mulf %93, %89 : vector<8x512xf32>
    %95 = arith.select %92, %89, %94 : vector<8x512xi1>, vector<8x512xf32>
    %96 = arith.truncf %95 : vector<8x512xf32> to vector<8x512xbf16>
    %c0_31 = arith.constant 0 : index
    %c0_32 = arith.constant 0 : index
    %97 = vector.load %arg6[%c0_31, %c0_32] : memref<8x512xbf16, #tpu.memory_space<vmem>>, vector<8x512xbf16>
    tpu.vector_store %arg6[%c0_31, %c0_32], %96 {strides = array<i32>} : memref<8x512xbf16, #tpu.memory_space<vmem>>, vector<8x512xbf16>,
    return
  }
}

module attributes {stable_mosaic.version = 11 : i64} {
  func.func @_dwsep_skip_kernel(%arg0: memref<8x146xbf16, #tpu.memory_space<vmem>>, %arg1: memref<4x128xbf16, #tpu.memory_space<vmem>>, %arg2: memref<9x1x128xbf16, #tpu.memory_space<vmem>>, %arg3: memref<9x8x1xbf16, #tpu.memory_space<vmem>>, %arg4: memref<8x1xf32, #tpu.memory_space<vmem>>, %arg5: memref<8x8xbf16, #tpu.memory_space<vmem>>, %arg6: memref<8x1xf32, #tpu.memory_space<vmem>>, %arg7: memref<8x4xbf16, #tpu.memory_space<vmem>>, %arg8: memref<8x1xf32, #tpu.memory_space<vmem>>, %arg9: memref<8x128xf32, #tpu.memory_space<vmem>>) attributes {dimension_semantics = [], scalar_prefetch = 0 : i64, scratch_operands = 0 : i64, tpu.core_type = #tpu.core_type<tc>} {
    %c0 = arith.constant 0 : index
    %c0_0 = arith.constant 0 : index
    %c0_1 = arith.constant 0 : index
    %0 = vector.load %arg2[%c0, %c0_0, %c0_1] : memref<9x1x128xbf16, #tpu.memory_space<vmem>>, vector<9x1x128xbf16>
    %c0_2 = arith.constant 0 : index
    %c0_3 = arith.constant 0 : index
    %c0_4 = arith.constant 0 : index
    %1 = vector.load %arg3[%c0_2, %c0_3, %c0_4] : memref<9x8x1xbf16, #tpu.memory_space<vmem>>, vector<9x8x1xbf16>
    %cst = arith.constant 0.000000e+00 : f32
    %2 = vector.broadcast %cst : f32 to vector<8x128xf32>
    %c0_5 = arith.constant 0 : index
    %c0_6 = arith.constant 0 : index
    %3 = vector.load %arg0[%c0_5, %c0_6] : memref<8x146xbf16, #tpu.memory_space<vmem>>, vector<8x128xbf16>
    %4 = vector.extract_strided_slice %1 {offsets = [0, 0, 0], sizes = [1, 8, 1], strides = [1, 1, 1]} : vector<9x8x1xbf16> to vector<1x8x1xbf16>
    %5 = vector.shape_cast %4 : vector<1x8x1xbf16> to vector<8x1xbf16>
    %6 = arith.extf %5 : vector<8x1xbf16> to vector<8x1xf32>
    %7 = vector.extract_strided_slice %0 {offsets = [0, 0, 0], sizes = [1, 1, 128], strides = [1, 1, 1]} : vector<9x1x128xbf16> to vector<1x1x128xbf16>
    %8 = vector.shape_cast %7 : vector<1x1x128xbf16> to vector<1x128xbf16>
    %9 = vector.broadcast %8 : vector<1x128xbf16> to vector<8x128xbf16>
    %10 = arith.mulf %3, %9 : vector<8x128xbf16>
    %11 = arith.extf %10 : vector<8x128xbf16> to vector<8x128xf32>
    %12 = vector.broadcast %6 : vector<8x1xf32> to vector<8x128xf32>
    %13 = arith.mulf %12, %11 : vector<8x128xf32>
    %14 = arith.addf %2, %13 : vector<8x128xf32>
    %c0_7 = arith.constant 0 : index
    %c1 = arith.constant 1 : index
    %15 = vector.load %arg0[%c0_7, %c1] : memref<8x146xbf16, #tpu.memory_space<vmem>>, vector<8x128xbf16>
    %16 = vector.extract_strided_slice %1 {offsets = [1, 0, 0], sizes = [1, 8, 1], strides = [1, 1, 1]} : vector<9x8x1xbf16> to vector<1x8x1xbf16>
    %17 = vector.shape_cast %16 : vector<1x8x1xbf16> to vector<8x1xbf16>
    %18 = arith.extf %17 : vector<8x1xbf16> to vector<8x1xf32>
    %19 = vector.extract_strided_slice %0 {offsets = [1, 0, 0], sizes = [1, 1, 128], strides = [1, 1, 1]} : vector<9x1x128xbf16> to vector<1x1x128xbf16>
    %20 = vector.shape_cast %19 : vector<1x1x128xbf16> to vector<1x128xbf16>
    %21 = vector.broadcast %20 : vector<1x128xbf16> to vector<8x128xbf16>
    %22 = arith.mulf %15, %21 : vector<8x128xbf16>
    %23 = arith.extf %22 : vector<8x128xbf16> to vector<8x128xf32>
    %24 = vector.broadcast %18 : vector<8x1xf32> to vector<8x128xf32>
    %25 = arith.mulf %24, %23 : vector<8x128xf32>
    %26 = arith.addf %14, %25 : vector<8x128xf32>
    %c0_8 = arith.constant 0 : index
    %c2 = arith.constant 2 : index
    %27 = vector.load %arg0[%c0_8, %c2] : memref<8x146xbf16, #tpu.memory_space<vmem>>, vector<8x128xbf16>
    %28 = vector.extract_strided_slice %1 {offsets = [2, 0, 0], sizes = [1, 8, 1], strides = [1, 1, 1]} : vector<9x8x1xbf16> to vector<1x8x1xbf16>
    %29 = vector.shape_cast %28 : vector<1x8x1xbf16> to vector<8x1xbf16>
    %30 = arith.extf %29 : vector<8x1xbf16> to vector<8x1xf32>
    %31 = vector.extract_strided_slice %0 {offsets = [2, 0, 0], sizes = [1, 1, 128], strides = [1, 1, 1]} : vector<9x1x128xbf16> to vector<1x1x128xbf16>
    %32 = vector.shape_cast %31 : vector<1x1x128xbf16> to vector<1x128xbf16>
    %33 = vector.broadcast %32 : vector<1x128xbf16> to vector<8x128xbf16>
    %34 = arith.mulf %27, %33 : vector<8x128xbf16>
    %35 = arith.extf %34 : vector<8x128xbf16> to vector<8x128xf32>
    %36 = vector.broadcast %30 : vector<8x1xf32> to vector<8x128xf32>
    %37 = arith.mulf %36, %35 : vector<8x128xf32>
    %38 = arith.addf %26, %37 : vector<8x128xf32>
    %c0_9 = arith.constant 0 : index
    %c8 = arith.constant 8 : index
    %39 = vector.load %arg0[%c0_9, %c8] : memref<8x146xbf16, #tpu.memory_space<vmem>>, vector<8x128xbf16>
    %40 = vector.extract_strided_slice %1 {offsets = [3, 0, 0], sizes = [1, 8, 1], strides = [1, 1, 1]} : vector<9x8x1xbf16> to vector<1x8x1xbf16>
    %41 = vector.shape_cast %40 : vector<1x8x1xbf16> to vector<8x1xbf16>
    %42 = arith.extf %41 : vector<8x1xbf16> to vector<8x1xf32>
    %43 = vector.extract_strided_slice %0 {offsets = [3, 0, 0], sizes = [1, 1, 128], strides = [1, 1, 1]} : vector<9x1x128xbf16> to vector<1x1x128xbf16>
    %44 = vector.shape_cast %43 : vector<1x1x128xbf16> to vector<1x128xbf16>
    %45 = vector.broadcast %44 : vector<1x128xbf16> to vector<8x128xbf16>
    %46 = arith.mulf %39, %45 : vector<8x128xbf16>
    %47 = arith.extf %46 : vector<8x128xbf16> to vector<8x128xf32>
    %48 = vector.broadcast %42 : vector<8x1xf32> to vector<8x128xf32>
    %49 = arith.mulf %48, %47 : vector<8x128xf32>
    %50 = arith.addf %38, %49 : vector<8x128xf32>
    %c0_10 = arith.constant 0 : index
    %c9 = arith.constant 9 : index
    %51 = vector.load %arg0[%c0_10, %c9] : memref<8x146xbf16, #tpu.memory_space<vmem>>, vector<8x128xbf16>
    %52 = vector.extract_strided_slice %1 {offsets = [4, 0, 0], sizes = [1, 8, 1], strides = [1, 1, 1]} : vector<9x8x1xbf16> to vector<1x8x1xbf16>
    %53 = vector.shape_cast %52 : vector<1x8x1xbf16> to vector<8x1xbf16>
    %54 = arith.extf %53 : vector<8x1xbf16> to vector<8x1xf32>
    %55 = vector.extract_strided_slice %0 {offsets = [4, 0, 0], sizes = [1, 1, 128], strides = [1, 1, 1]} : vector<9x1x128xbf16> to vector<1x1x128xbf16>
    %56 = vector.shape_cast %55 : vector<1x1x128xbf16> to vector<1x128xbf16>
    %57 = vector.broadcast %56 : vector<1x128xbf16> to vector<8x128xbf16>
    %58 = arith.mulf %51, %57 : vector<8x128xbf16>
    %59 = arith.extf %58 : vector<8x128xbf16> to vector<8x128xf32>
    %60 = vector.broadcast %54 : vector<8x1xf32> to vector<8x128xf32>
    %61 = arith.mulf %60, %59 : vector<8x128xf32>
    %62 = arith.addf %50, %61 : vector<8x128xf32>
    %c0_11 = arith.constant 0 : index
    %c10 = arith.constant 10 : index
    %63 = vector.load %arg0[%c0_11, %c10] : memref<8x146xbf16, #tpu.memory_space<vmem>>, vector<8x128xbf16>
    %64 = vector.extract_strided_slice %1 {offsets = [5, 0, 0], sizes = [1, 8, 1], strides = [1, 1, 1]} : vector<9x8x1xbf16> to vector<1x8x1xbf16>
    %65 = vector.shape_cast %64 : vector<1x8x1xbf16> to vector<8x1xbf16>
    %66 = arith.extf %65 : vector<8x1xbf16> to vector<8x1xf32>
    %67 = vector.extract_strided_slice %0 {offsets = [5, 0, 0], sizes = [1, 1, 128], strides = [1, 1, 1]} : vector<9x1x128xbf16> to vector<1x1x128xbf16>
    %68 = vector.shape_cast %67 : vector<1x1x128xbf16> to vector<1x128xbf16>
    %69 = vector.broadcast %68 : vector<1x128xbf16> to vector<8x128xbf16>
    %70 = arith.mulf %63, %69 : vector<8x128xbf16>
    %71 = arith.extf %70 : vector<8x128xbf16> to vector<8x128xf32>
    %72 = vector.broadcast %66 : vector<8x1xf32> to vector<8x128xf32>
    %73 = arith.mulf %72, %71 : vector<8x128xf32>
    %74 = arith.addf %62, %73 : vector<8x128xf32>
    %c0_12 = arith.constant 0 : index
    %c16 = arith.constant 16 : index
    %75 = vector.load %arg0[%c0_12, %c16] : memref<8x146xbf16, #tpu.memory_space<vmem>>, vector<8x128xbf16>
    %76 = vector.extract_strided_slice %1 {offsets = [6, 0, 0], sizes = [1, 8, 1], strides = [1, 1, 1]} : vector<9x8x1xbf16> to vector<1x8x1xbf16>
    %77 = vector.shape_cast %76 : vector<1x8x1xbf16> to vector<8x1xbf16>
    %78 = arith.extf %77 : vector<8x1xbf16> to vector<8x1xf32>
    %79 = vector.extract_strided_slice %0 {offsets = [6, 0, 0], sizes = [1, 1, 128], strides = [1, 1, 1]} : vector<9x1x128xbf16> to vector<1x1x128xbf16>
    %80 = vector.shape_cast %79 : vector<1x1x128xbf16> to vector<1x128xbf16>
    %81 = vector.broadcast %80 : vector<1x128xbf16> to vector<8x128xbf16>
    %82 = arith.mulf %75, %81 : vector<8x128xbf16>
    %83 = arith.extf %82 : vector<8x128xbf16> to vector<8x128xf32>
    %84 = vector.broadcast %78 : vector<8x1xf32> to vector<8x128xf32>
    %85 = arith.mulf %84, %83 : vector<8x128xf32>
    %86 = arith.addf %74, %85 : vector<8x128xf32>
    %c0_13 = arith.constant 0 : index
    %c17 = arith.constant 17 : index
    %87 = vector.load %arg0[%c0_13, %c17] : memref<8x146xbf16, #tpu.memory_space<vmem>>, vector<8x128xbf16>
    %88 = vector.extract_strided_slice %1 {offsets = [7, 0, 0], sizes = [1, 8, 1], strides = [1, 1, 1]} : vector<9x8x1xbf16> to vector<1x8x1xbf16>
    %89 = vector.shape_cast %88 : vector<1x8x1xbf16> to vector<8x1xbf16>
    %90 = arith.extf %89 : vector<8x1xbf16> to vector<8x1xf32>
    %91 = vector.extract_strided_slice %0 {offsets = [7, 0, 0], sizes = [1, 1, 128], strides = [1, 1, 1]} : vector<9x1x128xbf16> to vector<1x1x128xbf16>
    %92 = vector.shape_cast %91 : vector<1x1x128xbf16> to vector<1x128xbf16>
    %93 = vector.broadcast %92 : vector<1x128xbf16> to vector<8x128xbf16>
    %94 = arith.mulf %87, %93 : vector<8x128xbf16>
    %95 = arith.extf %94 : vector<8x128xbf16> to vector<8x128xf32>
    %96 = vector.broadcast %90 : vector<8x1xf32> to vector<8x128xf32>
    %97 = arith.mulf %96, %95 : vector<8x128xf32>
    %98 = arith.addf %86, %97 : vector<8x128xf32>
    %c0_14 = arith.constant 0 : index
    %c18 = arith.constant 18 : index
    %99 = vector.load %arg0[%c0_14, %c18] : memref<8x146xbf16, #tpu.memory_space<vmem>>, vector<8x128xbf16>
    %100 = vector.extract_strided_slice %1 {offsets = [8, 0, 0], sizes = [1, 8, 1], strides = [1, 1, 1]} : vector<9x8x1xbf16> to vector<1x8x1xbf16>
    %101 = vector.shape_cast %100 : vector<1x8x1xbf16> to vector<8x1xbf16>
    %102 = arith.extf %101 : vector<8x1xbf16> to vector<8x1xf32>
    %103 = vector.extract_strided_slice %0 {offsets = [8, 0, 0], sizes = [1, 1, 128], strides = [1, 1, 1]} : vector<9x1x128xbf16> to vector<1x1x128xbf16>
    %104 = vector.shape_cast %103 : vector<1x1x128xbf16> to vector<1x128xbf16>
    %105 = vector.broadcast %104 : vector<1x128xbf16> to vector<8x128xbf16>
    %106 = arith.mulf %99, %105 : vector<8x128xbf16>
    %107 = arith.extf %106 : vector<8x128xbf16> to vector<8x128xf32>
    %108 = vector.broadcast %102 : vector<8x1xf32> to vector<8x128xf32>
    %109 = arith.mulf %108, %107 : vector<8x128xf32>
    %110 = arith.addf %98, %109 : vector<8x128xf32>
    %c0_15 = arith.constant 0 : index
    %c0_16 = arith.constant 0 : index
    %111 = vector.load %arg4[%c0_15, %c0_16] : memref<8x1xf32, #tpu.memory_space<vmem>>, vector<8x1xf32>
    %112 = vector.broadcast %111 : vector<8x1xf32> to vector<8x128xf32>
    %113 = arith.addf %110, %112 : vector<8x128xf32>
    %114 = arith.truncf %113 : vector<8x128xf32> to vector<8x128xbf16>
    %c0_17 = arith.constant 0 : index
    %c0_18 = arith.constant 0 : index
    %115 = vector.load %arg5[%c0_17, %c0_18] : memref<8x8xbf16, #tpu.memory_space<vmem>>, vector<8x8xbf16>
    %cst_19 = arith.constant dense<0.000000e+00> : vector<8x128xf32>
    %116 = tpu.matmul %115, %114, %cst_19 {dimension_numbers = #tpu.dot_dimension_numbers<[1], [0], [0], [1], [0, 0, 1, 1], [], []>} : vector<8x8xbf16>, vector<8x128xbf16>, vector<8x128xf32> -> vector<8x128xf32>
    %c0_20 = arith.constant 0 : index
    %c0_21 = arith.constant 0 : index
    %117 = vector.load %arg6[%c0_20, %c0_21] : memref<8x1xf32, #tpu.memory_space<vmem>>, vector<8x1xf32>
    %118 = vector.broadcast %117 : vector<8x1xf32> to vector<8x128xf32>
    %119 = arith.addf %116, %118 : vector<8x128xf32>
    %c0_22 = arith.constant 0 : index
    %c0_23 = arith.constant 0 : index
    %120 = vector.load %arg7[%c0_22, %c0_23] : memref<8x4xbf16, #tpu.memory_space<vmem>>, vector<8x4xbf16>
    %c0_24 = arith.constant 0 : index
    %c0_25 = arith.constant 0 : index
    %121 = vector.load %arg1[%c0_24, %c0_25] : memref<4x128xbf16, #tpu.memory_space<vmem>>, vector<4x128xbf16>
    %cst_26 = arith.constant dense<0.000000e+00> : vector<8x128xf32>
    %122 = tpu.matmul %120, %121, %cst_26 {dimension_numbers = #tpu.dot_dimension_numbers<[1], [0], [0], [1], [0, 0, 1, 1], [], []>} : vector<8x4xbf16>, vector<4x128xbf16>, vector<8x128xf32> -> vector<8x128xf32>
    %123 = arith.addf %119, %122 : vector<8x128xf32>
    %c0_27 = arith.constant 0 : index
    %c0_28 = arith.constant 0 : index
    %124 = vector.load %arg8[%c0_27, %c0_28] : memref<8x1xf32, #tpu.memory_space<vmem>>, vector<8x1xf32>
    %125 = vector.broadcast %124 : vector<8x1xf32> to vector<8x128xf32>
    %126 = arith.addf %123, %125 : vector<8x128xf32>
    %c0_29 = arith.constant 0 : index
    %c0_30 = arith.constant 0 : index
    %127 = vector.load %arg9[%c0_29, %c0_30] : memref<8x128xf32, #tpu.memory_space<vmem>>, vector<8x128xf32>
    tpu.vector_store %arg9[%c0_29, %c0_30], %126 {strides = array<i32>} : memref<8x128xf32, #tpu.memory_space<vmem>>, vector<8x128xf32>,
    return
  }
}

</mosaic_0001>

<llo_original>
// kernel: dpblock_forward.6
$region0: #{dpblock_forward.6}
  #allocation0 [shape = 'u32[]', space=smem, size = 0x4, offset = 0x4, fixed_abs, tag = 'smem constant byte address 0x4 - core index']
  #allocation1 [shape = 'u32[144,128]{1,0:T(1,128)}', space=vmem, size = 0x12000, scoped, tag = 'internal scratch']
  #allocation2 [shape = 'f32[1,1]{1,0:T(1,128)S(1)}', space=vmem, size = 0x200, scoped, tag = 'scoped memory for dpblock_forward.6']
  %s0 = inlined_call_operand.vmem [shape: bf16[4,546], index: 0, kind: input, shape index: {}]
  %s1 = inlined_call_operand.vmem [shape: bf16[9,4,4], index: 1, kind: input, shape index: {}]
  %s2 = inlined_call_operand.vmem [shape: bf16[9,1,512], index: 2, kind: input, shape index: {}]
  %s3 = inlined_call_operand.vmem [shape: f32[4,1], index: 3, kind: input, shape index: {}]
  %s4 = inlined_call_operand.vmem [shape: f32[4,1], index: 4, kind: input, shape index: {}]
  %s5 = inlined_call_operand.<no memory space> [shape: f32[1,1], index: 5, kind: input, shape index: {}]
  %s6 = inlined_call_operand.vmem [shape: bf16[4,512], index: 6, kind: output, shape index: {}]
  %s7 = sld [smem:[#allocation0]]
  $region34: #{dpblock_forward.6} parent=0
    _
  %s9 = ssub.s32 1, %s7
  %s10 = scalar_select 0, %s9, %s7
  %v11 = vstv %s5
  %12 = vst [vmem:[#allocation2] sm:$0x1] %v11
  // Predicated region
  $region2: #{dpblock_forward.6} parent=0 // pred_check
    _
  $region3: #{dpblock_forward.6} parent=0 // pred_check_branch
    %14 = sbr.rel (0) target = $region5
  $region4: #{dpblock_forward.6} parent=0 // pred_region
    _
  $region5: #{dpblock_forward.6} parent=0 // pred_fallthru
    _
  // Predicated region
  $region6: #{dpblock_forward.6} parent=0 // pred_check
    _
  $region7: #{dpblock_forward.6} parent=0 // pred_check_branch
    %16 = sbr.rel (0) target = $region9
  $region8: #{dpblock_forward.6} parent=0 // pred_region
    _
  $region9: #{dpblock_forward.6} parent=0 // pred_fallthru
    _
  // Predicated region
  $region10: #{dpblock_forward.6} parent=0 // pred_check
    _
  $region11: #{dpblock_forward.6} parent=0 // pred_check_branch
    %18 = sbr.rel (0) target = $region13
  $region12: #{dpblock_forward.6} parent=0 // pred_region
    _
  $region13: #{dpblock_forward.6} parent=0 // pred_fallthru
    _
  // Predicated region
  $region14: #{dpblock_forward.6} parent=0 // pred_check
    _
  $region15: #{dpblock_forward.6} parent=0 // pred_check_branch
    %20 = sbr.rel (0) target = $region17
  $region16: #{dpblock_forward.6} parent=0 // pred_region
    _
  $region17: #{dpblock_forward.6} parent=0 // pred_fallthru
    _
  // Predicated region
  $region18: #{dpblock_forward.6} parent=0 // pred_check
    _
  $region19: #{dpblock_forward.6} parent=0 // pred_check_branch
    %22 = sbr.rel (0) target = $region21
  $region20: #{dpblock_forward.6} parent=0 // pred_region
    _
  $region21: #{dpblock_forward.6} parent=0 // pred_fallthru
    _
  // Predicated region
  $region22: #{dpblock_forward.6} parent=0 // pred_check
    _
  $region23: #{dpblock_forward.6} parent=0 // pred_check_branch
    %24 = sbr.rel (0) target = $region25
  $region24: #{dpblock_forward.6} parent=0 // pred_region
    _
  $region25: #{dpblock_forward.6} parent=0 // pred_fallthru
    _
  %v26 = vld [vmem:[%s1] sm:$0x3]
  %v27 = vld [vmem:[%s1 + $0x2] sm:$0x3]
  %v28 = vld [vmem:[%s1 + $0x4] sm:$0x3]
  %v29 = vld [vmem:[%s1 + $0x6] sm:$0x3]
  %v30 = vld [vmem:[%s1 + $0x8] sm:$0x3]
  %v31 = vld [vmem:[%s1 + $0xa] sm:$0x3]
  %v32 = vld [vmem:[%s1 + $0xc] sm:$0x3]
  %v33 = vld [vmem:[%s1 + $0xe] sm:$0x3]
  %v34 = vld [vmem:[%s1 + $0x10] sm:$0x3]
  %v35 = vld [vmem:[%s2] sm:$0xf]
  %v36 = vld [vmem:[%s2 + $0x4] sm:$0xf]
  %v37 = vld [vmem:[%s2 + $0x8] sm:$0xf]
  %v38 = vld [vmem:[%s2 + $0xc] sm:$0xf]
  %v39 = vld [vmem:[%s2 + $0x10] sm:$0xf]
  %v40 = vld [vmem:[%s2 + $0x14] sm:$0xf]
  %v41 = vld [vmem:[%s2 + $0x18] sm:$0xf]
  %v42 = vld [vmem:[%s2 + $0x1c] sm:$0xf]
  %v43 = vld [vmem:[%s2 + $0x20] sm:$0xf]
  %v44 = vld [vmem:[%s0] sm:$0xff]
  %v47 = vunpack.c.l.s4 1966171168
  %v48 = vunpack.c.0.s8 %v47
  %v49 = vlaneseq
  %v50 = vshrl.u32 %v49, 7
  %v51 = vsub.s32 %v48, %v50
  %v52 = vrot.slane %v35, %v51
  %v53 = vcombine.high %v52, %v52
  %v55 = vunpack.c.l.s4 1966171168
  %v56 = vunpack.c.0.s8 %v55
  %v57 = vlaneseq
  %v58 = vshrl.u32 %v57, 7
  %v59 = vsub.s32 %v56, %v58
  %v60 = vrot.slane %v52, %v59
  %v62 = vunpack.c.l.s4 1966171168
  %v63 = vunpack.c.0.s8 %v62
  %v64 = vlaneseq
  %v65 = vshrl.u32 %v64, 7
  %v66 = vsub.s32 %v63, %v65
  %v67 = vrot.slane %v53, %v66
  %v68 = vcombine.high %v60, %v60
  %v69 = vcombine.high %v67, %v67
  %v71 = vpack.i.b16 %v60, %v60
  %v73 = vlaneseq
  %v74 = vshrl.u32 %v73, 7
  %v75 = vsub.s32 0, %v74
  %v76 = vrot.slane %v71, %v75
  %v78 = vpack.i.b16 %v67, %v67
  %v80 = vlaneseq
  %v81 = vshrl.u32 %v80, 7
  %v82 = vsub.s32 0, %v81
  %v83 = vrot.slane %v78, %v82
  %v85 = vpack.i.b16 %v68, %v68
  %v87 = vlaneseq
  %v88 = vshrl.u32 %v87, 7
  %v89 = vsub.s32 0, %v88
  %v90 = vrot.slane %v85, %v89
  %v92 = vpack.i.b16 %v69, %v69
  %v94 = vlaneseq
  %v95 = vshrl.u32 %v94, 7
  %v96 = vsub.s32 0, %v95
  %v97 = vrot.slane %v92, %v96
  %v102 = vcombine.low %v76, %v83
  %v103 = vcombine.low %v90, %v97
  %v105 = vunpack.c.l.s4 1983009808
  %v106 = vunpack.c.0.s8 %v105
  %v107 = vlaneseq
  %v108 = vshrl.u32 %v107, 7
  %v109 = vsub.s32 %v106, %v108
  %v110 = vrot.slane %v102, %v109
  %v112 = vunpack.c.l.s4 1983009808
  %v113 = vunpack.c.0.s8 %v112
  %v114 = vlaneseq
  %v115 = vshrl.u32 %v114, 7
  %v116 = vsub.s32 %v113, %v115
  %v117 = vrot.slane %v103, %v116
  %v118 = vcombine.low %v110, %v117
  %v120 = vmul.bf16 %v44, %v118
  %v121 = vld [vmem:[%s0 + $0x8] sm:$0x3]
  %v124 = vunpack.c.l.s4 1966171168
  %v125 = vunpack.c.0.s8 %v124
  %v126 = vlaneseq
  %v127 = vshrl.u32 %v126, 7
  %v128 = vsub.s32 %v125, %v127
  %v129 = vrot.slane %v36, %v128
  %v130 = vcombine.high %v129, %v129
  %v132 = vunpack.c.l.s4 1966171168
  %v133 = vunpack.c.0.s8 %v132
  %v134 = vlaneseq
  %v135 = vshrl.u32 %v134, 7
  %v136 = vsub.s32 %v133, %v135
  %v137 = vrot.slane %v129, %v136
  %v139 = vunpack.c.l.s4 1966171168
  %v140 = vunpack.c.0.s8 %v139
  %v141 = vlaneseq
  %v142 = vshrl.u32 %v141, 7
  %v143 = vsub.s32 %v140, %v142
  %v144 = vrot.slane %v130, %v143
  %v145 = vcombine.high %v137, %v137
  %v146 = vcombine.high %v144, %v144
  %v148 = vpack.i.b16 %v137, %v137
  %v150 = vlaneseq
  %v151 = vshrl.u32 %v150, 7
  %v152 = vsub.s32 0, %v151
  %v153 = vrot.slane %v148, %v152
  %v155 = vpack.i.b16 %v144, %v144
  %v157 = vlaneseq
  %v158 = vshrl.u32 %v157, 7
  %v159 = vsub.s32 0, %v158
  %v160 = vrot.slane %v155, %v159
  %v162 = vpack.i.b16 %v145, %v145
  %v164 = vlaneseq
  %v165 = vshrl.u32 %v164, 7
  %v166 = vsub.s32 0, %v165
  %v167 = vrot.slane %v162, %v166
  %v169 = vpack.i.b16 %v146, %v146
  %v171 = vlaneseq
  %v172 = vshrl.u32 %v171, 7
  %v173 = vsub.s32 0, %v172
  %v174 = vrot.slane %v169, %v173
  %v179 = vcombine.low %v153, %v160
  %v180 = vcombine.low %v167, %v174
  %v182 = vunpack.c.l.s4 1983009808
  %v183 = vunpack.c.0.s8 %v182
  %v184 = vlaneseq
  %v185 = vshrl.u32 %v184, 7
  %v186 = vsub.s32 %v183, %v185
  %v187 = vrot.slane %v179, %v186
  %v189 = vunpack.c.l.s4 1983009808
  %v190 = vunpack.c.0.s8 %v189
  %v191 = vlaneseq
  %v192 = vshrl.u32 %v191, 7
  %v193 = vsub.s32 %v190, %v192
  %v194 = vrot.slane %v180, %v193
  %v195 = vcombine.low %v187, %v194
  %196 = vrot.lane.b32.xlu0 %v195, 1
  %v197 = vpop.permute.xlu0 %196
  %v198 = vrot.slane %v197, 6
  %vm199 = vcmask 7168
  %v200 = vsel %vm199, %v198, %v197
  %v203 = vmul.bf16 %v44, %v200
  %v204 = vmul.bf16 %v121, %v198
  %v207 = vcombine.high %v203, %v203
  %v209 = vunpack.c.l.s4 1983009808
  %v210 = vunpack.c.0.s8 %v209
  %v211 = vlaneseq
  %v212 = vshrl.u32 %v211, 7
  %v213 = vsub.s32 %v210, %v212
  %v214 = vrot.slane %v203, %v213
  %v216 = vunpack.c.l.s4 1983009808
  %v217 = vunpack.c.0.s8 %v216
  %v218 = vlaneseq
  %v219 = vshrl.u32 %v218, 7
  %v220 = vsub.s32 %v217, %v219
  %v221 = vrot.slane %v207, %v220
  %v222 = vcombine.high %v214, %v214
  %v223 = vcombine.high %v221, %v221
  %v225 = vunpack.c.l.s4 1983009808
  %v226 = vunpack.c.0.s8 %v225
  %v227 = vlaneseq
  %v228 = vshrl.u32 %v227, 7
  %v229 = vsub.s32 %v226, %v228
  %v230 = vrot.slane %v204, %v229
  %231 = vrot.lane.b32.xlu0 %v214, 127
  %v232 = vpop.permute.xlu0 %231
  %233 = vrot.lane.b32.xlu0 %v222, 127
  %v234 = vpop.permute.xlu0 %233
  %235 = vrot.lane.b32.xlu0 %v221, 127
  %v236 = vpop.permute.xlu0 %235
  %237 = vrot.lane.b32.xlu0 %v223, 127
  %v238 = vpop.permute.xlu0 %237
  %239 = vrot.lane.b32.xlu0 %v230, 127
  %v240 = vpop.permute.xlu0 %239
  %vm241 = vcmask 1039360
  %v242 = vsel %vm241, %v232, %v234
  %v243 = vsel %vm241, %v234, %v236
  %v244 = vsel %vm241, %v236, %v238
  %v245 = vsel %vm241, %v238, %v240
  %vm246 = vcmask 31744
  %v248 = vsel %vm246, %v27, 0
  %vm250 = vcmask 1041408
  %v252 = vsel %vm250, %v242, 0
  %v255 = vsel %vm250, %v243, 0
  %v258 = vsel %vm250, %v244, 0
  %v261 = vsel %vm250, %v245, 0
  %263 = vmatprep.subr.bf16.mxu0 0
  %264 = vmatpush1.bf16.msra.mxu0 0
  %265 = vmatprep.subr.bf16.mxu0 0
  %266 = vmatpush1.bf16.msra.mxu0 0
  %267 = vmatprep.subr.bf16.mxu0 0
  %268 = vmatpush1.bf16.msra.mxu0 0
  %269 = vmatprep.subr.bf16.mxu0 0
  %270 = vmatpush1.bf16.msra.mxu0 0
  %271 = vmatprep.subr.bf16.mxu0 0
  %272 = vmatpush1.bf16.msra.mxu0 0
  %273 = vmatprep.subr.bf16.mxu0 0
  %274 = vmatpush1.bf16.msra.mxu0 0
  %275 = vmatprep.subr.bf16.mxu0 0
  %276 = vmatpush1.bf16.msra.mxu0 0
  %277 = vmatprep.subr.bf16.mxu0 %v255
  %278 = vmatpush1.bf16.msra.mxu0 %v252
  %279 = vmatprep.subr.bf16.mxu0 0
  %280 = vmatpush2.bf16.msra.mxu0 0
  %281 = vmatprep.subr.bf16.mxu0 0
  %282 = vmatpush2.bf16.msra.mxu0 0
  %283 = vmatprep.subr.bf16.mxu0 0
  %284 = vmatpush2.bf16.msra.mxu0 0
  %285 = vmatprep.subr.bf16.mxu0 0
  %286 = vmatpush2.bf16.msra.mxu0 0
  %287 = vmatprep.subr.bf16.mxu0 0
  %288 = vmatpush2.bf16.msra.mxu0 0
  %289 = vmatprep.subr.bf16.mxu0 0
  %290 = vmatpush2.bf16.msra.mxu0 0
  %291 = vmatprep.subr.bf16.mxu0 0
  %292 = vmatpush2.bf16.msra.mxu0 0
  %293 = vmatprep.subr.bf16.mxu0 0
  %294 = vmatpush2.bf16.msra.mxu0 0
  %295 = vmatprep.mubr.bf16.mxu0 0
  %296 = vmatmul.mubr.bf16.gmra.mxu0 %v248
  %v297 = vpop.f32.mrf.mxu0
  %v298 = vadd.f32 0.0, %v297
  %v299 = vpop.f32.mrf.mxu0
  %v300 = vadd.f32 0.0, %v299
  %v301 = vpop.f32.mrf.mxu0
  %v302 = vpop.f32.mrf.mxu0
  %303 = vdwg.mxu0
  %304 = vmatprep.subr.bf16.mxu0 0
  %305 = vmatpush1.bf16.msra.mxu0 0
  %306 = vmatprep.subr.bf16.mxu0 0
  %307 = vmatpush1.bf16.msra.mxu0 0
  %308 = vmatprep.subr.bf16.mxu0 0
  %309 = vmatpush1.bf16.msra.mxu0 0
  %310 = vmatprep.subr.bf16.mxu0 0
  %311 = vmatpush1.bf16.msra.mxu0 0
  %312 = vmatprep.subr.bf16.mxu0 0
  %313 = vmatpush1.bf16.msra.mxu0 0
  %314 = vmatprep.subr.bf16.mxu0 0
  %315 = vmatpush1.bf16.msra.mxu0 0
  %316 = vmatprep.subr.bf16.mxu0 0
  %317 = vmatpush1.bf16.msra.mxu0 0
  %318 = vmatprep.subr.bf16.mxu0 %v261
  %319 = vmatpush1.bf16.msra.mxu0 %v258
  %320 = vmatprep.subr.bf16.mxu0 0
  %321 = vmatpush2.bf16.msra.mxu0 0
  %322 = vmatprep.subr.bf16.mxu0 0
  %323 = vmatpush2.bf16.msra.mxu0 0
  %324 = vmatprep.subr.bf16.mxu0 0
  %325 = vmatpush2.bf16.msra.mxu0 0
  %326 = vmatprep.subr.bf16.mxu0 0
  %327 = vmatpush2.bf16.msra.mxu0 0
  %328 = vmatprep.subr.bf16.mxu0 0
  %329 = vmatpush2.bf16.msra.mxu0 0
  %330 = vmatprep.subr.bf16.mxu0 0
  %331 = vmatpush2.bf16.msra.mxu0 0
  %332 = vmatprep.subr.bf16.mxu0 0
  %333 = vmatpush2.bf16.msra.mxu0 0
  %334 = vmatprep.subr.bf16.mxu0 0
  %335 = vmatpush2.bf16.msra.mxu0 0
  %336 = vmatprep.mubr.bf16.mxu0 0
  %337 = vmatmul.mubr.bf16.gmra.mxu0 %v248
  %v338 = vpop.f32.mrf.mxu0
  %v339 = vadd.f32 0.0, %v338
  %v340 = vpop.f32.mrf.mxu0
  %v341 = vadd.f32 0.0, %v340
  %v342 = vpop.f32.mrf.mxu0
  %v343 = vpop.f32.mrf.mxu0
  %344 = vdwg.mxu0
  %v346 = vcombine.high %v120, %v120
  %v348 = vunpack.c.l.s4 1983009808
  %v349 = vunpack.c.0.s8 %v348
  %v350 = vlaneseq
  %v351 = vshrl.u32 %v350, 7
  %v352 = vsub.s32 %v349, %v351
  %v353 = vrot.slane %v120, %v352
  %v355 = vunpack.c.l.s4 1983009808
  %v356 = vunpack.c.0.s8 %v355
  %v357 = vlaneseq
  %v358 = vshrl.u32 %v357, 7
  %v359 = vsub.s32 %v356, %v358
  %v360 = vrot.slane %v346, %v359
  %v361 = vcombine.high %v353, %v353
  %v362 = vcombine.high %v360, %v360
  %v364 = vsel %vm246, %v26, 0
  %v367 = vsel %vm250, %v353, 0
  %v370 = vsel %vm250, %v361, 0
  %v373 = vsel %vm250, %v360, 0
  %v376 = vsel %vm250, %v362, 0
  %378 = vmatprep.subr.bf16.mxu0 0
  %379 = vmatpush1.bf16.msra.mxu0 0
  %380 = vmatprep.subr.bf16.mxu0 0
  %381 = vmatpush1.bf16.msra.mxu0 0
  %382 = vmatprep.subr.bf16.mxu0 0
  %383 = vmatpush1.bf16.msra.mxu0 0
  %384 = vmatprep.subr.bf16.mxu0 0
  %385 = vmatpush1.bf16.msra.mxu0 0
  %386 = vmatprep.subr.bf16.mxu0 0
  %387 = vmatpush1.bf16.msra.mxu0 0
  %388 = vmatprep.subr.bf16.mxu0 0
  %389 = vmatpush1.bf16.msra.mxu0 0
  %390 = vmatprep.subr.bf16.mxu0 0
  %391 = vmatpush1.bf16.msra.mxu0 0
  %392 = vmatprep.subr.bf16.mxu0 %v370
  %393 = vmatpush1.bf16.msra.mxu0 %v367
  %394 = vmatprep.subr.bf16.mxu0 0
  %395 = vmatpush2.bf16.msra.mxu0 0
  %396 = vmatprep.subr.bf16.mxu0 0
  %397 = vmatpush2.bf16.msra.mxu0 0
  %398 = vmatprep.subr.bf16.mxu0 0
  %399 = vmatpush2.bf16.msra.mxu0 0
  %400 = vmatprep.subr.bf16.mxu0 0
  %401 = vmatpush2.bf16.msra.mxu0 0
  %402 = vmatprep.subr.bf16.mxu0 0
  %403 = vmatpush2.bf16.msra.mxu0 0
  %404 = vmatprep.subr.bf16.mxu0 0
  %405 = vmatpush2.bf16.msra.mxu0 0
  %406 = vmatprep.subr.bf16.mxu0 0
  %407 = vmatpush2.bf16.msra.mxu0 0
  %408 = vmatprep.subr.bf16.mxu0 0
  %409 = vmatpush2.bf16.msra.mxu0 0
  %410 = vmatprep.mubr.bf16.mxu0 0
  %411 = vmatmul.mubr.bf16.gmra.mxu0 %v364
  %v412 = vpop.f32.mrf.mxu0
  %v413 = vadd.f32 %v298, %v412
  %v414 = vpop.f32.mrf.mxu0
  %v415 = vadd.f32 %v300, %v414
  %v416 = vpop.f32.mrf.mxu0
  %v417 = vpop.f32.mrf.mxu0
  %418 = vdwg.mxu0
  %419 = vmatprep.subr.bf16.mxu0 0
  %420 = vmatpush1.bf16.msra.mxu0 0
  %421 = vmatprep.subr.bf16.mxu0 0
  %422 = vmatpush1.bf16.msra.mxu0 0
  %423 = vmatprep.subr.bf16.mxu0 0
  %424 = vmatpush1.bf16.msra.mxu0 0
  %425 = vmatprep.subr.bf16.mxu0 0
  %426 = vmatpush1.bf16.msra.mxu0 0
  %427 = vmatprep.subr.bf16.mxu0 0
  %428 = vmatpush1.bf16.msra.mxu0 0
  %429 = vmatprep.subr.bf16.mxu0 0
  %430 = vmatpush1.bf16.msra.mxu0 0
  %431 = vmatprep.subr.bf16.mxu0 0
  %432 = vmatpush1.bf16.msra.mxu0 0
  %433 = vmatprep.subr.bf16.mxu0 %v376
  %434 = vmatpush1.bf16.msra.mxu0 %v373
  %435 = vmatprep.subr.bf16.mxu0 0
  %436 = vmatpush2.bf16.msra.mxu0 0
  %437 = vmatprep.subr.bf16.mxu0 0
  %438 = vmatpush2.bf16.msra.mxu0 0
  %439 = vmatprep.subr.bf16.mxu0 0
  %440 = vmatpush2.bf16.msra.mxu0 0
  %441 = vmatprep.subr.bf16.mxu0 0
  %442 = vmatpush2.bf16.msra.mxu0 0
  %443 = vmatprep.subr.bf16.mxu0 0
  %444 = vmatpush2.bf16.msra.mxu0 0
  %445 = vmatprep.subr.bf16.mxu0 0
  %446 = vmatpush2.bf16.msra.mxu0 0
  %447 = vmatprep.subr.bf16.mxu0 0
  %448 = vmatpush2.bf16.msra.mxu0 0
  %449 = vmatprep.subr.bf16.mxu0 0
  %450 = vmatpush2.bf16.msra.mxu0 0
  %451 = vmatprep.mubr.bf16.mxu0 0
  %452 = vmatmul.mubr.bf16.gmra.mxu0 %v364
  %v453 = vpop.f32.mrf.mxu0
  %v454 = vadd.f32 %v339, %v453
  %v455 = vpop.f32.mrf.mxu0
  %v456 = vadd.f32 %v341, %v455
  %v457 = vpop.f32.mrf.mxu0
  %v458 = vpop.f32.mrf.mxu0
  %459 = vdwg.mxu0
  %v460 = vld [vmem:[%s0] sm:$0xff]
  %v461 = vld [vmem:[%s0 + $0x8] sm:$0x3]
  %v464 = vunpack.c.l.s4 1966171168
  %v465 = vunpack.c.0.s8 %v464
  %v466 = vlaneseq
  %v467 = vshrl.u32 %v466, 7
  %v468 = vsub.s32 %v465, %v467
  %v469 = vrot.slane %v37, %v468
  %v470 = vcombine.high %v469, %v469
  %v472 = vunpack.c.l.s4 1966171168
  %v473 = vunpack.c.0.s8 %v472
  %v474 = vlaneseq
  %v475 = vshrl.u32 %v474, 7
  %v476 = vsub.s32 %v473, %v475
  %v477 = vrot.slane %v469, %v476
  %v479 = vunpack.c.l.s4 1966171168
  %v480 = vunpack.c.0.s8 %v479
  %v481 = vlaneseq
  %v482 = vshrl.u32 %v481, 7
  %v483 = vsub.s32 %v480, %v482
  %v484 = vrot.slane %v470, %v483
  %v485 = vcombine.high %v477, %v477
  %v486 = vcombine.high %v484, %v484
  %v488 = vpack.i.b16 %v477, %v477
  %v490 = vlaneseq
  %v491 = vshrl.u32 %v490, 7
  %v492 = vsub.s32 0, %v491
  %v493 = vrot.slane %v488, %v492
  %v495 = vpack.i.b16 %v484, %v484
  %v497 = vlaneseq
  %v498 = vshrl.u32 %v497, 7
  %v499 = vsub.s32 0, %v498
  %v500 = vrot.slane %v495, %v499
  %v502 = vpack.i.b16 %v485, %v485
  %v504 = vlaneseq
  %v505 = vshrl.u32 %v504, 7
  %v506 = vsub.s32 0, %v505
  %v507 = vrot.slane %v502, %v506
  %v509 = vpack.i.b16 %v486, %v486
  %v511 = vlaneseq
  %v512 = vshrl.u32 %v511, 7
  %v513 = vsub.s32 0, %v512
  %v514 = vrot.slane %v509, %v513
  %v519 = vcombine.low %v493, %v500
  %v520 = vcombine.low %v507, %v514
  %v522 = vunpack.c.l.s4 1983009808
  %v523 = vunpack.c.0.s8 %v522
  %v524 = vlaneseq
  %v525 = vshrl.u32 %v524, 7
  %v526 = vsub.s32 %v523, %v525
  %v527 = vrot.slane %v519, %v526
  %v529 = vunpack.c.l.s4 1983009808
  %v530 = vunpack.c.0.s8 %v529
  %v531 = vlaneseq
  %v532 = vshrl.u32 %v531, 7
  %v533 = vsub.s32 %v530, %v532
  %v534 = vrot.slane %v520, %v533
  %v535 = vcombine.low %v527, %v534
  %536 = vrot.lane.b32.xlu0 %v535, 2
  %v537 = vpop.permute.xlu0 %536
  %v538 = vrot.slane %v537, 6
  %vm539 = vcmask 15360
  %v540 = vsel %vm539, %v538, %v537
  %v543 = vmul.bf16 %v460, %v540
  %v544 = vmul.bf16 %v461, %v538
  %v547 = vcombine.high %v543, %v543
  %v549 = vunpack.c.l.s4 1983009808
  %v550 = vunpack.c.0.s8 %v549
  %v551 = vlaneseq
  %v552 = vshrl.u32 %v551, 7
  %v553 = vsub.s32 %v550, %v552
  %v554 = vrot.slane %v543, %v553
  %v556 = vunpack.c.l.s4 1983009808
  %v557 = vunpack.c.0.s8 %v556
  %v558 = vlaneseq
  %v559 = vshrl.u32 %v558, 7
  %v560 = vsub.s32 %v557, %v559
  %v561 = vrot.slane %v547, %v560
  %v562 = vcombine.high %v554, %v554
  %v563 = vcombine.high %v561, %v561
  %v565 = vunpack.c.l.s4 1983009808
  %v566 = vunpack.c.0.s8 %v565
  %v567 = vlaneseq
  %v568 = vshrl.u32 %v567, 7
  %v569 = vsub.s32 %v566, %v568
  %v570 = vrot.slane %v544, %v569
  %571 = vrot.lane.b32.xlu0 %v554, 126
  %v572 = vpop.permute.xlu0 %571
  %573 = vrot.lane.b32.xlu0 %v562, 126
  %v574 = vpop.permute.xlu0 %573
  %575 = vrot.lane.b32.xlu0 %v561, 126
  %v576 = vpop.permute.xlu0 %575
  %577 = vrot.lane.b32.xlu0 %v563, 126
  %v578 = vpop.permute.xlu0 %577
  %579 = vrot.lane.b32.xlu0 %v570, 126
  %v580 = vpop.permute.xlu0 %579
  %vm581 = vcmask 1031168
  %v582 = vsel %vm581, %v572, %v574
  %v583 = vsel %vm581, %v574, %v576
  %v584 = vsel %vm581, %v576, %v578
  %v585 = vsel %vm581, %v578, %v580
  %v587 = vsel %vm246, %v28, 0
  %v590 = vsel %vm250, %v582, 0
  %v593 = vsel %vm250, %v583, 0
  %v596 = vsel %vm250, %v584, 0
  %v599 = vsel %vm250, %v585, 0
  %601 = vmatprep.subr.bf16.mxu0 0
  %602 = vmatpush1.bf16.msra.mxu0 0
  %603 = vmatprep.subr.bf16.mxu0 0
  %604 = vmatpush1.bf16.msra.mxu0 0
  %605 = vmatprep.subr.bf16.mxu0 0
  %606 = vmatpush1.bf16.msra.mxu0 0
  %607 = vmatprep.subr.bf16.mxu0 0
  %608 = vmatpush1.bf16.msra.mxu0 0
  %609 = vmatprep.subr.bf16.mxu0 0
  %610 = vmatpush1.bf16.msra.mxu0 0
  %611 = vmatprep.subr.bf16.mxu0 0
  %612 = vmatpush1.bf16.msra.mxu0 0
  %613 = vmatprep.subr.bf16.mxu0 0
  %614 = vmatpush1.bf16.msra.mxu0 0
  %615 = vmatprep.subr.bf16.mxu0 %v593
  %616 = vmatpush1.bf16.msra.mxu0 %v590
  %617 = vmatprep.subr.bf16.mxu0 0
  %618 = vmatpush2.bf16.msra.mxu0 0
  %619 = vmatprep.subr.bf16.mxu0 0
  %620 = vmatpush2.bf16.msra.mxu0 0
  %621 = vmatprep.subr.bf16.mxu0 0
  %622 = vmatpush2.bf16.msra.mxu0 0
  %623 = vmatprep.subr.bf16.mxu0 0
  %624 = vmatpush2.bf16.msra.mxu0 0
  %625 = vmatprep.subr.bf16.mxu0 0
  %626 = vmatpush2.bf16.msra.mxu0 0
  %627 = vmatprep.subr.bf16.mxu0 0
  %628 = vmatpush2.bf16.msra.mxu0 0
  %629 = vmatprep.subr.bf16.mxu0 0
  %630 = vmatpush2.bf16.msra.mxu0 0
  %631 = vmatprep.subr.bf16.mxu0 0
  %632 = vmatpush2.bf16.msra.mxu0 0
  %633 = vmatprep.mubr.bf16.mxu0 0
  %634 = vmatmul.mubr.bf16.gmra.mxu0 %v587
  %v635 = vpop.f32.mrf.mxu0
  %v636 = vadd.f32 0.0, %v635
  %v637 = vpop.f32.mrf.mxu0
  %v638 = vadd.f32 0.0, %v637
  %v639 = vpop.f32.mrf.mxu0
  %v640 = vpop.f32.mrf.mxu0
  %641 = vdwg.mxu0
  %642 = vmatprep.subr.bf16.mxu0 0
  %643 = vmatpush1.bf16.msra.mxu0 0
  %644 = vmatprep.subr.bf16.mxu0 0
  %645 = vmatpush1.bf16.msra.mxu0 0
  %646 = vmatprep.subr.bf16.mxu0 0
  %647 = vmatpush1.bf16.msra.mxu0 0
  %648 = vmatprep.subr.bf16.mxu0 0
  %649 = vmatpush1.bf16.msra.mxu0 0
  %650 = vmatprep.subr.bf16.mxu0 0
  %651 = vmatpush1.bf16.msra.mxu0 0
  %652 = vmatprep.subr.bf16.mxu0 0
  %653 = vmatpush1.bf16.msra.mxu0 0
  %654 = vmatprep.subr.bf16.mxu0 0
  %655 = vmatpush1.bf16.msra.mxu0 0
  %656 = vmatprep.subr.bf16.mxu0 %v599
  %657 = vmatpush1.bf16.msra.mxu0 %v596
  %658 = vmatprep.subr.bf16.mxu0 0
  %659 = vmatpush2.bf16.msra.mxu0 0
  %660 = vmatprep.subr.bf16.mxu0 0
  %661 = vmatpush2.bf16.msra.mxu0 0
  %662 = vmatprep.subr.bf16.mxu0 0
  %663 = vmatpush2.bf16.msra.mxu0 0
  %664 = vmatprep.subr.bf16.mxu0 0
  %665 = vmatpush2.bf16.msra.mxu0 0
  %666 = vmatprep.subr.bf16.mxu0 0
  %667 = vmatpush2.bf16.msra.mxu0 0
  %668 = vmatprep.subr.bf16.mxu0 0
  %669 = vmatpush2.bf16.msra.mxu0 0
  %670 = vmatprep.subr.bf16.mxu0 0
  %671 = vmatpush2.bf16.msra.mxu0 0
  %672 = vmatprep.subr.bf16.mxu0 0
  %673 = vmatpush2.bf16.msra.mxu0 0
  %674 = vmatprep.mubr.bf16.mxu0 0
  %675 = vmatmul.mubr.bf16.gmra.mxu0 %v587
  %v676 = vpop.f32.mrf.mxu0
  %v677 = vadd.f32 0.0, %v676
  %v678 = vpop.f32.mrf.mxu0
  %v679 = vadd.f32 0.0, %v678
  %v680 = vpop.f32.mrf.mxu0
  %v681 = vpop.f32.mrf.mxu0
  %682 = vdwg.mxu0
  %v683 = vadd.f32 %v413, %v636
  %v684 = vadd.f32 %v415, %v638
  %v685 = vadd.f32 %v454, %v677
  %v686 = vadd.f32 %v456, %v679
  %v687 = vld [vmem:[%s0] sm:$0xff]
  %v688 = vld [vmem:[%s0 + $0x8] sm:$0x3]
  %v691 = vunpack.c.l.s4 1966171168
  %v692 = vunpack.c.0.s8 %v691
  %v693 = vlaneseq
  %v694 = vshrl.u32 %v693, 7
  %v695 = vsub.s32 %v692, %v694
  %v696 = vrot.slane %v38, %v695
  %v697 = vcombine.high %v696, %v696
  %v699 = vunpack.c.l.s4 1966171168
  %v700 = vunpack.c.0.s8 %v699
  %v701 = vlaneseq
  %v702 = vshrl.u32 %v701, 7
  %v703 = vsub.s32 %v700, %v702
  %v704 = vrot.slane %v696, %v703
  %v706 = vunpack.c.l.s4 1966171168
  %v707 = vunpack.c.0.s8 %v706
  %v708 = vlaneseq
  %v709 = vshrl.u32 %v708, 7
  %v710 = vsub.s32 %v707, %v709
  %v711 = vrot.slane %v697, %v710
  %v712 = vcombine.high %v704, %v704
  %v713 = vcombine.high %v711, %v711
  %v715 = vpack.i.b16 %v704, %v704
  %v717 = vlaneseq
  %v718 = vshrl.u32 %v717, 7
  %v719 = vsub.s32 0, %v718
  %v720 = vrot.slane %v715, %v719
  %v722 = vpack.i.b16 %v711, %v711
  %v724 = vlaneseq
  %v725 = vshrl.u32 %v724, 7
  %v726 = vsub.s32 0, %v725
  %v727 = vrot.slane %v722, %v726
  %v729 = vpack.i.b16 %v712, %v712
  %v731 = vlaneseq
  %v732 = vshrl.u32 %v731, 7
  %v733 = vsub.s32 0, %v732
  %v734 = vrot.slane %v729, %v733
  %v736 = vpack.i.b16 %v713, %v713
  %v738 = vlaneseq
  %v739 = vshrl.u32 %v738, 7
  %v740 = vsub.s32 0, %v739
  %v741 = vrot.slane %v736, %v740
  %v746 = vcombine.low %v720, %v727
  %v747 = vcombine.low %v734, %v741
  %v749 = vunpack.c.l.s4 1983009808
  %v750 = vunpack.c.0.s8 %v749
  %v751 = vlaneseq
  %v752 = vshrl.u32 %v751, 7
  %v753 = vsub.s32 %v750, %v752
  %v754 = vrot.slane %v746, %v753
  %v756 = vunpack.c.l.s4 1983009808
  %v757 = vunpack.c.0.s8 %v756
  %v758 = vlaneseq
  %v759 = vshrl.u32 %v758, 7
  %v760 = vsub.s32 %v757, %v759
  %v761 = vrot.slane %v747, %v760
  %v762 = vcombine.low %v754, %v761
  %763 = vrot.lane.b32.xlu0 %v762, 16
  %v764 = vpop.permute.xlu0 %763
  %v765 = vrot.slane %v764, 6
  %vm766 = vcmask 130048
  %v767 = vsel %vm766, %v765, %v764
  %v770 = vmul.bf16 %v687, %v767
  %v771 = vmul.bf16 %v688, %v765
  %v774 = vcombine.high %v770, %v770
  %v776 = vunpack.c.l.s4 1983009808
  %v777 = vunpack.c.0.s8 %v776
  %v778 = vlaneseq
  %v779 = vshrl.u32 %v778, 7
  %v780 = vsub.s32 %v777, %v779
  %v781 = vrot.slane %v770, %v780
  %v783 = vunpack.c.l.s4 1983009808
  %v784 = vunpack.c.0.s8 %v783
  %v785 = vlaneseq
  %v786 = vshrl.u32 %v785, 7
  %v787 = vsub.s32 %v784, %v786
  %v788 = vrot.slane %v774, %v787
  %v789 = vcombine.high %v781, %v781
  %v790 = vcombine.high %v788, %v788
  %v792 = vunpack.c.l.s4 1983009808
  %v793 = vunpack.c.0.s8 %v792
  %v794 = vlaneseq
  %v795 = vshrl.u32 %v794, 7
  %v796 = vsub.s32 %v793, %v795
  %v797 = vrot.slane %v771, %v796
  %798 = vrot.lane.b32.xlu0 %v781, 112
  %v799 = vpop.permute.xlu0 %798
  %800 = vrot.lane.b32.xlu0 %v789, 112
  %v801 = vpop.permute.xlu0 %800
  %802 = vrot.lane.b32.xlu0 %v788, 112
  %v803 = vpop.permute.xlu0 %802
  %804 = vrot.lane.b32.xlu0 %v790, 112
  %v805 = vpop.permute.xlu0 %804
  %806 = vrot.lane.b32.xlu0 %v797, 112
  %v807 = vpop.permute.xlu0 %806
  %vm808 = vcmask 916480
  %v809 = vsel %vm808, %v799, %v801
  %v810 = vsel %vm808, %v801, %v803
  %v811 = vsel %vm808, %v803, %v805
  %v812 = vsel %vm808, %v805, %v807
  %v814 = vsel %vm246, %v29, 0
  %v817 = vsel %vm250, %v809, 0
  %v820 = vsel %vm250, %v810, 0
  %v823 = vsel %vm250, %v811, 0
  %v826 = vsel %vm250, %v812, 0
  %828 = vmatprep.subr.bf16.mxu0 0
  %829 = vmatpush1.bf16.msra.mxu0 0
  %830 = vmatprep.subr.bf16.mxu0 0
  %831 = vmatpush1.bf16.msra.mxu0 0
  %832 = vmatprep.subr.bf16.mxu0 0
  %833 = vmatpush1.bf16.msra.mxu0 0
  %834 = vmatprep.subr.bf16.mxu0 0
  %835 = vmatpush1.bf16.msra.mxu0 0
  %836 = vmatprep.subr.bf16.mxu0 0
  %837 = vmatpush1.bf16.msra.mxu0 0
  %838 = vmatprep.subr.bf16.mxu0 0
  %839 = vmatpush1.bf16.msra.mxu0 0
  %840 = vmatprep.subr.bf16.mxu0 0
  %841 = vmatpush1.bf16.msra.mxu0 0
  %842 = vmatprep.subr.bf16.mxu0 %v820
  %843 = vmatpush1.bf16.msra.mxu0 %v817
  %844 = vmatprep.subr.bf16.mxu0 0
  %845 = vmatpush2.bf16.msra.mxu0 0
  %846 = vmatprep.subr.bf16.mxu0 0
  %847 = vmatpush2.bf16.msra.mxu0 0
  %848 = vmatprep.subr.bf16.mxu0 0
  %849 = vmatpush2.bf16.msra.mxu0 0
  %850 = vmatprep.subr.bf16.mxu0 0
  %851 = vmatpush2.bf16.msra.mxu0 0
  %852 = vmatprep.subr.bf16.mxu0 0
  %853 = vmatpush2.bf16.msra.mxu0 0
  %854 = vmatprep.subr.bf16.mxu0 0
  %855 = vmatpush2.bf16.msra.mxu0 0
  %856 = vmatprep.subr.bf16.mxu0 0
  %857 = vmatpush2.bf16.msra.mxu0 0
  %858 = vmatprep.subr.bf16.mxu0 0
  %859 = vmatpush2.bf16.msra.mxu0 0
  %860 = vmatprep.mubr.bf16.mxu0 0
  %861 = vmatmul.mubr.bf16.gmra.mxu0 %v814
  %v862 = vpop.f32.mrf.mxu0
  %v863 = vadd.f32 0.0, %v862
  %v864 = vpop.f32.mrf.mxu0
  %v865 = vadd.f32 0.0, %v864
  %v866 = vpop.f32.mrf.mxu0
  %v867 = vpop.f32.mrf.mxu0
  %868 = vdwg.mxu0
  %869 = vmatprep.subr.bf16.mxu0 0
  %870 = vmatpush1.bf16.msra.mxu0 0
  %871 = vmatprep.subr.bf16.mxu0 0
  %872 = vmatpush1.bf16.msra.mxu0 0
  %873 = vmatprep.subr.bf16.mxu0 0
  %874 = vmatpush1.bf16.msra.mxu0 0
  %875 = vmatprep.subr.bf16.mxu0 0
  %876 = vmatpush1.bf16.msra.mxu0 0
  %877 = vmatprep.subr.bf16.mxu0 0
  %878 = vmatpush1.bf16.msra.mxu0 0
  %879 = vmatprep.subr.bf16.mxu0 0
  %880 = vmatpush1.bf16.msra.mxu0 0
  %881 = vmatprep.subr.bf16.mxu0 0
  %882 = vmatpush1.bf16.msra.mxu0 0
  %883 = vmatprep.subr.bf16.mxu0 %v826
  %884 = vmatpush1.bf16.msra.mxu0 %v823
  %885 = vmatprep.subr.bf16.mxu0 0
  %886 = vmatpush2.bf16.msra.mxu0 0
  %887 = vmatprep.subr.bf16.mxu0 0
  %888 = vmatpush2.bf16.msra.mxu0 0
  %889 = vmatprep.subr.bf16.mxu0 0
  %890 = vmatpush2.bf16.msra.mxu0 0
  %891 = vmatprep.subr.bf16.mxu0 0
  %892 = vmatpush2.bf16.msra.mxu0 0
  %893 = vmatprep.subr.bf16.mxu0 0
  %894 = vmatpush2.bf16.msra.mxu0 0
  %895 = vmatprep.subr.bf16.mxu0 0
  %896 = vmatpush2.bf16.msra.mxu0 0
  %897 = vmatprep.subr.bf16.mxu0 0
  %898 = vmatpush2.bf16.msra.mxu0 0
  %899 = vmatprep.subr.bf16.mxu0 0
  %900 = vmatpush2.bf16.msra.mxu0 0
  %901 = vmatprep.mubr.bf16.mxu0 0
  %902 = vmatmul.mubr.bf16.gmra.mxu0 %v814
  %v903 = vpop.f32.mrf.mxu0
  %v904 = vadd.f32 0.0, %v903
  %v905 = vpop.f32.mrf.mxu0
  %v906 = vadd.f32 0.0, %v905
  %v907 = vpop.f32.mrf.mxu0
  %v908 = vpop.f32.mrf.mxu0
  %909 = vdwg.mxu0
  %v910 = vadd.f32 %v683, %v863
  %v911 = vadd.f32 %v684, %v865
  %v912 = vadd.f32 %v685, %v904
  %v913 = vadd.f32 %v686, %v906
  %v914 = vld [vmem:[%s0] sm:$0xff]
  %v915 = vld [vmem:[%s0 + $0x8] sm:$0x3]
  %v918 = vunpack.c.l.s4 1966171168
  %v919 = vunpack.c.0.s8 %v918
  %v920 = vlaneseq
  %v921 = vshrl.u32 %v920, 7
  %v922 = vsub.s32 %v919, %v921
  %v923 = vrot.slane %v39, %v922
  %v924 = vcombine.high %v923, %v923
  %v926 = vunpack.c.l.s4 1966171168
  %v927 = vunpack.c.0.s8 %v926
  %v928 = vlaneseq
  %v929 = vshrl.u32 %v928, 7
  %v930 = vsub.s32 %v927, %v929
  %v931 = vrot.slane %v923, %v930
  %v933 = vunpack.c.l.s4 1966171168
  %v934 = vunpack.c.0.s8 %v933
  %v935 = vlaneseq
  %v936 = vshrl.u32 %v935, 7
  %v937 = vsub.s32 %v934, %v936
  %v938 = vrot.slane %v924, %v937
  %v939 = vcombine.high %v931, %v931
  %v940 = vcombine.high %v938, %v938
  %v942 = vpack.i.b16 %v931, %v931
  %v944 = vlaneseq
  %v945 = vshrl.u32 %v944, 7
  %v946 = vsub.s32 0, %v945
  %v947 = vrot.slane %v942, %v946
  %v949 = vpack.i.b16 %v938, %v938
  %v951 = vlaneseq
  %v952 = vshrl.u32 %v951, 7
  %v953 = vsub.s32 0, %v952
  %v954 = vrot.slane %v949, %v953
  %v956 = vpack.i.b16 %v939, %v939
  %v958 = vlaneseq
  %v959 = vshrl.u32 %v958, 7
  %v960 = vsub.s32 0, %v959
  %v961 = vrot.slane %v956, %v960
  %v963 = vpack.i.b16 %v940, %v940
  %v965 = vlaneseq
  %v966 = vshrl.u32 %v965, 7
  %v967 = vsub.s32 0, %v966
  %v968 = vrot.slane %v963, %v967
  %v973 = vcombine.low %v947, %v954
  %v974 = vcombine.low %v961, %v968
  %v976 = vunpack.c.l.s4 1983009808
  %v977 = vunpack.c.0.s8 %v976
  %v978 = vlaneseq
  %v979 = vshrl.u32 %v978, 7
  %v980 = vsub.s32 %v977, %v979
  %v981 = vrot.slane %v973, %v980
  %v983 = vunpack.c.l.s4 1983009808
  %v984 = vunpack.c.0.s8 %v983
  %v985 = vlaneseq
  %v986 = vshrl.u32 %v985, 7
  %v987 = vsub.s32 %v984, %v986
  %v988 = vrot.slane %v974, %v987
  %v989 = vcombine.low %v981, %v988
  %990 = vrot.lane.b32.xlu0 %v989, 17
  %v991 = vpop.permute.xlu0 %990
  %v992 = vrot.slane %v991, 6
  %vm993 = vcmask 138240
  %v994 = vsel %vm993, %v992, %v991
  %v997 = vmul.bf16 %v914, %v994
  %v998 = vmul.bf16 %v915, %v992
  %v1001 = vcombine.high %v997, %v997
  %v1003 = vunpack.c.l.s4 1983009808
  %v1004 = vunpack.c.0.s8 %v1003
  %v1005 = vlaneseq
  %v1006 = vshrl.u32 %v1005, 7
  %v1007 = vsub.s32 %v1004, %v1006
  %v1008 = vrot.slane %v997, %v1007
  %v1010 = vunpack.c.l.s4 1983009808
  %v1011 = vunpack.c.0.s8 %v1010
  %v1012 = vlaneseq
  %v1013 = vshrl.u32 %v1012, 7
  %v1014 = vsub.s32 %v1011, %v1013
  %v1015 = vrot.slane %v1001, %v1014
  %v1016 = vcombine.high %v1008, %v1008
  %v1017 = vcombine.high %v1015, %v1015
  %v1019 = vunpack.c.l.s4 1983009808
  %v1020 = vunpack.c.0.s8 %v1019
  %v1021 = vlaneseq
  %v1022 = vshrl.u32 %v1021, 7
  %v1023 = vsub.s32 %v1020, %v1022
  %v1024 = vrot.slane %v998, %v1023
  %1025 = vrot.lane.b32.xlu0 %v1008, 111
  %v1026 = vpop.permute.xlu0 %1025
  %1027 = vrot.lane.b32.xlu0 %v1016, 111
  %v1028 = vpop.permute.xlu0 %1027
  %1029 = vrot.lane.b32.xlu0 %v1015, 111
  %v1030 = vpop.permute.xlu0 %1029
  %1031 = vrot.lane.b32.xlu0 %v1017, 111
  %v1032 = vpop.permute.xlu0 %1031
  %1033 = vrot.lane.b32.xlu0 %v1024, 111
  %v1034 = vpop.permute.xlu0 %1033
  %vm1035 = vcmask 908288
  %v1036 = vsel %vm1035, %v1026, %v1028
  %v1037 = vsel %vm1035, %v1028, %v1030
  %v1038 = vsel %vm1035, %v1030, %v1032
  %v1039 = vsel %vm1035, %v1032, %v1034
  %v1041 = vsel %vm246, %v30, 0
  %v1044 = vsel %vm250, %v1036, 0
  %v1047 = vsel %vm250, %v1037, 0
  %v1050 = vsel %vm250, %v1038, 0
  %v1053 = vsel %vm250, %v1039, 0
  %1055 = vmatprep.subr.bf16.mxu0 0
  %1056 = vmatpush1.bf16.msra.mxu0 0
  %1057 = vmatprep.subr.bf16.mxu0 0
  %1058 = vmatpush1.bf16.msra.mxu0 0
  %1059 = vmatprep.subr.bf16.mxu0 0
  %1060 = vmatpush1.bf16.msra.mxu0 0
  %1061 = vmatprep.subr.bf16.mxu0 0
  %1062 = vmatpush1.bf16.msra.mxu0 0
  %1063 = vmatprep.subr.bf16.mxu0 0
  %1064 = vmatpush1.bf16.msra.mxu0 0
  %1065 = vmatprep.subr.bf16.mxu0 0
  %1066 = vmatpush1.bf16.msra.mxu0 0
  %1067 = vmatprep.subr.bf16.mxu0 0
  %1068 = vmatpush1.bf16.msra.mxu0 0
  %1069 = vmatprep.subr.bf16.mxu0 %v1047
  %1070 = vmatpush1.bf16.msra.mxu0 %v1044
  %1071 = vmatprep.subr.bf16.mxu0 0
  %1072 = vmatpush2.bf16.msra.mxu0 0
  %1073 = vmatprep.subr.bf16.mxu0 0
  %1074 = vmatpush2.bf16.msra.mxu0 0
  %1075 = vmatprep.subr.bf16.mxu0 0
  %1076 = vmatpush2.bf16.msra.mxu0 0
  %1077 = vmatprep.subr.bf16.mxu0 0
  %1078 = vmatpush2.bf16.msra.mxu0 0
  %1079 = vmatprep.subr.bf16.mxu0 0
  %1080 = vmatpush2.bf16.msra.mxu0 0
  %1081 = vmatprep.subr.bf16.mxu0 0
  %1082 = vmatpush2.bf16.msra.mxu0 0
  %1083 = vmatprep.subr.bf16.mxu0 0
  %1084 = vmatpush2.bf16.msra.mxu0 0
  %1085 = vmatprep.subr.bf16.mxu0 0
  %1086 = vmatpush2.bf16.msra.mxu0 0
  %1087 = vmatprep.mubr.bf16.mxu0 0
  %1088 = vmatmul.mubr.bf16.gmra.mxu0 %v1041
  %v1089 = vpop.f32.mrf.mxu0
  %v1090 = vadd.f32 0.0, %v1089
  %v1091 = vpop.f32.mrf.mxu0
  %v1092 = vadd.f32 0.0, %v1091
  %v1093 = vpop.f32.mrf.mxu0
  %v1094 = vpop.f32.mrf.mxu0
  %1095 = vdwg.mxu0
  %1096 = vmatprep.subr.bf16.mxu0 0
  %1097 = vmatpush1.bf16.msra.mxu0 0
  %1098 = vmatprep.subr.bf16.mxu0 0
  %1099 = vmatpush1.bf16.msra.mxu0 0
  %1100 = vmatprep.subr.bf16.mxu0 0
  %1101 = vmatpush1.bf16.msra.mxu0 0
  %1102 = vmatprep.subr.bf16.mxu0 0
  %1103 = vmatpush1.bf16.msra.mxu0 0
  %1104 = vmatprep.subr.bf16.mxu0 0
  %1105 = vmatpush1.bf16.msra.mxu0 0
  %1106 = vmatprep.subr.bf16.mxu0 0
  %1107 = vmatpush1.bf16.msra.mxu0 0
  %1108 = vmatprep.subr.bf16.mxu0 0
  %1109 = vmatpush1.bf16.msra.mxu0 0
  %1110 = vmatprep.subr.bf16.mxu0 %v1053
  %1111 = vmatpush1.bf16.msra.mxu0 %v1050
  %1112 = vmatprep.subr.bf16.mxu0 0
  %1113 = vmatpush2.bf16.msra.mxu0 0
  %1114 = vmatprep.subr.bf16.mxu0 0
  %1115 = vmatpush2.bf16.msra.mxu0 0
  %1116 = vmatprep.subr.bf16.mxu0 0
  %1117 = vmatpush2.bf16.msra.mxu0 0
  %1118 = vmatprep.subr.bf16.mxu0 0
  %1119 = vmatpush2.bf16.msra.mxu0 0
  %1120 = vmatprep.subr.bf16.mxu0 0
  %1121 = vmatpush2.bf16.msra.mxu0 0
  %1122 = vmatprep.subr.bf16.mxu0 0
  %1123 = vmatpush2.bf16.msra.mxu0 0
  %1124 = vmatprep.subr.bf16.mxu0 0
  %1125 = vmatpush2.bf16.msra.mxu0 0
  %1126 = vmatprep.subr.bf16.mxu0 0
  %1127 = vmatpush2.bf16.msra.mxu0 0
  %1128 = vmatprep.mubr.bf16.mxu0 0
  %1129 = vmatmul.mubr.bf16.gmra.mxu0 %v1041
  %v1130 = vpop.f32.mrf.mxu0
  %v1131 = vadd.f32 0.0, %v1130
  %v1132 = vpop.f32.mrf.mxu0
  %v1133 = vadd.f32 0.0, %v1132
  %v1134 = vpop.f32.mrf.mxu0
  %v1135 = vpop.f32.mrf.mxu0
  %1136 = vdwg.mxu0
  %v1137 = vadd.f32 %v910, %v1090
  %v1138 = vadd.f32 %v911, %v1092
  %v1139 = vadd.f32 %v912, %v1131
  %v1140 = vadd.f32 %v913, %v1133
  %v1141 = vld [vmem:[%s0] sm:$0xff]
  %v1142 = vld [vmem:[%s0 + $0x8] sm:$0x3]
  %v1145 = vunpack.c.l.s4 1966171168
  %v1146 = vunpack.c.0.s8 %v1145
  %v1147 = vlaneseq
  %v1148 = vshrl.u32 %v1147, 7
  %v1149 = vsub.s32 %v1146, %v1148
  %v1150 = vrot.slane %v40, %v1149
  %v1151 = vcombine.high %v1150, %v1150
  %v1153 = vunpack.c.l.s4 1966171168
  %v1154 = vunpack.c.0.s8 %v1153
  %v1155 = vlaneseq
  %v1156 = vshrl.u32 %v1155, 7
  %v1157 = vsub.s32 %v1154, %v1156
  %v1158 = vrot.slane %v1150, %v1157
  %v1160 = vunpack.c.l.s4 1966171168
  %v1161 = vunpack.c.0.s8 %v1160
  %v1162 = vlaneseq
  %v1163 = vshrl.u32 %v1162, 7
  %v1164 = vsub.s32 %v1161, %v1163
  %v1165 = vrot.slane %v1151, %v1164
  %v1166 = vcombine.high %v1158, %v1158
  %v1167 = vcombine.high %v1165, %v1165
  %v1169 = vpack.i.b16 %v1158, %v1158
  %v1171 = vlaneseq
  %v1172 = vshrl.u32 %v1171, 7
  %v1173 = vsub.s32 0, %v1172
  %v1174 = vrot.slane %v1169, %v1173
  %v1176 = vpack.i.b16 %v1165, %v1165
  %v1178 = vlaneseq
  %v1179 = vshrl.u32 %v1178, 7
  %v1180 = vsub.s32 0, %v1179
  %v1181 = vrot.slane %v1176, %v1180
  %v1183 = vpack.i.b16 %v1166, %v1166
  %v1185 = vlaneseq
  %v1186 = vshrl.u32 %v1185, 7
  %v1187 = vsub.s32 0, %v1186
  %v1188 = vrot.slane %v1183, %v1187
  %v1190 = vpack.i.b16 %v1167, %v1167
  %v1192 = vlaneseq
  %v1193 = vshrl.u32 %v1192, 7
  %v1194 = vsub.s32 0, %v1193
  %v1195 = vrot.slane %v1190, %v1194
  %v1200 = vcombine.low %v1174, %v1181
  %v1201 = vcombine.low %v1188, %v1195
  %v1203 = vunpack.c.l.s4 1983009808
  %v1204 = vunpack.c.0.s8 %v1203
  %v1205 = vlaneseq
  %v1206 = vshrl.u32 %v1205, 7
  %v1207 = vsub.s32 %v1204, %v1206
  %v1208 = vrot.slane %v1200, %v1207
  %v1210 = vunpack.c.l.s4 1983009808
  %v1211 = vunpack.c.0.s8 %v1210
  %v1212 = vlaneseq
  %v1213 = vshrl.u32 %v1212, 7
  %v1214 = vsub.s32 %v1211, %v1213
  %v1215 = vrot.slane %v1201, %v1214
  %v1216 = vcombine.low %v1208, %v1215
  %1217 = vrot.lane.b32.xlu0 %v1216, 18
  %v1218 = vpop.permute.xlu0 %1217
  %v1219 = vrot.slane %v1218, 6
  %vm1220 = vcmask 146432
  %v1221 = vsel %vm1220, %v1219, %v1218
  %v1224 = vmul.bf16 %v1141, %v1221
  %v1225 = vmul.bf16 %v1142, %v1219
  %v1228 = vcombine.high %v1224, %v1224
  %v1230 = vunpack.c.l.s4 1983009808
  %v1231 = vunpack.c.0.s8 %v1230
  %v1232 = vlaneseq
  %v1233 = vshrl.u32 %v1232, 7
  %v1234 = vsub.s32 %v1231, %v1233
  %v1235 = vrot.slane %v1224, %v1234
  %v1237 = vunpack.c.l.s4 1983009808
  %v1238 = vunpack.c.0.s8 %v1237
  %v1239 = vlaneseq
  %v1240 = vshrl.u32 %v1239, 7
  %v1241 = vsub.s32 %v1238, %v1240
  %v1242 = vrot.slane %v1228, %v1241
  %v1243 = vcombine.high %v1235, %v1235
  %v1244 = vcombine.high %v1242, %v1242
  %v1246 = vunpack.c.l.s4 1983009808
  %v1247 = vunpack.c.0.s8 %v1246
  %v1248 = vlaneseq
  %v1249 = vshrl.u32 %v1248, 7
  %v1250 = vsub.s32 %v1247, %v1249
  %v1251 = vrot.slane %v1225, %v1250
  %1252 = vrot.lane.b32.xlu0 %v1235, 110
  %v1253 = vpop.permute.xlu0 %1252
  %1254 = vrot.lane.b32.xlu0 %v1243, 110
  %v1255 = vpop.permute.xlu0 %1254
  %1256 = vrot.lane.b32.xlu0 %v1242, 110
  %v1257 = vpop.permute.xlu0 %1256
  %1258 = vrot.lane.b32.xlu0 %v1244, 110
  %v1259 = vpop.permute.xlu0 %1258
  %1260 = vrot.lane.b32.xlu0 %v1251, 110
  %v1261 = vpop.permute.xlu0 %1260
  %vm1262 = vcmask 900096
  %v1263 = vsel %vm1262, %v1253, %v1255
  %v1264 = vsel %vm1262, %v1255, %v1257
  %v1265 = vsel %vm1262, %v1257, %v1259
  %v1266 = vsel %vm1262, %v1259, %v1261
  %v1268 = vsel %vm246, %v31, 0
  %v1271 = vsel %vm250, %v1263, 0
  %v1274 = vsel %vm250, %v1264, 0
  %v1277 = vsel %vm250, %v1265, 0
  %v1280 = vsel %vm250, %v1266, 0
  %1282 = vmatprep.subr.bf16.mxu0 0
  %1283 = vmatpush1.bf16.msra.mxu0 0
  %1284 = vmatprep.subr.bf16.mxu0 0
  %1285 = vmatpush1.bf16.msra.mxu0 0
  %1286 = vmatprep.subr.bf16.mxu0 0
  %1287 = vmatpush1.bf16.msra.mxu0 0
  %1288 = vmatprep.subr.bf16.mxu0 0
  %1289 = vmatpush1.bf16.msra.mxu0 0
  %1290 = vmatprep.subr.bf16.mxu0 0
  %1291 = vmatpush1.bf16.msra.mxu0 0
  %1292 = vmatprep.subr.bf16.mxu0 0
  %1293 = vmatpush1.bf16.msra.mxu0 0
  %1294 = vmatprep.subr.bf16.mxu0 0
  %1295 = vmatpush1.bf16.msra.mxu0 0
  %1296 = vmatprep.subr.bf16.mxu0 %v1274
  %1297 = vmatpush1.bf16.msra.mxu0 %v1271
  %1298 = vmatprep.subr.bf16.mxu0 0
  %1299 = vmatpush2.bf16.msra.mxu0 0
  %1300 = vmatprep.subr.bf16.mxu0 0
  %1301 = vmatpush2.bf16.msra.mxu0 0
  %1302 = vmatprep.subr.bf16.mxu0 0
  %1303 = vmatpush2.bf16.msra.mxu0 0
  %1304 = vmatprep.subr.bf16.mxu0 0
  %1305 = vmatpush2.bf16.msra.mxu0 0
  %1306 = vmatprep.subr.bf16.mxu0 0
  %1307 = vmatpush2.bf16.msra.mxu0 0
  %1308 = vmatprep.subr.bf16.mxu0 0
  %1309 = vmatpush2.bf16.msra.mxu0 0
  %1310 = vmatprep.subr.bf16.mxu0 0
  %1311 = vmatpush2.bf16.msra.mxu0 0
  %1312 = vmatprep.subr.bf16.mxu0 0
  %1313 = vmatpush2.bf16.msra.mxu0 0
  %1314 = vmatprep.mubr.bf16.mxu0 0
  %1315 = vmatmul.mubr.bf16.gmra.mxu0 %v1268
  %v1316 = vpop.f32.mrf.mxu0
  %v1317 = vadd.f32 0.0, %v1316
  %v1318 = vpop.f32.mrf.mxu0
  %v1319 = vadd.f32 0.0, %v1318
  %v1320 = vpop.f32.mrf.mxu0
  %v1321 = vpop.f32.mrf.mxu0
  %1322 = vdwg.mxu0
  %1323 = vmatprep.subr.bf16.mxu0 0
  %1324 = vmatpush1.bf16.msra.mxu0 0
  %1325 = vmatprep.subr.bf16.mxu0 0
  %1326 = vmatpush1.bf16.msra.mxu0 0
  %1327 = vmatprep.subr.bf16.mxu0 0
  %1328 = vmatpush1.bf16.msra.mxu0 0
  %1329 = vmatprep.subr.bf16.mxu0 0
  %1330 = vmatpush1.bf16.msra.mxu0 0
  %1331 = vmatprep.subr.bf16.mxu0 0
  %1332 = vmatpush1.bf16.msra.mxu0 0
  %1333 = vmatprep.subr.bf16.mxu0 0
  %1334 = vmatpush1.bf16.msra.mxu0 0
  %1335 = vmatprep.subr.bf16.mxu0 0
  %1336 = vmatpush1.bf16.msra.mxu0 0
  %1337 = vmatprep.subr.bf16.mxu0 %v1280
  %1338 = vmatpush1.bf16.msra.mxu0 %v1277
  %1339 = vmatprep.subr.bf16.mxu0 0
  %1340 = vmatpush2.bf16.msra.mxu0 0
  %1341 = vmatprep.subr.bf16.mxu0 0
  %1342 = vmatpush2.bf16.msra.mxu0 0
  %1343 = vmatprep.subr.bf16.mxu0 0
  %1344 = vmatpush2.bf16.msra.mxu0 0
  %1345 = vmatprep.subr.bf16.mxu0 0
  %1346 = vmatpush2.bf16.msra.mxu0 0
  %1347 = vmatprep.subr.bf16.mxu0 0
  %1348 = vmatpush2.bf16.msra.mxu0 0
  %1349 = vmatprep.subr.bf16.mxu0 0
  %1350 = vmatpush2.bf16.msra.mxu0 0
  %1351 = vmatprep.subr.bf16.mxu0 0
  %1352 = vmatpush2.bf16.msra.mxu0 0
  %1353 = vmatprep.subr.bf16.mxu0 0
  %1354 = vmatpush2.bf16.msra.mxu0 0
  %1355 = vmatprep.mubr.bf16.mxu0 0
  %1356 = vmatmul.mubr.bf16.gmra.mxu0 %v1268
  %v1357 = vpop.f32.mrf.mxu0
  %v1358 = vadd.f32 0.0, %v1357
  %v1359 = vpop.f32.mrf.mxu0
  %v1360 = vadd.f32 0.0, %v1359
  %v1361 = vpop.f32.mrf.mxu0
  %v1362 = vpop.f32.mrf.mxu0
  %1363 = vdwg.mxu0
  %v1364 = vadd.f32 %v1137, %v1317
  %v1365 = vadd.f32 %v1138, %v1319
  %v1366 = vadd.f32 %v1139, %v1358
  %v1367 = vadd.f32 %v1140, %v1360
  %v1368 = vld [vmem:[%s0] sm:$0xff]
  %v1369 = vld [vmem:[%s0 + $0x8] sm:$0x3]
  %v1372 = vunpack.c.l.s4 1966171168
  %v1373 = vunpack.c.0.s8 %v1372
  %v1374 = vlaneseq
  %v1375 = vshrl.u32 %v1374, 7
  %v1376 = vsub.s32 %v1373, %v1375
  %v1377 = vrot.slane %v41, %v1376
  %v1378 = vcombine.high %v1377, %v1377
  %v1380 = vunpack.c.l.s4 1966171168
  %v1381 = vunpack.c.0.s8 %v1380
  %v1382 = vlaneseq
  %v1383 = vshrl.u32 %v1382, 7
  %v1384 = vsub.s32 %v1381, %v1383
  %v1385 = vrot.slane %v1377, %v1384
  %v1387 = vunpack.c.l.s4 1966171168
  %v1388 = vunpack.c.0.s8 %v1387
  %v1389 = vlaneseq
  %v1390 = vshrl.u32 %v1389, 7
  %v1391 = vsub.s32 %v1388, %v1390
  %v1392 = vrot.slane %v1378, %v1391
  %v1393 = vcombine.high %v1385, %v1385
  %v1394 = vcombine.high %v1392, %v1392
  %v1396 = vpack.i.b16 %v1385, %v1385
  %v1398 = vlaneseq
  %v1399 = vshrl.u32 %v1398, 7
  %v1400 = vsub.s32 0, %v1399
  %v1401 = vrot.slane %v1396, %v1400
  %v1403 = vpack.i.b16 %v1392, %v1392
  %v1405 = vlaneseq
  %v1406 = vshrl.u32 %v1405, 7
  %v1407 = vsub.s32 0, %v1406
  %v1408 = vrot.slane %v1403, %v1407
  %v1410 = vpack.i.b16 %v1393, %v1393
  %v1412 = vlaneseq
  %v1413 = vshrl.u32 %v1412, 7
  %v1414 = vsub.s32 0, %v1413
  %v1415 = vrot.slane %v1410, %v1414
  %v1417 = vpack.i.b16 %v1394, %v1394
  %v1419 = vlaneseq
  %v1420 = vshrl.u32 %v1419, 7
  %v1421 = vsub.s32 0, %v1420
  %v1422 = vrot.slane %v1417, %v1421
  %v1427 = vcombine.low %v1401, %v1408
  %v1428 = vcombine.low %v1415, %v1422
  %v1430 = vunpack.c.l.s4 1983009808
  %v1431 = vunpack.c.0.s8 %v1430
  %v1432 = vlaneseq
  %v1433 = vshrl.u32 %v1432, 7
  %v1434 = vsub.s32 %v1431, %v1433
  %v1435 = vrot.slane %v1427, %v1434
  %v1437 = vunpack.c.l.s4 1983009808
  %v1438 = vunpack.c.0.s8 %v1437
  %v1439 = vlaneseq
  %v1440 = vshrl.u32 %v1439, 7
  %v1441 = vsub.s32 %v1438, %v1440
  %v1442 = vrot.slane %v1428, %v1441
  %v1443 = vcombine.low %v1435, %v1442
  %1444 = vrot.lane.b32.xlu0 %v1443, 32
  %v1445 = vpop.permute.xlu0 %1444
  %v1446 = vrot.slane %v1445, 6
  %vm1447 = vcmask 261120
  %v1448 = vsel %vm1447, %v1446, %v1445
  %v1451 = vmul.bf16 %v1368, %v1448
  %v1452 = vmul.bf16 %v1369, %v1446
  %v1455 = vcombine.high %v1451, %v1451
  %v1457 = vunpack.c.l.s4 1983009808
  %v1458 = vunpack.c.0.s8 %v1457
  %v1459 = vlaneseq
  %v1460 = vshrl.u32 %v1459, 7
  %v1461 = vsub.s32 %v1458, %v1460
  %v1462 = vrot.slane %v1451, %v1461
  %v1464 = vunpack.c.l.s4 1983009808
  %v1465 = vunpack.c.0.s8 %v1464
  %v1466 = vlaneseq
  %v1467 = vshrl.u32 %v1466, 7
  %v1468 = vsub.s32 %v1465, %v1467
  %v1469 = vrot.slane %v1455, %v1468
  %v1470 = vcombine.high %v1462, %v1462
  %v1471 = vcombine.high %v1469, %v1469
  %v1473 = vunpack.c.l.s4 1983009808
  %v1474 = vunpack.c.0.s8 %v1473
  %v1475 = vlaneseq
  %v1476 = vshrl.u32 %v1475, 7
  %v1477 = vsub.s32 %v1474, %v1476
  %v1478 = vrot.slane %v1452, %v1477
  %1479 = vrot.lane.b32.xlu0 %v1462, 96
  %v1480 = vpop.permute.xlu0 %1479
  %1481 = vrot.lane.b32.xlu0 %v1470, 96
  %v1482 = vpop.permute.xlu0 %1481
  %1483 = vrot.lane.b32.xlu0 %v1469, 96
  %v1484 = vpop.permute.xlu0 %1483
  %1485 = vrot.lane.b32.xlu0 %v1471, 96
  %v1486 = vpop.permute.xlu0 %1485
  %1487 = vrot.lane.b32.xlu0 %v1478, 96
  %v1488 = vpop.permute.xlu0 %1487
  %vm1489 = vcmask 785408
  %v1490 = vsel %vm1489, %v1480, %v1482
  %v1491 = vsel %vm1489, %v1482, %v1484
  %v1492 = vsel %vm1489, %v1484, %v1486
  %v1493 = vsel %vm1489, %v1486, %v1488
  %v1495 = vsel %vm246, %v32, 0
  %v1498 = vsel %vm250, %v1490, 0
  %v1501 = vsel %vm250, %v1491, 0
  %v1504 = vsel %vm250, %v1492, 0
  %v1507 = vsel %vm250, %v1493, 0
  %1509 = vmatprep.subr.bf16.mxu0 0
  %1510 = vmatpush1.bf16.msra.mxu0 0
  %1511 = vmatprep.subr.bf16.mxu0 0
  %1512 = vmatpush1.bf16.msra.mxu0 0
  %1513 = vmatprep.subr.bf16.mxu0 0
  %1514 = vmatpush1.bf16.msra.mxu0 0
  %1515 = vmatprep.subr.bf16.mxu0 0
  %1516 = vmatpush1.bf16.msra.mxu0 0
  %1517 = vmatprep.subr.bf16.mxu0 0
  %1518 = vmatpush1.bf16.msra.mxu0 0
  %1519 = vmatprep.subr.bf16.mxu0 0
  %1520 = vmatpush1.bf16.msra.mxu0 0
  %1521 = vmatprep.subr.bf16.mxu0 0
  %1522 = vmatpush1.bf16.msra.mxu0 0
  %1523 = vmatprep.subr.bf16.mxu0 %v1501
  %1524 = vmatpush1.bf16.msra.mxu0 %v1498
  %1525 = vmatprep.subr.bf16.mxu0 0
  %1526 = vmatpush2.bf16.msra.mxu0 0
  %1527 = vmatprep.subr.bf16.mxu0 0
  %1528 = vmatpush2.bf16.msra.mxu0 0
  %1529 = vmatprep.subr.bf16.mxu0 0
  %1530 = vmatpush2.bf16.msra.mxu0 0
  %1531 = vmatprep.subr.bf16.mxu0 0
  %1532 = vmatpush2.bf16.msra.mxu0 0
  %1533 = vmatprep.subr.bf16.mxu0 0
  %1534 = vmatpush2.bf16.msra.mxu0 0
  %1535 = vmatprep.subr.bf16.mxu0 0
  %1536 = vmatpush2.bf16.msra.mxu0 0
  %1537 = vmatprep.subr.bf16.mxu0 0
  %1538 = vmatpush2.bf16.msra.mxu0 0
  %1539 = vmatprep.subr.bf16.mxu0 0
  %1540 = vmatpush2.bf16.msra.mxu0 0
  %1541 = vmatprep.mubr.bf16.mxu0 0
  %1542 = vmatmul.mubr.bf16.gmra.mxu0 %v1495
  %v1543 = vpop.f32.mrf.mxu0
  %v1544 = vadd.f32 0.0, %v1543
  %v1545 = vpop.f32.mrf.mxu0
  %v1546 = vadd.f32 0.0, %v1545
  %v1547 = vpop.f32.mrf.mxu0
  %v1548 = vpop.f32.mrf.mxu0
  %1549 = vdwg.mxu0
  %1550 = vmatprep.subr.bf16.mxu0 0
  %1551 = vmatpush1.bf16.msra.mxu0 0
  %1552 = vmatprep.subr.bf16.mxu0 0
  %1553 = vmatpush1.bf16.msra.mxu0 0
  %1554 = vmatprep.subr.bf16.mxu0 0
  %1555 = vmatpush1.bf16.msra.mxu0 0
  %1556 = vmatprep.subr.bf16.mxu0 0
  %1557 = vmatpush1.bf16.msra.mxu0 0
  %1558 = vmatprep.subr.bf16.mxu0 0
  %1559 = vmatpush1.bf16.msra.mxu0 0
  %1560 = vmatprep.subr.bf16.mxu0 0
  %1561 = vmatpush1.bf16.msra.mxu0 0
  %1562 = vmatprep.subr.bf16.mxu0 0
  %1563 = vmatpush1.bf16.msra.mxu0 0
  %1564 = vmatprep.subr.bf16.mxu0 %v1507
  %1565 = vmatpush1.bf16.msra.mxu0 %v1504
  %1566 = vmatprep.subr.bf16.mxu0 0
  %1567 = vmatpush2.bf16.msra.mxu0 0
  %1568 = vmatprep.subr.bf16.mxu0 0
  %1569 = vmatpush2.bf16.msra.mxu0 0
  %1570 = vmatprep.subr.bf16.mxu0 0
  %1571 = vmatpush2.bf16.msra.mxu0 0
  %1572 = vmatprep.subr.bf16.mxu0 0
  %1573 = vmatpush2.bf16.msra.mxu0 0
  %1574 = vmatprep.subr.bf16.mxu0 0
  %1575 = vmatpush2.bf16.msra.mxu0 0
  %1576 = vmatprep.subr.bf16.mxu0 0
  %1577 = vmatpush2.bf16.msra.mxu0 0
  %1578 = vmatprep.subr.bf16.mxu0 0
  %1579 = vmatpush2.bf16.msra.mxu0 0
  %1580 = vmatprep.subr.bf16.mxu0 0
  %1581 = vmatpush2.bf16.msra.mxu0 0
  %1582 = vmatprep.mubr.bf16.mxu0 0
  %1583 = vmatmul.mubr.bf16.gmra.mxu0 %v1495
  %v1584 = vpop.f32.mrf.mxu0
  %v1585 = vadd.f32 0.0, %v1584
  %v1586 = vpop.f32.mrf.mxu0
  %v1587 = vadd.f32 0.0, %v1586
  %v1588 = vpop.f32.mrf.mxu0
  %v1589 = vpop.f32.mrf.mxu0
  %1590 = vdwg.mxu0
  %v1591 = vadd.f32 %v1364, %v1544
  %v1592 = vadd.f32 %v1365, %v1546
  %v1593 = vadd.f32 %v1366, %v1585
  %v1594 = vadd.f32 %v1367, %v1587
  %v1595 = vld [vmem:[%s0] sm:$0xff]
  %v1596 = vld [vmem:[%s0 + $0x8] sm:$0x3]
  %v1599 = vunpack.c.l.s4 1966171168
  %v1600 = vunpack.c.0.s8 %v1599
  %v1601 = vlaneseq
  %v1602 = vshrl.u32 %v1601, 7
  %v1603 = vsub.s32 %v1600, %v1602
  %v1604 = vrot.slane %v42, %v1603
  %v1605 = vcombine.high %v1604, %v1604
  %v1607 = vunpack.c.l.s4 1966171168
  %v1608 = vunpack.c.0.s8 %v1607
  %v1609 = vlaneseq
  %v1610 = vshrl.u32 %v1609, 7
  %v1611 = vsub.s32 %v1608, %v1610
  %v1612 = vrot.slane %v1604, %v1611
  %v1614 = vunpack.c.l.s4 1966171168
  %v1615 = vunpack.c.0.s8 %v1614
  %v1616 = vlaneseq
  %v1617 = vshrl.u32 %v1616, 7
  %v1618 = vsub.s32 %v1615, %v1617
  %v1619 = vrot.slane %v1605, %v1618
  %v1620 = vcombine.high %v1612, %v1612
  %v1621 = vcombine.high %v1619, %v1619
  %v1623 = vpack.i.b16 %v1612, %v1612
  %v1625 = vlaneseq
  %v1626 = vshrl.u32 %v1625, 7
  %v1627 = vsub.s32 0, %v1626
  %v1628 = vrot.slane %v1623, %v1627
  %v1630 = vpack.i.b16 %v1619, %v1619
  %v1632 = vlaneseq
  %v1633 = vshrl.u32 %v1632, 7
  %v1634 = vsub.s32 0, %v1633
  %v1635 = vrot.slane %v1630, %v1634
  %v1637 = vpack.i.b16 %v1620, %v1620
  %v1639 = vlaneseq
  %v1640 = vshrl.u32 %v1639, 7
  %v1641 = vsub.s32 0, %v1640
  %v1642 = vrot.slane %v1637, %v1641
  %v1644 = vpack.i.b16 %v1621, %v1621
  %v1646 = vlaneseq
  %v1647 = vshrl.u32 %v1646, 7
  %v1648 = vsub.s32 0, %v1647
  %v1649 = vrot.slane %v1644, %v1648
  %v1654 = vcombine.low %v1628, %v1635
  %v1655 = vcombine.low %v1642, %v1649
  %v1657 = vunpack.c.l.s4 1983009808
  %v1658 = vunpack.c.0.s8 %v1657
  %v1659 = vlaneseq
  %v1660 = vshrl.u32 %v1659, 7
  %v1661 = vsub.s32 %v1658, %v1660
  %v1662 = vrot.slane %v1654, %v1661
  %v1664 = vunpack.c.l.s4 1983009808
  %v1665 = vunpack.c.0.s8 %v1664
  %v1666 = vlaneseq
  %v1667 = vshrl.u32 %v1666, 7
  %v1668 = vsub.s32 %v1665, %v1667
  %v1669 = vrot.slane %v1655, %v1668
  %v1670 = vcombine.low %v1662, %v1669
  %1671 = vrot.lane.b32.xlu0 %v1670, 33
  %v1672 = vpop.permute.xlu0 %1671
  %v1673 = vrot.slane %v1672, 6
  %vm1674 = vcmask 269312
  %v1675 = vsel %vm1674, %v1673, %v1672
  %v1678 = vmul.bf16 %v1595, %v1675
  %v1679 = vmul.bf16 %v1596, %v1673
  %v1682 = vcombine.high %v1678, %v1678
  %v1684 = vunpack.c.l.s4 1983009808
  %v1685 = vunpack.c.0.s8 %v1684
  %v1686 = vlaneseq
  %v1687 = vshrl.u32 %v1686, 7
  %v1688 = vsub.s32 %v1685, %v1687
  %v1689 = vrot.slane %v1678, %v1688
  %v1691 = vunpack.c.l.s4 1983009808
  %v1692 = vunpack.c.0.s8 %v1691
  %v1693 = vlaneseq
  %v1694 = vshrl.u32 %v1693, 7
  %v1695 = vsub.s32 %v1692, %v1694
  %v1696 = vrot.slane %v1682, %v1695
  %v1697 = vcombine.high %v1689, %v1689
  %v1698 = vcombine.high %v1696, %v1696
  %v1700 = vunpack.c.l.s4 1983009808
  %v1701 = vunpack.c.0.s8 %v1700
  %v1702 = vlaneseq
  %v1703 = vshrl.u32 %v1702, 7
  %v1704 = vsub.s32 %v1701, %v1703
  %v1705 = vrot.slane %v1679, %v1704
  %1706 = vrot.lane.b32.xlu0 %v1689, 95
  %v1707 = vpop.permute.xlu0 %1706
  %1708 = vrot.lane.b32.xlu0 %v1697, 95
  %v1709 = vpop.permute.xlu0 %1708
  %1710 = vrot.lane.b32.xlu0 %v1696, 95
  %v1711 = vpop.permute.xlu0 %1710
  %1712 = vrot.lane.b32.xlu0 %v1698, 95
  %v1713 = vpop.permute.xlu0 %1712
  %1714 = vrot.lane.b32.xlu0 %v1705, 95
  %v1715 = vpop.permute.xlu0 %1714
  %vm1716 = vcmask 777216
  %v1717 = vsel %vm1716, %v1707, %v1709
  %v1718 = vsel %vm1716, %v1709, %v1711
  %v1719 = vsel %vm1716, %v1711, %v1713
  %v1720 = vsel %vm1716, %v1713, %v1715
  %v1722 = vsel %vm246, %v33, 0
  %v1725 = vsel %vm250, %v1717, 0
  %v1728 = vsel %vm250, %v1718, 0
  %v1731 = vsel %vm250, %v1719, 0
  %v1734 = vsel %vm250, %v1720, 0
  %1736 = vmatprep.subr.bf16.mxu0 0
  %1737 = vmatpush1.bf16.msra.mxu0 0
  %1738 = vmatprep.subr.bf16.mxu0 0
  %1739 = vmatpush1.bf16.msra.mxu0 0
  %1740 = vmatprep.subr.bf16.mxu0 0
  %1741 = vmatpush1.bf16.msra.mxu0 0
  %1742 = vmatprep.subr.bf16.mxu0 0
  %1743 = vmatpush1.bf16.msra.mxu0 0
  %1744 = vmatprep.subr.bf16.mxu0 0
  %1745 = vmatpush1.bf16.msra.mxu0 0
  %1746 = vmatprep.subr.bf16.mxu0 0
  %1747 = vmatpush1.bf16.msra.mxu0 0
  %1748 = vmatprep.subr.bf16.mxu0 0
  %1749 = vmatpush1.bf16.msra.mxu0 0
  %1750 = vmatprep.subr.bf16.mxu0 %v1728
  %1751 = vmatpush1.bf16.msra.mxu0 %v1725
  %1752 = vmatprep.subr.bf16.mxu0 0
  %1753 = vmatpush2.bf16.msra.mxu0 0
  %1754 = vmatprep.subr.bf16.mxu0 0
  %1755 = vmatpush2.bf16.msra.mxu0 0
  %1756 = vmatprep.subr.bf16.mxu0 0
  %1757 = vmatpush2.bf16.msra.mxu0 0
  %1758 = vmatprep.subr.bf16.mxu0 0
  %1759 = vmatpush2.bf16.msra.mxu0 0
  %1760 = vmatprep.subr.bf16.mxu0 0
  %1761 = vmatpush2.bf16.msra.mxu0 0
  %1762 = vmatprep.subr.bf16.mxu0 0
  %1763 = vmatpush2.bf16.msra.mxu0 0
  %1764 = vmatprep.subr.bf16.mxu0 0
  %1765 = vmatpush2.bf16.msra.mxu0 0
  %1766 = vmatprep.subr.bf16.mxu0 0
  %1767 = vmatpush2.bf16.msra.mxu0 0
  %1768 = vmatprep.mubr.bf16.mxu0 0
  %1769 = vmatmul.mubr.bf16.gmra.mxu0 %v1722
  %v1770 = vpop.f32.mrf.mxu0
  %v1771 = vadd.f32 0.0, %v1770
  %v1772 = vpop.f32.mrf.mxu0
  %v1773 = vadd.f32 0.0, %v1772
  %v1774 = vpop.f32.mrf.mxu0
  %v1775 = vpop.f32.mrf.mxu0
  %1776 = vdwg.mxu0
  %1777 = vmatprep.subr.bf16.mxu0 0
  %1778 = vmatpush1.bf16.msra.mxu0 0
  %1779 = vmatprep.subr.bf16.mxu0 0
  %1780 = vmatpush1.bf16.msra.mxu0 0
  %1781 = vmatprep.subr.bf16.mxu0 0
  %1782 = vmatpush1.bf16.msra.mxu0 0
  %1783 = vmatprep.subr.bf16.mxu0 0
  %1784 = vmatpush1.bf16.msra.mxu0 0
  %1785 = vmatprep.subr.bf16.mxu0 0
  %1786 = vmatpush1.bf16.msra.mxu0 0
  %1787 = vmatprep.subr.bf16.mxu0 0
  %1788 = vmatpush1.bf16.msra.mxu0 0
  %1789 = vmatprep.subr.bf16.mxu0 0
  %1790 = vmatpush1.bf16.msra.mxu0 0
  %1791 = vmatprep.subr.bf16.mxu0 %v1734
  %1792 = vmatpush1.bf16.msra.mxu0 %v1731
  %1793 = vmatprep.subr.bf16.mxu0 0
  %1794 = vmatpush2.bf16.msra.mxu0 0
  %1795 = vmatprep.subr.bf16.mxu0 0
  %1796 = vmatpush2.bf16.msra.mxu0 0
  %1797 = vmatprep.subr.bf16.mxu0 0
  %1798 = vmatpush2.bf16.msra.mxu0 0
  %1799 = vmatprep.subr.bf16.mxu0 0
  %1800 = vmatpush2.bf16.msra.mxu0 0
  %1801 = vmatprep.subr.bf16.mxu0 0
  %1802 = vmatpush2.bf16.msra.mxu0 0
  %1803 = vmatprep.subr.bf16.mxu0 0
  %1804 = vmatpush2.bf16.msra.mxu0 0
  %1805 = vmatprep.subr.bf16.mxu0 0
  %1806 = vmatpush2.bf16.msra.mxu0 0
  %1807 = vmatprep.subr.bf16.mxu0 0
  %1808 = vmatpush2.bf16.msra.mxu0 0
  %1809 = vmatprep.mubr.bf16.mxu0 0
  %1810 = vmatmul.mubr.bf16.gmra.mxu0 %v1722
  %v1811 = vpop.f32.mrf.mxu0
  %v1812 = vadd.f32 0.0, %v1811
  %v1813 = vpop.f32.mrf.mxu0
  %v1814 = vadd.f32 0.0, %v1813
  %v1815 = vpop.f32.mrf.mxu0
  %v1816 = vpop.f32.mrf.mxu0
  %1817 = vdwg.mxu0
  %v1818 = vadd.f32 %v1591, %v1771
  %v1819 = vadd.f32 %v1592, %v1773
  %v1820 = vadd.f32 %v1593, %v1812
  %v1821 = vadd.f32 %v1594, %v1814
  %v1822 = vld [vmem:[%s0] sm:$0xff]
  %v1823 = vld [vmem:[%s0 + $0x8] sm:$0x3]
  %v1826 = vunpack.c.l.s4 1966171168
  %v1827 = vunpack.c.0.s8 %v1826
  %v1828 = vlaneseq
  %v1829 = vshrl.u32 %v1828, 7
  %v1830 = vsub.s32 %v1827, %v1829
  %v1831 = vrot.slane %v43, %v1830
  %v1832 = vcombine.high %v1831, %v1831
  %v1834 = vunpack.c.l.s4 1966171168
  %v1835 = vunpack.c.0.s8 %v1834
  %v1836 = vlaneseq
  %v1837 = vshrl.u32 %v1836, 7
  %v1838 = vsub.s32 %v1835, %v1837
  %v1839 = vrot.slane %v1831, %v1838
  %v1841 = vunpack.c.l.s4 1966171168
  %v1842 = vunpack.c.0.s8 %v1841
  %v1843 = vlaneseq
  %v1844 = vshrl.u32 %v1843, 7
  %v1845 = vsub.s32 %v1842, %v1844
  %v1846 = vrot.slane %v1832, %v1845
  %v1847 = vcombine.high %v1839, %v1839
  %v1848 = vcombine.high %v1846, %v1846
  %v1850 = vpack.i.b16 %v1839, %v1839
  %v1852 = vlaneseq
  %v1853 = vshrl.u32 %v1852, 7
  %v1854 = vsub.s32 0, %v1853
  %v1855 = vrot.slane %v1850, %v1854
  %v1857 = vpack.i.b16 %v1846, %v1846
  %v1859 = vlaneseq
  %v1860 = vshrl.u32 %v1859, 7
  %v1861 = vsub.s32 0, %v1860
  %v1862 = vrot.slane %v1857, %v1861
  %v1864 = vpack.i.b16 %v1847, %v1847
  %v1866 = vlaneseq
  %v1867 = vshrl.u32 %v1866, 7
  %v1868 = vsub.s32 0, %v1867
  %v1869 = vrot.slane %v1864, %v1868
  %v1871 = vpack.i.b16 %v1848, %v1848
  %v1873 = vlaneseq
  %v1874 = vshrl.u32 %v1873, 7
  %v1875 = vsub.s32 0, %v1874
  %v1876 = vrot.slane %v1871, %v1875
  %v1881 = vcombine.low %v1855, %v1862
  %v1882 = vcombine.low %v1869, %v1876
  %v1884 = vunpack.c.l.s4 1983009808
  %v1885 = vunpack.c.0.s8 %v1884
  %v1886 = vlaneseq
  %v1887 = vshrl.u32 %v1886, 7
  %v1888 = vsub.s32 %v1885, %v1887
  %v1889 = vrot.slane %v1881, %v1888
  %v1891 = vunpack.c.l.s4 1983009808
  %v1892 = vunpack.c.0.s8 %v1891
  %v1893 = vlaneseq
  %v1894 = vshrl.u32 %v1893, 7
  %v1895 = vsub.s32 %v1892, %v1894
  %v1896 = vrot.slane %v1882, %v1895
  %v1897 = vcombine.low %v1889, %v1896
  %1898 = vrot.lane.b32.xlu0 %v1897, 34
  %v1899 = vpop.permute.xlu0 %1898
  %v1900 = vrot.slane %v1899, 6
  %vm1901 = vcmask 277504
  %v1902 = vsel %vm1901, %v1900, %v1899
  %v1905 = vmul.bf16 %v1822, %v1902
  %v1906 = vmul.bf16 %v1823, %v1900
  %v1909 = vcombine.high %v1905, %v1905
  %v1911 = vunpack.c.l.s4 1983009808
  %v1912 = vunpack.c.0.s8 %v1911
  %v1913 = vlaneseq
  %v1914 = vshrl.u32 %v1913, 7
  %v1915 = vsub.s32 %v1912, %v1914
  %v1916 = vrot.slane %v1905, %v1915
  %v1918 = vunpack.c.l.s4 1983009808
  %v1919 = vunpack.c.0.s8 %v1918
  %v1920 = vlaneseq
  %v1921 = vshrl.u32 %v1920, 7
  %v1922 = vsub.s32 %v1919, %v1921
  %v1923 = vrot.slane %v1909, %v1922
  %v1924 = vcombine.high %v1916, %v1916
  %v1925 = vcombine.high %v1923, %v1923
  %v1927 = vunpack.c.l.s4 1983009808
  %v1928 = vunpack.c.0.s8 %v1927
  %v1929 = vlaneseq
  %v1930 = vshrl.u32 %v1929, 7
  %v1931 = vsub.s32 %v1928, %v1930
  %v1932 = vrot.slane %v1906, %v1931
  %1933 = vrot.lane.b32.xlu0 %v1916, 94
  %v1934 = vpop.permute.xlu0 %1933
  %1935 = vrot.lane.b32.xlu0 %v1924, 94
  %v1936 = vpop.permute.xlu0 %1935
  %1937 = vrot.lane.b32.xlu0 %v1923, 94
  %v1938 = vpop.permute.xlu0 %1937
  %1939 = vrot.lane.b32.xlu0 %v1925, 94
  %v1940 = vpop.permute.xlu0 %1939
  %1941 = vrot.lane.b32.xlu0 %v1932, 94
  %v1942 = vpop.permute.xlu0 %1941
  %vm1943 = vcmask 769024
  %v1944 = vsel %vm1943, %v1934, %v1936
  %v1945 = vsel %vm1943, %v1936, %v1938
  %v1946 = vsel %vm1943, %v1938, %v1940
  %v1947 = vsel %vm1943, %v1940, %v1942
  %v1949 = vsel %vm246, %v34, 0
  %v1952 = vsel %vm250, %v1944, 0
  %v1955 = vsel %vm250, %v1945, 0
  %v1958 = vsel %vm250, %v1946, 0
  %v1961 = vsel %vm250, %v1947, 0
  %1963 = vmatprep.subr.bf16.mxu0 0
  %1964 = vmatpush1.bf16.msra.mxu0 0
  %1965 = vmatprep.subr.bf16.mxu0 0
  %1966 = vmatpush1.bf16.msra.mxu0 0
  %1967 = vmatprep.subr.bf16.mxu0 0
  %1968 = vmatpush1.bf16.msra.mxu0 0
  %1969 = vmatprep.subr.bf16.mxu0 0
  %1970 = vmatpush1.bf16.msra.mxu0 0
  %1971 = vmatprep.subr.bf16.mxu0 0
  %1972 = vmatpush1.bf16.msra.mxu0 0
  %1973 = vmatprep.subr.bf16.mxu0 0
  %1974 = vmatpush1.bf16.msra.mxu0 0
  %1975 = vmatprep.subr.bf16.mxu0 0
  %1976 = vmatpush1.bf16.msra.mxu0 0
  %1977 = vmatprep.subr.bf16.mxu0 %v1955
  %1978 = vmatpush1.bf16.msra.mxu0 %v1952
  %1979 = vmatprep.subr.bf16.mxu0 0
  %1980 = vmatpush2.bf16.msra.mxu0 0
  %1981 = vmatprep.subr.bf16.mxu0 0
  %1982 = vmatpush2.bf16.msra.mxu0 0
  %1983 = vmatprep.subr.bf16.mxu0 0
  %1984 = vmatpush2.bf16.msra.mxu0 0
  %1985 = vmatprep.subr.bf16.mxu0 0
  %1986 = vmatpush2.bf16.msra.mxu0 0
  %1987 = vmatprep.subr.bf16.mxu0 0
  %1988 = vmatpush2.bf16.msra.mxu0 0
  %1989 = vmatprep.subr.bf16.mxu0 0
  %1990 = vmatpush2.bf16.msra.mxu0 0
  %1991 = vmatprep.subr.bf16.mxu0 0
  %1992 = vmatpush2.bf16.msra.mxu0 0
  %1993 = vmatprep.subr.bf16.mxu0 0
  %1994 = vmatpush2.bf16.msra.mxu0 0
  %1995 = vmatprep.mubr.bf16.mxu0 0
  %1996 = vmatmul.mubr.bf16.gmra.mxu0 %v1949
  %v1997 = vpop.f32.mrf.mxu0
  %v1998 = vadd.f32 0.0, %v1997
  %v1999 = vpop.f32.mrf.mxu0
  %v2000 = vadd.f32 0.0, %v1999
  %v2001 = vpop.f32.mrf.mxu0
  %v2002 = vpop.f32.mrf.mxu0
  %2003 = vdwg.mxu0
  %2004 = vmatprep.subr.bf16.mxu0 0
  %2005 = vmatpush1.bf16.msra.mxu0 0
  %2006 = vmatprep.subr.bf16.mxu0 0
  %2007 = vmatpush1.bf16.msra.mxu0 0
  %2008 = vmatprep.subr.bf16.mxu0 0
  %2009 = vmatpush1.bf16.msra.mxu0 0
  %2010 = vmatprep.subr.bf16.mxu0 0
  %2011 = vmatpush1.bf16.msra.mxu0 0
  %2012 = vmatprep.subr.bf16.mxu0 0
  %2013 = vmatpush1.bf16.msra.mxu0 0
  %2014 = vmatprep.subr.bf16.mxu0 0
  %2015 = vmatpush1.bf16.msra.mxu0 0
  %2016 = vmatprep.subr.bf16.mxu0 0
  %2017 = vmatpush1.bf16.msra.mxu0 0
  %2018 = vmatprep.subr.bf16.mxu0 %v1961
  %2019 = vmatpush1.bf16.msra.mxu0 %v1958
  %2020 = vmatprep.subr.bf16.mxu0 0
  %2021 = vmatpush2.bf16.msra.mxu0 0
  %2022 = vmatprep.subr.bf16.mxu0 0
  %2023 = vmatpush2.bf16.msra.mxu0 0
  %2024 = vmatprep.subr.bf16.mxu0 0
  %2025 = vmatpush2.bf16.msra.mxu0 0
  %2026 = vmatprep.subr.bf16.mxu0 0
  %2027 = vmatpush2.bf16.msra.mxu0 0
  %2028 = vmatprep.subr.bf16.mxu0 0
  %2029 = vmatpush2.bf16.msra.mxu0 0
  %2030 = vmatprep.subr.bf16.mxu0 0
  %2031 = vmatpush2.bf16.msra.mxu0 0
  %2032 = vmatprep.subr.bf16.mxu0 0
  %2033 = vmatpush2.bf16.msra.mxu0 0
  %2034 = vmatprep.subr.bf16.mxu0 0
  %2035 = vmatpush2.bf16.msra.mxu0 0
  %2036 = vmatprep.mubr.bf16.mxu0 0
  %2037 = vmatmul.mubr.bf16.gmra.mxu0 %v1949
  %v2038 = vpop.f32.mrf.mxu0
  %v2039 = vadd.f32 0.0, %v2038
  %v2040 = vpop.f32.mrf.mxu0
  %v2041 = vadd.f32 0.0, %v2040
  %v2042 = vpop.f32.mrf.mxu0
  %v2043 = vpop.f32.mrf.mxu0
  %2044 = vdwg.mxu0
  %v2045 = vadd.f32 %v1818, %v1998
  %v2046 = vadd.f32 %v1819, %v2000
  %v2047 = vadd.f32 %v1820, %v2039
  %v2048 = vadd.f32 %v1821, %v2041
  %v2049 = vld [vmem:[%s3] sm:$0xf]
  %2051 = vset.pattern.permute.xlu0 0
  %2052 = vperm.xlu0 %2051, %v2049
  %v2053 = vpop.permute.xlu0 %2052
  %v2055 = vmul.f32 %v2045, %v2053
  %v2056 = vmul.f32 %v2046, %v2053
  %v2057 = vmul.f32 %v2047, %v2053
  %v2058 = vmul.f32 %v2048, %v2053
  %v2059 = vld [vmem:[%s4] sm:$0xf]
  %2061 = vset.pattern.permute.xlu0 0
  %2062 = vperm.xlu0 %2061, %v2059
  %v2063 = vpop.permute.xlu0 %2062
  %v2065 = vadd.f32 %v2055, %v2063
  %v2066 = vadd.f32 %v2056, %v2063
  %v2067 = vadd.f32 %v2057, %v2063
  %v2068 = vadd.f32 %v2058, %v2063
  %v2069 = vld [vmem:[#allocation2] sm:$0x1]
  %vm2070 = vcmp.gt.f32.partialorder %v2065, 0.0
  %vm2071 = vcmp.gt.f32.partialorder %v2066, 0.0
  %vm2072 = vcmp.gt.f32.partialorder %v2067, 0.0
  %vm2073 = vcmp.gt.f32.partialorder %v2068, 0.0
  %v2075 = vlaneseq
  %v2076 = vshrl.u32 %v2075, 7
  %v2077 = vsub.s32 0, %v2076
  %v2078 = vrot.slane %v2069, %v2077
  %2079 = vset.pattern.permute.xlu0 0
  %2080 = vperm.xlu0 %2079, %v2078
  %v2081 = vpop.permute.xlu0 %2080
  %v2083 = vmul.f32 %v2081, %v2065
  %v2084 = vmul.f32 %v2081, %v2066
  %v2085 = vmul.f32 %v2081, %v2067
  %v2086 = vmul.f32 %v2081, %v2068
  %v2087 = vsel %vm2070, %v2065, %v2083
  %v2088 = vsel %vm2071, %v2066, %v2084
  %v2089 = vsel %vm2072, %v2067, %v2085
  %v2090 = vsel %vm2073, %v2068, %v2086
  %v2091 = vpack.c.bf16 %v2087, %v2087
  %v2092 = vpack.c.bf16 %v2088, %v2088
  %v2093 = vpack.c.bf16 %v2089, %v2089
  %v2094 = vpack.c.bf16 %v2090, %v2090
  %v2099 = vcombine.low %v2091, %v2092
  %v2100 = vcombine.low %v2093, %v2094
  %v2102 = vunpack.c.l.s4 1983009808
  %v2103 = vunpack.c.0.s8 %v2102
  %v2104 = vlaneseq
  %v2105 = vshrl.u32 %v2104, 7
  %v2106 = vsub.s32 %v2103, %v2105
  %v2107 = vrot.slane %v2099, %v2106
  %v2109 = vunpack.c.l.s4 1983009808
  %v2110 = vunpack.c.0.s8 %v2109
  %v2111 = vlaneseq
  %v2112 = vshrl.u32 %v2111, 7
  %v2113 = vsub.s32 %v2110, %v2112
  %v2114 = vrot.slane %v2100, %v2113
  %v2115 = vcombine.low %v2107, %v2114
  %2117 = vst [vmem:[%s6] sm:$0xff] %v2115
  // Predicated region
  $region26: #{dpblock_forward.6} parent=0 // pred_check
    _
  $region27: #{dpblock_forward.6} parent=0 // pred_check_branch
    %2119 = sbr.rel (0) target = $region29
  $region28: #{dpblock_forward.6} parent=0 // pred_region
    _
  $region29: #{dpblock_forward.6} parent=0 // pred_fallthru
    _
  // Predicated region
  $region30: #{dpblock_forward.6} parent=0 // pred_check
    _
  $region31: #{dpblock_forward.6} parent=0 // pred_check_branch
    %2121 = sbr.rel (0) target = $region33
  $region32: #{dpblock_forward.6} parent=0 // pred_region
    _
  $region33: #{dpblock_forward.6} parent=0 // pred_fallthru
    _

// kernel: dpblock_forward.9
$region0: #{dpblock_forward.9}
  #allocation0 [shape = 'u32[]', space=smem, size = 0x4, offset = 0x4, fixed_abs, tag = 'smem constant byte address 0x4 - core index']
  #allocation1 [shape = 'u32[144,128]{1,0:T(1,128)}', space=vmem, size = 0x12000, scoped, tag = 'internal scratch']
  #allocation2 [shape = 'f32[1,1]{1,0:T(1,128)S(1)}', space=vmem, size = 0x200, scoped, tag = 'scoped memory for dpblock_forward.9']
  %s0 = inlined_call_operand.vmem [shape: bf16[12,546], index: 0, kind: input, shape index: {}]
  %s1 = inlined_call_operand.vmem [shape: bf16[9,4,12], index: 1, kind: input, shape index: {}]
  %s2 = inlined_call_operand.vmem [shape: bf16[9,1,512], index: 2, kind: input, shape index: {}]
  %s3 = inlined_call_operand.vmem [shape: f32[4,1], index: 3, kind: input, shape index: {}]
  %s4 = inlined_call_operand.vmem [shape: f32[4,1], index: 4, kind: input, shape index: {}]
  %s5 = inlined_call_operand.<no memory space> [shape: f32[1,1], index: 5, kind: input, shape index: {}]
  %s6 = inlined_call_operand.vmem [shape: bf16[4,512], index: 6, kind: input, shape index: {}]
  %s7 = inlined_call_operand.vmem [shape: bf16[4,512], index: 7, kind: output, shape index: {}]
  %s8 = sld [smem:[#allocation0]]
  $region38: #{dpblock_forward.9} parent=0
    _
  %s10 = ssub.s32 1, %s8
  %s11 = scalar_select 0, %s10, %s8
  %v12 = vstv %s5
  %13 = vst [vmem:[#allocation2] sm:$0x1] %v12
  // Predicated region
  $region2: #{dpblock_forward.9} parent=0 // pred_check
    _
  $region3: #{dpblock_forward.9} parent=0 // pred_check_branch
    %15 = sbr.rel (0) target = $region5
  $region4: #{dpblock_forward.9} parent=0 // pred_region
    _
  $region5: #{dpblock_forward.9} parent=0 // pred_fallthru
    _
  // Predicated region
  $region6: #{dpblock_forward.9} parent=0 // pred_check
    _
  $region7: #{dpblock_forward.9} parent=0 // pred_check_branch
    %17 = sbr.rel (0) target = $region9
  $region8: #{dpblock_forward.9} parent=0 // pred_region
    _
  $region9: #{dpblock_forward.9} parent=0 // pred_fallthru
    _
  // Predicated region
  $region10: #{dpblock_forward.9} parent=0 // pred_check
    _
  $region11: #{dpblock_forward.9} parent=0 // pred_check_branch
    %19 = sbr.rel (0) target = $region13
  $region12: #{dpblock_forward.9} parent=0 // pred_region
    _
  $region13: #{dpblock_forward.9} parent=0 // pred_fallthru
    _
  // Predicated region
  $region14: #{dpblock_forward.9} parent=0 // pred_check
    _
  $region15: #{dpblock_forward.9} parent=0 // pred_check_branch
    %21 = sbr.rel (0) target = $region17
  $region16: #{dpblock_forward.9} parent=0 // pred_region
    _
  $region17: #{dpblock_forward.9} parent=0 // pred_fallthru
    _
  // Predicated region
  $region18: #{dpblock_forward.9} parent=0 // pred_check
    _
  $region19: #{dpblock_forward.9} parent=0 // pred_check_branch
    %23 = sbr.rel (0) target = $region21
  $region20: #{dpblock_forward.9} parent=0 // pred_region
    _
  $region21: #{dpblock_forward.9} parent=0 // pred_fallthru
    _
  // Predicated region
  $region22: #{dpblock_forward.9} parent=0 // pred_check
    _
  $region23: #{dpblock_forward.9} parent=0 // pred_check_branch
    %25 = sbr.rel (0) target = $region25
  $region24: #{dpblock_forward.9} parent=0 // pred_region
    _
  $region25: #{dpblock_forward.9} parent=0 // pred_fallthru
    _
  // Predicated region
  $region26: #{dpblock_forward.9} parent=0 // pred_check
    _
  $region27: #{dpblock_forward.9} parent=0 // pred_check_branch
    %27 = sbr.rel (0) target = $region29
  $region28: #{dpblock_forward.9} parent=0 // pred_region
    _
  $region29: #{dpblock_forward.9} parent=0 // pred_fallthru
    _
  %v29 = vld [vmem:[%s1] sm:$0x3]
  %v30 = vld [vmem:[%s1 + $0x2] sm:$0x3]
  %v31 = vld [vmem:[%s1 + $0x4] sm:$0x3]
  %v32 = vld [vmem:[%s1 + $0x6] sm:$0x3]
  %v33 = vld [vmem:[%s1 + $0x8] sm:$0x3]
  %v34 = vld [vmem:[%s1 + $0xa] sm:$0x3]
  %v35 = vld [vmem:[%s1 + $0xc] sm:$0x3]
  %v36 = vld [vmem:[%s1 + $0xe] sm:$0x3]
  %v37 = vld [vmem:[%s1 + $0x10] sm:$0x3]
  %v38 = vld [vmem:[%s2] sm:$0xf]
  %v39 = vld [vmem:[%s2 + $0x4] sm:$0xf]
  %v40 = vld [vmem:[%s2 + $0x8] sm:$0xf]
  %v41 = vld [vmem:[%s2 + $0xc] sm:$0xf]
  %v42 = vld [vmem:[%s2 + $0x10] sm:$0xf]
  %v43 = vld [vmem:[%s2 + $0x14] sm:$0xf]
  %v44 = vld [vmem:[%s2 + $0x18] sm:$0xf]
  %v45 = vld [vmem:[%s2 + $0x1c] sm:$0xf]
  %v46 = vld [vmem:[%s2 + $0x20] sm:$0xf]
  %v47 = vld [vmem:[%s0] sm:$0xff]
  %v48 = vld [vmem:[%s0 + $0x8] sm:$0xff]
  %v49 = vld [vmem:[%s0 + $0x14] sm:$0x33]
  %v50 = vld [vmem:[%s0 + $0x1c] sm:$0x33]
  %v53 = vunpack.c.l.s4 1966171168
  %v54 = vunpack.c.0.s8 %v53
  %v55 = vlaneseq
  %v56 = vshrl.u32 %v55, 7
  %v57 = vsub.s32 %v54, %v56
  %v58 = vrot.slane %v38, %v57
  %v59 = vcombine.high %v58, %v58
  %v61 = vunpack.c.l.s4 1966171168
  %v62 = vunpack.c.0.s8 %v61
  %v63 = vlaneseq
  %v64 = vshrl.u32 %v63, 7
  %v65 = vsub.s32 %v62, %v64
  %v66 = vrot.slane %v58, %v65
  %v68 = vunpack.c.l.s4 1966171168
  %v69 = vunpack.c.0.s8 %v68
  %v70 = vlaneseq
  %v71 = vshrl.u32 %v70, 7
  %v72 = vsub.s32 %v69, %v71
  %v73 = vrot.slane %v59, %v72
  %v74 = vcombine.high %v66, %v66
  %v75 = vcombine.high %v73, %v73
  %v77 = vpack.i.b16 %v66, %v66
  %v79 = vlaneseq
  %v80 = vshrl.u32 %v79, 7
  %v81 = vsub.s32 0, %v80
  %v82 = vrot.slane %v77, %v81
  %v84 = vpack.i.b16 %v73, %v73
  %v86 = vlaneseq
  %v87 = vshrl.u32 %v86, 7
  %v88 = vsub.s32 0, %v87
  %v89 = vrot.slane %v84, %v88
  %v91 = vpack.i.b16 %v74, %v74
  %v93 = vlaneseq
  %v94 = vshrl.u32 %v93, 7
  %v95 = vsub.s32 0, %v94
  %v96 = vrot.slane %v91, %v95
  %v98 = vpack.i.b16 %v75, %v75
  %v100 = vlaneseq
  %v101 = vshrl.u32 %v100, 7
  %v102 = vsub.s32 0, %v101
  %v103 = vrot.slane %v98, %v102
  %v108 = vunpack.c.l.b16 %v82
  %v109 = vunpack.c.l.b16 %v89
  %v110 = vunpack.c.l.b16 %v96
  %v111 = vunpack.c.l.b16 %v103
  %v112 = vpack.c.b16 %v109, %v108
  %v113 = vpack.c.b16 %v111, %v110
  %v116 = vmul.bf16 %v47, %v112
  %v117 = vmul.bf16 %v48, %v113
  %v118 = vmul.bf16 %v49, %v112
  %v119 = vmul.bf16 %v50, %v113
  %v120 = vld [vmem:[%s0 + $0x10] sm:$0xf]
  %v121 = vld [vmem:[%s0 + $0x24] sm:$0x3]
  %v124 = vunpack.c.l.s4 1966171168
  %v125 = vunpack.c.0.s8 %v124
  %v126 = vlaneseq
  %v127 = vshrl.u32 %v126, 7
  %v128 = vsub.s32 %v125, %v127
  %v129 = vrot.slane %v39, %v128
  %v130 = vcombine.high %v129, %v129
  %v132 = vunpack.c.l.s4 1966171168
  %v133 = vunpack.c.0.s8 %v132
  %v134 = vlaneseq
  %v135 = vshrl.u32 %v134, 7
  %v136 = vsub.s32 %v133, %v135
  %v137 = vrot.slane %v129, %v136
  %v139 = vunpack.c.l.s4 1966171168
  %v140 = vunpack.c.0.s8 %v139
  %v141 = vlaneseq
  %v142 = vshrl.u32 %v141, 7
  %v143 = vsub.s32 %v140, %v142
  %v144 = vrot.slane %v130, %v143
  %v145 = vcombine.high %v137, %v137
  %v146 = vcombine.high %v144, %v144
  %v148 = vpack.i.b16 %v137, %v137
  %v150 = vlaneseq
  %v151 = vshrl.u32 %v150, 7
  %v152 = vsub.s32 0, %v151
  %v153 = vrot.slane %v148, %v152
  %v155 = vpack.i.b16 %v144, %v144
  %v157 = vlaneseq
  %v158 = vshrl.u32 %v157, 7
  %v159 = vsub.s32 0, %v158
  %v160 = vrot.slane %v155, %v159
  %v162 = vpack.i.b16 %v145, %v145
  %v164 = vlaneseq
  %v165 = vshrl.u32 %v164, 7
  %v166 = vsub.s32 0, %v165
  %v167 = vrot.slane %v162, %v166
  %v169 = vpack.i.b16 %v146, %v146
  %v171 = vlaneseq
  %v172 = vshrl.u32 %v171, 7
  %v173 = vsub.s32 0, %v172
  %v174 = vrot.slane %v169, %v173
  %v179 = vunpack.c.l.b16 %v153
  %v180 = vunpack.c.l.b16 %v160
  %v181 = vunpack.c.l.b16 %v167
  %v182 = vunpack.c.l.b16 %v174
  %v183 = vpack.c.b16 %v180, %v179
  %v184 = vpack.c.b16 %v182, %v181
  %185 = vrot.lane.b32.xlu0 %v183, 1
  %v186 = vpop.permute.xlu0 %185
  %187 = vrot.lane.b32.xlu0 %v184, 1
  %v188 = vpop.permute.xlu0 %187
  %v189 = vrot.slane %v186, 4
  %v190 = vrot.slane %v188, 4
  %vm191 = vcmask 7168
  %v192 = vsel %vm191, %v189, %v186
  %vm193 = vcmask 1043456
  %v194 = vsel %vm193, %v189, %v190
  %v195 = vsel %vm191, %v194, %v188
  %v199 = vmul.bf16 %v47, %v192
  %v200 = vmul.bf16 %v48, %v195
  %v201 = vmul.bf16 %v120, %v190
  %v202 = vmul.bf16 %v49, %v192
  %v203 = vmul.bf16 %v50, %v195
  %v204 = vmul.bf16 %v121, %v190
  %v211 = vunpack.c.l.b16 %v199
  %v212 = vunpack.c.h.b16 %v199
  %v213 = vunpack.c.l.b16 %v200
  %v214 = vunpack.c.h.b16 %v200
  %v215 = vunpack.c.l.b16 %v201
  %v216 = vunpack.c.l.b16 %v202
  %v217 = vunpack.c.h.b16 %v202
  %v218 = vunpack.c.l.b16 %v203
  %v219 = vunpack.c.h.b16 %v203
  %v220 = vunpack.c.l.b16 %v204
  %v221 = vpack.c.b16 %v216, %v211
  %v222 = vpack.c.b16 %v217, %v212
  %v223 = vpack.c.b16 %v218, %v213
  %v224 = vpack.c.b16 %v219, %v214
  %v225 = vpack.c.b16 %v220, %v215
  %226 = vrot.lane.b32.xlu0 %v221, 127
  %v227 = vpop.permute.xlu0 %226
  %228 = vrot.lane.b32.xlu0 %v222, 127
  %v229 = vpop.permute.xlu0 %228
  %230 = vrot.lane.b32.xlu0 %v223, 127
  %v231 = vpop.permute.xlu0 %230
  %232 = vrot.lane.b32.xlu0 %v224, 127
  %v233 = vpop.permute.xlu0 %232
  %234 = vrot.lane.b32.xlu0 %v225, 127
  %v235 = vpop.permute.xlu0 %234
  %vm236 = vcmask 1039360
  %v237 = vsel %vm236, %v227, %v229
  %v238 = vsel %vm236, %v229, %v231
  %v239 = vsel %vm236, %v231, %v233
  %v240 = vsel %vm236, %v233, %v235
  %vm241 = vcmask 97280
  %v243 = vsel %vm241, %v30, 0
  %vm245 = vcmask 1045504
  %v247 = vsel %vm245, %v237, 0
  %v250 = vsel %vm245, %v238, 0
  %v253 = vsel %vm245, %v239, 0
  %v256 = vsel %vm245, %v240, 0
  %258 = vmatprep.subr.bf16.mxu0 0
  %259 = vmatpush1.bf16.msra.mxu0 0
  %260 = vmatprep.subr.bf16.mxu0 0
  %261 = vmatpush1.bf16.msra.mxu0 0
  %262 = vmatprep.subr.bf16.mxu0 0
  %263 = vmatpush1.bf16.msra.mxu0 0
  %264 = vmatprep.subr.bf16.mxu0 0
  %265 = vmatpush1.bf16.msra.mxu0 0
  %266 = vmatprep.subr.bf16.mxu0 0
  %267 = vmatpush1.bf16.msra.mxu0 0
  %268 = vmatprep.subr.bf16.mxu0 0
  %269 = vmatpush1.bf16.msra.mxu0 0
  %270 = vmatprep.subr.bf16.mxu0 0
  %271 = vmatpush1.bf16.msra.mxu0 0
  %272 = vmatprep.subr.bf16.mxu0 %v250
  %273 = vmatpush1.bf16.msra.mxu0 %v247
  %274 = vmatprep.subr.bf16.mxu0 0
  %275 = vmatpush2.bf16.msra.mxu0 0
  %276 = vmatprep.subr.bf16.mxu0 0
  %277 = vmatpush2.bf16.msra.mxu0 0
  %278 = vmatprep.subr.bf16.mxu0 0
  %279 = vmatpush2.bf16.msra.mxu0 0
  %280 = vmatprep.subr.bf16.mxu0 0
  %281 = vmatpush2.bf16.msra.mxu0 0
  %282 = vmatprep.subr.bf16.mxu0 0
  %283 = vmatpush2.bf16.msra.mxu0 0
  %284 = vmatprep.subr.bf16.mxu0 0
  %285 = vmatpush2.bf16.msra.mxu0 0
  %286 = vmatprep.subr.bf16.mxu0 0
  %287 = vmatpush2.bf16.msra.mxu0 0
  %288 = vmatprep.subr.bf16.mxu0 0
  %289 = vmatpush2.bf16.msra.mxu0 0
  %290 = vmatprep.mubr.bf16.mxu0 0
  %291 = vmatmul.mubr.bf16.gmra.mxu0 %v243
  %v292 = vpop.f32.mrf.mxu0
  %v293 = vadd.f32 0.0, %v292
  %v294 = vpop.f32.mrf.mxu0
  %v295 = vadd.f32 0.0, %v294
  %v296 = vpop.f32.mrf.mxu0
  %v297 = vpop.f32.mrf.mxu0
  %298 = vdwg.mxu0
  %299 = vmatprep.subr.bf16.mxu0 0
  %300 = vmatpush1.bf16.msra.mxu0 0
  %301 = vmatprep.subr.bf16.mxu0 0
  %302 = vmatpush1.bf16.msra.mxu0 0
  %303 = vmatprep.subr.bf16.mxu0 0
  %304 = vmatpush1.bf16.msra.mxu0 0
  %305 = vmatprep.subr.bf16.mxu0 0
  %306 = vmatpush1.bf16.msra.mxu0 0
  %307 = vmatprep.subr.bf16.mxu0 0
  %308 = vmatpush1.bf16.msra.mxu0 0
  %309 = vmatprep.subr.bf16.mxu0 0
  %310 = vmatpush1.bf16.msra.mxu0 0
  %311 = vmatprep.subr.bf16.mxu0 0
  %312 = vmatpush1.bf16.msra.mxu0 0
  %313 = vmatprep.subr.bf16.mxu0 %v256
  %314 = vmatpush1.bf16.msra.mxu0 %v253
  %315 = vmatprep.subr.bf16.mxu0 0
  %316 = vmatpush2.bf16.msra.mxu0 0
  %317 = vmatprep.subr.bf16.mxu0 0
  %318 = vmatpush2.bf16.msra.mxu0 0
  %319 = vmatprep.subr.bf16.mxu0 0
  %320 = vmatpush2.bf16.msra.mxu0 0
  %321 = vmatprep.subr.bf16.mxu0 0
  %322 = vmatpush2.bf16.msra.mxu0 0
  %323 = vmatprep.subr.bf16.mxu0 0
  %324 = vmatpush2.bf16.msra.mxu0 0
  %325 = vmatprep.subr.bf16.mxu0 0
  %326 = vmatpush2.bf16.msra.mxu0 0
  %327 = vmatprep.subr.bf16.mxu0 0
  %328 = vmatpush2.bf16.msra.mxu0 0
  %329 = vmatprep.subr.bf16.mxu0 0
  %330 = vmatpush2.bf16.msra.mxu0 0
  %331 = vmatprep.mubr.bf16.mxu0 0
  %332 = vmatmul.mubr.bf16.gmra.mxu0 %v243
  %v333 = vpop.f32.mrf.mxu0
  %v334 = vadd.f32 0.0, %v333
  %v335 = vpop.f32.mrf.mxu0
  %v336 = vadd.f32 0.0, %v335
  %v337 = vpop.f32.mrf.mxu0
  %v338 = vpop.f32.mrf.mxu0
  %339 = vdwg.mxu0
  %v344 = vunpack.c.l.b16 %v116
  %v345 = vunpack.c.h.b16 %v116
  %v346 = vunpack.c.l.b16 %v117
  %v347 = vunpack.c.h.b16 %v117
  %v348 = vunpack.c.l.b16 %v118
  %v349 = vunpack.c.h.b16 %v118
  %v350 = vunpack.c.l.b16 %v119
  %v351 = vunpack.c.h.b16 %v119
  %v352 = vpack.c.b16 %v348, %v344
  %v353 = vpack.c.b16 %v349, %v345
  %v354 = vpack.c.b16 %v350, %v346
  %v355 = vpack.c.b16 %v351, %v347
  %v357 = vsel %vm241, %v29, 0
  %v360 = vsel %vm245, %v352, 0
  %v363 = vsel %vm245, %v353, 0
  %v366 = vsel %vm245, %v354, 0
  %v369 = vsel %vm245, %v355, 0
  %371 = vmatprep.subr.bf16.mxu0 0
  %372 = vmatpush1.bf16.msra.mxu0 0
  %373 = vmatprep.subr.bf16.mxu0 0
  %374 = vmatpush1.bf16.msra.mxu0 0
  %375 = vmatprep.subr.bf16.mxu0 0
  %376 = vmatpush1.bf16.msra.mxu0 0
  %377 = vmatprep.subr.bf16.mxu0 0
  %378 = vmatpush1.bf16.msra.mxu0 0
  %379 = vmatprep.subr.bf16.mxu0 0
  %380 = vmatpush1.bf16.msra.mxu0 0
  %381 = vmatprep.subr.bf16.mxu0 0
  %382 = vmatpush1.bf16.msra.mxu0 0
  %383 = vmatprep.subr.bf16.mxu0 0
  %384 = vmatpush1.bf16.msra.mxu0 0
  %385 = vmatprep.subr.bf16.mxu0 %v363
  %386 = vmatpush1.bf16.msra.mxu0 %v360
  %387 = vmatprep.subr.bf16.mxu0 0
  %388 = vmatpush2.bf16.msra.mxu0 0
  %389 = vmatprep.subr.bf16.mxu0 0
  %390 = vmatpush2.bf16.msra.mxu0 0
  %391 = vmatprep.subr.bf16.mxu0 0
  %392 = vmatpush2.bf16.msra.mxu0 0
  %393 = vmatprep.subr.bf16.mxu0 0
  %394 = vmatpush2.bf16.msra.mxu0 0
  %395 = vmatprep.subr.bf16.mxu0 0
  %396 = vmatpush2.bf16.msra.mxu0 0
  %397 = vmatprep.subr.bf16.mxu0 0
  %398 = vmatpush2.bf16.msra.mxu0 0
  %399 = vmatprep.subr.bf16.mxu0 0
  %400 = vmatpush2.bf16.msra.mxu0 0
  %401 = vmatprep.subr.bf16.mxu0 0
  %402 = vmatpush2.bf16.msra.mxu0 0
  %403 = vmatprep.mubr.bf16.mxu0 0
  %404 = vmatmul.mubr.bf16.gmra.mxu0 %v357
  %v405 = vpop.f32.mrf.mxu0
  %v406 = vadd.f32 %v293, %v405
  %v407 = vpop.f32.mrf.mxu0
  %v408 = vadd.f32 %v295, %v407
  %v409 = vpop.f32.mrf.mxu0
  %v410 = vpop.f32.mrf.mxu0
  %411 = vdwg.mxu0
  %412 = vmatprep.subr.bf16.mxu0 0
  %413 = vmatpush1.bf16.msra.mxu0 0
  %414 = vmatprep.subr.bf16.mxu0 0
  %415 = vmatpush1.bf16.msra.mxu0 0
  %416 = vmatprep.subr.bf16.mxu0 0
  %417 = vmatpush1.bf16.msra.mxu0 0
  %418 = vmatprep.subr.bf16.mxu0 0
  %419 = vmatpush1.bf16.msra.mxu0 0
  %420 = vmatprep.subr.bf16.mxu0 0
  %421 = vmatpush1.bf16.msra.mxu0 0
  %422 = vmatprep.subr.bf16.mxu0 0
  %423 = vmatpush1.bf16.msra.mxu0 0
  %424 = vmatprep.subr.bf16.mxu0 0
  %425 = vmatpush1.bf16.msra.mxu0 0
  %426 = vmatprep.subr.bf16.mxu0 %v369
  %427 = vmatpush1.bf16.msra.mxu0 %v366
  %428 = vmatprep.subr.bf16.mxu0 0
  %429 = vmatpush2.bf16.msra.mxu0 0
  %430 = vmatprep.subr.bf16.mxu0 0
  %431 = vmatpush2.bf16.msra.mxu0 0
  %432 = vmatprep.subr.bf16.mxu0 0
  %433 = vmatpush2.bf16.msra.mxu0 0
  %434 = vmatprep.subr.bf16.mxu0 0
  %435 = vmatpush2.bf16.msra.mxu0 0
  %436 = vmatprep.subr.bf16.mxu0 0
  %437 = vmatpush2.bf16.msra.mxu0 0
  %438 = vmatprep.subr.bf16.mxu0 0
  %439 = vmatpush2.bf16.msra.mxu0 0
  %440 = vmatprep.subr.bf16.mxu0 0
  %441 = vmatpush2.bf16.msra.mxu0 0
  %442 = vmatprep.subr.bf16.mxu0 0
  %443 = vmatpush2.bf16.msra.mxu0 0
  %444 = vmatprep.mubr.bf16.mxu0 0
  %445 = vmatmul.mubr.bf16.gmra.mxu0 %v357
  %v446 = vpop.f32.mrf.mxu0
  %v447 = vadd.f32 %v334, %v446
  %v448 = vpop.f32.mrf.mxu0
  %v449 = vadd.f32 %v336, %v448
  %v450 = vpop.f32.mrf.mxu0
  %v451 = vpop.f32.mrf.mxu0
  %452 = vdwg.mxu0
  %v453 = vld [vmem:[%s0] sm:$0xff]
  %v454 = vld [vmem:[%s0 + $0x8] sm:$0xff]
  %v455 = vld [vmem:[%s0 + $0x10] sm:$0xf]
  %v456 = vld [vmem:[%s0 + $0x14] sm:$0x33]
  %v457 = vld [vmem:[%s0 + $0x1c] sm:$0x33]
  %v458 = vld [vmem:[%s0 + $0x24] sm:$0x3]
  %v461 = vunpack.c.l.s4 1966171168
  %v462 = vunpack.c.0.s8 %v461
  %v463 = vlaneseq
  %v464 = vshrl.u32 %v463, 7
  %v465 = vsub.s32 %v462, %v464
  %v466 = vrot.slane %v40, %v465
  %v467 = vcombine.high %v466, %v466
  %v469 = vunpack.c.l.s4 1966171168
  %v470 = vunpack.c.0.s8 %v469
  %v471 = vlaneseq
  %v472 = vshrl.u32 %v471, 7
  %v473 = vsub.s32 %v470, %v472
  %v474 = vrot.slane %v466, %v473
  %v476 = vunpack.c.l.s4 1966171168
  %v477 = vunpack.c.0.s8 %v476
  %v478 = vlaneseq
  %v479 = vshrl.u32 %v478, 7
  %v480 = vsub.s32 %v477, %v479
  %v481 = vrot.slane %v467, %v480
  %v482 = vcombine.high %v474, %v474
  %v483 = vcombine.high %v481, %v481
  %v485 = vpack.i.b16 %v474, %v474
  %v487 = vlaneseq
  %v488 = vshrl.u32 %v487, 7
  %v489 = vsub.s32 0, %v488
  %v490 = vrot.slane %v485, %v489
  %v492 = vpack.i.b16 %v481, %v481
  %v494 = vlaneseq
  %v495 = vshrl.u32 %v494, 7
  %v496 = vsub.s32 0, %v495
  %v497 = vrot.slane %v492, %v496
  %v499 = vpack.i.b16 %v482, %v482
  %v501 = vlaneseq
  %v502 = vshrl.u32 %v501, 7
  %v503 = vsub.s32 0, %v502
  %v504 = vrot.slane %v499, %v503
  %v506 = vpack.i.b16 %v483, %v483
  %v508 = vlaneseq
  %v509 = vshrl.u32 %v508, 7
  %v510 = vsub.s32 0, %v509
  %v511 = vrot.slane %v506, %v510
  %v516 = vunpack.c.l.b16 %v490
  %v517 = vunpack.c.l.b16 %v497
  %v518 = vunpack.c.l.b16 %v504
  %v519 = vunpack.c.l.b16 %v511
  %v520 = vpack.c.b16 %v517, %v516
  %v521 = vpack.c.b16 %v519, %v518
  %522 = vrot.lane.b32.xlu0 %v520, 2
  %v523 = vpop.permute.xlu0 %522
  %524 = vrot.lane.b32.xlu0 %v521, 2
  %v525 = vpop.permute.xlu0 %524
  %v526 = vrot.slane %v523, 4
  %v527 = vrot.slane %v525, 4
  %vm528 = vcmask 15360
  %v529 = vsel %vm528, %v526, %v523
  %v530 = vsel %vm193, %v526, %v527
  %v531 = vsel %vm528, %v530, %v525
  %v535 = vmul.bf16 %v453, %v529
  %v536 = vmul.bf16 %v454, %v531
  %v537 = vmul.bf16 %v455, %v527
  %v538 = vmul.bf16 %v456, %v529
  %v539 = vmul.bf16 %v457, %v531
  %v540 = vmul.bf16 %v458, %v527
  %v547 = vunpack.c.l.b16 %v535
  %v548 = vunpack.c.h.b16 %v535
  %v549 = vunpack.c.l.b16 %v536
  %v550 = vunpack.c.h.b16 %v536
  %v551 = vunpack.c.l.b16 %v537
  %v552 = vunpack.c.l.b16 %v538
  %v553 = vunpack.c.h.b16 %v538
  %v554 = vunpack.c.l.b16 %v539
  %v555 = vunpack.c.h.b16 %v539
  %v556 = vunpack.c.l.b16 %v540
  %v557 = vpack.c.b16 %v552, %v547
  %v558 = vpack.c.b16 %v553, %v548
  %v559 = vpack.c.b16 %v554, %v549
  %v560 = vpack.c.b16 %v555, %v550
  %v561 = vpack.c.b16 %v556, %v551
  %562 = vrot.lane.b32.xlu0 %v557, 126
  %v563 = vpop.permute.xlu0 %562
  %564 = vrot.lane.b32.xlu0 %v558, 126
  %v565 = vpop.permute.xlu0 %564
  %566 = vrot.lane.b32.xlu0 %v559, 126
  %v567 = vpop.permute.xlu0 %566
  %568 = vrot.lane.b32.xlu0 %v560, 126
  %v569 = vpop.permute.xlu0 %568
  %570 = vrot.lane.b32.xlu0 %v561, 126
  %v571 = vpop.permute.xlu0 %570
  %vm572 = vcmask 1031168
  %v573 = vsel %vm572, %v563, %v565
  %v574 = vsel %vm572, %v565, %v567
  %v575 = vsel %vm572, %v567, %v569
  %v576 = vsel %vm572, %v569, %v571
  %v578 = vsel %vm241, %v31, 0
  %v581 = vsel %vm245, %v573, 0
  %v584 = vsel %vm245, %v574, 0
  %v587 = vsel %vm245, %v575, 0
  %v590 = vsel %vm245, %v576, 0
  %592 = vmatprep.subr.bf16.mxu0 0
  %593 = vmatpush1.bf16.msra.mxu0 0
  %594 = vmatprep.subr.bf16.mxu0 0
  %595 = vmatpush1.bf16.msra.mxu0 0
  %596 = vmatprep.subr.bf16.mxu0 0
  %597 = vmatpush1.bf16.msra.mxu0 0
  %598 = vmatprep.subr.bf16.mxu0 0
  %599 = vmatpush1.bf16.msra.mxu0 0
  %600 = vmatprep.subr.bf16.mxu0 0
  %601 = vmatpush1.bf16.msra.mxu0 0
  %602 = vmatprep.subr.bf16.mxu0 0
  %603 = vmatpush1.bf16.msra.mxu0 0
  %604 = vmatprep.subr.bf16.mxu0 0
  %605 = vmatpush1.bf16.msra.mxu0 0
  %606 = vmatprep.subr.bf16.mxu0 %v584
  %607 = vmatpush1.bf16.msra.mxu0 %v581
  %608 = vmatprep.subr.bf16.mxu0 0
  %609 = vmatpush2.bf16.msra.mxu0 0
  %610 = vmatprep.subr.bf16.mxu0 0
  %611 = vmatpush2.bf16.msra.mxu0 0
  %612 = vmatprep.subr.bf16.mxu0 0
  %613 = vmatpush2.bf16.msra.mxu0 0
  %614 = vmatprep.subr.bf16.mxu0 0
  %615 = vmatpush2.bf16.msra.mxu0 0
  %616 = vmatprep.subr.bf16.mxu0 0
  %617 = vmatpush2.bf16.msra.mxu0 0
  %618 = vmatprep.subr.bf16.mxu0 0
  %619 = vmatpush2.bf16.msra.mxu0 0
  %620 = vmatprep.subr.bf16.mxu0 0
  %621 = vmatpush2.bf16.msra.mxu0 0
  %622 = vmatprep.subr.bf16.mxu0 0
  %623 = vmatpush2.bf16.msra.mxu0 0
  %624 = vmatprep.mubr.bf16.mxu0 0
  %625 = vmatmul.mubr.bf16.gmra.mxu0 %v578
  %v626 = vpop.f32.mrf.mxu0
  %v627 = vadd.f32 0.0, %v626
  %v628 = vpop.f32.mrf.mxu0
  %v629 = vadd.f32 0.0, %v628
  %v630 = vpop.f32.mrf.mxu0
  %v631 = vpop.f32.mrf.mxu0
  %632 = vdwg.mxu0
  %633 = vmatprep.subr.bf16.mxu0 0
  %634 = vmatpush1.bf16.msra.mxu0 0
  %635 = vmatprep.subr.bf16.mxu0 0
  %636 = vmatpush1.bf16.msra.mxu0 0
  %637 = vmatprep.subr.bf16.mxu0 0
  %638 = vmatpush1.bf16.msra.mxu0 0
  %639 = vmatprep.subr.bf16.mxu0 0
  %640 = vmatpush1.bf16.msra.mxu0 0
  %641 = vmatprep.subr.bf16.mxu0 0
  %642 = vmatpush1.bf16.msra.mxu0 0
  %643 = vmatprep.subr.bf16.mxu0 0
  %644 = vmatpush1.bf16.msra.mxu0 0
  %645 = vmatprep.subr.bf16.mxu0 0
  %646 = vmatpush1.bf16.msra.mxu0 0
  %647 = vmatprep.subr.bf16.mxu0 %v590
  %648 = vmatpush1.bf16.msra.mxu0 %v587
  %649 = vmatprep.subr.bf16.mxu0 0
  %650 = vmatpush2.bf16.msra.mxu0 0
  %651 = vmatprep.subr.bf16.mxu0 0
  %652 = vmatpush2.bf16.msra.mxu0 0
  %653 = vmatprep.subr.bf16.mxu0 0
  %654 = vmatpush2.bf16.msra.mxu0 0
  %655 = vmatprep.subr.bf16.mxu0 0
  %656 = vmatpush2.bf16.msra.mxu0 0
  %657 = vmatprep.subr.bf16.mxu0 0
  %658 = vmatpush2.bf16.msra.mxu0 0
  %659 = vmatprep.subr.bf16.mxu0 0
  %660 = vmatpush2.bf16.msra.mxu0 0
  %661 = vmatprep.subr.bf16.mxu0 0
  %662 = vmatpush2.bf16.msra.mxu0 0
  %663 = vmatprep.subr.bf16.mxu0 0
  %664 = vmatpush2.bf16.msra.mxu0 0
  %665 = vmatprep.mubr.bf16.mxu0 0
  %666 = vmatmul.mubr.bf16.gmra.mxu0 %v578
  %v667 = vpop.f32.mrf.mxu0
  %v668 = vadd.f32 0.0, %v667
  %v669 = vpop.f32.mrf.mxu0
  %v670 = vadd.f32 0.0, %v669
  %v671 = vpop.f32.mrf.mxu0
  %v672 = vpop.f32.mrf.mxu0
  %673 = vdwg.mxu0
  %v674 = vadd.f32 %v406, %v627
  %v675 = vadd.f32 %v408, %v629
  %v676 = vadd.f32 %v447, %v668
  %v677 = vadd.f32 %v449, %v670
  %v678 = vld [vmem:[%s0] sm:$0xff]
  %v679 = vld [vmem:[%s0 + $0x8] sm:$0xff]
  %v680 = vld [vmem:[%s0 + $0x10] sm:$0xf]
  %v681 = vld [vmem:[%s0 + $0x14] sm:$0x33]
  %v682 = vld [vmem:[%s0 + $0x1c] sm:$0x33]
  %v683 = vld [vmem:[%s0 + $0x24] sm:$0x3]
  %v686 = vunpack.c.l.s4 1966171168
  %v687 = vunpack.c.0.s8 %v686
  %v688 = vlaneseq
  %v689 = vshrl.u32 %v688, 7
  %v690 = vsub.s32 %v687, %v689
  %v691 = vrot.slane %v41, %v690
  %v692 = vcombine.high %v691, %v691
  %v694 = vunpack.c.l.s4 1966171168
  %v695 = vunpack.c.0.s8 %v694
  %v696 = vlaneseq
  %v697 = vshrl.u32 %v696, 7
  %v698 = vsub.s32 %v695, %v697
  %v699 = vrot.slane %v691, %v698
  %v701 = vunpack.c.l.s4 1966171168
  %v702 = vunpack.c.0.s8 %v701
  %v703 = vlaneseq
  %v704 = vshrl.u32 %v703, 7
  %v705 = vsub.s32 %v702, %v704
  %v706 = vrot.slane %v692, %v705
  %v707 = vcombine.high %v699, %v699
  %v708 = vcombine.high %v706, %v706
  %v710 = vpack.i.b16 %v699, %v699
  %v712 = vlaneseq
  %v713 = vshrl.u32 %v712, 7
  %v714 = vsub.s32 0, %v713
  %v715 = vrot.slane %v710, %v714
  %v717 = vpack.i.b16 %v706, %v706
  %v719 = vlaneseq
  %v720 = vshrl.u32 %v719, 7
  %v721 = vsub.s32 0, %v720
  %v722 = vrot.slane %v717, %v721
  %v724 = vpack.i.b16 %v707, %v707
  %v726 = vlaneseq
  %v727 = vshrl.u32 %v726, 7
  %v728 = vsub.s32 0, %v727
  %v729 = vrot.slane %v724, %v728
  %v731 = vpack.i.b16 %v708, %v708
  %v733 = vlaneseq
  %v734 = vshrl.u32 %v733, 7
  %v735 = vsub.s32 0, %v734
  %v736 = vrot.slane %v731, %v735
  %v741 = vunpack.c.l.b16 %v715
  %v742 = vunpack.c.l.b16 %v722
  %v743 = vunpack.c.l.b16 %v729
  %v744 = vunpack.c.l.b16 %v736
  %v745 = vpack.c.b16 %v742, %v741
  %v746 = vpack.c.b16 %v744, %v743
  %747 = vrot.lane.b32.xlu0 %v745, 16
  %v748 = vpop.permute.xlu0 %747
  %749 = vrot.lane.b32.xlu0 %v746, 16
  %v750 = vpop.permute.xlu0 %749
  %v751 = vrot.slane %v748, 4
  %v752 = vrot.slane %v750, 4
  %vm753 = vcmask 130048
  %v754 = vsel %vm753, %v751, %v748
  %v755 = vsel %vm193, %v751, %v752
  %v756 = vsel %vm753, %v755, %v750
  %v760 = vmul.bf16 %v678, %v754
  %v761 = vmul.bf16 %v679, %v756
  %v762 = vmul.bf16 %v680, %v752
  %v763 = vmul.bf16 %v681, %v754
  %v764 = vmul.bf16 %v682, %v756
  %v765 = vmul.bf16 %v683, %v752
  %v772 = vunpack.c.l.b16 %v760
  %v773 = vunpack.c.h.b16 %v760
  %v774 = vunpack.c.l.b16 %v761
  %v775 = vunpack.c.h.b16 %v761
  %v776 = vunpack.c.l.b16 %v762
  %v777 = vunpack.c.l.b16 %v763
  %v778 = vunpack.c.h.b16 %v763
  %v779 = vunpack.c.l.b16 %v764
  %v780 = vunpack.c.h.b16 %v764
  %v781 = vunpack.c.l.b16 %v765
  %v782 = vpack.c.b16 %v777, %v772
  %v783 = vpack.c.b16 %v778, %v773
  %v784 = vpack.c.b16 %v779, %v774
  %v785 = vpack.c.b16 %v780, %v775
  %v786 = vpack.c.b16 %v781, %v776
  %787 = vrot.lane.b32.xlu0 %v782, 112
  %v788 = vpop.permute.xlu0 %787
  %789 = vrot.lane.b32.xlu0 %v783, 112
  %v790 = vpop.permute.xlu0 %789
  %791 = vrot.lane.b32.xlu0 %v784, 112
  %v792 = vpop.permute.xlu0 %791
  %793 = vrot.lane.b32.xlu0 %v785, 112
  %v794 = vpop.permute.xlu0 %793
  %795 = vrot.lane.b32.xlu0 %v786, 112
  %v796 = vpop.permute.xlu0 %795
  %vm797 = vcmask 916480
  %v798 = vsel %vm797, %v788, %v790
  %v799 = vsel %vm797, %v790, %v792
  %v800 = vsel %vm797, %v792, %v794
  %v801 = vsel %vm797, %v794, %v796
  %v803 = vsel %vm241, %v32, 0
  %v806 = vsel %vm245, %v798, 0
  %v809 = vsel %vm245, %v799, 0
  %v812 = vsel %vm245, %v800, 0
  %v815 = vsel %vm245, %v801, 0
  %817 = vmatprep.subr.bf16.mxu0 0
  %818 = vmatpush1.bf16.msra.mxu0 0
  %819 = vmatprep.subr.bf16.mxu0 0
  %820 = vmatpush1.bf16.msra.mxu0 0
  %821 = vmatprep.subr.bf16.mxu0 0
  %822 = vmatpush1.bf16.msra.mxu0 0
  %823 = vmatprep.subr.bf16.mxu0 0
  %824 = vmatpush1.bf16.msra.mxu0 0
  %825 = vmatprep.subr.bf16.mxu0 0
  %826 = vmatpush1.bf16.msra.mxu0 0
  %827 = vmatprep.subr.bf16.mxu0 0
  %828 = vmatpush1.bf16.msra.mxu0 0
  %829 = vmatprep.subr.bf16.mxu0 0
  %830 = vmatpush1.bf16.msra.mxu0 0
  %831 = vmatprep.subr.bf16.mxu0 %v809
  %832 = vmatpush1.bf16.msra.mxu0 %v806
  %833 = vmatprep.subr.bf16.mxu0 0
  %834 = vmatpush2.bf16.msra.mxu0 0
  %835 = vmatprep.subr.bf16.mxu0 0
  %836 = vmatpush2.bf16.msra.mxu0 0
  %837 = vmatprep.subr.bf16.mxu0 0
  %838 = vmatpush2.bf16.msra.mxu0 0
  %839 = vmatprep.subr.bf16.mxu0 0
  %840 = vmatpush2.bf16.msra.mxu0 0
  %841 = vmatprep.subr.bf16.mxu0 0
  %842 = vmatpush2.bf16.msra.mxu0 0
  %843 = vmatprep.subr.bf16.mxu0 0
  %844 = vmatpush2.bf16.msra.mxu0 0
  %845 = vmatprep.subr.bf16.mxu0 0
  %846 = vmatpush2.bf16.msra.mxu0 0
  %847 = vmatprep.subr.bf16.mxu0 0
  %848 = vmatpush2.bf16.msra.mxu0 0
  %849 = vmatprep.mubr.bf16.mxu0 0
  %850 = vmatmul.mubr.bf16.gmra.mxu0 %v803
  %v851 = vpop.f32.mrf.mxu0
  %v852 = vadd.f32 0.0, %v851
  %v853 = vpop.f32.mrf.mxu0
  %v854 = vadd.f32 0.0, %v853
  %v855 = vpop.f32.mrf.mxu0
  %v856 = vpop.f32.mrf.mxu0
  %857 = vdwg.mxu0
  %858 = vmatprep.subr.bf16.mxu0 0
  %859 = vmatpush1.bf16.msra.mxu0 0
  %860 = vmatprep.subr.bf16.mxu0 0
  %861 = vmatpush1.bf16.msra.mxu0 0
  %862 = vmatprep.subr.bf16.mxu0 0
  %863 = vmatpush1.bf16.msra.mxu0 0
  %864 = vmatprep.subr.bf16.mxu0 0
  %865 = vmatpush1.bf16.msra.mxu0 0
  %866 = vmatprep.subr.bf16.mxu0 0
  %867 = vmatpush1.bf16.msra.mxu0 0
  %868 = vmatprep.subr.bf16.mxu0 0
  %869 = vmatpush1.bf16.msra.mxu0 0
  %870 = vmatprep.subr.bf16.mxu0 0
  %871 = vmatpush1.bf16.msra.mxu0 0
  %872 = vmatprep.subr.bf16.mxu0 %v815
  %873 = vmatpush1.bf16.msra.mxu0 %v812
  %874 = vmatprep.subr.bf16.mxu0 0
  %875 = vmatpush2.bf16.msra.mxu0 0
  %876 = vmatprep.subr.bf16.mxu0 0
  %877 = vmatpush2.bf16.msra.mxu0 0
  %878 = vmatprep.subr.bf16.mxu0 0
  %879 = vmatpush2.bf16.msra.mxu0 0
  %880 = vmatprep.subr.bf16.mxu0 0
  %881 = vmatpush2.bf16.msra.mxu0 0
  %882 = vmatprep.subr.bf16.mxu0 0
  %883 = vmatpush2.bf16.msra.mxu0 0
  %884 = vmatprep.subr.bf16.mxu0 0
  %885 = vmatpush2.bf16.msra.mxu0 0
  %886 = vmatprep.subr.bf16.mxu0 0
  %887 = vmatpush2.bf16.msra.mxu0 0
  %888 = vmatprep.subr.bf16.mxu0 0
  %889 = vmatpush2.bf16.msra.mxu0 0
  %890 = vmatprep.mubr.bf16.mxu0 0
  %891 = vmatmul.mubr.bf16.gmra.mxu0 %v803
  %v892 = vpop.f32.mrf.mxu0
  %v893 = vadd.f32 0.0, %v892
  %v894 = vpop.f32.mrf.mxu0
  %v895 = vadd.f32 0.0, %v894
  %v896 = vpop.f32.mrf.mxu0
  %v897 = vpop.f32.mrf.mxu0
  %898 = vdwg.mxu0
  %v899 = vadd.f32 %v674, %v852
  %v900 = vadd.f32 %v675, %v854
  %v901 = vadd.f32 %v676, %v893
  %v902 = vadd.f32 %v677, %v895
  %v903 = vld [vmem:[%s0] sm:$0xff]
  %v904 = vld [vmem:[%s0 + $0x8] sm:$0xff]
  %v905 = vld [vmem:[%s0 + $0x10] sm:$0xf]
  %v906 = vld [vmem:[%s0 + $0x14] sm:$0x33]
  %v907 = vld [vmem:[%s0 + $0x1c] sm:$0x33]
  %v908 = vld [vmem:[%s0 + $0x24] sm:$0x3]
  %v911 = vunpack.c.l.s4 1966171168
  %v912 = vunpack.c.0.s8 %v911
  %v913 = vlaneseq
  %v914 = vshrl.u32 %v913, 7
  %v915 = vsub.s32 %v912, %v914
  %v916 = vrot.slane %v42, %v915
  %v917 = vcombine.high %v916, %v916
  %v919 = vunpack.c.l.s4 1966171168
  %v920 = vunpack.c.0.s8 %v919
  %v921 = vlaneseq
  %v922 = vshrl.u32 %v921, 7
  %v923 = vsub.s32 %v920, %v922
  %v924 = vrot.slane %v916, %v923
  %v926 = vunpack.c.l.s4 1966171168
  %v927 = vunpack.c.0.s8 %v926
  %v928 = vlaneseq
  %v929 = vshrl.u32 %v928, 7
  %v930 = vsub.s32 %v927, %v929
  %v931 = vrot.slane %v917, %v930
  %v932 = vcombine.high %v924, %v924
  %v933 = vcombine.high %v931, %v931
  %v935 = vpack.i.b16 %v924, %v924
  %v937 = vlaneseq
  %v938 = vshrl.u32 %v937, 7
  %v939 = vsub.s32 0, %v938
  %v940 = vrot.slane %v935, %v939
  %v942 = vpack.i.b16 %v931, %v931
  %v944 = vlaneseq
  %v945 = vshrl.u32 %v944, 7
  %v946 = vsub.s32 0, %v945
  %v947 = vrot.slane %v942, %v946
  %v949 = vpack.i.b16 %v932, %v932
  %v951 = vlaneseq
  %v952 = vshrl.u32 %v951, 7
  %v953 = vsub.s32 0, %v952
  %v954 = vrot.slane %v949, %v953
  %v956 = vpack.i.b16 %v933, %v933
  %v958 = vlaneseq
  %v959 = vshrl.u32 %v958, 7
  %v960 = vsub.s32 0, %v959
  %v961 = vrot.slane %v956, %v960
  %v966 = vunpack.c.l.b16 %v940
  %v967 = vunpack.c.l.b16 %v947
  %v968 = vunpack.c.l.b16 %v954
  %v969 = vunpack.c.l.b16 %v961
  %v970 = vpack.c.b16 %v967, %v966
  %v971 = vpack.c.b16 %v969, %v968
  %972 = vrot.lane.b32.xlu0 %v970, 17
  %v973 = vpop.permute.xlu0 %972
  %974 = vrot.lane.b32.xlu0 %v971, 17
  %v975 = vpop.permute.xlu0 %974
  %v976 = vrot.slane %v973, 4
  %v977 = vrot.slane %v975, 4
  %vm978 = vcmask 138240
  %v979 = vsel %vm978, %v976, %v973
  %v980 = vsel %vm193, %v976, %v977
  %v981 = vsel %vm978, %v980, %v975
  %v985 = vmul.bf16 %v903, %v979
  %v986 = vmul.bf16 %v904, %v981
  %v987 = vmul.bf16 %v905, %v977
  %v988 = vmul.bf16 %v906, %v979
  %v989 = vmul.bf16 %v907, %v981
  %v990 = vmul.bf16 %v908, %v977
  %v997 = vunpack.c.l.b16 %v985
  %v998 = vunpack.c.h.b16 %v985
  %v999 = vunpack.c.l.b16 %v986
  %v1000 = vunpack.c.h.b16 %v986
  %v1001 = vunpack.c.l.b16 %v987
  %v1002 = vunpack.c.l.b16 %v988
  %v1003 = vunpack.c.h.b16 %v988
  %v1004 = vunpack.c.l.b16 %v989
  %v1005 = vunpack.c.h.b16 %v989
  %v1006 = vunpack.c.l.b16 %v990
  %v1007 = vpack.c.b16 %v1002, %v997
  %v1008 = vpack.c.b16 %v1003, %v998
  %v1009 = vpack.c.b16 %v1004, %v999
  %v1010 = vpack.c.b16 %v1005, %v1000
  %v1011 = vpack.c.b16 %v1006, %v1001
  %1012 = vrot.lane.b32.xlu0 %v1007, 111
  %v1013 = vpop.permute.xlu0 %1012
  %1014 = vrot.lane.b32.xlu0 %v1008, 111
  %v1015 = vpop.permute.xlu0 %1014
  %1016 = vrot.lane.b32.xlu0 %v1009, 111
  %v1017 = vpop.permute.xlu0 %1016
  %1018 = vrot.lane.b32.xlu0 %v1010, 111
  %v1019 = vpop.permute.xlu0 %1018
  %1020 = vrot.lane.b32.xlu0 %v1011, 111
  %v1021 = vpop.permute.xlu0 %1020
  %vm1022 = vcmask 908288
  %v1023 = vsel %vm1022, %v1013, %v1015
  %v1024 = vsel %vm1022, %v1015, %v1017
  %v1025 = vsel %vm1022, %v1017, %v1019
  %v1026 = vsel %vm1022, %v1019, %v1021
  %v1028 = vsel %vm241, %v33, 0
  %v1031 = vsel %vm245, %v1023, 0
  %v1034 = vsel %vm245, %v1024, 0
  %v1037 = vsel %vm245, %v1025, 0
  %v1040 = vsel %vm245, %v1026, 0
  %1042 = vmatprep.subr.bf16.mxu0 0
  %1043 = vmatpush1.bf16.msra.mxu0 0
  %1044 = vmatprep.subr.bf16.mxu0 0
  %1045 = vmatpush1.bf16.msra.mxu0 0
  %1046 = vmatprep.subr.bf16.mxu0 0
  %1047 = vmatpush1.bf16.msra.mxu0 0
  %1048 = vmatprep.subr.bf16.mxu0 0
  %1049 = vmatpush1.bf16.msra.mxu0 0
  %1050 = vmatprep.subr.bf16.mxu0 0
  %1051 = vmatpush1.bf16.msra.mxu0 0
  %1052 = vmatprep.subr.bf16.mxu0 0
  %1053 = vmatpush1.bf16.msra.mxu0 0
  %1054 = vmatprep.subr.bf16.mxu0 0
  %1055 = vmatpush1.bf16.msra.mxu0 0
  %1056 = vmatprep.subr.bf16.mxu0 %v1034
  %1057 = vmatpush1.bf16.msra.mxu0 %v1031
  %1058 = vmatprep.subr.bf16.mxu0 0
  %1059 = vmatpush2.bf16.msra.mxu0 0
  %1060 = vmatprep.subr.bf16.mxu0 0
  %1061 = vmatpush2.bf16.msra.mxu0 0
  %1062 = vmatprep.subr.bf16.mxu0 0
  %1063 = vmatpush2.bf16.msra.mxu0 0
  %1064 = vmatprep.subr.bf16.mxu0 0
  %1065 = vmatpush2.bf16.msra.mxu0 0
  %1066 = vmatprep.subr.bf16.mxu0 0
  %1067 = vmatpush2.bf16.msra.mxu0 0
  %1068 = vmatprep.subr.bf16.mxu0 0
  %1069 = vmatpush2.bf16.msra.mxu0 0
  %1070 = vmatprep.subr.bf16.mxu0 0
  %1071 = vmatpush2.bf16.msra.mxu0 0
  %1072 = vmatprep.subr.bf16.mxu0 0
  %1073 = vmatpush2.bf16.msra.mxu0 0
  %1074 = vmatprep.mubr.bf16.mxu0 0
  %1075 = vmatmul.mubr.bf16.gmra.mxu0 %v1028
  %v1076 = vpop.f32.mrf.mxu0
  %v1077 = vadd.f32 0.0, %v1076
  %v1078 = vpop.f32.mrf.mxu0
  %v1079 = vadd.f32 0.0, %v1078
  %v1080 = vpop.f32.mrf.mxu0
  %v1081 = vpop.f32.mrf.mxu0
  %1082 = vdwg.mxu0
  %1083 = vmatprep.subr.bf16.mxu0 0
  %1084 = vmatpush1.bf16.msra.mxu0 0
  %1085 = vmatprep.subr.bf16.mxu0 0
  %1086 = vmatpush1.bf16.msra.mxu0 0
  %1087 = vmatprep.subr.bf16.mxu0 0
  %1088 = vmatpush1.bf16.msra.mxu0 0
  %1089 = vmatprep.subr.bf16.mxu0 0
  %1090 = vmatpush1.bf16.msra.mxu0 0
  %1091 = vmatprep.subr.bf16.mxu0 0
  %1092 = vmatpush1.bf16.msra.mxu0 0
  %1093 = vmatprep.subr.bf16.mxu0 0
  %1094 = vmatpush1.bf16.msra.mxu0 0
  %1095 = vmatprep.subr.bf16.mxu0 0
  %1096 = vmatpush1.bf16.msra.mxu0 0
  %1097 = vmatprep.subr.bf16.mxu0 %v1040
  %1098 = vmatpush1.bf16.msra.mxu0 %v1037
  %1099 = vmatprep.subr.bf16.mxu0 0
  %1100 = vmatpush2.bf16.msra.mxu0 0
  %1101 = vmatprep.subr.bf16.mxu0 0
  %1102 = vmatpush2.bf16.msra.mxu0 0
  %1103 = vmatprep.subr.bf16.mxu0 0
  %1104 = vmatpush2.bf16.msra.mxu0 0
  %1105 = vmatprep.subr.bf16.mxu0 0
  %1106 = vmatpush2.bf16.msra.mxu0 0
  %1107 = vmatprep.subr.bf16.mxu0 0
  %1108 = vmatpush2.bf16.msra.mxu0 0
  %1109 = vmatprep.subr.bf16.mxu0 0
  %1110 = vmatpush2.bf16.msra.mxu0 0
  %1111 = vmatprep.subr.bf16.mxu0 0
  %1112 = vmatpush2.bf16.msra.mxu0 0
  %1113 = vmatprep.subr.bf16.mxu0 0
  %1114 = vmatpush2.bf16.msra.mxu0 0
  %1115 = vmatprep.mubr.bf16.mxu0 0
  %1116 = vmatmul.mubr.bf16.gmra.mxu0 %v1028
  %v1117 = vpop.f32.mrf.mxu0
  %v1118 = vadd.f32 0.0, %v1117
  %v1119 = vpop.f32.mrf.mxu0
  %v1120 = vadd.f32 0.0, %v1119
  %v1121 = vpop.f32.mrf.mxu0
  %v1122 = vpop.f32.mrf.mxu0
  %1123 = vdwg.mxu0
  %v1124 = vadd.f32 %v899, %v1077
  %v1125 = vadd.f32 %v900, %v1079
  %v1126 = vadd.f32 %v901, %v1118
  %v1127 = vadd.f32 %v902, %v1120
  %v1128 = vld [vmem:[%s0] sm:$0xff]
  %v1129 = vld [vmem:[%s0 + $0x8] sm:$0xff]
  %v1130 = vld [vmem:[%s0 + $0x10] sm:$0xf]
  %v1131 = vld [vmem:[%s0 + $0x14] sm:$0x33]
  %v1132 = vld [vmem:[%s0 + $0x1c] sm:$0x33]
  %v1133 = vld [vmem:[%s0 + $0x24] sm:$0x3]
  %v1136 = vunpack.c.l.s4 1966171168
  %v1137 = vunpack.c.0.s8 %v1136
  %v1138 = vlaneseq
  %v1139 = vshrl.u32 %v1138, 7
  %v1140 = vsub.s32 %v1137, %v1139
  %v1141 = vrot.slane %v43, %v1140
  %v1142 = vcombine.high %v1141, %v1141
  %v1144 = vunpack.c.l.s4 1966171168
  %v1145 = vunpack.c.0.s8 %v1144
  %v1146 = vlaneseq
  %v1147 = vshrl.u32 %v1146, 7
  %v1148 = vsub.s32 %v1145, %v1147
  %v1149 = vrot.slane %v1141, %v1148
  %v1151 = vunpack.c.l.s4 1966171168
  %v1152 = vunpack.c.0.s8 %v1151
  %v1153 = vlaneseq
  %v1154 = vshrl.u32 %v1153, 7
  %v1155 = vsub.s32 %v1152, %v1154
  %v1156 = vrot.slane %v1142, %v1155
  %v1157 = vcombine.high %v1149, %v1149
  %v1158 = vcombine.high %v1156, %v1156
  %v1160 = vpack.i.b16 %v1149, %v1149
  %v1162 = vlaneseq
  %v1163 = vshrl.u32 %v1162, 7
  %v1164 = vsub.s32 0, %v1163
  %v1165 = vrot.slane %v1160, %v1164
  %v1167 = vpack.i.b16 %v1156, %v1156
  %v1169 = vlaneseq
  %v1170 = vshrl.u32 %v1169, 7
  %v1171 = vsub.s32 0, %v1170
  %v1172 = vrot.slane %v1167, %v1171
  %v1174 = vpack.i.b16 %v1157, %v1157
  %v1176 = vlaneseq
  %v1177 = vshrl.u32 %v1176, 7
  %v1178 = vsub.s32 0, %v1177
  %v1179 = vrot.slane %v1174, %v1178
  %v1181 = vpack.i.b16 %v1158, %v1158
  %v1183 = vlaneseq
  %v1184 = vshrl.u32 %v1183, 7
  %v1185 = vsub.s32 0, %v1184
  %v1186 = vrot.slane %v1181, %v1185
  %v1191 = vunpack.c.l.b16 %v1165
  %v1192 = vunpack.c.l.b16 %v1172
  %v1193 = vunpack.c.l.b16 %v1179
  %v1194 = vunpack.c.l.b16 %v1186
  %v1195 = vpack.c.b16 %v1192, %v1191
  %v1196 = vpack.c.b16 %v1194, %v1193
  %1197 = vrot.lane.b32.xlu0 %v1195, 18
  %v1198 = vpop.permute.xlu0 %1197
  %1199 = vrot.lane.b32.xlu0 %v1196, 18
  %v1200 = vpop.permute.xlu0 %1199
  %v1201 = vrot.slane %v1198, 4
  %v1202 = vrot.slane %v1200, 4
  %vm1203 = vcmask 146432
  %v1204 = vsel %vm1203, %v1201, %v1198
  %v1205 = vsel %vm193, %v1201, %v1202
  %v1206 = vsel %vm1203, %v1205, %v1200
  %v1210 = vmul.bf16 %v1128, %v1204
  %v1211 = vmul.bf16 %v1129, %v1206
  %v1212 = vmul.bf16 %v1130, %v1202
  %v1213 = vmul.bf16 %v1131, %v1204
  %v1214 = vmul.bf16 %v1132, %v1206
  %v1215 = vmul.bf16 %v1133, %v1202
  %v1222 = vunpack.c.l.b16 %v1210
  %v1223 = vunpack.c.h.b16 %v1210
  %v1224 = vunpack.c.l.b16 %v1211
  %v1225 = vunpack.c.h.b16 %v1211
  %v1226 = vunpack.c.l.b16 %v1212
  %v1227 = vunpack.c.l.b16 %v1213
  %v1228 = vunpack.c.h.b16 %v1213
  %v1229 = vunpack.c.l.b16 %v1214
  %v1230 = vunpack.c.h.b16 %v1214
  %v1231 = vunpack.c.l.b16 %v1215
  %v1232 = vpack.c.b16 %v1227, %v1222
  %v1233 = vpack.c.b16 %v1228, %v1223
  %v1234 = vpack.c.b16 %v1229, %v1224
  %v1235 = vpack.c.b16 %v1230, %v1225
  %v1236 = vpack.c.b16 %v1231, %v1226
  %1237 = vrot.lane.b32.xlu0 %v1232, 110
  %v1238 = vpop.permute.xlu0 %1237
  %1239 = vrot.lane.b32.xlu0 %v1233, 110
  %v1240 = vpop.permute.xlu0 %1239
  %1241 = vrot.lane.b32.xlu0 %v1234, 110
  %v1242 = vpop.permute.xlu0 %1241
  %1243 = vrot.lane.b32.xlu0 %v1235, 110
  %v1244 = vpop.permute.xlu0 %1243
  %1245 = vrot.lane.b32.xlu0 %v1236, 110
  %v1246 = vpop.permute.xlu0 %1245
  %vm1247 = vcmask 900096
  %v1248 = vsel %vm1247, %v1238, %v1240
  %v1249 = vsel %vm1247, %v1240, %v1242
  %v1250 = vsel %vm1247, %v1242, %v1244
  %v1251 = vsel %vm1247, %v1244, %v1246
  %v1253 = vsel %vm241, %v34, 0
  %v1256 = vsel %vm245, %v1248, 0
  %v1259 = vsel %vm245, %v1249, 0
  %v1262 = vsel %vm245, %v1250, 0
  %v1265 = vsel %vm245, %v1251, 0
  %1267 = vmatprep.subr.bf16.mxu0 0
  %1268 = vmatpush1.bf16.msra.mxu0 0
  %1269 = vmatprep.subr.bf16.mxu0 0
  %1270 = vmatpush1.bf16.msra.mxu0 0
  %1271 = vmatprep.subr.bf16.mxu0 0
  %1272 = vmatpush1.bf16.msra.mxu0 0
  %1273 = vmatprep.subr.bf16.mxu0 0
  %1274 = vmatpush1.bf16.msra.mxu0 0
  %1275 = vmatprep.subr.bf16.mxu0 0
  %1276 = vmatpush1.bf16.msra.mxu0 0
  %1277 = vmatprep.subr.bf16.mxu0 0
  %1278 = vmatpush1.bf16.msra.mxu0 0
  %1279 = vmatprep.subr.bf16.mxu0 0
  %1280 = vmatpush1.bf16.msra.mxu0 0
  %1281 = vmatprep.subr.bf16.mxu0 %v1259
  %1282 = vmatpush1.bf16.msra.mxu0 %v1256
  %1283 = vmatprep.subr.bf16.mxu0 0
  %1284 = vmatpush2.bf16.msra.mxu0 0
  %1285 = vmatprep.subr.bf16.mxu0 0
  %1286 = vmatpush2.bf16.msra.mxu0 0
  %1287 = vmatprep.subr.bf16.mxu0 0
  %1288 = vmatpush2.bf16.msra.mxu0 0
  %1289 = vmatprep.subr.bf16.mxu0 0
  %1290 = vmatpush2.bf16.msra.mxu0 0
  %1291 = vmatprep.subr.bf16.mxu0 0
  %1292 = vmatpush2.bf16.msra.mxu0 0
  %1293 = vmatprep.subr.bf16.mxu0 0
  %1294 = vmatpush2.bf16.msra.mxu0 0
  %1295 = vmatprep.subr.bf16.mxu0 0
  %1296 = vmatpush2.bf16.msra.mxu0 0
  %1297 = vmatprep.subr.bf16.mxu0 0
  %1298 = vmatpush2.bf16.msra.mxu0 0
  %1299 = vmatprep.mubr.bf16.mxu0 0
  %1300 = vmatmul.mubr.bf16.gmra.mxu0 %v1253
  %v1301 = vpop.f32.mrf.mxu0
  %v1302 = vadd.f32 0.0, %v1301
  %v1303 = vpop.f32.mrf.mxu0
  %v1304 = vadd.f32 0.0, %v1303
  %v1305 = vpop.f32.mrf.mxu0
  %v1306 = vpop.f32.mrf.mxu0
  %1307 = vdwg.mxu0
  %1308 = vmatprep.subr.bf16.mxu0 0
  %1309 = vmatpush1.bf16.msra.mxu0 0
  %1310 = vmatprep.subr.bf16.mxu0 0
  %1311 = vmatpush1.bf16.msra.mxu0 0
  %1312 = vmatprep.subr.bf16.mxu0 0
  %1313 = vmatpush1.bf16.msra.mxu0 0
  %1314 = vmatprep.subr.bf16.mxu0 0
  %1315 = vmatpush1.bf16.msra.mxu0 0
  %1316 = vmatprep.subr.bf16.mxu0 0
  %1317 = vmatpush1.bf16.msra.mxu0 0
  %1318 = vmatprep.subr.bf16.mxu0 0
  %1319 = vmatpush1.bf16.msra.mxu0 0
  %1320 = vmatprep.subr.bf16.mxu0 0
  %1321 = vmatpush1.bf16.msra.mxu0 0
  %1322 = vmatprep.subr.bf16.mxu0 %v1265
  %1323 = vmatpush1.bf16.msra.mxu0 %v1262
  %1324 = vmatprep.subr.bf16.mxu0 0
  %1325 = vmatpush2.bf16.msra.mxu0 0
  %1326 = vmatprep.subr.bf16.mxu0 0
  %1327 = vmatpush2.bf16.msra.mxu0 0
  %1328 = vmatprep.subr.bf16.mxu0 0
  %1329 = vmatpush2.bf16.msra.mxu0 0
  %1330 = vmatprep.subr.bf16.mxu0 0
  %1331 = vmatpush2.bf16.msra.mxu0 0
  %1332 = vmatprep.subr.bf16.mxu0 0
  %1333 = vmatpush2.bf16.msra.mxu0 0
  %1334 = vmatprep.subr.bf16.mxu0 0
  %1335 = vmatpush2.bf16.msra.mxu0 0
  %1336 = vmatprep.subr.bf16.mxu0 0
  %1337 = vmatpush2.bf16.msra.mxu0 0
  %1338 = vmatprep.subr.bf16.mxu0 0
  %1339 = vmatpush2.bf16.msra.mxu0 0
  %1340 = vmatprep.mubr.bf16.mxu0 0
  %1341 = vmatmul.mubr.bf16.gmra.mxu0 %v1253
  %v1342 = vpop.f32.mrf.mxu0
  %v1343 = vadd.f32 0.0, %v1342
  %v1344 = vpop.f32.mrf.mxu0
  %v1345 = vadd.f32 0.0, %v1344
  %v1346 = vpop.f32.mrf.mxu0
  %v1347 = vpop.f32.mrf.mxu0
  %1348 = vdwg.mxu0
  %v1349 = vadd.f32 %v1124, %v1302
  %v1350 = vadd.f32 %v1125, %v1304
  %v1351 = vadd.f32 %v1126, %v1343
  %v1352 = vadd.f32 %v1127, %v1345
  %v1353 = vld [vmem:[%s0] sm:$0xff]
  %v1354 = vld [vmem:[%s0 + $0x8] sm:$0xff]
  %v1355 = vld [vmem:[%s0 + $0x10] sm:$0xf]
  %v1356 = vld [vmem:[%s0 + $0x14] sm:$0x33]
  %v1357 = vld [vmem:[%s0 + $0x1c] sm:$0x33]
  %v1358 = vld [vmem:[%s0 + $0x24] sm:$0x3]
  %v1361 = vunpack.c.l.s4 1966171168
  %v1362 = vunpack.c.0.s8 %v1361
  %v1363 = vlaneseq
  %v1364 = vshrl.u32 %v1363, 7
  %v1365 = vsub.s32 %v1362, %v1364
  %v1366 = vrot.slane %v44, %v1365
  %v1367 = vcombine.high %v1366, %v1366
  %v1369 = vunpack.c.l.s4 1966171168
  %v1370 = vunpack.c.0.s8 %v1369
  %v1371 = vlaneseq
  %v1372 = vshrl.u32 %v1371, 7
  %v1373 = vsub.s32 %v1370, %v1372
  %v1374 = vrot.slane %v1366, %v1373
  %v1376 = vunpack.c.l.s4 1966171168
  %v1377 = vunpack.c.0.s8 %v1376
  %v1378 = vlaneseq
  %v1379 = vshrl.u32 %v1378, 7
  %v1380 = vsub.s32 %v1377, %v1379
  %v1381 = vrot.slane %v1367, %v1380
  %v1382 = vcombine.high %v1374, %v1374
  %v1383 = vcombine.high %v1381, %v1381
  %v1385 = vpack.i.b16 %v1374, %v1374
  %v1387 = vlaneseq
  %v1388 = vshrl.u32 %v1387, 7
  %v1389 = vsub.s32 0, %v1388
  %v1390 = vrot.slane %v1385, %v1389
  %v1392 = vpack.i.b16 %v1381, %v1381
  %v1394 = vlaneseq
  %v1395 = vshrl.u32 %v1394, 7
  %v1396 = vsub.s32 0, %v1395
  %v1397 = vrot.slane %v1392, %v1396
  %v1399 = vpack.i.b16 %v1382, %v1382
  %v1401 = vlaneseq
  %v1402 = vshrl.u32 %v1401, 7
  %v1403 = vsub.s32 0, %v1402
  %v1404 = vrot.slane %v1399, %v1403
  %v1406 = vpack.i.b16 %v1383, %v1383
  %v1408 = vlaneseq
  %v1409 = vshrl.u32 %v1408, 7
  %v1410 = vsub.s32 0, %v1409
  %v1411 = vrot.slane %v1406, %v1410
  %v1416 = vunpack.c.l.b16 %v1390
  %v1417 = vunpack.c.l.b16 %v1397
  %v1418 = vunpack.c.l.b16 %v1404
  %v1419 = vunpack.c.l.b16 %v1411
  %v1420 = vpack.c.b16 %v1417, %v1416
  %v1421 = vpack.c.b16 %v1419, %v1418
  %1422 = vrot.lane.b32.xlu0 %v1420, 32
  %v1423 = vpop.permute.xlu0 %1422
  %1424 = vrot.lane.b32.xlu0 %v1421, 32
  %v1425 = vpop.permute.xlu0 %1424
  %v1426 = vrot.slane %v1423, 4
  %v1427 = vrot.slane %v1425, 4
  %vm1428 = vcmask 261120
  %v1429 = vsel %vm1428, %v1426, %v1423
  %v1430 = vsel %vm193, %v1426, %v1427
  %v1431 = vsel %vm1428, %v1430, %v1425
  %v1435 = vmul.bf16 %v1353, %v1429
  %v1436 = vmul.bf16 %v1354, %v1431
  %v1437 = vmul.bf16 %v1355, %v1427
  %v1438 = vmul.bf16 %v1356, %v1429
  %v1439 = vmul.bf16 %v1357, %v1431
  %v1440 = vmul.bf16 %v1358, %v1427
  %v1447 = vunpack.c.l.b16 %v1435
  %v1448 = vunpack.c.h.b16 %v1435
  %v1449 = vunpack.c.l.b16 %v1436
  %v1450 = vunpack.c.h.b16 %v1436
  %v1451 = vunpack.c.l.b16 %v1437
  %v1452 = vunpack.c.l.b16 %v1438
  %v1453 = vunpack.c.h.b16 %v1438
  %v1454 = vunpack.c.l.b16 %v1439
  %v1455 = vunpack.c.h.b16 %v1439
  %v1456 = vunpack.c.l.b16 %v1440
  %v1457 = vpack.c.b16 %v1452, %v1447
  %v1458 = vpack.c.b16 %v1453, %v1448
  %v1459 = vpack.c.b16 %v1454, %v1449
  %v1460 = vpack.c.b16 %v1455, %v1450
  %v1461 = vpack.c.b16 %v1456, %v1451
  %1462 = vrot.lane.b32.xlu0 %v1457, 96
  %v1463 = vpop.permute.xlu0 %1462
  %1464 = vrot.lane.b32.xlu0 %v1458, 96
  %v1465 = vpop.permute.xlu0 %1464
  %1466 = vrot.lane.b32.xlu0 %v1459, 96
  %v1467 = vpop.permute.xlu0 %1466
  %1468 = vrot.lane.b32.xlu0 %v1460, 96
  %v1469 = vpop.permute.xlu0 %1468
  %1470 = vrot.lane.b32.xlu0 %v1461, 96
  %v1471 = vpop.permute.xlu0 %1470
  %vm1472 = vcmask 785408
  %v1473 = vsel %vm1472, %v1463, %v1465
  %v1474 = vsel %vm1472, %v1465, %v1467
  %v1475 = vsel %vm1472, %v1467, %v1469
  %v1476 = vsel %vm1472, %v1469, %v1471
  %v1478 = vsel %vm241, %v35, 0
  %v1481 = vsel %vm245, %v1473, 0
  %v1484 = vsel %vm245, %v1474, 0
  %v1487 = vsel %vm245, %v1475, 0
  %v1490 = vsel %vm245, %v1476, 0
  %1492 = vmatprep.subr.bf16.mxu0 0
  %1493 = vmatpush1.bf16.msra.mxu0 0
  %1494 = vmatprep.subr.bf16.mxu0 0
  %1495 = vmatpush1.bf16.msra.mxu0 0
  %1496 = vmatprep.subr.bf16.mxu0 0
  %1497 = vmatpush1.bf16.msra.mxu0 0
  %1498 = vmatprep.subr.bf16.mxu0 0
  %1499 = vmatpush1.bf16.msra.mxu0 0
  %1500 = vmatprep.subr.bf16.mxu0 0
  %1501 = vmatpush1.bf16.msra.mxu0 0
  %1502 = vmatprep.subr.bf16.mxu0 0
  %1503 = vmatpush1.bf16.msra.mxu0 0
  %1504 = vmatprep.subr.bf16.mxu0 0
  %1505 = vmatpush1.bf16.msra.mxu0 0
  %1506 = vmatprep.subr.bf16.mxu0 %v1484
  %1507 = vmatpush1.bf16.msra.mxu0 %v1481
  %1508 = vmatprep.subr.bf16.mxu0 0
  %1509 = vmatpush2.bf16.msra.mxu0 0
  %1510 = vmatprep.subr.bf16.mxu0 0
  %1511 = vmatpush2.bf16.msra.mxu0 0
  %1512 = vmatprep.subr.bf16.mxu0 0
  %1513 = vmatpush2.bf16.msra.mxu0 0
  %1514 = vmatprep.subr.bf16.mxu0 0
  %1515 = vmatpush2.bf16.msra.mxu0 0
  %1516 = vmatprep.subr.bf16.mxu0 0
  %1517 = vmatpush2.bf16.msra.mxu0 0
  %1518 = vmatprep.subr.bf16.mxu0 0
  %1519 = vmatpush2.bf16.msra.mxu0 0
  %1520 = vmatprep.subr.bf16.mxu0 0
  %1521 = vmatpush2.bf16.msra.mxu0 0
  %1522 = vmatprep.subr.bf16.mxu0 0
  %1523 = vmatpush2.bf16.msra.mxu0 0
  %1524 = vmatprep.mubr.bf16.mxu0 0
  %1525 = vmatmul.mubr.bf16.gmra.mxu0 %v1478
  %v1526 = vpop.f32.mrf.mxu0
  %v1527 = vadd.f32 0.0, %v1526
  %v1528 = vpop.f32.mrf.mxu0
  %v1529 = vadd.f32 0.0, %v1528
  %v1530 = vpop.f32.mrf.mxu0
  %v1531 = vpop.f32.mrf.mxu0
  %1532 = vdwg.mxu0
  %1533 = vmatprep.subr.bf16.mxu0 0
  %1534 = vmatpush1.bf16.msra.mxu0 0
  %1535 = vmatprep.subr.bf16.mxu0 0
  %1536 = vmatpush1.bf16.msra.mxu0 0
  %1537 = vmatprep.subr.bf16.mxu0 0
  %1538 = vmatpush1.bf16.msra.mxu0 0
  %1539 = vmatprep.subr.bf16.mxu0 0
  %1540 = vmatpush1.bf16.msra.mxu0 0
  %1541 = vmatprep.subr.bf16.mxu0 0
  %1542 = vmatpush1.bf16.msra.mxu0 0
  %1543 = vmatprep.subr.bf16.mxu0 0
  %1544 = vmatpush1.bf16.msra.mxu0 0
  %1545 = vmatprep.subr.bf16.mxu0 0
  %1546 = vmatpush1.bf16.msra.mxu0 0
  %1547 = vmatprep.subr.bf16.mxu0 %v1490
  %1548 = vmatpush1.bf16.msra.mxu0 %v1487
  %1549 = vmatprep.subr.bf16.mxu0 0
  %1550 = vmatpush2.bf16.msra.mxu0 0
  %1551 = vmatprep.subr.bf16.mxu0 0
  %1552 = vmatpush2.bf16.msra.mxu0 0
  %1553 = vmatprep.subr.bf16.mxu0 0
  %1554 = vmatpush2.bf16.msra.mxu0 0
  %1555 = vmatprep.subr.bf16.mxu0 0
  %1556 = vmatpush2.bf16.msra.mxu0 0
  %1557 = vmatprep.subr.bf16.mxu0 0
  %1558 = vmatpush2.bf16.msra.mxu0 0
  %1559 = vmatprep.subr.bf16.mxu0 0
  %1560 = vmatpush2.bf16.msra.mxu0 0
  %1561 = vmatprep.subr.bf16.mxu0 0
  %1562 = vmatpush2.bf16.msra.mxu0 0
  %1563 = vmatprep.subr.bf16.mxu0 0
  %1564 = vmatpush2.bf16.msra.mxu0 0
  %1565 = vmatprep.mubr.bf16.mxu0 0
  %1566 = vmatmul.mubr.bf16.gmra.mxu0 %v1478
  %v1567 = vpop.f32.mrf.mxu0
  %v1568 = vadd.f32 0.0, %v1567
  %v1569 = vpop.f32.mrf.mxu0
  %v1570 = vadd.f32 0.0, %v1569
  %v1571 = vpop.f32.mrf.mxu0
  %v1572 = vpop.f32.mrf.mxu0
  %1573 = vdwg.mxu0
  %v1574 = vadd.f32 %v1349, %v1527
  %v1575 = vadd.f32 %v1350, %v1529
  %v1576 = vadd.f32 %v1351, %v1568
  %v1577 = vadd.f32 %v1352, %v1570
  %v1578 = vld [vmem:[%s0] sm:$0xff]
  %v1579 = vld [vmem:[%s0 + $0x8] sm:$0xff]
  %v1580 = vld [vmem:[%s0 + $0x10] sm:$0xf]
  %v1581 = vld [vmem:[%s0 + $0x14] sm:$0x33]
  %v1582 = vld [vmem:[%s0 + $0x1c] sm:$0x33]
  %v1583 = vld [vmem:[%s0 + $0x24] sm:$0x3]
  %v1586 = vunpack.c.l.s4 1966171168
  %v1587 = vunpack.c.0.s8 %v1586
  %v1588 = vlaneseq
  %v1589 = vshrl.u32 %v1588, 7
  %v1590 = vsub.s32 %v1587, %v1589
  %v1591 = vrot.slane %v45, %v1590
  %v1592 = vcombine.high %v1591, %v1591
  %v1594 = vunpack.c.l.s4 1966171168
  %v1595 = vunpack.c.0.s8 %v1594
  %v1596 = vlaneseq
  %v1597 = vshrl.u32 %v1596, 7
  %v1598 = vsub.s32 %v1595, %v1597
  %v1599 = vrot.slane %v1591, %v1598
  %v1601 = vunpack.c.l.s4 1966171168
  %v1602 = vunpack.c.0.s8 %v1601
  %v1603 = vlaneseq
  %v1604 = vshrl.u32 %v1603, 7
  %v1605 = vsub.s32 %v1602, %v1604
  %v1606 = vrot.slane %v1592, %v1605
  %v1607 = vcombine.high %v1599, %v1599
  %v1608 = vcombine.high %v1606, %v1606
  %v1610 = vpack.i.b16 %v1599, %v1599
  %v1612 = vlaneseq
  %v1613 = vshrl.u32 %v1612, 7
  %v1614 = vsub.s32 0, %v1613
  %v1615 = vrot.slane %v1610, %v1614
  %v1617 = vpack.i.b16 %v1606, %v1606
  %v1619 = vlaneseq
  %v1620 = vshrl.u32 %v1619, 7
  %v1621 = vsub.s32 0, %v1620
  %v1622 = vrot.slane %v1617, %v1621
  %v1624 = vpack.i.b16 %v1607, %v1607
  %v1626 = vlaneseq
  %v1627 = vshrl.u32 %v1626, 7
  %v1628 = vsub.s32 0, %v1627
  %v1629 = vrot.slane %v1624, %v1628
  %v1631 = vpack.i.b16 %v1608, %v1608
  %v1633 = vlaneseq
  %v1634 = vshrl.u32 %v1633, 7
  %v1635 = vsub.s32 0, %v1634
  %v1636 = vrot.slane %v1631, %v1635
  %v1641 = vunpack.c.l.b16 %v1615
  %v1642 = vunpack.c.l.b16 %v1622
  %v1643 = vunpack.c.l.b16 %v1629
  %v1644 = vunpack.c.l.b16 %v1636
  %v1645 = vpack.c.b16 %v1642, %v1641
  %v1646 = vpack.c.b16 %v1644, %v1643
  %1647 = vrot.lane.b32.xlu0 %v1645, 33
  %v1648 = vpop.permute.xlu0 %1647
  %1649 = vrot.lane.b32.xlu0 %v1646, 33
  %v1650 = vpop.permute.xlu0 %1649
  %v1651 = vrot.slane %v1648, 4
  %v1652 = vrot.slane %v1650, 4
  %vm1653 = vcmask 269312
  %v1654 = vsel %vm1653, %v1651, %v1648
  %v1655 = vsel %vm193, %v1651, %v1652
  %v1656 = vsel %vm1653, %v1655, %v1650
  %v1660 = vmul.bf16 %v1578, %v1654
  %v1661 = vmul.bf16 %v1579, %v1656
  %v1662 = vmul.bf16 %v1580, %v1652
  %v1663 = vmul.bf16 %v1581, %v1654
  %v1664 = vmul.bf16 %v1582, %v1656
  %v1665 = vmul.bf16 %v1583, %v1652
  %v1672 = vunpack.c.l.b16 %v1660
  %v1673 = vunpack.c.h.b16 %v1660
  %v1674 = vunpack.c.l.b16 %v1661
  %v1675 = vunpack.c.h.b16 %v1661
  %v1676 = vunpack.c.l.b16 %v1662
  %v1677 = vunpack.c.l.b16 %v1663
  %v1678 = vunpack.c.h.b16 %v1663
  %v1679 = vunpack.c.l.b16 %v1664
  %v1680 = vunpack.c.h.b16 %v1664
  %v1681 = vunpack.c.l.b16 %v1665
  %v1682 = vpack.c.b16 %v1677, %v1672
  %v1683 = vpack.c.b16 %v1678, %v1673
  %v1684 = vpack.c.b16 %v1679, %v1674
  %v1685 = vpack.c.b16 %v1680, %v1675
  %v1686 = vpack.c.b16 %v1681, %v1676
  %1687 = vrot.lane.b32.xlu0 %v1682, 95
  %v1688 = vpop.permute.xlu0 %1687
  %1689 = vrot.lane.b32.xlu0 %v1683, 95
  %v1690 = vpop.permute.xlu0 %1689
  %1691 = vrot.lane.b32.xlu0 %v1684, 95
  %v1692 = vpop.permute.xlu0 %1691
  %1693 = vrot.lane.b32.xlu0 %v1685, 95
  %v1694 = vpop.permute.xlu0 %1693
  %1695 = vrot.lane.b32.xlu0 %v1686, 95
  %v1696 = vpop.permute.xlu0 %1695
  %vm1697 = vcmask 777216
  %v1698 = vsel %vm1697, %v1688, %v1690
  %v1699 = vsel %vm1697, %v1690, %v1692
  %v1700 = vsel %vm1697, %v1692, %v1694
  %v1701 = vsel %vm1697, %v1694, %v1696
  %v1703 = vsel %vm241, %v36, 0
  %v1706 = vsel %vm245, %v1698, 0
  %v1709 = vsel %vm245, %v1699, 0
  %v1712 = vsel %vm245, %v1700, 0
  %v1715 = vsel %vm245, %v1701, 0
  %1717 = vmatprep.subr.bf16.mxu0 0
  %1718 = vmatpush1.bf16.msra.mxu0 0
  %1719 = vmatprep.subr.bf16.mxu0 0
  %1720 = vmatpush1.bf16.msra.mxu0 0
  %1721 = vmatprep.subr.bf16.mxu0 0
  %1722 = vmatpush1.bf16.msra.mxu0 0
  %1723 = vmatprep.subr.bf16.mxu0 0
  %1724 = vmatpush1.bf16.msra.mxu0 0
  %1725 = vmatprep.subr.bf16.mxu0 0
  %1726 = vmatpush1.bf16.msra.mxu0 0
  %1727 = vmatprep.subr.bf16.mxu0 0
  %1728 = vmatpush1.bf16.msra.mxu0 0
  %1729 = vmatprep.subr.bf16.mxu0 0
  %1730 = vmatpush1.bf16.msra.mxu0 0
  %1731 = vmatprep.subr.bf16.mxu0 %v1709
  %1732 = vmatpush1.bf16.msra.mxu0 %v1706
  %1733 = vmatprep.subr.bf16.mxu0 0
  %1734 = vmatpush2.bf16.msra.mxu0 0
  %1735 = vmatprep.subr.bf16.mxu0 0
  %1736 = vmatpush2.bf16.msra.mxu0 0
  %1737 = vmatprep.subr.bf16.mxu0 0
  %1738 = vmatpush2.bf16.msra.mxu0 0
  %1739 = vmatprep.subr.bf16.mxu0 0
  %1740 = vmatpush2.bf16.msra.mxu0 0
  %1741 = vmatprep.subr.bf16.mxu0 0
  %1742 = vmatpush2.bf16.msra.mxu0 0
  %1743 = vmatprep.subr.bf16.mxu0 0
  %1744 = vmatpush2.bf16.msra.mxu0 0
  %1745 = vmatprep.subr.bf16.mxu0 0
  %1746 = vmatpush2.bf16.msra.mxu0 0
  %1747 = vmatprep.subr.bf16.mxu0 0
  %1748 = vmatpush2.bf16.msra.mxu0 0
  %1749 = vmatprep.mubr.bf16.mxu0 0
  %1750 = vmatmul.mubr.bf16.gmra.mxu0 %v1703
  %v1751 = vpop.f32.mrf.mxu0
  %v1752 = vadd.f32 0.0, %v1751
  %v1753 = vpop.f32.mrf.mxu0
  %v1754 = vadd.f32 0.0, %v1753
  %v1755 = vpop.f32.mrf.mxu0
  %v1756 = vpop.f32.mrf.mxu0
  %1757 = vdwg.mxu0
  %1758 = vmatprep.subr.bf16.mxu0 0
  %1759 = vmatpush1.bf16.msra.mxu0 0
  %1760 = vmatprep.subr.bf16.mxu0 0
  %1761 = vmatpush1.bf16.msra.mxu0 0
  %1762 = vmatprep.subr.bf16.mxu0 0
  %1763 = vmatpush1.bf16.msra.mxu0 0
  %1764 = vmatprep.subr.bf16.mxu0 0
  %1765 = vmatpush1.bf16.msra.mxu0 0
  %1766 = vmatprep.subr.bf16.mxu0 0
  %1767 = vmatpush1.bf16.msra.mxu0 0
  %1768 = vmatprep.subr.bf16.mxu0 0
  %1769 = vmatpush1.bf16.msra.mxu0 0
  %1770 = vmatprep.subr.bf16.mxu0 0
  %1771 = vmatpush1.bf16.msra.mxu0 0
  %1772 = vmatprep.subr.bf16.mxu0 %v1715
  %1773 = vmatpush1.bf16.msra.mxu0 %v1712
  %1774 = vmatprep.subr.bf16.mxu0 0
  %1775 = vmatpush2.bf16.msra.mxu0 0
  %1776 = vmatprep.subr.bf16.mxu0 0
  %1777 = vmatpush2.bf16.msra.mxu0 0
  %1778 = vmatprep.subr.bf16.mxu0 0
  %1779 = vmatpush2.bf16.msra.mxu0 0
  %1780 = vmatprep.subr.bf16.mxu0 0
  %1781 = vmatpush2.bf16.msra.mxu0 0
  %1782 = vmatprep.subr.bf16.mxu0 0
  %1783 = vmatpush2.bf16.msra.mxu0 0
  %1784 = vmatprep.subr.bf16.mxu0 0
  %1785 = vmatpush2.bf16.msra.mxu0 0
  %1786 = vmatprep.subr.bf16.mxu0 0
  %1787 = vmatpush2.bf16.msra.mxu0 0
  %1788 = vmatprep.subr.bf16.mxu0 0
  %1789 = vmatpush2.bf16.msra.mxu0 0
  %1790 = vmatprep.mubr.bf16.mxu0 0
  %1791 = vmatmul.mubr.bf16.gmra.mxu0 %v1703
  %v1792 = vpop.f32.mrf.mxu0
  %v1793 = vadd.f32 0.0, %v1792
  %v1794 = vpop.f32.mrf.mxu0
  %v1795 = vadd.f32 0.0, %v1794
  %v1796 = vpop.f32.mrf.mxu0
  %v1797 = vpop.f32.mrf.mxu0
  %1798 = vdwg.mxu0
  %v1799 = vadd.f32 %v1574, %v1752
  %v1800 = vadd.f32 %v1575, %v1754
  %v1801 = vadd.f32 %v1576, %v1793
  %v1802 = vadd.f32 %v1577, %v1795
  %v1803 = vld [vmem:[%s0] sm:$0xff]
  %v1804 = vld [vmem:[%s0 + $0x8] sm:$0xff]
  %v1805 = vld [vmem:[%s0 + $0x10] sm:$0xf]
  %v1806 = vld [vmem:[%s0 + $0x14] sm:$0x33]
  %v1807 = vld [vmem:[%s0 + $0x1c] sm:$0x33]
  %v1808 = vld [vmem:[%s0 + $0x24] sm:$0x3]
  %v1811 = vunpack.c.l.s4 1966171168
  %v1812 = vunpack.c.0.s8 %v1811
  %v1813 = vlaneseq
  %v1814 = vshrl.u32 %v1813, 7
  %v1815 = vsub.s32 %v1812, %v1814
  %v1816 = vrot.slane %v46, %v1815
  %v1817 = vcombine.high %v1816, %v1816
  %v1819 = vunpack.c.l.s4 1966171168
  %v1820 = vunpack.c.0.s8 %v1819
  %v1821 = vlaneseq
  %v1822 = vshrl.u32 %v1821, 7
  %v1823 = vsub.s32 %v1820, %v1822
  %v1824 = vrot.slane %v1816, %v1823
  %v1826 = vunpack.c.l.s4 1966171168
  %v1827 = vunpack.c.0.s8 %v1826
  %v1828 = vlaneseq
  %v1829 = vshrl.u32 %v1828, 7
  %v1830 = vsub.s32 %v1827, %v1829
  %v1831 = vrot.slane %v1817, %v1830
  %v1832 = vcombine.high %v1824, %v1824
  %v1833 = vcombine.high %v1831, %v1831
  %v1835 = vpack.i.b16 %v1824, %v1824
  %v1837 = vlaneseq
  %v1838 = vshrl.u32 %v1837, 7
  %v1839 = vsub.s32 0, %v1838
  %v1840 = vrot.slane %v1835, %v1839
  %v1842 = vpack.i.b16 %v1831, %v1831
  %v1844 = vlaneseq
  %v1845 = vshrl.u32 %v1844, 7
  %v1846 = vsub.s32 0, %v1845
  %v1847 = vrot.slane %v1842, %v1846
  %v1849 = vpack.i.b16 %v1832, %v1832
  %v1851 = vlaneseq
  %v1852 = vshrl.u32 %v1851, 7
  %v1853 = vsub.s32 0, %v1852
  %v1854 = vrot.slane %v1849, %v1853
  %v1856 = vpack.i.b16 %v1833, %v1833
  %v1858 = vlaneseq
  %v1859 = vshrl.u32 %v1858, 7
  %v1860 = vsub.s32 0, %v1859
  %v1861 = vrot.slane %v1856, %v1860
  %v1866 = vunpack.c.l.b16 %v1840
  %v1867 = vunpack.c.l.b16 %v1847
  %v1868 = vunpack.c.l.b16 %v1854
  %v1869 = vunpack.c.l.b16 %v1861
  %v1870 = vpack.c.b16 %v1867, %v1866
  %v1871 = vpack.c.b16 %v1869, %v1868
  %1872 = vrot.lane.b32.xlu0 %v1870, 34
  %v1873 = vpop.permute.xlu0 %1872
  %1874 = vrot.lane.b32.xlu0 %v1871, 34
  %v1875 = vpop.permute.xlu0 %1874
  %v1876 = vrot.slane %v1873, 4
  %v1877 = vrot.slane %v1875, 4
  %vm1878 = vcmask 277504
  %v1879 = vsel %vm1878, %v1876, %v1873
  %v1880 = vsel %vm193, %v1876, %v1877
  %v1881 = vsel %vm1878, %v1880, %v1875
  %v1885 = vmul.bf16 %v1803, %v1879
  %v1886 = vmul.bf16 %v1804, %v1881
  %v1887 = vmul.bf16 %v1805, %v1877
  %v1888 = vmul.bf16 %v1806, %v1879
  %v1889 = vmul.bf16 %v1807, %v1881
  %v1890 = vmul.bf16 %v1808, %v1877
  %v1897 = vunpack.c.l.b16 %v1885
  %v1898 = vunpack.c.h.b16 %v1885
  %v1899 = vunpack.c.l.b16 %v1886
  %v1900 = vunpack.c.h.b16 %v1886
  %v1901 = vunpack.c.l.b16 %v1887
  %v1902 = vunpack.c.l.b16 %v1888
  %v1903 = vunpack.c.h.b16 %v1888
  %v1904 = vunpack.c.l.b16 %v1889
  %v1905 = vunpack.c.h.b16 %v1889
  %v1906 = vunpack.c.l.b16 %v1890
  %v1907 = vpack.c.b16 %v1902, %v1897
  %v1908 = vpack.c.b16 %v1903, %v1898
  %v1909 = vpack.c.b16 %v1904, %v1899
  %v1910 = vpack.c.b16 %v1905, %v1900
  %v1911 = vpack.c.b16 %v1906, %v1901
  %1912 = vrot.lane.b32.xlu0 %v1907, 94
  %v1913 = vpop.permute.xlu0 %1912
  %1914 = vrot.lane.b32.xlu0 %v1908, 94
  %v1915 = vpop.permute.xlu0 %1914
  %1916 = vrot.lane.b32.xlu0 %v1909, 94
  %v1917 = vpop.permute.xlu0 %1916
  %1918 = vrot.lane.b32.xlu0 %v1910, 94
  %v1919 = vpop.permute.xlu0 %1918
  %1920 = vrot.lane.b32.xlu0 %v1911, 94
  %v1921 = vpop.permute.xlu0 %1920
  %vm1922 = vcmask 769024
  %v1923 = vsel %vm1922, %v1913, %v1915
  %v1924 = vsel %vm1922, %v1915, %v1917
  %v1925 = vsel %vm1922, %v1917, %v1919
  %v1926 = vsel %vm1922, %v1919, %v1921
  %v1928 = vsel %vm241, %v37, 0
  %v1931 = vsel %vm245, %v1923, 0
  %v1934 = vsel %vm245, %v1924, 0
  %v1937 = vsel %vm245, %v1925, 0
  %v1940 = vsel %vm245, %v1926, 0
  %1942 = vmatprep.subr.bf16.mxu0 0
  %1943 = vmatpush1.bf16.msra.mxu0 0
  %1944 = vmatprep.subr.bf16.mxu0 0
  %1945 = vmatpush1.bf16.msra.mxu0 0
  %1946 = vmatprep.subr.bf16.mxu0 0
  %1947 = vmatpush1.bf16.msra.mxu0 0
  %1948 = vmatprep.subr.bf16.mxu0 0
  %1949 = vmatpush1.bf16.msra.mxu0 0
  %1950 = vmatprep.subr.bf16.mxu0 0
  %1951 = vmatpush1.bf16.msra.mxu0 0
  %1952 = vmatprep.subr.bf16.mxu0 0
  %1953 = vmatpush1.bf16.msra.mxu0 0
  %1954 = vmatprep.subr.bf16.mxu0 0
  %1955 = vmatpush1.bf16.msra.mxu0 0
  %1956 = vmatprep.subr.bf16.mxu0 %v1934
  %1957 = vmatpush1.bf16.msra.mxu0 %v1931
  %1958 = vmatprep.subr.bf16.mxu0 0
  %1959 = vmatpush2.bf16.msra.mxu0 0
  %1960 = vmatprep.subr.bf16.mxu0 0
  %1961 = vmatpush2.bf16.msra.mxu0 0
  %1962 = vmatprep.subr.bf16.mxu0 0
  %1963 = vmatpush2.bf16.msra.mxu0 0
  %1964 = vmatprep.subr.bf16.mxu0 0
  %1965 = vmatpush2.bf16.msra.mxu0 0
  %1966 = vmatprep.subr.bf16.mxu0 0
  %1967 = vmatpush2.bf16.msra.mxu0 0
  %1968 = vmatprep.subr.bf16.mxu0 0
  %1969 = vmatpush2.bf16.msra.mxu0 0
  %1970 = vmatprep.subr.bf16.mxu0 0
  %1971 = vmatpush2.bf16.msra.mxu0 0
  %1972 = vmatprep.subr.bf16.mxu0 0
  %1973 = vmatpush2.bf16.msra.mxu0 0
  %1974 = vmatprep.mubr.bf16.mxu0 0
  %1975 = vmatmul.mubr.bf16.gmra.mxu0 %v1928
  %v1976 = vpop.f32.mrf.mxu0
  %v1977 = vadd.f32 0.0, %v1976
  %v1978 = vpop.f32.mrf.mxu0
  %v1979 = vadd.f32 0.0, %v1978
  %v1980 = vpop.f32.mrf.mxu0
  %v1981 = vpop.f32.mrf.mxu0
  %1982 = vdwg.mxu0
  %1983 = vmatprep.subr.bf16.mxu0 0
  %1984 = vmatpush1.bf16.msra.mxu0 0
  %1985 = vmatprep.subr.bf16.mxu0 0
  %1986 = vmatpush1.bf16.msra.mxu0 0
  %1987 = vmatprep.subr.bf16.mxu0 0
  %1988 = vmatpush1.bf16.msra.mxu0 0
  %1989 = vmatprep.subr.bf16.mxu0 0
  %1990 = vmatpush1.bf16.msra.mxu0 0
  %1991 = vmatprep.subr.bf16.mxu0 0
  %1992 = vmatpush1.bf16.msra.mxu0 0
  %1993 = vmatprep.subr.bf16.mxu0 0
  %1994 = vmatpush1.bf16.msra.mxu0 0
  %1995 = vmatprep.subr.bf16.mxu0 0
  %1996 = vmatpush1.bf16.msra.mxu0 0
  %1997 = vmatprep.subr.bf16.mxu0 %v1940
  %1998 = vmatpush1.bf16.msra.mxu0 %v1937
  %1999 = vmatprep.subr.bf16.mxu0 0
  %2000 = vmatpush2.bf16.msra.mxu0 0
  %2001 = vmatprep.subr.bf16.mxu0 0
  %2002 = vmatpush2.bf16.msra.mxu0 0
  %2003 = vmatprep.subr.bf16.mxu0 0
  %2004 = vmatpush2.bf16.msra.mxu0 0
  %2005 = vmatprep.subr.bf16.mxu0 0
  %2006 = vmatpush2.bf16.msra.mxu0 0
  %2007 = vmatprep.subr.bf16.mxu0 0
  %2008 = vmatpush2.bf16.msra.mxu0 0
  %2009 = vmatprep.subr.bf16.mxu0 0
  %2010 = vmatpush2.bf16.msra.mxu0 0
  %2011 = vmatprep.subr.bf16.mxu0 0
  %2012 = vmatpush2.bf16.msra.mxu0 0
  %2013 = vmatprep.subr.bf16.mxu0 0
  %2014 = vmatpush2.bf16.msra.mxu0 0
  %2015 = vmatprep.mubr.bf16.mxu0 0
  %2016 = vmatmul.mubr.bf16.gmra.mxu0 %v1928
  %v2017 = vpop.f32.mrf.mxu0
  %v2018 = vadd.f32 0.0, %v2017
  %v2019 = vpop.f32.mrf.mxu0
  %v2020 = vadd.f32 0.0, %v2019
  %v2021 = vpop.f32.mrf.mxu0
  %v2022 = vpop.f32.mrf.mxu0
  %2023 = vdwg.mxu0
  %v2024 = vadd.f32 %v1799, %v1977
  %v2025 = vadd.f32 %v1800, %v1979
  %v2026 = vadd.f32 %v1801, %v2018
  %v2027 = vadd.f32 %v1802, %v2020
  %v2028 = vld [vmem:[%s3] sm:$0xf]
  %2030 = vset.pattern.permute.xlu0 0
  %2031 = vperm.xlu0 %2030, %v2028
  %v2032 = vpop.permute.xlu0 %2031
  %v2034 = vmul.f32 %v2024, %v2032
  %v2035 = vmul.f32 %v2025, %v2032
  %v2036 = vmul.f32 %v2026, %v2032
  %v2037 = vmul.f32 %v2027, %v2032
  %v2038 = vld [vmem:[%s4] sm:$0xf]
  %2040 = vset.pattern.permute.xlu0 0
  %2041 = vperm.xlu0 %2040, %v2038
  %v2042 = vpop.permute.xlu0 %2041
  %v2044 = vadd.f32 %v2034, %v2042
  %v2045 = vadd.f32 %v2035, %v2042
  %v2046 = vadd.f32 %v2036, %v2042
  %v2047 = vadd.f32 %v2037, %v2042
  %v2048 = vld [vmem:[%s6] sm:$0xff]
  %v2049 = vunpack.c.l.bf16 %v2048
  %v2050 = vunpack.c.h.bf16 %v2048
  %v2053 = vcombine.high %v2049, %v2049
  %v2054 = vcombine.high %v2050, %v2050
  %v2057 = vadd.f32 %v2044, %v2049
  %v2058 = vadd.f32 %v2045, %v2053
  %v2059 = vadd.f32 %v2046, %v2050
  %v2060 = vadd.f32 %v2047, %v2054
  %v2061 = vld [vmem:[#allocation2] sm:$0x1]
  %vm2062 = vcmp.gt.f32.partialorder %v2057, 0.0
  %vm2063 = vcmp.gt.f32.partialorder %v2058, 0.0
  %vm2064 = vcmp.gt.f32.partialorder %v2059, 0.0
  %vm2065 = vcmp.gt.f32.partialorder %v2060, 0.0
  %v2067 = vlaneseq
  %v2068 = vshrl.u32 %v2067, 7
  %v2069 = vsub.s32 0, %v2068
  %v2070 = vrot.slane %v2061, %v2069
  %2071 = vset.pattern.permute.xlu0 0
  %2072 = vperm.xlu0 %2071, %v2070
  %v2073 = vpop.permute.xlu0 %2072
  %v2075 = vmul.f32 %v2073, %v2057
  %v2076 = vmul.f32 %v2073, %v2058
  %v2077 = vmul.f32 %v2073, %v2059
  %v2078 = vmul.f32 %v2073, %v2060
  %v2079 = vsel %vm2062, %v2057, %v2075
  %v2080 = vsel %vm2063, %v2058, %v2076
  %v2081 = vsel %vm2064, %v2059, %v2077
  %v2082 = vsel %vm2065, %v2060, %v2078
  %v2083 = vpack.c.bf16 %v2079, %v2079
  %v2084 = vpack.c.bf16 %v2080, %v2080
  %v2085 = vpack.c.bf16 %v2081, %v2081
  %v2086 = vpack.c.bf16 %v2082, %v2082
  %v2091 = vcombine.low %v2083, %v2084
  %v2092 = vcombine.low %v2085, %v2086
  %v2094 = vunpack.c.l.s4 1983009808
  %v2095 = vunpack.c.0.s8 %v2094
  %v2096 = vlaneseq
  %v2097 = vshrl.u32 %v2096, 7
  %v2098 = vsub.s32 %v2095, %v2097
  %v2099 = vrot.slane %v2091, %v2098
  %v2101 = vunpack.c.l.s4 1983009808
  %v2102 = vunpack.c.0.s8 %v2101
  %v2103 = vlaneseq
  %v2104 = vshrl.u32 %v2103, 7
  %v2105 = vsub.s32 %v2102, %v2104
  %v2106 = vrot.slane %v2092, %v2105
  %v2107 = vcombine.low %v2099, %v2106
  %2109 = vst [vmem:[%s7] sm:$0xff] %v2107
  // Predicated region
  $region30: #{dpblock_forward.9} parent=0 // pred_check
    _
  $region31: #{dpblock_forward.9} parent=0 // pred_check_branch
    %2111 = sbr.rel (0) target = $region33
  $region32: #{dpblock_forward.9} parent=0 // pred_region
    _
  $region33: #{dpblock_forward.9} parent=0 // pred_fallthru
    _
  // Predicated region
  $region34: #{dpblock_forward.9} parent=0 // pred_check
    _
  $region35: #{dpblock_forward.9} parent=0 // pred_check_branch
    %2113 = sbr.rel (0) target = $region37
  $region36: #{dpblock_forward.9} parent=0 // pred_region
    _
  $region37: #{dpblock_forward.9} parent=0 // pred_fallthru
    _

// kernel: dpblock_forward.10
$region0: #{dpblock_forward.10}
  #allocation0 [shape = 'u32[]', space=smem, size = 0x4, offset = 0x4, fixed_abs, tag = 'smem constant byte address 0x4 - core index']
  #allocation1 [shape = 'u32[144,128]{1,0:T(1,128)}', space=vmem, size = 0x12000, scoped, tag = 'internal scratch']
  #allocation2 [shape = 'f32[1,1]{1,0:T(1,128)S(1)}', space=vmem, size = 0x200, scoped, tag = 'scoped memory for dpblock_forward.10']
  %s0 = inlined_call_operand.vmem [shape: bf16[4,580], index: 0, kind: input, shape index: {}]
  %s1 = inlined_call_operand.vmem [shape: bf16[9,8,4], index: 1, kind: input, shape index: {}]
  %s2 = inlined_call_operand.vmem [shape: bf16[9,1,512], index: 2, kind: input, shape index: {}]
  %s3 = inlined_call_operand.vmem [shape: f32[8,1], index: 3, kind: input, shape index: {}]
  %s4 = inlined_call_operand.vmem [shape: f32[8,1], index: 4, kind: input, shape index: {}]
  %s5 = inlined_call_operand.<no memory space> [shape: f32[1,1], index: 5, kind: input, shape index: {}]
  %s6 = inlined_call_operand.vmem [shape: bf16[8,512], index: 6, kind: output, shape index: {}]
  %s7 = sld [smem:[#allocation0]]
  $region34: #{dpblock_forward.10} parent=0
    _
  %s9 = ssub.s32 1, %s7
  %s10 = scalar_select 0, %s9, %s7
  %v11 = vstv %s5
  %12 = vst [vmem:[#allocation2] sm:$0x1] %v11
  // Predicated region
  $region2: #{dpblock_forward.10} parent=0 // pred_check
    _
  $region3: #{dpblock_forward.10} parent=0 // pred_check_branch
    %14 = sbr.rel (0) target = $region5
  $region4: #{dpblock_forward.10} parent=0 // pred_region
    _
  $region5: #{dpblock_forward.10} parent=0 // pred_fallthru
    _
  // Predicated region
  $region6: #{dpblock_forward.10} parent=0 // pred_check
    _
  $region7: #{dpblock_forward.10} parent=0 // pred_check_branch
    %16 = sbr.rel (0) target = $region9
  $region8: #{dpblock_forward.10} parent=0 // pred_region
    _
  $region9: #{dpblock_forward.10} parent=0 // pred_fallthru
    _
  // Predicated region
  $region10: #{dpblock_forward.10} parent=0 // pred_check
    _
  $region11: #{dpblock_forward.10} parent=0 // pred_check_branch
    %18 = sbr.rel (0) target = $region13
  $region12: #{dpblock_forward.10} parent=0 // pred_region
    _
  $region13: #{dpblock_forward.10} parent=0 // pred_fallthru
    _
  // Predicated region
  $region14: #{dpblock_forward.10} parent=0 // pred_check
    _
  $region15: #{dpblock_forward.10} parent=0 // pred_check_branch
    %20 = sbr.rel (0) target = $region17
  $region16: #{dpblock_forward.10} parent=0 // pred_region
    _
  $region17: #{dpblock_forward.10} parent=0 // pred_fallthru
    _
  // Predicated region
  $region18: #{dpblock_forward.10} parent=0 // pred_check
    _
  $region19: #{dpblock_forward.10} parent=0 // pred_check_branch
    %22 = sbr.rel (0) target = $region21
  $region20: #{dpblock_forward.10} parent=0 // pred_region
    _
  $region21: #{dpblock_forward.10} parent=0 // pred_fallthru
    _
  // Predicated region
  $region22: #{dpblock_forward.10} parent=0 // pred_check
    _
  $region23: #{dpblock_forward.10} parent=0 // pred_check_branch
    %24 = sbr.rel (0) target = $region25
  $region24: #{dpblock_forward.10} parent=0 // pred_region
    _
  $region25: #{dpblock_forward.10} parent=0 // pred_fallthru
    _
  %v26 = vld [vmem:[%s1] sm:$0xf]
  %v27 = vld [vmem:[%s1 + $0x4] sm:$0xf]
  %v28 = vld [vmem:[%s1 + $0x8] sm:$0xf]
  %v29 = vld [vmem:[%s1 + $0xc] sm:$0xf]
  %v30 = vld [vmem:[%s1 + $0x10] sm:$0xf]
  %v31 = vld [vmem:[%s1 + $0x14] sm:$0xf]
  %v32 = vld [vmem:[%s1 + $0x18] sm:$0xf]
  %v33 = vld [vmem:[%s1 + $0x1c] sm:$0xf]
  %v34 = vld [vmem:[%s1 + $0x20] sm:$0xf]
  %v35 = vld [vmem:[%s2] sm:$0xf]
  %v36 = vld [vmem:[%s2 + $0x4] sm:$0xf]
  %v37 = vld [vmem:[%s2 + $0x8] sm:$0xf]
  %v38 = vld [vmem:[%s2 + $0xc] sm:$0xf]
  %v39 = vld [vmem:[%s2 + $0x10] sm:$0xf]
  %v40 = vld [vmem:[%s2 + $0x14] sm:$0xf]
  %v41 = vld [vmem:[%s2 + $0x18] sm:$0xf]
  %v42 = vld [vmem:[%s2 + $0x1c] sm:$0xf]
  %v43 = vld [vmem:[%s2 + $0x20] sm:$0xf]
  %v44 = vld [vmem:[%s0] sm:$0xff]
  %v47 = vunpack.c.l.s4 1966171168
  %v48 = vunpack.c.0.s8 %v47
  %v49 = vlaneseq
  %v50 = vshrl.u32 %v49, 7
  %v51 = vsub.s32 %v48, %v50
  %v52 = vrot.slane %v35, %v51
  %v53 = vcombine.high %v52, %v52
  %v55 = vunpack.c.l.s4 1966171168
  %v56 = vunpack.c.0.s8 %v55
  %v57 = vlaneseq
  %v58 = vshrl.u32 %v57, 7
  %v59 = vsub.s32 %v56, %v58
  %v60 = vrot.slane %v52, %v59
  %v62 = vunpack.c.l.s4 1966171168
  %v63 = vunpack.c.0.s8 %v62
  %v64 = vlaneseq
  %v65 = vshrl.u32 %v64, 7
  %v66 = vsub.s32 %v63, %v65
  %v67 = vrot.slane %v53, %v66
  %v68 = vcombine.high %v60, %v60
  %v69 = vcombine.high %v67, %v67
  %v71 = vpack.i.b16 %v60, %v60
  %v73 = vlaneseq
  %v74 = vshrl.u32 %v73, 7
  %v75 = vsub.s32 0, %v74
  %v76 = vrot.slane %v71, %v75
  %v78 = vpack.i.b16 %v67, %v67
  %v80 = vlaneseq
  %v81 = vshrl.u32 %v80, 7
  %v82 = vsub.s32 0, %v81
  %v83 = vrot.slane %v78, %v82
  %v85 = vpack.i.b16 %v68, %v68
  %v87 = vlaneseq
  %v88 = vshrl.u32 %v87, 7
  %v89 = vsub.s32 0, %v88
  %v90 = vrot.slane %v85, %v89
  %v92 = vpack.i.b16 %v69, %v69
  %v94 = vlaneseq
  %v95 = vshrl.u32 %v94, 7
  %v96 = vsub.s32 0, %v95
  %v97 = vrot.slane %v92, %v96
  %v102 = vcombine.low %v76, %v83
  %v103 = vcombine.low %v90, %v97
  %v105 = vunpack.c.l.s4 1983009808
  %v106 = vunpack.c.0.s8 %v105
  %v107 = vlaneseq
  %v108 = vshrl.u32 %v107, 7
  %v109 = vsub.s32 %v106, %v108
  %v110 = vrot.slane %v102, %v109
  %v112 = vunpack.c.l.s4 1983009808
  %v113 = vunpack.c.0.s8 %v112
  %v114 = vlaneseq
  %v115 = vshrl.u32 %v114, 7
  %v116 = vsub.s32 %v113, %v115
  %v117 = vrot.slane %v103, %v116
  %v118 = vcombine.low %v110, %v117
  %v120 = vmul.bf16 %v44, %v118
  %v121 = vld [vmem:[%s0 + $0x8] sm:$0x3]
  %v124 = vunpack.c.l.s4 1966171168
  %v125 = vunpack.c.0.s8 %v124
  %v126 = vlaneseq
  %v127 = vshrl.u32 %v126, 7
  %v128 = vsub.s32 %v125, %v127
  %v129 = vrot.slane %v36, %v128
  %v130 = vcombine.high %v129, %v129
  %v132 = vunpack.c.l.s4 1966171168
  %v133 = vunpack.c.0.s8 %v132
  %v134 = vlaneseq
  %v135 = vshrl.u32 %v134, 7
  %v136 = vsub.s32 %v133, %v135
  %v137 = vrot.slane %v129, %v136
  %v139 = vunpack.c.l.s4 1966171168
  %v140 = vunpack.c.0.s8 %v139
  %v141 = vlaneseq
  %v142 = vshrl.u32 %v141, 7
  %v143 = vsub.s32 %v140, %v142
  %v144 = vrot.slane %v130, %v143
  %v145 = vcombine.high %v137, %v137
  %v146 = vcombine.high %v144, %v144
  %v148 = vpack.i.b16 %v137, %v137
  %v150 = vlaneseq
  %v151 = vshrl.u32 %v150, 7
  %v152 = vsub.s32 0, %v151
  %v153 = vrot.slane %v148, %v152
  %v155 = vpack.i.b16 %v144, %v144
  %v157 = vlaneseq
  %v158 = vshrl.u32 %v157, 7
  %v159 = vsub.s32 0, %v158
  %v160 = vrot.slane %v155, %v159
  %v162 = vpack.i.b16 %v145, %v145
  %v164 = vlaneseq
  %v165 = vshrl.u32 %v164, 7
  %v166 = vsub.s32 0, %v165
  %v167 = vrot.slane %v162, %v166
  %v169 = vpack.i.b16 %v146, %v146
  %v171 = vlaneseq
  %v172 = vshrl.u32 %v171, 7
  %v173 = vsub.s32 0, %v172
  %v174 = vrot.slane %v169, %v173
  %v179 = vcombine.low %v153, %v160
  %v180 = vcombine.low %v167, %v174
  %v182 = vunpack.c.l.s4 1983009808
  %v183 = vunpack.c.0.s8 %v182
  %v184 = vlaneseq
  %v185 = vshrl.u32 %v184, 7
  %v186 = vsub.s32 %v183, %v185
  %v187 = vrot.slane %v179, %v186
  %v189 = vunpack.c.l.s4 1983009808
  %v190 = vunpack.c.0.s8 %v189
  %v191 = vlaneseq
  %v192 = vshrl.u32 %v191, 7
  %v193 = vsub.s32 %v190, %v192
  %v194 = vrot.slane %v180, %v193
  %v195 = vcombine.low %v187, %v194
  %196 = vrot.lane.b32.xlu0 %v195, 2
  %v197 = vpop.permute.xlu0 %196
  %v198 = vrot.slane %v197, 6
  %vm199 = vcmask 15360
  %v200 = vsel %vm199, %v198, %v197
  %v203 = vmul.bf16 %v44, %v200
  %v204 = vmul.bf16 %v121, %v198
  %v207 = vcombine.high %v203, %v203
  %v209 = vunpack.c.l.s4 1983009808
  %v210 = vunpack.c.0.s8 %v209
  %v211 = vlaneseq
  %v212 = vshrl.u32 %v211, 7
  %v213 = vsub.s32 %v210, %v212
  %v214 = vrot.slane %v203, %v213
  %v216 = vunpack.c.l.s4 1983009808
  %v217 = vunpack.c.0.s8 %v216
  %v218 = vlaneseq
  %v219 = vshrl.u32 %v218, 7
  %v220 = vsub.s32 %v217, %v219
  %v221 = vrot.slane %v207, %v220
  %v222 = vcombine.high %v214, %v214
  %v223 = vcombine.high %v221, %v221
  %v225 = vunpack.c.l.s4 1983009808
  %v226 = vunpack.c.0.s8 %v225
  %v227 = vlaneseq
  %v228 = vshrl.u32 %v227, 7
  %v229 = vsub.s32 %v226, %v228
  %v230 = vrot.slane %v204, %v229
  %231 = vrot.lane.b32.xlu0 %v214, 126
  %v232 = vpop.permute.xlu0 %231
  %233 = vrot.lane.b32.xlu0 %v222, 126
  %v234 = vpop.permute.xlu0 %233
  %235 = vrot.lane.b32.xlu0 %v221, 126
  %v236 = vpop.permute.xlu0 %235
  %237 = vrot.lane.b32.xlu0 %v223, 126
  %v238 = vpop.permute.xlu0 %237
  %239 = vrot.lane.b32.xlu0 %v230, 126
  %v240 = vpop.permute.xlu0 %239
  %vm241 = vcmask 1031168
  %v242 = vsel %vm241, %v232, %v234
  %v243 = vsel %vm241, %v234, %v236
  %v244 = vsel %vm241, %v236, %v238
  %v245 = vsel %vm241, %v238, %v240
  %vm246 = vcmask 31744
  %v248 = vsel %vm246, %v27, 0
  %vm250 = vcmask 1041408
  %v252 = vsel %vm250, %v242, 0
  %v255 = vsel %vm250, %v243, 0
  %v258 = vsel %vm250, %v244, 0
  %v261 = vsel %vm250, %v245, 0
  %263 = vmatprep.subr.bf16.mxu0 0
  %264 = vmatpush1.bf16.msra.mxu0 0
  %265 = vmatprep.subr.bf16.mxu0 0
  %266 = vmatpush1.bf16.msra.mxu0 0
  %267 = vmatprep.subr.bf16.mxu0 0
  %268 = vmatpush1.bf16.msra.mxu0 0
  %269 = vmatprep.subr.bf16.mxu0 0
  %270 = vmatpush1.bf16.msra.mxu0 0
  %271 = vmatprep.subr.bf16.mxu0 0
  %272 = vmatpush1.bf16.msra.mxu0 0
  %273 = vmatprep.subr.bf16.mxu0 0
  %274 = vmatpush1.bf16.msra.mxu0 0
  %275 = vmatprep.subr.bf16.mxu0 0
  %276 = vmatpush1.bf16.msra.mxu0 0
  %277 = vmatprep.subr.bf16.mxu0 %v255
  %278 = vmatpush1.bf16.msra.mxu0 %v252
  %279 = vmatprep.subr.bf16.mxu0 0
  %280 = vmatpush2.bf16.msra.mxu0 0
  %281 = vmatprep.subr.bf16.mxu0 0
  %282 = vmatpush2.bf16.msra.mxu0 0
  %283 = vmatprep.subr.bf16.mxu0 0
  %284 = vmatpush2.bf16.msra.mxu0 0
  %285 = vmatprep.subr.bf16.mxu0 0
  %286 = vmatpush2.bf16.msra.mxu0 0
  %287 = vmatprep.subr.bf16.mxu0 0
  %288 = vmatpush2.bf16.msra.mxu0 0
  %289 = vmatprep.subr.bf16.mxu0 0
  %290 = vmatpush2.bf16.msra.mxu0 0
  %291 = vmatprep.subr.bf16.mxu0 0
  %292 = vmatpush2.bf16.msra.mxu0 0
  %293 = vmatprep.subr.bf16.mxu0 0
  %294 = vmatpush2.bf16.msra.mxu0 0
  %295 = vmatprep.mubr.bf16.mxu0 0
  %296 = vmatmul.mubr.bf16.gmra.mxu0 %v248
  %v297 = vpop.f32.mrf.mxu0
  %v298 = vadd.f32 0.0, %v297
  %v299 = vpop.f32.mrf.mxu0
  %v300 = vadd.f32 0.0, %v299
  %v301 = vpop.f32.mrf.mxu0
  %v302 = vpop.f32.mrf.mxu0
  %303 = vdwg.mxu0
  %304 = vmatprep.subr.bf16.mxu0 0
  %305 = vmatpush1.bf16.msra.mxu0 0
  %306 = vmatprep.subr.bf16.mxu0 0
  %307 = vmatpush1.bf16.msra.mxu0 0
  %308 = vmatprep.subr.bf16.mxu0 0
  %309 = vmatpush1.bf16.msra.mxu0 0
  %310 = vmatprep.subr.bf16.mxu0 0
  %311 = vmatpush1.bf16.msra.mxu0 0
  %312 = vmatprep.subr.bf16.mxu0 0
  %313 = vmatpush1.bf16.msra.mxu0 0
  %314 = vmatprep.subr.bf16.mxu0 0
  %315 = vmatpush1.bf16.msra.mxu0 0
  %316 = vmatprep.subr.bf16.mxu0 0
  %317 = vmatpush1.bf16.msra.mxu0 0
  %318 = vmatprep.subr.bf16.mxu0 %v261
  %319 = vmatpush1.bf16.msra.mxu0 %v258
  %320 = vmatprep.subr.bf16.mxu0 0
  %321 = vmatpush2.bf16.msra.mxu0 0
  %322 = vmatprep.subr.bf16.mxu0 0
  %323 = vmatpush2.bf16.msra.mxu0 0
  %324 = vmatprep.subr.bf16.mxu0 0
  %325 = vmatpush2.bf16.msra.mxu0 0
  %326 = vmatprep.subr.bf16.mxu0 0
  %327 = vmatpush2.bf16.msra.mxu0 0
  %328 = vmatprep.subr.bf16.mxu0 0
  %329 = vmatpush2.bf16.msra.mxu0 0
  %330 = vmatprep.subr.bf16.mxu0 0
  %331 = vmatpush2.bf16.msra.mxu0 0
  %332 = vmatprep.subr.bf16.mxu0 0
  %333 = vmatpush2.bf16.msra.mxu0 0
  %334 = vmatprep.subr.bf16.mxu0 0
  %335 = vmatpush2.bf16.msra.mxu0 0
  %336 = vmatprep.mubr.bf16.mxu0 0
  %337 = vmatmul.mubr.bf16.gmra.mxu0 %v248
  %v338 = vpop.f32.mrf.mxu0
  %v339 = vadd.f32 0.0, %v338
  %v340 = vpop.f32.mrf.mxu0
  %v341 = vadd.f32 0.0, %v340
  %v342 = vpop.f32.mrf.mxu0
  %v343 = vpop.f32.mrf.mxu0
  %344 = vdwg.mxu0
  %v346 = vcombine.high %v120, %v120
  %v348 = vunpack.c.l.s4 1983009808
  %v349 = vunpack.c.0.s8 %v348
  %v350 = vlaneseq
  %v351 = vshrl.u32 %v350, 7
  %v352 = vsub.s32 %v349, %v351
  %v353 = vrot.slane %v120, %v352
  %v355 = vunpack.c.l.s4 1983009808
  %v356 = vunpack.c.0.s8 %v355
  %v357 = vlaneseq
  %v358 = vshrl.u32 %v357, 7
  %v359 = vsub.s32 %v356, %v358
  %v360 = vrot.slane %v346, %v359
  %v361 = vcombine.high %v353, %v353
  %v362 = vcombine.high %v360, %v360
  %v364 = vsel %vm246, %v26, 0
  %v367 = vsel %vm250, %v353, 0
  %v370 = vsel %vm250, %v361, 0
  %v373 = vsel %vm250, %v360, 0
  %v376 = vsel %vm250, %v362, 0
  %378 = vmatprep.subr.bf16.mxu0 0
  %379 = vmatpush1.bf16.msra.mxu0 0
  %380 = vmatprep.subr.bf16.mxu0 0
  %381 = vmatpush1.bf16.msra.mxu0 0
  %382 = vmatprep.subr.bf16.mxu0 0
  %383 = vmatpush1.bf16.msra.mxu0 0
  %384 = vmatprep.subr.bf16.mxu0 0
  %385 = vmatpush1.bf16.msra.mxu0 0
  %386 = vmatprep.subr.bf16.mxu0 0
  %387 = vmatpush1.bf16.msra.mxu0 0
  %388 = vmatprep.subr.bf16.mxu0 0
  %389 = vmatpush1.bf16.msra.mxu0 0
  %390 = vmatprep.subr.bf16.mxu0 0
  %391 = vmatpush1.bf16.msra.mxu0 0
  %392 = vmatprep.subr.bf16.mxu0 %v370
  %393 = vmatpush1.bf16.msra.mxu0 %v367
  %394 = vmatprep.subr.bf16.mxu0 0
  %395 = vmatpush2.bf16.msra.mxu0 0
  %396 = vmatprep.subr.bf16.mxu0 0
  %397 = vmatpush2.bf16.msra.mxu0 0
  %398 = vmatprep.subr.bf16.mxu0 0
  %399 = vmatpush2.bf16.msra.mxu0 0
  %400 = vmatprep.subr.bf16.mxu0 0
  %401 = vmatpush2.bf16.msra.mxu0 0
  %402 = vmatprep.subr.bf16.mxu0 0
  %403 = vmatpush2.bf16.msra.mxu0 0
  %404 = vmatprep.subr.bf16.mxu0 0
  %405 = vmatpush2.bf16.msra.mxu0 0
  %406 = vmatprep.subr.bf16.mxu0 0
  %407 = vmatpush2.bf16.msra.mxu0 0
  %408 = vmatprep.subr.bf16.mxu0 0
  %409 = vmatpush2.bf16.msra.mxu0 0
  %410 = vmatprep.mubr.bf16.mxu0 0
  %411 = vmatmul.mubr.bf16.gmra.mxu0 %v364
  %v412 = vpop.f32.mrf.mxu0
  %v413 = vadd.f32 %v298, %v412
  %v414 = vpop.f32.mrf.mxu0
  %v415 = vadd.f32 %v300, %v414
  %v416 = vpop.f32.mrf.mxu0
  %v417 = vpop.f32.mrf.mxu0
  %418 = vdwg.mxu0
  %419 = vmatprep.subr.bf16.mxu0 0
  %420 = vmatpush1.bf16.msra.mxu0 0
  %421 = vmatprep.subr.bf16.mxu0 0
  %422 = vmatpush1.bf16.msra.mxu0 0
  %423 = vmatprep.subr.bf16.mxu0 0
  %424 = vmatpush1.bf16.msra.mxu0 0
  %425 = vmatprep.subr.bf16.mxu0 0
  %426 = vmatpush1.bf16.msra.mxu0 0
  %427 = vmatprep.subr.bf16.mxu0 0
  %428 = vmatpush1.bf16.msra.mxu0 0
  %429 = vmatprep.subr.bf16.mxu0 0
  %430 = vmatpush1.bf16.msra.mxu0 0
  %431 = vmatprep.subr.bf16.mxu0 0
  %432 = vmatpush1.bf16.msra.mxu0 0
  %433 = vmatprep.subr.bf16.mxu0 %v376
  %434 = vmatpush1.bf16.msra.mxu0 %v373
  %435 = vmatprep.subr.bf16.mxu0 0
  %436 = vmatpush2.bf16.msra.mxu0 0
  %437 = vmatprep.subr.bf16.mxu0 0
  %438 = vmatpush2.bf16.msra.mxu0 0
  %439 = vmatprep.subr.bf16.mxu0 0
  %440 = vmatpush2.bf16.msra.mxu0 0
  %441 = vmatprep.subr.bf16.mxu0 0
  %442 = vmatpush2.bf16.msra.mxu0 0
  %443 = vmatprep.subr.bf16.mxu0 0
  %444 = vmatpush2.bf16.msra.mxu0 0
  %445 = vmatprep.subr.bf16.mxu0 0
  %446 = vmatpush2.bf16.msra.mxu0 0
  %447 = vmatprep.subr.bf16.mxu0 0
  %448 = vmatpush2.bf16.msra.mxu0 0
  %449 = vmatprep.subr.bf16.mxu0 0
  %450 = vmatpush2.bf16.msra.mxu0 0
  %451 = vmatprep.mubr.bf16.mxu0 0
  %452 = vmatmul.mubr.bf16.gmra.mxu0 %v364
  %v453 = vpop.f32.mrf.mxu0
  %v454 = vadd.f32 %v339, %v453
  %v455 = vpop.f32.mrf.mxu0
  %v456 = vadd.f32 %v341, %v455
  %v457 = vpop.f32.mrf.mxu0
  %v458 = vpop.f32.mrf.mxu0
  %459 = vdwg.mxu0
  %v460 = vld [vmem:[%s0] sm:$0xff]
  %v461 = vld [vmem:[%s0 + $0x8] sm:$0x3]
  %v464 = vunpack.c.l.s4 1966171168
  %v465 = vunpack.c.0.s8 %v464
  %v466 = vlaneseq
  %v467 = vshrl.u32 %v466, 7
  %v468 = vsub.s32 %v465, %v467
  %v469 = vrot.slane %v37, %v468
  %v470 = vcombine.high %v469, %v469
  %v472 = vunpack.c.l.s4 1966171168
  %v473 = vunpack.c.0.s8 %v472
  %v474 = vlaneseq
  %v475 = vshrl.u32 %v474, 7
  %v476 = vsub.s32 %v473, %v475
  %v477 = vrot.slane %v469, %v476
  %v479 = vunpack.c.l.s4 1966171168
  %v480 = vunpack.c.0.s8 %v479
  %v481 = vlaneseq
  %v482 = vshrl.u32 %v481, 7
  %v483 = vsub.s32 %v480, %v482
  %v484 = vrot.slane %v470, %v483
  %v485 = vcombine.high %v477, %v477
  %v486 = vcombine.high %v484, %v484
  %v488 = vpack.i.b16 %v477, %v477
  %v490 = vlaneseq
  %v491 = vshrl.u32 %v490, 7
  %v492 = vsub.s32 0, %v491
  %v493 = vrot.slane %v488, %v492
  %v495 = vpack.i.b16 %v484, %v484
  %v497 = vlaneseq
  %v498 = vshrl.u32 %v497, 7
  %v499 = vsub.s32 0, %v498
  %v500 = vrot.slane %v495, %v499
  %v502 = vpack.i.b16 %v485, %v485
  %v504 = vlaneseq
  %v505 = vshrl.u32 %v504, 7
  %v506 = vsub.s32 0, %v505
  %v507 = vrot.slane %v502, %v506
  %v509 = vpack.i.b16 %v486, %v486
  %v511 = vlaneseq
  %v512 = vshrl.u32 %v511, 7
  %v513 = vsub.s32 0, %v512
  %v514 = vrot.slane %v509, %v513
  %v519 = vcombine.low %v493, %v500
  %v520 = vcombine.low %v507, %v514
  %v522 = vunpack.c.l.s4 1983009808
  %v523 = vunpack.c.0.s8 %v522
  %v524 = vlaneseq
  %v525 = vshrl.u32 %v524, 7
  %v526 = vsub.s32 %v523, %v525
  %v527 = vrot.slane %v519, %v526
  %v529 = vunpack.c.l.s4 1983009808
  %v530 = vunpack.c.0.s8 %v529
  %v531 = vlaneseq
  %v532 = vshrl.u32 %v531, 7
  %v533 = vsub.s32 %v530, %v532
  %v534 = vrot.slane %v520, %v533
  %v535 = vcombine.low %v527, %v534
  %536 = vrot.lane.b32.xlu0 %v535, 4
  %v537 = vpop.permute.xlu0 %536
  %v538 = vrot.slane %v537, 6
  %vm539 = vcmask 31744
  %v540 = vsel %vm539, %v538, %v537
  %v543 = vmul.bf16 %v460, %v540
  %v544 = vmul.bf16 %v461, %v538
  %v547 = vcombine.high %v543, %v543
  %v549 = vunpack.c.l.s4 1983009808
  %v550 = vunpack.c.0.s8 %v549
  %v551 = vlaneseq
  %v552 = vshrl.u32 %v551, 7
  %v553 = vsub.s32 %v550, %v552
  %v554 = vrot.slane %v543, %v553
  %v556 = vunpack.c.l.s4 1983009808
  %v557 = vunpack.c.0.s8 %v556
  %v558 = vlaneseq
  %v559 = vshrl.u32 %v558, 7
  %v560 = vsub.s32 %v557, %v559
  %v561 = vrot.slane %v547, %v560
  %v562 = vcombine.high %v554, %v554
  %v563 = vcombine.high %v561, %v561
  %v565 = vunpack.c.l.s4 1983009808
  %v566 = vunpack.c.0.s8 %v565
  %v567 = vlaneseq
  %v568 = vshrl.u32 %v567, 7
  %v569 = vsub.s32 %v566, %v568
  %v570 = vrot.slane %v544, %v569
  %571 = vrot.lane.b32.xlu0 %v554, 124
  %v572 = vpop.permute.xlu0 %571
  %573 = vrot.lane.b32.xlu0 %v562, 124
  %v574 = vpop.permute.xlu0 %573
  %575 = vrot.lane.b32.xlu0 %v561, 124
  %v576 = vpop.permute.xlu0 %575
  %577 = vrot.lane.b32.xlu0 %v563, 124
  %v578 = vpop.permute.xlu0 %577
  %579 = vrot.lane.b32.xlu0 %v570, 124
  %v580 = vpop.permute.xlu0 %579
  %vm581 = vcmask 1014784
  %v582 = vsel %vm581, %v572, %v574
  %v583 = vsel %vm581, %v574, %v576
  %v584 = vsel %vm581, %v576, %v578
  %v585 = vsel %vm581, %v578, %v580
  %v587 = vsel %vm246, %v28, 0
  %v590 = vsel %vm250, %v582, 0
  %v593 = vsel %vm250, %v583, 0
  %v596 = vsel %vm250, %v584, 0
  %v599 = vsel %vm250, %v585, 0
  %601 = vmatprep.subr.bf16.mxu0 0
  %602 = vmatpush1.bf16.msra.mxu0 0
  %603 = vmatprep.subr.bf16.mxu0 0
  %604 = vmatpush1.bf16.msra.mxu0 0
  %605 = vmatprep.subr.bf16.mxu0 0
  %606 = vmatpush1.bf16.msra.mxu0 0
  %607 = vmatprep.subr.bf16.mxu0 0
  %608 = vmatpush1.bf16.msra.mxu0 0
  %609 = vmatprep.subr.bf16.mxu0 0
  %610 = vmatpush1.bf16.msra.mxu0 0
  %611 = vmatprep.subr.bf16.mxu0 0
  %612 = vmatpush1.bf16.msra.mxu0 0
  %613 = vmatprep.subr.bf16.mxu0 0
  %614 = vmatpush1.bf16.msra.mxu0 0
  %615 = vmatprep.subr.bf16.mxu0 %v593
  %616 = vmatpush1.bf16.msra.mxu0 %v590
  %617 = vmatprep.subr.bf16.mxu0 0
  %618 = vmatpush2.bf16.msra.mxu0 0
  %619 = vmatprep.subr.bf16.mxu0 0
  %620 = vmatpush2.bf16.msra.mxu0 0
  %621 = vmatprep.subr.bf16.mxu0 0
  %622 = vmatpush2.bf16.msra.mxu0 0
  %623 = vmatprep.subr.bf16.mxu0 0
  %624 = vmatpush2.bf16.msra.mxu0 0
  %625 = vmatprep.subr.bf16.mxu0 0
  %626 = vmatpush2.bf16.msra.mxu0 0
  %627 = vmatprep.subr.bf16.mxu0 0
  %628 = vmatpush2.bf16.msra.mxu0 0
  %629 = vmatprep.subr.bf16.mxu0 0
  %630 = vmatpush2.bf16.msra.mxu0 0
  %631 = vmatprep.subr.bf16.mxu0 0
  %632 = vmatpush2.bf16.msra.mxu0 0
  %633 = vmatprep.mubr.bf16.mxu0 0
  %634 = vmatmul.mubr.bf16.gmra.mxu0 %v587
  %v635 = vpop.f32.mrf.mxu0
  %v636 = vadd.f32 0.0, %v635
  %v637 = vpop.f32.mrf.mxu0
  %v638 = vadd.f32 0.0, %v637
  %v639 = vpop.f32.mrf.mxu0
  %v640 = vpop.f32.mrf.mxu0
  %641 = vdwg.mxu0
  %642 = vmatprep.subr.bf16.mxu0 0
  %643 = vmatpush1.bf16.msra.mxu0 0
  %644 = vmatprep.subr.bf16.mxu0 0
  %645 = vmatpush1.bf16.msra.mxu0 0
  %646 = vmatprep.subr.bf16.mxu0 0
  %647 = vmatpush1.bf16.msra.mxu0 0
  %648 = vmatprep.subr.bf16.mxu0 0
  %649 = vmatpush1.bf16.msra.mxu0 0
  %650 = vmatprep.subr.bf16.mxu0 0
  %651 = vmatpush1.bf16.msra.mxu0 0
  %652 = vmatprep.subr.bf16.mxu0 0
  %653 = vmatpush1.bf16.msra.mxu0 0
  %654 = vmatprep.subr.bf16.mxu0 0
  %655 = vmatpush1.bf16.msra.mxu0 0
  %656 = vmatprep.subr.bf16.mxu0 %v599
  %657 = vmatpush1.bf16.msra.mxu0 %v596
  %658 = vmatprep.subr.bf16.mxu0 0
  %659 = vmatpush2.bf16.msra.mxu0 0
  %660 = vmatprep.subr.bf16.mxu0 0
  %661 = vmatpush2.bf16.msra.mxu0 0
  %662 = vmatprep.subr.bf16.mxu0 0
  %663 = vmatpush2.bf16.msra.mxu0 0
  %664 = vmatprep.subr.bf16.mxu0 0
  %665 = vmatpush2.bf16.msra.mxu0 0
  %666 = vmatprep.subr.bf16.mxu0 0
  %667 = vmatpush2.bf16.msra.mxu0 0
  %668 = vmatprep.subr.bf16.mxu0 0
  %669 = vmatpush2.bf16.msra.mxu0 0
  %670 = vmatprep.subr.bf16.mxu0 0
  %671 = vmatpush2.bf16.msra.mxu0 0
  %672 = vmatprep.subr.bf16.mxu0 0
  %673 = vmatpush2.bf16.msra.mxu0 0
  %674 = vmatprep.mubr.bf16.mxu0 0
  %675 = vmatmul.mubr.bf16.gmra.mxu0 %v587
  %v676 = vpop.f32.mrf.mxu0
  %v677 = vadd.f32 0.0, %v676
  %v678 = vpop.f32.mrf.mxu0
  %v679 = vadd.f32 0.0, %v678
  %v680 = vpop.f32.mrf.mxu0
  %v681 = vpop.f32.mrf.mxu0
  %682 = vdwg.mxu0
  %v683 = vadd.f32 %v413, %v636
  %v684 = vadd.f32 %v415, %v638
  %v685 = vadd.f32 %v454, %v677
  %v686 = vadd.f32 %v456, %v679
  %v687 = vld [vmem:[%s0] sm:$0xff]
  %v688 = vld [vmem:[%s0 + $0x8] sm:$0x3]
  %v691 = vunpack.c.l.s4 1966171168
  %v692 = vunpack.c.0.s8 %v691
  %v693 = vlaneseq
  %v694 = vshrl.u32 %v693, 7
  %v695 = vsub.s32 %v692, %v694
  %v696 = vrot.slane %v38, %v695
  %v697 = vcombine.high %v696, %v696
  %v699 = vunpack.c.l.s4 1966171168
  %v700 = vunpack.c.0.s8 %v699
  %v701 = vlaneseq
  %v702 = vshrl.u32 %v701, 7
  %v703 = vsub.s32 %v700, %v702
  %v704 = vrot.slane %v696, %v703
  %v706 = vunpack.c.l.s4 1966171168
  %v707 = vunpack.c.0.s8 %v706
  %v708 = vlaneseq
  %v709 = vshrl.u32 %v708, 7
  %v710 = vsub.s32 %v707, %v709
  %v711 = vrot.slane %v697, %v710
  %v712 = vcombine.high %v704, %v704
  %v713 = vcombine.high %v711, %v711
  %v715 = vpack.i.b16 %v704, %v704
  %v717 = vlaneseq
  %v718 = vshrl.u32 %v717, 7
  %v719 = vsub.s32 0, %v718
  %v720 = vrot.slane %v715, %v719
  %v722 = vpack.i.b16 %v711, %v711
  %v724 = vlaneseq
  %v725 = vshrl.u32 %v724, 7
  %v726 = vsub.s32 0, %v725
  %v727 = vrot.slane %v722, %v726
  %v729 = vpack.i.b16 %v712, %v712
  %v731 = vlaneseq
  %v732 = vshrl.u32 %v731, 7
  %v733 = vsub.s32 0, %v732
  %v734 = vrot.slane %v729, %v733
  %v736 = vpack.i.b16 %v713, %v713
  %v738 = vlaneseq
  %v739 = vshrl.u32 %v738, 7
  %v740 = vsub.s32 0, %v739
  %v741 = vrot.slane %v736, %v740
  %v746 = vcombine.low %v720, %v727
  %v747 = vcombine.low %v734, %v741
  %v749 = vunpack.c.l.s4 1983009808
  %v750 = vunpack.c.0.s8 %v749
  %v751 = vlaneseq
  %v752 = vshrl.u32 %v751, 7
  %v753 = vsub.s32 %v750, %v752
  %v754 = vrot.slane %v746, %v753
  %v756 = vunpack.c.l.s4 1983009808
  %v757 = vunpack.c.0.s8 %v756
  %v758 = vlaneseq
  %v759 = vshrl.u32 %v758, 7
  %v760 = vsub.s32 %v757, %v759
  %v761 = vrot.slane %v747, %v760
  %v762 = vcombine.low %v754, %v761
  %763 = vrot.lane.b32.xlu0 %v762, 32
  %v764 = vpop.permute.xlu0 %763
  %v765 = vrot.slane %v764, 6
  %vm766 = vcmask 261120
  %v767 = vsel %vm766, %v765, %v764
  %v770 = vmul.bf16 %v687, %v767
  %v771 = vmul.bf16 %v688, %v765
  %v774 = vcombine.high %v770, %v770
  %v776 = vunpack.c.l.s4 1983009808
  %v777 = vunpack.c.0.s8 %v776
  %v778 = vlaneseq
  %v779 = vshrl.u32 %v778, 7
  %v780 = vsub.s32 %v777, %v779
  %v781 = vrot.slane %v770, %v780
  %v783 = vunpack.c.l.s4 1983009808
  %v784 = vunpack.c.0.s8 %v783
  %v785 = vlaneseq
  %v786 = vshrl.u32 %v785, 7
  %v787 = vsub.s32 %v784, %v786
  %v788 = vrot.slane %v774, %v787
  %v789 = vcombine.high %v781, %v781
  %v790 = vcombine.high %v788, %v788
  %v792 = vunpack.c.l.s4 1983009808
  %v793 = vunpack.c.0.s8 %v792
  %v794 = vlaneseq
  %v795 = vshrl.u32 %v794, 7
  %v796 = vsub.s32 %v793, %v795
  %v797 = vrot.slane %v771, %v796
  %798 = vrot.lane.b32.xlu0 %v781, 96
  %v799 = vpop.permute.xlu0 %798
  %800 = vrot.lane.b32.xlu0 %v789, 96
  %v801 = vpop.permute.xlu0 %800
  %802 = vrot.lane.b32.xlu0 %v788, 96
  %v803 = vpop.permute.xlu0 %802
  %804 = vrot.lane.b32.xlu0 %v790, 96
  %v805 = vpop.permute.xlu0 %804
  %806 = vrot.lane.b32.xlu0 %v797, 96
  %v807 = vpop.permute.xlu0 %806
  %vm808 = vcmask 785408
  %v809 = vsel %vm808, %v799, %v801
  %v810 = vsel %vm808, %v801, %v803
  %v811 = vsel %vm808, %v803, %v805
  %v812 = vsel %vm808, %v805, %v807
  %v814 = vsel %vm246, %v29, 0
  %v817 = vsel %vm250, %v809, 0
  %v820 = vsel %vm250, %v810, 0
  %v823 = vsel %vm250, %v811, 0
  %v826 = vsel %vm250, %v812, 0
  %828 = vmatprep.subr.bf16.mxu0 0
  %829 = vmatpush1.bf16.msra.mxu0 0
  %830 = vmatprep.subr.bf16.mxu0 0
  %831 = vmatpush1.bf16.msra.mxu0 0
  %832 = vmatprep.subr.bf16.mxu0 0
  %833 = vmatpush1.bf16.msra.mxu0 0
  %834 = vmatprep.subr.bf16.mxu0 0
  %835 = vmatpush1.bf16.msra.mxu0 0
  %836 = vmatprep.subr.bf16.mxu0 0
  %837 = vmatpush1.bf16.msra.mxu0 0
  %838 = vmatprep.subr.bf16.mxu0 0
  %839 = vmatpush1.bf16.msra.mxu0 0
  %840 = vmatprep.subr.bf16.mxu0 0
  %841 = vmatpush1.bf16.msra.mxu0 0
  %842 = vmatprep.subr.bf16.mxu0 %v820
  %843 = vmatpush1.bf16.msra.mxu0 %v817
  %844 = vmatprep.subr.bf16.mxu0 0
  %845 = vmatpush2.bf16.msra.mxu0 0
  %846 = vmatprep.subr.bf16.mxu0 0
  %847 = vmatpush2.bf16.msra.mxu0 0
  %848 = vmatprep.subr.bf16.mxu0 0
  %849 = vmatpush2.bf16.msra.mxu0 0
  %850 = vmatprep.subr.bf16.mxu0 0
  %851 = vmatpush2.bf16.msra.mxu0 0
  %852 = vmatprep.subr.bf16.mxu0 0
  %853 = vmatpush2.bf16.msra.mxu0 0
  %854 = vmatprep.subr.bf16.mxu0 0
  %855 = vmatpush2.bf16.msra.mxu0 0
  %856 = vmatprep.subr.bf16.mxu0 0
  %857 = vmatpush2.bf16.msra.mxu0 0
  %858 = vmatprep.subr.bf16.mxu0 0
  %859 = vmatpush2.bf16.msra.mxu0 0
  %860 = vmatprep.mubr.bf16.mxu0 0
  %861 = vmatmul.mubr.bf16.gmra.mxu0 %v814
  %v862 = vpop.f32.mrf.mxu0
  %v863 = vadd.f32 0.0, %v862
  %v864 = vpop.f32.mrf.mxu0
  %v865 = vadd.f32 0.0, %v864
  %v866 = vpop.f32.mrf.mxu0
  %v867 = vpop.f32.mrf.mxu0
  %868 = vdwg.mxu0
  %869 = vmatprep.subr.bf16.mxu0 0
  %870 = vmatpush1.bf16.msra.mxu0 0
  %871 = vmatprep.subr.bf16.mxu0 0
  %872 = vmatpush1.bf16.msra.mxu0 0
  %873 = vmatprep.subr.bf16.mxu0 0
  %874 = vmatpush1.bf16.msra.mxu0 0
  %875 = vmatprep.subr.bf16.mxu0 0
  %876 = vmatpush1.bf16.msra.mxu0 0
  %877 = vmatprep.subr.bf16.mxu0 0
  %878 = vmatpush1.bf16.msra.mxu0 0
  %879 = vmatprep.subr.bf16.mxu0 0
  %880 = vmatpush1.bf16.msra.mxu0 0
  %881 = vmatprep.subr.bf16.mxu0 0
  %882 = vmatpush1.bf16.msra.mxu0 0
  %883 = vmatprep.subr.bf16.mxu0 %v826
  %884 = vmatpush1.bf16.msra.mxu0 %v823
  %885 = vmatprep.subr.bf16.mxu0 0
  %886 = vmatpush2.bf16.msra.mxu0 0
  %887 = vmatprep.subr.bf16.mxu0 0
  %888 = vmatpush2.bf16.msra.mxu0 0
  %889 = vmatprep.subr.bf16.mxu0 0
  %890 = vmatpush2.bf16.msra.mxu0 0
  %891 = vmatprep.subr.bf16.mxu0 0
  %892 = vmatpush2.bf16.msra.mxu0 0
  %893 = vmatprep.subr.bf16.mxu0 0
  %894 = vmatpush2.bf16.msra.mxu0 0
  %895 = vmatprep.subr.bf16.mxu0 0
  %896 = vmatpush2.bf16.msra.mxu0 0
  %897 = vmatprep.subr.bf16.mxu0 0
  %898 = vmatpush2.bf16.msra.mxu0 0
  %899 = vmatprep.subr.bf16.mxu0 0
  %900 = vmatpush2.bf16.msra.mxu0 0
  %901 = vmatprep.mubr.bf16.mxu0 0
  %902 = vmatmul.mubr.bf16.gmra.mxu0 %v814
  %v903 = vpop.f32.mrf.mxu0
  %v904 = vadd.f32 0.0, %v903
  %v905 = vpop.f32.mrf.mxu0
  %v906 = vadd.f32 0.0, %v905
  %v907 = vpop.f32.mrf.mxu0
  %v908 = vpop.f32.mrf.mxu0
  %909 = vdwg.mxu0
  %v910 = vadd.f32 %v683, %v863
  %v911 = vadd.f32 %v684, %v865
  %v912 = vadd.f32 %v685, %v904
  %v913 = vadd.f32 %v686, %v906
  %v914 = vld [vmem:[%s0] sm:$0xff]
  %v915 = vld [vmem:[%s0 + $0x8] sm:$0x3]
  %v918 = vunpack.c.l.s4 1966171168
  %v919 = vunpack.c.0.s8 %v918
  %v920 = vlaneseq
  %v921 = vshrl.u32 %v920, 7
  %v922 = vsub.s32 %v919, %v921
  %v923 = vrot.slane %v39, %v922
  %v924 = vcombine.high %v923, %v923
  %v926 = vunpack.c.l.s4 1966171168
  %v927 = vunpack.c.0.s8 %v926
  %v928 = vlaneseq
  %v929 = vshrl.u32 %v928, 7
  %v930 = vsub.s32 %v927, %v929
  %v931 = vrot.slane %v923, %v930
  %v933 = vunpack.c.l.s4 1966171168
  %v934 = vunpack.c.0.s8 %v933
  %v935 = vlaneseq
  %v936 = vshrl.u32 %v935, 7
  %v937 = vsub.s32 %v934, %v936
  %v938 = vrot.slane %v924, %v937
  %v939 = vcombine.high %v931, %v931
  %v940 = vcombine.high %v938, %v938
  %v942 = vpack.i.b16 %v931, %v931
  %v944 = vlaneseq
  %v945 = vshrl.u32 %v944, 7
  %v946 = vsub.s32 0, %v945
  %v947 = vrot.slane %v942, %v946
  %v949 = vpack.i.b16 %v938, %v938
  %v951 = vlaneseq
  %v952 = vshrl.u32 %v951, 7
  %v953 = vsub.s32 0, %v952
  %v954 = vrot.slane %v949, %v953
  %v956 = vpack.i.b16 %v939, %v939
  %v958 = vlaneseq
  %v959 = vshrl.u32 %v958, 7
  %v960 = vsub.s32 0, %v959
  %v961 = vrot.slane %v956, %v960
  %v963 = vpack.i.b16 %v940, %v940
  %v965 = vlaneseq
  %v966 = vshrl.u32 %v965, 7
  %v967 = vsub.s32 0, %v966
  %v968 = vrot.slane %v963, %v967
  %v973 = vcombine.low %v947, %v954
  %v974 = vcombine.low %v961, %v968
  %v976 = vunpack.c.l.s4 1983009808
  %v977 = vunpack.c.0.s8 %v976
  %v978 = vlaneseq
  %v979 = vshrl.u32 %v978, 7
  %v980 = vsub.s32 %v977, %v979
  %v981 = vrot.slane %v973, %v980
  %v983 = vunpack.c.l.s4 1983009808
  %v984 = vunpack.c.0.s8 %v983
  %v985 = vlaneseq
  %v986 = vshrl.u32 %v985, 7
  %v987 = vsub.s32 %v984, %v986
  %v988 = vrot.slane %v974, %v987
  %v989 = vcombine.low %v981, %v988
  %990 = vrot.lane.b32.xlu0 %v989, 34
  %v991 = vpop.permute.xlu0 %990
  %v992 = vrot.slane %v991, 6
  %vm993 = vcmask 277504
  %v994 = vsel %vm993, %v992, %v991
  %v997 = vmul.bf16 %v914, %v994
  %v998 = vmul.bf16 %v915, %v992
  %v1001 = vcombine.high %v997, %v997
  %v1003 = vunpack.c.l.s4 1983009808
  %v1004 = vunpack.c.0.s8 %v1003
  %v1005 = vlaneseq
  %v1006 = vshrl.u32 %v1005, 7
  %v1007 = vsub.s32 %v1004, %v1006
  %v1008 = vrot.slane %v997, %v1007
  %v1010 = vunpack.c.l.s4 1983009808
  %v1011 = vunpack.c.0.s8 %v1010
  %v1012 = vlaneseq
  %v1013 = vshrl.u32 %v1012, 7
  %v1014 = vsub.s32 %v1011, %v1013
  %v1015 = vrot.slane %v1001, %v1014
  %v1016 = vcombine.high %v1008, %v1008
  %v1017 = vcombine.high %v1015, %v1015
  %v1019 = vunpack.c.l.s4 1983009808
  %v1020 = vunpack.c.0.s8 %v1019
  %v1021 = vlaneseq
  %v1022 = vshrl.u32 %v1021, 7
  %v1023 = vsub.s32 %v1020, %v1022
  %v1024 = vrot.slane %v998, %v1023
  %1025 = vrot.lane.b32.xlu0 %v1008, 94
  %v1026 = vpop.permute.xlu0 %1025
  %1027 = vrot.lane.b32.xlu0 %v1016, 94
  %v1028 = vpop.permute.xlu0 %1027
  %1029 = vrot.lane.b32.xlu0 %v1015, 94
  %v1030 = vpop.permute.xlu0 %1029
  %1031 = vrot.lane.b32.xlu0 %v1017, 94
  %v1032 = vpop.permute.xlu0 %1031
  %1033 = vrot.lane.b32.xlu0 %v1024, 94
  %v1034 = vpop.permute.xlu0 %1033
  %vm1035 = vcmask 769024
  %v1036 = vsel %vm1035, %v1026, %v1028
  %v1037 = vsel %vm1035, %v1028, %v1030
  %v1038 = vsel %vm1035, %v1030, %v1032
  %v1039 = vsel %vm1035, %v1032, %v1034
  %v1041 = vsel %vm246, %v30, 0
  %v1044 = vsel %vm250, %v1036, 0
  %v1047 = vsel %vm250, %v1037, 0
  %v1050 = vsel %vm250, %v1038, 0
  %v1053 = vsel %vm250, %v1039, 0
  %1055 = vmatprep.subr.bf16.mxu0 0
  %1056 = vmatpush1.bf16.msra.mxu0 0
  %1057 = vmatprep.subr.bf16.mxu0 0
  %1058 = vmatpush1.bf16.msra.mxu0 0
  %1059 = vmatprep.subr.bf16.mxu0 0
  %1060 = vmatpush1.bf16.msra.mxu0 0
  %1061 = vmatprep.subr.bf16.mxu0 0
  %1062 = vmatpush1.bf16.msra.mxu0 0
  %1063 = vmatprep.subr.bf16.mxu0 0
  %1064 = vmatpush1.bf16.msra.mxu0 0
  %1065 = vmatprep.subr.bf16.mxu0 0
  %1066 = vmatpush1.bf16.msra.mxu0 0
  %1067 = vmatprep.subr.bf16.mxu0 0
  %1068 = vmatpush1.bf16.msra.mxu0 0
  %1069 = vmatprep.subr.bf16.mxu0 %v1047
  %1070 = vmatpush1.bf16.msra.mxu0 %v1044
  %1071 = vmatprep.subr.bf16.mxu0 0
  %1072 = vmatpush2.bf16.msra.mxu0 0
  %1073 = vmatprep.subr.bf16.mxu0 0
  %1074 = vmatpush2.bf16.msra.mxu0 0
  %1075 = vmatprep.subr.bf16.mxu0 0
  %1076 = vmatpush2.bf16.msra.mxu0 0
  %1077 = vmatprep.subr.bf16.mxu0 0
  %1078 = vmatpush2.bf16.msra.mxu0 0
  %1079 = vmatprep.subr.bf16.mxu0 0
  %1080 = vmatpush2.bf16.msra.mxu0 0
  %1081 = vmatprep.subr.bf16.mxu0 0
  %1082 = vmatpush2.bf16.msra.mxu0 0
  %1083 = vmatprep.subr.bf16.mxu0 0
  %1084 = vmatpush2.bf16.msra.mxu0 0
  %1085 = vmatprep.subr.bf16.mxu0 0
  %1086 = vmatpush2.bf16.msra.mxu0 0
  %1087 = vmatprep.mubr.bf16.mxu0 0
  %1088 = vmatmul.mubr.bf16.gmra.mxu0 %v1041
  %v1089 = vpop.f32.mrf.mxu0
  %v1090 = vadd.f32 0.0, %v1089
  %v1091 = vpop.f32.mrf.mxu0
  %v1092 = vadd.f32 0.0, %v1091
  %v1093 = vpop.f32.mrf.mxu0
  %v1094 = vpop.f32.mrf.mxu0
  %1095 = vdwg.mxu0
  %1096 = vmatprep.subr.bf16.mxu0 0
  %1097 = vmatpush1.bf16.msra.mxu0 0
  %1098 = vmatprep.subr.bf16.mxu0 0
  %1099 = vmatpush1.bf16.msra.mxu0 0
  %1100 = vmatprep.subr.bf16.mxu0 0
  %1101 = vmatpush1.bf16.msra.mxu0 0
  %1102 = vmatprep.subr.bf16.mxu0 0
  %1103 = vmatpush1.bf16.msra.mxu0 0
  %1104 = vmatprep.subr.bf16.mxu0 0
  %1105 = vmatpush1.bf16.msra.mxu0 0
  %1106 = vmatprep.subr.bf16.mxu0 0
  %1107 = vmatpush1.bf16.msra.mxu0 0
  %1108 = vmatprep.subr.bf16.mxu0 0
  %1109 = vmatpush1.bf16.msra.mxu0 0
  %1110 = vmatprep.subr.bf16.mxu0 %v1053
  %1111 = vmatpush1.bf16.msra.mxu0 %v1050
  %1112 = vmatprep.subr.bf16.mxu0 0
  %1113 = vmatpush2.bf16.msra.mxu0 0
  %1114 = vmatprep.subr.bf16.mxu0 0
  %1115 = vmatpush2.bf16.msra.mxu0 0
  %1116 = vmatprep.subr.bf16.mxu0 0
  %1117 = vmatpush2.bf16.msra.mxu0 0
  %1118 = vmatprep.subr.bf16.mxu0 0
  %1119 = vmatpush2.bf16.msra.mxu0 0
  %1120 = vmatprep.subr.bf16.mxu0 0
  %1121 = vmatpush2.bf16.msra.mxu0 0
  %1122 = vmatprep.subr.bf16.mxu0 0
  %1123 = vmatpush2.bf16.msra.mxu0 0
  %1124 = vmatprep.subr.bf16.mxu0 0
  %1125 = vmatpush2.bf16.msra.mxu0 0
  %1126 = vmatprep.subr.bf16.mxu0 0
  %1127 = vmatpush2.bf16.msra.mxu0 0
  %1128 = vmatprep.mubr.bf16.mxu0 0
  %1129 = vmatmul.mubr.bf16.gmra.mxu0 %v1041
  %v1130 = vpop.f32.mrf.mxu0
  %v1131 = vadd.f32 0.0, %v1130
  %v1132 = vpop.f32.mrf.mxu0
  %v1133 = vadd.f32 0.0, %v1132
  %v1134 = vpop.f32.mrf.mxu0
  %v1135 = vpop.f32.mrf.mxu0
  %1136 = vdwg.mxu0
  %v1137 = vadd.f32 %v910, %v1090
  %v1138 = vadd.f32 %v911, %v1092
  %v1139 = vadd.f32 %v912, %v1131
  %v1140 = vadd.f32 %v913, %v1133
  %v1141 = vld [vmem:[%s0] sm:$0xff]
  %v1142 = vld [vmem:[%s0 + $0x8] sm:$0x3]
  %v1145 = vunpack.c.l.s4 1966171168
  %v1146 = vunpack.c.0.s8 %v1145
  %v1147 = vlaneseq
  %v1148 = vshrl.u32 %v1147, 7
  %v1149 = vsub.s32 %v1146, %v1148
  %v1150 = vrot.slane %v40, %v1149
  %v1151 = vcombine.high %v1150, %v1150
  %v1153 = vunpack.c.l.s4 1966171168
  %v1154 = vunpack.c.0.s8 %v1153
  %v1155 = vlaneseq
  %v1156 = vshrl.u32 %v1155, 7
  %v1157 = vsub.s32 %v1154, %v1156
  %v1158 = vrot.slane %v1150, %v1157
  %v1160 = vunpack.c.l.s4 1966171168
  %v1161 = vunpack.c.0.s8 %v1160
  %v1162 = vlaneseq
  %v1163 = vshrl.u32 %v1162, 7
  %v1164 = vsub.s32 %v1161, %v1163
  %v1165 = vrot.slane %v1151, %v1164
  %v1166 = vcombine.high %v1158, %v1158
  %v1167 = vcombine.high %v1165, %v1165
  %v1169 = vpack.i.b16 %v1158, %v1158
  %v1171 = vlaneseq
  %v1172 = vshrl.u32 %v1171, 7
  %v1173 = vsub.s32 0, %v1172
  %v1174 = vrot.slane %v1169, %v1173
  %v1176 = vpack.i.b16 %v1165, %v1165
  %v1178 = vlaneseq
  %v1179 = vshrl.u32 %v1178, 7
  %v1180 = vsub.s32 0, %v1179
  %v1181 = vrot.slane %v1176, %v1180
  %v1183 = vpack.i.b16 %v1166, %v1166
  %v1185 = vlaneseq
  %v1186 = vshrl.u32 %v1185, 7
  %v1187 = vsub.s32 0, %v1186
  %v1188 = vrot.slane %v1183, %v1187
  %v1190 = vpack.i.b16 %v1167, %v1167
  %v1192 = vlaneseq
  %v1193 = vshrl.u32 %v1192, 7
  %v1194 = vsub.s32 0, %v1193
  %v1195 = vrot.slane %v1190, %v1194
  %v1200 = vcombine.low %v1174, %v1181
  %v1201 = vcombine.low %v1188, %v1195
  %v1203 = vunpack.c.l.s4 1983009808
  %v1204 = vunpack.c.0.s8 %v1203
  %v1205 = vlaneseq
  %v1206 = vshrl.u32 %v1205, 7
  %v1207 = vsub.s32 %v1204, %v1206
  %v1208 = vrot.slane %v1200, %v1207
  %v1210 = vunpack.c.l.s4 1983009808
  %v1211 = vunpack.c.0.s8 %v1210
  %v1212 = vlaneseq
  %v1213 = vshrl.u32 %v1212, 7
  %v1214 = vsub.s32 %v1211, %v1213
  %v1215 = vrot.slane %v1201, %v1214
  %v1216 = vcombine.low %v1208, %v1215
  %1217 = vrot.lane.b32.xlu0 %v1216, 36
  %v1218 = vpop.permute.xlu0 %1217
  %v1219 = vrot.slane %v1218, 6
  %vm1220 = vcmask 293888
  %v1221 = vsel %vm1220, %v1219, %v1218
  %v1224 = vmul.bf16 %v1141, %v1221
  %v1225 = vmul.bf16 %v1142, %v1219
  %v1228 = vcombine.high %v1224, %v1224
  %v1230 = vunpack.c.l.s4 1983009808
  %v1231 = vunpack.c.0.s8 %v1230
  %v1232 = vlaneseq
  %v1233 = vshrl.u32 %v1232, 7
  %v1234 = vsub.s32 %v1231, %v1233
  %v1235 = vrot.slane %v1224, %v1234
  %v1237 = vunpack.c.l.s4 1983009808
  %v1238 = vunpack.c.0.s8 %v1237
  %v1239 = vlaneseq
  %v1240 = vshrl.u32 %v1239, 7
  %v1241 = vsub.s32 %v1238, %v1240
  %v1242 = vrot.slane %v1228, %v1241
  %v1243 = vcombine.high %v1235, %v1235
  %v1244 = vcombine.high %v1242, %v1242
  %v1246 = vunpack.c.l.s4 1983009808
  %v1247 = vunpack.c.0.s8 %v1246
  %v1248 = vlaneseq
  %v1249 = vshrl.u32 %v1248, 7
  %v1250 = vsub.s32 %v1247, %v1249
  %v1251 = vrot.slane %v1225, %v1250
  %1252 = vrot.lane.b32.xlu0 %v1235, 92
  %v1253 = vpop.permute.xlu0 %1252
  %1254 = vrot.lane.b32.xlu0 %v1243, 92
  %v1255 = vpop.permute.xlu0 %1254
  %1256 = vrot.lane.b32.xlu0 %v1242, 92
  %v1257 = vpop.permute.xlu0 %1256
  %1258 = vrot.lane.b32.xlu0 %v1244, 92
  %v1259 = vpop.permute.xlu0 %1258
  %1260 = vrot.lane.b32.xlu0 %v1251, 92
  %v1261 = vpop.permute.xlu0 %1260
  %vm1262 = vcmask 752640
  %v1263 = vsel %vm1262, %v1253, %v1255
  %v1264 = vsel %vm1262, %v1255, %v1257
  %v1265 = vsel %vm1262, %v1257, %v1259
  %v1266 = vsel %vm1262, %v1259, %v1261
  %v1268 = vsel %vm246, %v31, 0
  %v1271 = vsel %vm250, %v1263, 0
  %v1274 = vsel %vm250, %v1264, 0
  %v1277 = vsel %vm250, %v1265, 0
  %v1280 = vsel %vm250, %v1266, 0
  %1282 = vmatprep.subr.bf16.mxu0 0
  %1283 = vmatpush1.bf16.msra.mxu0 0
  %1284 = vmatprep.subr.bf16.mxu0 0
  %1285 = vmatpush1.bf16.msra.mxu0 0
  %1286 = vmatprep.subr.bf16.mxu0 0
  %1287 = vmatpush1.bf16.msra.mxu0 0
  %1288 = vmatprep.subr.bf16.mxu0 0
  %1289 = vmatpush1.bf16.msra.mxu0 0
  %1290 = vmatprep.subr.bf16.mxu0 0
  %1291 = vmatpush1.bf16.msra.mxu0 0
  %1292 = vmatprep.subr.bf16.mxu0 0
  %1293 = vmatpush1.bf16.msra.mxu0 0
  %1294 = vmatprep.subr.bf16.mxu0 0
  %1295 = vmatpush1.bf16.msra.mxu0 0
  %1296 = vmatprep.subr.bf16.mxu0 %v1274
  %1297 = vmatpush1.bf16.msra.mxu0 %v1271
  %1298 = vmatprep.subr.bf16.mxu0 0
  %1299 = vmatpush2.bf16.msra.mxu0 0
  %1300 = vmatprep.subr.bf16.mxu0 0
  %1301 = vmatpush2.bf16.msra.mxu0 0
  %1302 = vmatprep.subr.bf16.mxu0 0
  %1303 = vmatpush2.bf16.msra.mxu0 0
  %1304 = vmatprep.subr.bf16.mxu0 0
  %1305 = vmatpush2.bf16.msra.mxu0 0
  %1306 = vmatprep.subr.bf16.mxu0 0
  %1307 = vmatpush2.bf16.msra.mxu0 0
  %1308 = vmatprep.subr.bf16.mxu0 0
  %1309 = vmatpush2.bf16.msra.mxu0 0
  %1310 = vmatprep.subr.bf16.mxu0 0
  %1311 = vmatpush2.bf16.msra.mxu0 0
  %1312 = vmatprep.subr.bf16.mxu0 0
  %1313 = vmatpush2.bf16.msra.mxu0 0
  %1314 = vmatprep.mubr.bf16.mxu0 0
  %1315 = vmatmul.mubr.bf16.gmra.mxu0 %v1268
  %v1316 = vpop.f32.mrf.mxu0
  %v1317 = vadd.f32 0.0, %v1316
  %v1318 = vpop.f32.mrf.mxu0
  %v1319 = vadd.f32 0.0, %v1318
  %v1320 = vpop.f32.mrf.mxu0
  %v1321 = vpop.f32.mrf.mxu0
  %1322 = vdwg.mxu0
  %1323 = vmatprep.subr.bf16.mxu0 0
  %1324 = vmatpush1.bf16.msra.mxu0 0
  %1325 = vmatprep.subr.bf16.mxu0 0
  %1326 = vmatpush1.bf16.msra.mxu0 0
  %1327 = vmatprep.subr.bf16.mxu0 0
  %1328 = vmatpush1.bf16.msra.mxu0 0
  %1329 = vmatprep.subr.bf16.mxu0 0
  %1330 = vmatpush1.bf16.msra.mxu0 0
  %1331 = vmatprep.subr.bf16.mxu0 0
  %1332 = vmatpush1.bf16.msra.mxu0 0
  %1333 = vmatprep.subr.bf16.mxu0 0
  %1334 = vmatpush1.bf16.msra.mxu0 0
  %1335 = vmatprep.subr.bf16.mxu0 0
  %1336 = vmatpush1.bf16.msra.mxu0 0
  %1337 = vmatprep.subr.bf16.mxu0 %v1280
  %1338 = vmatpush1.bf16.msra.mxu0 %v1277
  %1339 = vmatprep.subr.bf16.mxu0 0
  %1340 = vmatpush2.bf16.msra.mxu0 0
  %1341 = vmatprep.subr.bf16.mxu0 0
  %1342 = vmatpush2.bf16.msra.mxu0 0
  %1343 = vmatprep.subr.bf16.mxu0 0
  %1344 = vmatpush2.bf16.msra.mxu0 0
  %1345 = vmatprep.subr.bf16.mxu0 0
  %1346 = vmatpush2.bf16.msra.mxu0 0
  %1347 = vmatprep.subr.bf16.mxu0 0
  %1348 = vmatpush2.bf16.msra.mxu0 0
  %1349 = vmatprep.subr.bf16.mxu0 0
  %1350 = vmatpush2.bf16.msra.mxu0 0
  %1351 = vmatprep.subr.bf16.mxu0 0
  %1352 = vmatpush2.bf16.msra.mxu0 0
  %1353 = vmatprep.subr.bf16.mxu0 0
  %1354 = vmatpush2.bf16.msra.mxu0 0
  %1355 = vmatprep.mubr.bf16.mxu0 0
  %1356 = vmatmul.mubr.bf16.gmra.mxu0 %v1268
  %v1357 = vpop.f32.mrf.mxu0
  %v1358 = vadd.f32 0.0, %v1357
  %v1359 = vpop.f32.mrf.mxu0
  %v1360 = vadd.f32 0.0, %v1359
  %v1361 = vpop.f32.mrf.mxu0
  %v1362 = vpop.f32.mrf.mxu0
  %1363 = vdwg.mxu0
  %v1364 = vadd.f32 %v1137, %v1317
  %v1365 = vadd.f32 %v1138, %v1319
  %v1366 = vadd.f32 %v1139, %v1358
  %v1367 = vadd.f32 %v1140, %v1360
  %v1368 = vld [vmem:[%s0] sm:$0xff]
  %v1369 = vld [vmem:[%s0 + $0x8] sm:$0x3]
  %v1372 = vunpack.c.l.s4 1966171168
  %v1373 = vunpack.c.0.s8 %v1372
  %v1374 = vlaneseq
  %v1375 = vshrl.u32 %v1374, 7
  %v1376 = vsub.s32 %v1373, %v1375
  %v1377 = vrot.slane %v41, %v1376
  %v1378 = vcombine.high %v1377, %v1377
  %v1380 = vunpack.c.l.s4 1966171168
  %v1381 = vunpack.c.0.s8 %v1380
  %v1382 = vlaneseq
  %v1383 = vshrl.u32 %v1382, 7
  %v1384 = vsub.s32 %v1381, %v1383
  %v1385 = vrot.slane %v1377, %v1384
  %v1387 = vunpack.c.l.s4 1966171168
  %v1388 = vunpack.c.0.s8 %v1387
  %v1389 = vlaneseq
  %v1390 = vshrl.u32 %v1389, 7
  %v1391 = vsub.s32 %v1388, %v1390
  %v1392 = vrot.slane %v1378, %v1391
  %v1393 = vcombine.high %v1385, %v1385
  %v1394 = vcombine.high %v1392, %v1392
  %v1396 = vpack.i.b16 %v1385, %v1385
  %v1398 = vlaneseq
  %v1399 = vshrl.u32 %v1398, 7
  %v1400 = vsub.s32 0, %v1399
  %v1401 = vrot.slane %v1396, %v1400
  %v1403 = vpack.i.b16 %v1392, %v1392
  %v1405 = vlaneseq
  %v1406 = vshrl.u32 %v1405, 7
  %v1407 = vsub.s32 0, %v1406
  %v1408 = vrot.slane %v1403, %v1407
  %v1410 = vpack.i.b16 %v1393, %v1393
  %v1412 = vlaneseq
  %v1413 = vshrl.u32 %v1412, 7
  %v1414 = vsub.s32 0, %v1413
  %v1415 = vrot.slane %v1410, %v1414
  %v1417 = vpack.i.b16 %v1394, %v1394
  %v1419 = vlaneseq
  %v1420 = vshrl.u32 %v1419, 7
  %v1421 = vsub.s32 0, %v1420
  %v1422 = vrot.slane %v1417, %v1421
  %v1427 = vcombine.low %v1401, %v1408
  %v1428 = vcombine.low %v1415, %v1422
  %v1430 = vunpack.c.l.s4 1983009808
  %v1431 = vunpack.c.0.s8 %v1430
  %v1432 = vlaneseq
  %v1433 = vshrl.u32 %v1432, 7
  %v1434 = vsub.s32 %v1431, %v1433
  %v1435 = vrot.slane %v1427, %v1434
  %v1437 = vunpack.c.l.s4 1983009808
  %v1438 = vunpack.c.0.s8 %v1437
  %v1439 = vlaneseq
  %v1440 = vshrl.u32 %v1439, 7
  %v1441 = vsub.s32 %v1438, %v1440
  %v1442 = vrot.slane %v1428, %v1441
  %v1443 = vcombine.low %v1435, %v1442
  %1444 = vrot.lane.b32.xlu0 %v1443, 64
  %v1445 = vpop.permute.xlu0 %1444
  %v1446 = vrot.slane %v1445, 6
  %vm1447 = vcmask 523264
  %v1448 = vsel %vm1447, %v1446, %v1445
  %v1451 = vmul.bf16 %v1368, %v1448
  %v1452 = vmul.bf16 %v1369, %v1446
  %v1455 = vcombine.high %v1451, %v1451
  %v1457 = vunpack.c.l.s4 1983009808
  %v1458 = vunpack.c.0.s8 %v1457
  %v1459 = vlaneseq
  %v1460 = vshrl.u32 %v1459, 7
  %v1461 = vsub.s32 %v1458, %v1460
  %v1462 = vrot.slane %v1451, %v1461
  %v1464 = vunpack.c.l.s4 1983009808
  %v1465 = vunpack.c.0.s8 %v1464
  %v1466 = vlaneseq
  %v1467 = vshrl.u32 %v1466, 7
  %v1468 = vsub.s32 %v1465, %v1467
  %v1469 = vrot.slane %v1455, %v1468
  %v1470 = vcombine.high %v1462, %v1462
  %v1471 = vcombine.high %v1469, %v1469
  %v1473 = vunpack.c.l.s4 1983009808
  %v1474 = vunpack.c.0.s8 %v1473
  %v1475 = vlaneseq
  %v1476 = vshrl.u32 %v1475, 7
  %v1477 = vsub.s32 %v1474, %v1476
  %v1478 = vrot.slane %v1452, %v1477
  %1479 = vrot.lane.b32.xlu0 %v1462, 64
  %v1480 = vpop.permute.xlu0 %1479
  %1481 = vrot.lane.b32.xlu0 %v1470, 64
  %v1482 = vpop.permute.xlu0 %1481
  %1483 = vrot.lane.b32.xlu0 %v1469, 64
  %v1484 = vpop.permute.xlu0 %1483
  %1485 = vrot.lane.b32.xlu0 %v1471, 64
  %v1486 = vpop.permute.xlu0 %1485
  %1487 = vrot.lane.b32.xlu0 %v1478, 64
  %v1488 = vpop.permute.xlu0 %1487
  %v1489 = vsel %vm1447, %v1480, %v1482
  %v1490 = vsel %vm1447, %v1482, %v1484
  %v1491 = vsel %vm1447, %v1484, %v1486
  %v1492 = vsel %vm1447, %v1486, %v1488
  %v1494 = vsel %vm246, %v32, 0
  %v1497 = vsel %vm250, %v1489, 0
  %v1500 = vsel %vm250, %v1490, 0
  %v1503 = vsel %vm250, %v1491, 0
  %v1506 = vsel %vm250, %v1492, 0
  %1508 = vmatprep.subr.bf16.mxu0 0
  %1509 = vmatpush1.bf16.msra.mxu0 0
  %1510 = vmatprep.subr.bf16.mxu0 0
  %1511 = vmatpush1.bf16.msra.mxu0 0
  %1512 = vmatprep.subr.bf16.mxu0 0
  %1513 = vmatpush1.bf16.msra.mxu0 0
  %1514 = vmatprep.subr.bf16.mxu0 0
  %1515 = vmatpush1.bf16.msra.mxu0 0
  %1516 = vmatprep.subr.bf16.mxu0 0
  %1517 = vmatpush1.bf16.msra.mxu0 0
  %1518 = vmatprep.subr.bf16.mxu0 0
  %1519 = vmatpush1.bf16.msra.mxu0 0
  %1520 = vmatprep.subr.bf16.mxu0 0
  %1521 = vmatpush1.bf16.msra.mxu0 0
  %1522 = vmatprep.subr.bf16.mxu0 %v1500
  %1523 = vmatpush1.bf16.msra.mxu0 %v1497
  %1524 = vmatprep.subr.bf16.mxu0 0
  %1525 = vmatpush2.bf16.msra.mxu0 0
  %1526 = vmatprep.subr.bf16.mxu0 0
  %1527 = vmatpush2.bf16.msra.mxu0 0
  %1528 = vmatprep.subr.bf16.mxu0 0
  %1529 = vmatpush2.bf16.msra.mxu0 0
  %1530 = vmatprep.subr.bf16.mxu0 0
  %1531 = vmatpush2.bf16.msra.mxu0 0
  %1532 = vmatprep.subr.bf16.mxu0 0
  %1533 = vmatpush2.bf16.msra.mxu0 0
  %1534 = vmatprep.subr.bf16.mxu0 0
  %1535 = vmatpush2.bf16.msra.mxu0 0
  %1536 = vmatprep.subr.bf16.mxu0 0
  %1537 = vmatpush2.bf16.msra.mxu0 0
  %1538 = vmatprep.subr.bf16.mxu0 0
  %1539 = vmatpush2.bf16.msra.mxu0 0
  %1540 = vmatprep.mubr.bf16.mxu0 0
  %1541 = vmatmul.mubr.bf16.gmra.mxu0 %v1494
  %v1542 = vpop.f32.mrf.mxu0
  %v1543 = vadd.f32 0.0, %v1542
  %v1544 = vpop.f32.mrf.mxu0
  %v1545 = vadd.f32 0.0, %v1544
  %v1546 = vpop.f32.mrf.mxu0
  %v1547 = vpop.f32.mrf.mxu0
  %1548 = vdwg.mxu0
  %1549 = vmatprep.subr.bf16.mxu0 0
  %1550 = vmatpush1.bf16.msra.mxu0 0
  %1551 = vmatprep.subr.bf16.mxu0 0
  %1552 = vmatpush1.bf16.msra.mxu0 0
  %1553 = vmatprep.subr.bf16.mxu0 0
  %1554 = vmatpush1.bf16.msra.mxu0 0
  %1555 = vmatprep.subr.bf16.mxu0 0
  %1556 = vmatpush1.bf16.msra.mxu0 0
  %1557 = vmatprep.subr.bf16.mxu0 0
  %1558 = vmatpush1.bf16.msra.mxu0 0
  %1559 = vmatprep.subr.bf16.mxu0 0
  %1560 = vmatpush1.bf16.msra.mxu0 0
  %1561 = vmatprep.subr.bf16.mxu0 0
  %1562 = vmatpush1.bf16.msra.mxu0 0
  %1563 = vmatprep.subr.bf16.mxu0 %v1506
  %1564 = vmatpush1.bf16.msra.mxu0 %v1503
  %1565 = vmatprep.subr.bf16.mxu0 0
  %1566 = vmatpush2.bf16.msra.mxu0 0
  %1567 = vmatprep.subr.bf16.mxu0 0
  %1568 = vmatpush2.bf16.msra.mxu0 0
  %1569 = vmatprep.subr.bf16.mxu0 0
  %1570 = vmatpush2.bf16.msra.mxu0 0
  %1571 = vmatprep.subr.bf16.mxu0 0
  %1572 = vmatpush2.bf16.msra.mxu0 0
  %1573 = vmatprep.subr.bf16.mxu0 0
  %1574 = vmatpush2.bf16.msra.mxu0 0
  %1575 = vmatprep.subr.bf16.mxu0 0
  %1576 = vmatpush2.bf16.msra.mxu0 0
  %1577 = vmatprep.subr.bf16.mxu0 0
  %1578 = vmatpush2.bf16.msra.mxu0 0
  %1579 = vmatprep.subr.bf16.mxu0 0
  %1580 = vmatpush2.bf16.msra.mxu0 0
  %1581 = vmatprep.mubr.bf16.mxu0 0
  %1582 = vmatmul.mubr.bf16.gmra.mxu0 %v1494
  %v1583 = vpop.f32.mrf.mxu0
  %v1584 = vadd.f32 0.0, %v1583
  %v1585 = vpop.f32.mrf.mxu0
  %v1586 = vadd.f32 0.0, %v1585
  %v1587 = vpop.f32.mrf.mxu0
  %v1588 = vpop.f32.mrf.mxu0
  %1589 = vdwg.mxu0
  %v1590 = vadd.f32 %v1364, %v1543
  %v1591 = vadd.f32 %v1365, %v1545
  %v1592 = vadd.f32 %v1366, %v1584
  %v1593 = vadd.f32 %v1367, %v1586
  %v1594 = vld [vmem:[%s0] sm:$0xff]
  %v1595 = vld [vmem:[%s0 + $0x8] sm:$0x3]
  %v1598 = vunpack.c.l.s4 1966171168
  %v1599 = vunpack.c.0.s8 %v1598
  %v1600 = vlaneseq
  %v1601 = vshrl.u32 %v1600, 7
  %v1602 = vsub.s32 %v1599, %v1601
  %v1603 = vrot.slane %v42, %v1602
  %v1604 = vcombine.high %v1603, %v1603
  %v1606 = vunpack.c.l.s4 1966171168
  %v1607 = vunpack.c.0.s8 %v1606
  %v1608 = vlaneseq
  %v1609 = vshrl.u32 %v1608, 7
  %v1610 = vsub.s32 %v1607, %v1609
  %v1611 = vrot.slane %v1603, %v1610
  %v1613 = vunpack.c.l.s4 1966171168
  %v1614 = vunpack.c.0.s8 %v1613
  %v1615 = vlaneseq
  %v1616 = vshrl.u32 %v1615, 7
  %v1617 = vsub.s32 %v1614, %v1616
  %v1618 = vrot.slane %v1604, %v1617
  %v1619 = vcombine.high %v1611, %v1611
  %v1620 = vcombine.high %v1618, %v1618
  %v1622 = vpack.i.b16 %v1611, %v1611
  %v1624 = vlaneseq
  %v1625 = vshrl.u32 %v1624, 7
  %v1626 = vsub.s32 0, %v1625
  %v1627 = vrot.slane %v1622, %v1626
  %v1629 = vpack.i.b16 %v1618, %v1618
  %v1631 = vlaneseq
  %v1632 = vshrl.u32 %v1631, 7
  %v1633 = vsub.s32 0, %v1632
  %v1634 = vrot.slane %v1629, %v1633
  %v1636 = vpack.i.b16 %v1619, %v1619
  %v1638 = vlaneseq
  %v1639 = vshrl.u32 %v1638, 7
  %v1640 = vsub.s32 0, %v1639
  %v1641 = vrot.slane %v1636, %v1640
  %v1643 = vpack.i.b16 %v1620, %v1620
  %v1645 = vlaneseq
  %v1646 = vshrl.u32 %v1645, 7
  %v1647 = vsub.s32 0, %v1646
  %v1648 = vrot.slane %v1643, %v1647
  %v1653 = vcombine.low %v1627, %v1634
  %v1654 = vcombine.low %v1641, %v1648
  %v1656 = vunpack.c.l.s4 1983009808
  %v1657 = vunpack.c.0.s8 %v1656
  %v1658 = vlaneseq
  %v1659 = vshrl.u32 %v1658, 7
  %v1660 = vsub.s32 %v1657, %v1659
  %v1661 = vrot.slane %v1653, %v1660
  %v1663 = vunpack.c.l.s4 1983009808
  %v1664 = vunpack.c.0.s8 %v1663
  %v1665 = vlaneseq
  %v1666 = vshrl.u32 %v1665, 7
  %v1667 = vsub.s32 %v1664, %v1666
  %v1668 = vrot.slane %v1654, %v1667
  %v1669 = vcombine.low %v1661, %v1668
  %1670 = vrot.lane.b32.xlu0 %v1669, 66
  %v1671 = vpop.permute.xlu0 %1670
  %v1672 = vrot.slane %v1671, 6
  %vm1673 = vcmask 539648
  %v1674 = vsel %vm1673, %v1672, %v1671
  %v1677 = vmul.bf16 %v1594, %v1674
  %v1678 = vmul.bf16 %v1595, %v1672
  %v1681 = vcombine.high %v1677, %v1677
  %v1683 = vunpack.c.l.s4 1983009808
  %v1684 = vunpack.c.0.s8 %v1683
  %v1685 = vlaneseq
  %v1686 = vshrl.u32 %v1685, 7
  %v1687 = vsub.s32 %v1684, %v1686
  %v1688 = vrot.slane %v1677, %v1687
  %v1690 = vunpack.c.l.s4 1983009808
  %v1691 = vunpack.c.0.s8 %v1690
  %v1692 = vlaneseq
  %v1693 = vshrl.u32 %v1692, 7
  %v1694 = vsub.s32 %v1691, %v1693
  %v1695 = vrot.slane %v1681, %v1694
  %v1696 = vcombine.high %v1688, %v1688
  %v1697 = vcombine.high %v1695, %v1695
  %v1699 = vunpack.c.l.s4 1983009808
  %v1700 = vunpack.c.0.s8 %v1699
  %v1701 = vlaneseq
  %v1702 = vshrl.u32 %v1701, 7
  %v1703 = vsub.s32 %v1700, %v1702
  %v1704 = vrot.slane %v1678, %v1703
  %1705 = vrot.lane.b32.xlu0 %v1688, 62
  %v1706 = vpop.permute.xlu0 %1705
  %1707 = vrot.lane.b32.xlu0 %v1696, 62
  %v1708 = vpop.permute.xlu0 %1707
  %1709 = vrot.lane.b32.xlu0 %v1695, 62
  %v1710 = vpop.permute.xlu0 %1709
  %1711 = vrot.lane.b32.xlu0 %v1697, 62
  %v1712 = vpop.permute.xlu0 %1711
  %1713 = vrot.lane.b32.xlu0 %v1704, 62
  %v1714 = vpop.permute.xlu0 %1713
  %vm1715 = vcmask 506880
  %v1716 = vsel %vm1715, %v1706, %v1708
  %v1717 = vsel %vm1715, %v1708, %v1710
  %v1718 = vsel %vm1715, %v1710, %v1712
  %v1719 = vsel %vm1715, %v1712, %v1714
  %v1721 = vsel %vm246, %v33, 0
  %v1724 = vsel %vm250, %v1716, 0
  %v1727 = vsel %vm250, %v1717, 0
  %v1730 = vsel %vm250, %v1718, 0
  %v1733 = vsel %vm250, %v1719, 0
  %1735 = vmatprep.subr.bf16.mxu0 0
  %1736 = vmatpush1.bf16.msra.mxu0 0
  %1737 = vmatprep.subr.bf16.mxu0 0
  %1738 = vmatpush1.bf16.msra.mxu0 0
  %1739 = vmatprep.subr.bf16.mxu0 0
  %1740 = vmatpush1.bf16.msra.mxu0 0
  %1741 = vmatprep.subr.bf16.mxu0 0
  %1742 = vmatpush1.bf16.msra.mxu0 0
  %1743 = vmatprep.subr.bf16.mxu0 0
  %1744 = vmatpush1.bf16.msra.mxu0 0
  %1745 = vmatprep.subr.bf16.mxu0 0
  %1746 = vmatpush1.bf16.msra.mxu0 0
  %1747 = vmatprep.subr.bf16.mxu0 0
  %1748 = vmatpush1.bf16.msra.mxu0 0
  %1749 = vmatprep.subr.bf16.mxu0 %v1727
  %1750 = vmatpush1.bf16.msra.mxu0 %v1724
  %1751 = vmatprep.subr.bf16.mxu0 0
  %1752 = vmatpush2.bf16.msra.mxu0 0
  %1753 = vmatprep.subr.bf16.mxu0 0
  %1754 = vmatpush2.bf16.msra.mxu0 0
  %1755 = vmatprep.subr.bf16.mxu0 0
  %1756 = vmatpush2.bf16.msra.mxu0 0
  %1757 = vmatprep.subr.bf16.mxu0 0
  %1758 = vmatpush2.bf16.msra.mxu0 0
  %1759 = vmatprep.subr.bf16.mxu0 0
  %1760 = vmatpush2.bf16.msra.mxu0 0
  %1761 = vmatprep.subr.bf16.mxu0 0
  %1762 = vmatpush2.bf16.msra.mxu0 0
  %1763 = vmatprep.subr.bf16.mxu0 0
  %1764 = vmatpush2.bf16.msra.mxu0 0
  %1765 = vmatprep.subr.bf16.mxu0 0
  %1766 = vmatpush2.bf16.msra.mxu0 0
  %1767 = vmatprep.mubr.bf16.mxu0 0
  %1768 = vmatmul.mubr.bf16.gmra.mxu0 %v1721
  %v1769 = vpop.f32.mrf.mxu0
  %v1770 = vadd.f32 0.0, %v1769
  %v1771 = vpop.f32.mrf.mxu0
  %v1772 = vadd.f32 0.0, %v1771
  %v1773 = vpop.f32.mrf.mxu0
  %v1774 = vpop.f32.mrf.mxu0
  %1775 = vdwg.mxu0
  %1776 = vmatprep.subr.bf16.mxu0 0
  %1777 = vmatpush1.bf16.msra.mxu0 0
  %1778 = vmatprep.subr.bf16.mxu0 0
  %1779 = vmatpush1.bf16.msra.mxu0 0
  %1780 = vmatprep.subr.bf16.mxu0 0
  %1781 = vmatpush1.bf16.msra.mxu0 0
  %1782 = vmatprep.subr.bf16.mxu0 0
  %1783 = vmatpush1.bf16.msra.mxu0 0
  %1784 = vmatprep.subr.bf16.mxu0 0
  %1785 = vmatpush1.bf16.msra.mxu0 0
  %1786 = vmatprep.subr.bf16.mxu0 0
  %1787 = vmatpush1.bf16.msra.mxu0 0
  %1788 = vmatprep.subr.bf16.mxu0 0
  %1789 = vmatpush1.bf16.msra.mxu0 0
  %1790 = vmatprep.subr.bf16.mxu0 %v1733
  %1791 = vmatpush1.bf16.msra.mxu0 %v1730
  %1792 = vmatprep.subr.bf16.mxu0 0
  %1793 = vmatpush2.bf16.msra.mxu0 0
  %1794 = vmatprep.subr.bf16.mxu0 0
  %1795 = vmatpush2.bf16.msra.mxu0 0
  %1796 = vmatprep.subr.bf16.mxu0 0
  %1797 = vmatpush2.bf16.msra.mxu0 0
  %1798 = vmatprep.subr.bf16.mxu0 0
  %1799 = vmatpush2.bf16.msra.mxu0 0
  %1800 = vmatprep.subr.bf16.mxu0 0
  %1801 = vmatpush2.bf16.msra.mxu0 0
  %1802 = vmatprep.subr.bf16.mxu0 0
  %1803 = vmatpush2.bf16.msra.mxu0 0
  %1804 = vmatprep.subr.bf16.mxu0 0
  %1805 = vmatpush2.bf16.msra.mxu0 0
  %1806 = vmatprep.subr.bf16.mxu0 0
  %1807 = vmatpush2.bf16.msra.mxu0 0
  %1808 = vmatprep.mubr.bf16.mxu0 0
  %1809 = vmatmul.mubr.bf16.gmra.mxu0 %v1721
  %v1810 = vpop.f32.mrf.mxu0
  %v1811 = vadd.f32 0.0, %v1810
  %v1812 = vpop.f32.mrf.mxu0
  %v1813 = vadd.f32 0.0, %v1812
  %v1814 = vpop.f32.mrf.mxu0
  %v1815 = vpop.f32.mrf.mxu0
  %1816 = vdwg.mxu0
  %v1817 = vadd.f32 %v1590, %v1770
  %v1818 = vadd.f32 %v1591, %v1772
  %v1819 = vadd.f32 %v1592, %v1811
  %v1820 = vadd.f32 %v1593, %v1813
  %v1821 = vld [vmem:[%s0] sm:$0xff]
  %v1822 = vld [vmem:[%s0 + $0x8] sm:$0x3]
  %v1825 = vunpack.c.l.s4 1966171168
  %v1826 = vunpack.c.0.s8 %v1825
  %v1827 = vlaneseq
  %v1828 = vshrl.u32 %v1827, 7
  %v1829 = vsub.s32 %v1826, %v1828
  %v1830 = vrot.slane %v43, %v1829
  %v1831 = vcombine.high %v1830, %v1830
  %v1833 = vunpack.c.l.s4 1966171168
  %v1834 = vunpack.c.0.s8 %v1833
  %v1835 = vlaneseq
  %v1836 = vshrl.u32 %v1835, 7
  %v1837 = vsub.s32 %v1834, %v1836
  %v1838 = vrot.slane %v1830, %v1837
  %v1840 = vunpack.c.l.s4 1966171168
  %v1841 = vunpack.c.0.s8 %v1840
  %v1842 = vlaneseq
  %v1843 = vshrl.u32 %v1842, 7
  %v1844 = vsub.s32 %v1841, %v1843
  %v1845 = vrot.slane %v1831, %v1844
  %v1846 = vcombine.high %v1838, %v1838
  %v1847 = vcombine.high %v1845, %v1845
  %v1849 = vpack.i.b16 %v1838, %v1838
  %v1851 = vlaneseq
  %v1852 = vshrl.u32 %v1851, 7
  %v1853 = vsub.s32 0, %v1852
  %v1854 = vrot.slane %v1849, %v1853
  %v1856 = vpack.i.b16 %v1845, %v1845
  %v1858 = vlaneseq
  %v1859 = vshrl.u32 %v1858, 7
  %v1860 = vsub.s32 0, %v1859
  %v1861 = vrot.slane %v1856, %v1860
  %v1863 = vpack.i.b16 %v1846, %v1846
  %v1865 = vlaneseq
  %v1866 = vshrl.u32 %v1865, 7
  %v1867 = vsub.s32 0, %v1866
  %v1868 = vrot.slane %v1863, %v1867
  %v1870 = vpack.i.b16 %v1847, %v1847
  %v1872 = vlaneseq
  %v1873 = vshrl.u32 %v1872, 7
  %v1874 = vsub.s32 0, %v1873
  %v1875 = vrot.slane %v1870, %v1874
  %v1880 = vcombine.low %v1854, %v1861
  %v1881 = vcombine.low %v1868, %v1875
  %v1883 = vunpack.c.l.s4 1983009808
  %v1884 = vunpack.c.0.s8 %v1883
  %v1885 = vlaneseq
  %v1886 = vshrl.u32 %v1885, 7
  %v1887 = vsub.s32 %v1884, %v1886
  %v1888 = vrot.slane %v1880, %v1887
  %v1890 = vunpack.c.l.s4 1983009808
  %v1891 = vunpack.c.0.s8 %v1890
  %v1892 = vlaneseq
  %v1893 = vshrl.u32 %v1892, 7
  %v1894 = vsub.s32 %v1891, %v1893
  %v1895 = vrot.slane %v1881, %v1894
  %v1896 = vcombine.low %v1888, %v1895
  %1897 = vrot.lane.b32.xlu0 %v1896, 68
  %v1898 = vpop.permute.xlu0 %1897
  %v1899 = vrot.slane %v1898, 6
  %vm1900 = vcmask 556032
  %v1901 = vsel %vm1900, %v1899, %v1898
  %v1904 = vmul.bf16 %v1821, %v1901
  %v1905 = vmul.bf16 %v1822, %v1899
  %v1908 = vcombine.high %v1904, %v1904
  %v1910 = vunpack.c.l.s4 1983009808
  %v1911 = vunpack.c.0.s8 %v1910
  %v1912 = vlaneseq
  %v1913 = vshrl.u32 %v1912, 7
  %v1914 = vsub.s32 %v1911, %v1913
  %v1915 = vrot.slane %v1904, %v1914
  %v1917 = vunpack.c.l.s4 1983009808
  %v1918 = vunpack.c.0.s8 %v1917
  %v1919 = vlaneseq
  %v1920 = vshrl.u32 %v1919, 7
  %v1921 = vsub.s32 %v1918, %v1920
  %v1922 = vrot.slane %v1908, %v1921
  %v1923 = vcombine.high %v1915, %v1915
  %v1924 = vcombine.high %v1922, %v1922
  %v1926 = vunpack.c.l.s4 1983009808
  %v1927 = vunpack.c.0.s8 %v1926
  %v1928 = vlaneseq
  %v1929 = vshrl.u32 %v1928, 7
  %v1930 = vsub.s32 %v1927, %v1929
  %v1931 = vrot.slane %v1905, %v1930
  %1932 = vrot.lane.b32.xlu0 %v1915, 60
  %v1933 = vpop.permute.xlu0 %1932
  %1934 = vrot.lane.b32.xlu0 %v1923, 60
  %v1935 = vpop.permute.xlu0 %1934
  %1936 = vrot.lane.b32.xlu0 %v1922, 60
  %v1937 = vpop.permute.xlu0 %1936
  %1938 = vrot.lane.b32.xlu0 %v1924, 60
  %v1939 = vpop.permute.xlu0 %1938
  %1940 = vrot.lane.b32.xlu0 %v1931, 60
  %v1941 = vpop.permute.xlu0 %1940
  %vm1942 = vcmask 490496
  %v1943 = vsel %vm1942, %v1933, %v1935
  %v1944 = vsel %vm1942, %v1935, %v1937
  %v1945 = vsel %vm1942, %v1937, %v1939
  %v1946 = vsel %vm1942, %v1939, %v1941
  %v1948 = vsel %vm246, %v34, 0
  %v1951 = vsel %vm250, %v1943, 0
  %v1954 = vsel %vm250, %v1944, 0
  %v1957 = vsel %vm250, %v1945, 0
  %v1960 = vsel %vm250, %v1946, 0
  %1962 = vmatprep.subr.bf16.mxu0 0
  %1963 = vmatpush1.bf16.msra.mxu0 0
  %1964 = vmatprep.subr.bf16.mxu0 0
  %1965 = vmatpush1.bf16.msra.mxu0 0
  %1966 = vmatprep.subr.bf16.mxu0 0
  %1967 = vmatpush1.bf16.msra.mxu0 0
  %1968 = vmatprep.subr.bf16.mxu0 0
  %1969 = vmatpush1.bf16.msra.mxu0 0
  %1970 = vmatprep.subr.bf16.mxu0 0
  %1971 = vmatpush1.bf16.msra.mxu0 0
  %1972 = vmatprep.subr.bf16.mxu0 0
  %1973 = vmatpush1.bf16.msra.mxu0 0
  %1974 = vmatprep.subr.bf16.mxu0 0
  %1975 = vmatpush1.bf16.msra.mxu0 0
  %1976 = vmatprep.subr.bf16.mxu0 %v1954
  %1977 = vmatpush1.bf16.msra.mxu0 %v1951
  %1978 = vmatprep.subr.bf16.mxu0 0
  %1979 = vmatpush2.bf16.msra.mxu0 0
  %1980 = vmatprep.subr.bf16.mxu0 0
  %1981 = vmatpush2.bf16.msra.mxu0 0
  %1982 = vmatprep.subr.bf16.mxu0 0
  %1983 = vmatpush2.bf16.msra.mxu0 0
  %1984 = vmatprep.subr.bf16.mxu0 0
  %1985 = vmatpush2.bf16.msra.mxu0 0
  %1986 = vmatprep.subr.bf16.mxu0 0
  %1987 = vmatpush2.bf16.msra.mxu0 0
  %1988 = vmatprep.subr.bf16.mxu0 0
  %1989 = vmatpush2.bf16.msra.mxu0 0
  %1990 = vmatprep.subr.bf16.mxu0 0
  %1991 = vmatpush2.bf16.msra.mxu0 0
  %1992 = vmatprep.subr.bf16.mxu0 0
  %1993 = vmatpush2.bf16.msra.mxu0 0
  %1994 = vmatprep.mubr.bf16.mxu0 0
  %1995 = vmatmul.mubr.bf16.gmra.mxu0 %v1948
  %v1996 = vpop.f32.mrf.mxu0
  %v1997 = vadd.f32 0.0, %v1996
  %v1998 = vpop.f32.mrf.mxu0
  %v1999 = vadd.f32 0.0, %v1998
  %v2000 = vpop.f32.mrf.mxu0
  %v2001 = vpop.f32.mrf.mxu0
  %2002 = vdwg.mxu0
  %2003 = vmatprep.subr.bf16.mxu0 0
  %2004 = vmatpush1.bf16.msra.mxu0 0
  %2005 = vmatprep.subr.bf16.mxu0 0
  %2006 = vmatpush1.bf16.msra.mxu0 0
  %2007 = vmatprep.subr.bf16.mxu0 0
  %2008 = vmatpush1.bf16.msra.mxu0 0
  %2009 = vmatprep.subr.bf16.mxu0 0
  %2010 = vmatpush1.bf16.msra.mxu0 0
  %2011 = vmatprep.subr.bf16.mxu0 0
  %2012 = vmatpush1.bf16.msra.mxu0 0
  %2013 = vmatprep.subr.bf16.mxu0 0
  %2014 = vmatpush1.bf16.msra.mxu0 0
  %2015 = vmatprep.subr.bf16.mxu0 0
  %2016 = vmatpush1.bf16.msra.mxu0 0
  %2017 = vmatprep.subr.bf16.mxu0 %v1960
  %2018 = vmatpush1.bf16.msra.mxu0 %v1957
  %2019 = vmatprep.subr.bf16.mxu0 0
  %2020 = vmatpush2.bf16.msra.mxu0 0
  %2021 = vmatprep.subr.bf16.mxu0 0
  %2022 = vmatpush2.bf16.msra.mxu0 0
  %2023 = vmatprep.subr.bf16.mxu0 0
  %2024 = vmatpush2.bf16.msra.mxu0 0
  %2025 = vmatprep.subr.bf16.mxu0 0
  %2026 = vmatpush2.bf16.msra.mxu0 0
  %2027 = vmatprep.subr.bf16.mxu0 0
  %2028 = vmatpush2.bf16.msra.mxu0 0
  %2029 = vmatprep.subr.bf16.mxu0 0
  %2030 = vmatpush2.bf16.msra.mxu0 0
  %2031 = vmatprep.subr.bf16.mxu0 0
  %2032 = vmatpush2.bf16.msra.mxu0 0
  %2033 = vmatprep.subr.bf16.mxu0 0
  %2034 = vmatpush2.bf16.msra.mxu0 0
  %2035 = vmatprep.mubr.bf16.mxu0 0
  %2036 = vmatmul.mubr.bf16.gmra.mxu0 %v1948
  %v2037 = vpop.f32.mrf.mxu0
  %v2038 = vadd.f32 0.0, %v2037
  %v2039 = vpop.f32.mrf.mxu0
  %v2040 = vadd.f32 0.0, %v2039
  %v2041 = vpop.f32.mrf.mxu0
  %v2042 = vpop.f32.mrf.mxu0
  %2043 = vdwg.mxu0
  %v2044 = vadd.f32 %v1817, %v1997
  %v2045 = vadd.f32 %v1818, %v1999
  %v2046 = vadd.f32 %v1819, %v2038
  %v2047 = vadd.f32 %v1820, %v2040
  %v2048 = vld [vmem:[%s3] sm:$0xff]
  %2050 = vset.pattern.permute.xlu0 0
  %2051 = vperm.xlu0 %2050, %v2048
  %v2052 = vpop.permute.xlu0 %2051
  %v2054 = vmul.f32 %v2044, %v2052
  %v2055 = vmul.f32 %v2045, %v2052
  %v2056 = vmul.f32 %v2046, %v2052
  %v2057 = vmul.f32 %v2047, %v2052
  %v2058 = vld [vmem:[%s4] sm:$0xff]
  %2060 = vset.pattern.permute.xlu0 0
  %2061 = vperm.xlu0 %2060, %v2058
  %v2062 = vpop.permute.xlu0 %2061
  %v2064 = vadd.f32 %v2054, %v2062
  %v2065 = vadd.f32 %v2055, %v2062
  %v2066 = vadd.f32 %v2056, %v2062
  %v2067 = vadd.f32 %v2057, %v2062
  %v2068 = vld [vmem:[#allocation2] sm:$0x1]
  %vm2069 = vcmp.gt.f32.partialorder %v2064, 0.0
  %vm2070 = vcmp.gt.f32.partialorder %v2065, 0.0
  %vm2071 = vcmp.gt.f32.partialorder %v2066, 0.0
  %vm2072 = vcmp.gt.f32.partialorder %v2067, 0.0
  %v2074 = vlaneseq
  %v2075 = vshrl.u32 %v2074, 7
  %v2076 = vsub.s32 0, %v2075
  %v2077 = vrot.slane %v2068, %v2076
  %2078 = vset.pattern.permute.xlu0 0
  %2079 = vperm.xlu0 %2078, %v2077
  %v2080 = vpop.permute.xlu0 %2079
  %v2082 = vmul.f32 %v2080, %v2064
  %v2083 = vmul.f32 %v2080, %v2065
  %v2084 = vmul.f32 %v2080, %v2066
  %v2085 = vmul.f32 %v2080, %v2067
  %v2086 = vsel %vm2069, %v2064, %v2082
  %v2087 = vsel %vm2070, %v2065, %v2083
  %v2088 = vsel %vm2071, %v2066, %v2084
  %v2089 = vsel %vm2072, %v2067, %v2085
  %v2090 = vpack.c.bf16 %v2086, %v2086
  %v2091 = vpack.c.bf16 %v2087, %v2087
  %v2092 = vpack.c.bf16 %v2088, %v2088
  %v2093 = vpack.c.bf16 %v2089, %v2089
  %v2098 = vunpack.c.l.b16 %v2090
  %v2099 = vunpack.c.l.b16 %v2091
  %v2100 = vunpack.c.l.b16 %v2092
  %v2101 = vunpack.c.l.b16 %v2093
  %v2102 = vpack.c.b16 %v2099, %v2098
  %v2103 = vpack.c.b16 %v2101, %v2100
  %2106 = vst [vmem:[%s6] sm:$0xff] %v2102
  %2107 = vst [vmem:[%s6 + $0x8] sm:$0xff] %v2103
  // Predicated region
  $region26: #{dpblock_forward.10} parent=0 // pred_check
    _
  $region27: #{dpblock_forward.10} parent=0 // pred_check_branch
    %2109 = sbr.rel (0) target = $region29
  $region28: #{dpblock_forward.10} parent=0 // pred_region
    _
  $region29: #{dpblock_forward.10} parent=0 // pred_fallthru
    _
  // Predicated region
  $region30: #{dpblock_forward.10} parent=0 // pred_check
    _
  $region31: #{dpblock_forward.10} parent=0 // pred_check_branch
    %2111 = sbr.rel (0) target = $region33
  $region32: #{dpblock_forward.10} parent=0 // pred_region
    _
  $region33: #{dpblock_forward.10} parent=0 // pred_fallthru
    _

// kernel: dpblock_forward.11
$region0: #{dpblock_forward.11}
  #allocation0 [shape = 'u32[]', space=smem, size = 0x4, offset = 0x4, fixed_abs, tag = 'smem constant byte address 0x4 - core index']
  #allocation1 [shape = 'u32[144,128]{1,0:T(1,128)}', space=vmem, size = 0x12000, scoped, tag = 'internal scratch']
  %s0 = inlined_call_operand.vmem [shape: bf16[8,146], index: 0, kind: input, shape index: {}]
  %s1 = inlined_call_operand.vmem [shape: bf16[4,128], index: 1, kind: input, shape index: {}]
  %s2 = inlined_call_operand.vmem [shape: bf16[9,1,128], index: 2, kind: input, shape index: {}]
  %s3 = inlined_call_operand.vmem [shape: bf16[9,8,1], index: 3, kind: input, shape index: {}]
  %s4 = inlined_call_operand.vmem [shape: f32[8,1], index: 4, kind: input, shape index: {}]
  %s5 = inlined_call_operand.vmem [shape: bf16[8,8], index: 5, kind: input, shape index: {}]
  %s6 = inlined_call_operand.vmem [shape: f32[8,1], index: 6, kind: input, shape index: {}]
  %s7 = inlined_call_operand.vmem [shape: bf16[8,4], index: 7, kind: input, shape index: {}]
  %s8 = inlined_call_operand.vmem [shape: f32[8,1], index: 8, kind: input, shape index: {}]
  %s9 = inlined_call_operand.vmem [shape: f32[8,128], index: 9, kind: output, shape index: {}]
  %s10 = sld [smem:[#allocation0]]
  $region46: #{dpblock_forward.11} parent=0
    _
  %s12 = ssub.s32 1, %s10
  %s13 = scalar_select 0, %s12, %s10
  // Predicated region
  $region2: #{dpblock_forward.11} parent=0 // pred_check
    _
  $region3: #{dpblock_forward.11} parent=0 // pred_check_branch
    %15 = sbr.rel (0) target = $region5
  $region4: #{dpblock_forward.11} parent=0 // pred_region
    _
  $region5: #{dpblock_forward.11} parent=0 // pred_fallthru
    _
  // Predicated region
  $region6: #{dpblock_forward.11} parent=0 // pred_check
    _
  $region7: #{dpblock_forward.11} parent=0 // pred_check_branch
    %17 = sbr.rel (0) target = $region9
  $region8: #{dpblock_forward.11} parent=0 // pred_region
    _
  $region9: #{dpblock_forward.11} parent=0 // pred_fallthru
    _
  // Predicated region
  $region10: #{dpblock_forward.11} parent=0 // pred_check
    _
  $region11: #{dpblock_forward.11} parent=0 // pred_check_branch
    %19 = sbr.rel (0) target = $region13
  $region12: #{dpblock_forward.11} parent=0 // pred_region
    _
  $region13: #{dpblock_forward.11} parent=0 // pred_fallthru
    _
  // Predicated region
  $region14: #{dpblock_forward.11} parent=0 // pred_check
    _
  $region15: #{dpblock_forward.11} parent=0 // pred_check_branch
    %21 = sbr.rel (0) target = $region17
  $region16: #{dpblock_forward.11} parent=0 // pred_region
    _
  $region17: #{dpblock_forward.11} parent=0 // pred_fallthru
    _
  // Predicated region
  $region18: #{dpblock_forward.11} parent=0 // pred_check
    _
  $region19: #{dpblock_forward.11} parent=0 // pred_check_branch
    %23 = sbr.rel (0) target = $region21
  $region20: #{dpblock_forward.11} parent=0 // pred_region
    _
  $region21: #{dpblock_forward.11} parent=0 // pred_fallthru
    _
  // Predicated region
  $region22: #{dpblock_forward.11} parent=0 // pred_check
    _
  $region23: #{dpblock_forward.11} parent=0 // pred_check_branch
    %25 = sbr.rel (0) target = $region25
  $region24: #{dpblock_forward.11} parent=0 // pred_region
    _
  $region25: #{dpblock_forward.11} parent=0 // pred_fallthru
    _
  // Predicated region
  $region26: #{dpblock_forward.11} parent=0 // pred_check
    _
  $region27: #{dpblock_forward.11} parent=0 // pred_check_branch
    %27 = sbr.rel (0) target = $region29
  $region28: #{dpblock_forward.11} parent=0 // pred_region
    _
  $region29: #{dpblock_forward.11} parent=0 // pred_fallthru
    _
  // Predicated region
  $region30: #{dpblock_forward.11} parent=0 // pred_check
    _
  $region31: #{dpblock_forward.11} parent=0 // pred_check_branch
    %29 = sbr.rel (0) target = $region33
  $region32: #{dpblock_forward.11} parent=0 // pred_region
    _
  $region33: #{dpblock_forward.11} parent=0 // pred_fallthru
    _
  // Predicated region
  $region34: #{dpblock_forward.11} parent=0 // pred_check
    _
  $region35: #{dpblock_forward.11} parent=0 // pred_check_branch
    %31 = sbr.rel (0) target = $region37
  $region36: #{dpblock_forward.11} parent=0 // pred_region
    _
  $region37: #{dpblock_forward.11} parent=0 // pred_fallthru
    _
  %v33 = vld [vmem:[%s2] sm:$0x1]
  %v34 = vld [vmem:[%s2 + $0x1] sm:$0x1]
  %v35 = vld [vmem:[%s2 + $0x2] sm:$0x1]
  %v36 = vld [vmem:[%s2 + $0x3] sm:$0x1]
  %v37 = vld [vmem:[%s2 + $0x4] sm:$0x1]
  %v38 = vld [vmem:[%s2 + $0x5] sm:$0x1]
  %v39 = vld [vmem:[%s2 + $0x6] sm:$0x1]
  %v40 = vld [vmem:[%s2 + $0x7] sm:$0x1]
  %v41 = vld [vmem:[%s2 + $0x8] sm:$0x1]
  %v42 = vld [vmem:[%s3] sm:$0xf]
  %v43 = vld [vmem:[%s3 + $0x4] sm:$0xf]
  %v44 = vld [vmem:[%s3 + $0x8] sm:$0xf]
  %v45 = vld [vmem:[%s3 + $0xc] sm:$0xf]
  %v46 = vld [vmem:[%s3 + $0x10] sm:$0xf]
  %v47 = vld [vmem:[%s3 + $0x14] sm:$0xf]
  %v48 = vld [vmem:[%s3 + $0x18] sm:$0xf]
  %v49 = vld [vmem:[%s3 + $0x1c] sm:$0xf]
  %v50 = vld [vmem:[%s3 + $0x20] sm:$0xf]
  %v51 = vld [vmem:[%s0] sm:$0xf]
  %v52 = vunpack.c.l.bf16 %v42
  %v54 = vpack.i.b16 %v33, %v33
  %v56 = vlaneseq
  %v57 = vshrl.u32 %v56, 7
  %v58 = vsub.s32 0, %v57
  %v59 = vrot.slane %v54, %v58
  %v60 = vmul.bf16 %v51, %v59
  %v61 = vunpack.c.l.bf16 %v60
  %63 = vset.pattern.permute.xlu0 0
  %64 = vperm.xlu0 %63, %v52
  %v65 = vpop.permute.xlu0 %64
  %v67 = vmul.f32 %v65, %v61
  %v68 = vadd.f32 %v67, 0.0
  %v69 = vld [vmem:[%s0] sm:$0xff]
  %v70 = vunpack.c.l.bf16 %v43
  %v72 = vpack.i.b16 %v34, %v34
  %v74 = vlaneseq
  %v75 = vshrl.u32 %v74, 7
  %v76 = vsub.s32 0, %v75
  %v77 = vrot.slane %v72, %v76
  %v79 = vunpack.c.l.b16 %v77
  %v80 = vpack.c.b16 %v79, %v79
  %81 = vrot.lane.b32.xlu0 %v80, 1
  %v82 = vpop.permute.xlu0 %81
  %v83 = vrot.slane %v82, 4
  %vm84 = vcmask 7168
  %v85 = vsel %vm84, %v83, %v82
  %v87 = vmul.bf16 %v69, %v85
  %v88 = vunpack.c.l.bf16 %v87
  %v89 = vunpack.c.h.bf16 %v87
  %91 = vset.pattern.permute.xlu0 0
  %92 = vperm.xlu0 %91, %v70
  %v93 = vpop.permute.xlu0 %92
  %v95 = vmul.f32 %v93, %v88
  %v96 = vmul.f32 %v93, %v89
  %99 = vrot.lane.b32.xlu0 %v95, 127
  %v100 = vpop.permute.xlu0 %99
  %101 = vrot.lane.b32.xlu0 %v96, 127
  %v102 = vpop.permute.xlu0 %101
  %vm103 = vcmask 1039360
  %v104 = vsel %vm103, %v100, %v102
  %v106 = vadd.f32 %v68, %v104
  %v107 = vunpack.c.l.bf16 %v44
  %v109 = vpack.i.b16 %v35, %v35
  %v111 = vlaneseq
  %v112 = vshrl.u32 %v111, 7
  %v113 = vsub.s32 0, %v112
  %v114 = vrot.slane %v109, %v113
  %v116 = vunpack.c.l.b16 %v114
  %v117 = vpack.c.b16 %v116, %v116
  %118 = vrot.lane.b32.xlu0 %v117, 2
  %v119 = vpop.permute.xlu0 %118
  %v120 = vrot.slane %v119, 4
  %vm121 = vcmask 15360
  %v122 = vsel %vm121, %v120, %v119
  %v124 = vmul.bf16 %v69, %v122
  %v125 = vunpack.c.l.bf16 %v124
  %v126 = vunpack.c.h.bf16 %v124
  %128 = vset.pattern.permute.xlu0 0
  %129 = vperm.xlu0 %128, %v107
  %v130 = vpop.permute.xlu0 %129
  %v132 = vmul.f32 %v130, %v125
  %v133 = vmul.f32 %v130, %v126
  %136 = vrot.lane.b32.xlu0 %v132, 126
  %v137 = vpop.permute.xlu0 %136
  %138 = vrot.lane.b32.xlu0 %v133, 126
  %v139 = vpop.permute.xlu0 %138
  %vm140 = vcmask 1031168
  %v141 = vsel %vm140, %v137, %v139
  %v143 = vadd.f32 %v106, %v141
  %v144 = vunpack.c.l.bf16 %v45
  %v146 = vpack.i.b16 %v36, %v36
  %v148 = vlaneseq
  %v149 = vshrl.u32 %v148, 7
  %v150 = vsub.s32 0, %v149
  %v151 = vrot.slane %v146, %v150
  %v153 = vunpack.c.l.b16 %v151
  %v154 = vpack.c.b16 %v153, %v153
  %155 = vrot.lane.b32.xlu0 %v154, 8
  %v156 = vpop.permute.xlu0 %155
  %v157 = vrot.slane %v156, 4
  %vm158 = vcmask 64512
  %v159 = vsel %vm158, %v157, %v156
  %v161 = vmul.bf16 %v69, %v159
  %v162 = vunpack.c.l.bf16 %v161
  %v163 = vunpack.c.h.bf16 %v161
  %165 = vset.pattern.permute.xlu0 0
  %166 = vperm.xlu0 %165, %v144
  %v167 = vpop.permute.xlu0 %166
  %v169 = vmul.f32 %v167, %v162
  %v170 = vmul.f32 %v167, %v163
  %173 = vrot.lane.b32.xlu0 %v169, 120
  %v174 = vpop.permute.xlu0 %173
  %175 = vrot.lane.b32.xlu0 %v170, 120
  %v176 = vpop.permute.xlu0 %175
  %vm177 = vcmask 982016
  %v178 = vsel %vm177, %v174, %v176
  %v180 = vadd.f32 %v143, %v178
  %v181 = vunpack.c.l.bf16 %v46
  %v183 = vpack.i.b16 %v37, %v37
  %v185 = vlaneseq
  %v186 = vshrl.u32 %v185, 7
  %v187 = vsub.s32 0, %v186
  %v188 = vrot.slane %v183, %v187
  %v190 = vunpack.c.l.b16 %v188
  %v191 = vpack.c.b16 %v190, %v190
  %192 = vrot.lane.b32.xlu0 %v191, 9
  %v193 = vpop.permute.xlu0 %192
  %v194 = vrot.slane %v193, 4
  %vm195 = vcmask 72704
  %v196 = vsel %vm195, %v194, %v193
  %v198 = vmul.bf16 %v69, %v196
  %v199 = vunpack.c.l.bf16 %v198
  %v200 = vunpack.c.h.bf16 %v198
  %202 = vset.pattern.permute.xlu0 0
  %203 = vperm.xlu0 %202, %v181
  %v204 = vpop.permute.xlu0 %203
  %v206 = vmul.f32 %v204, %v199
  %v207 = vmul.f32 %v204, %v200
  %210 = vrot.lane.b32.xlu0 %v206, 119
  %v211 = vpop.permute.xlu0 %210
  %212 = vrot.lane.b32.xlu0 %v207, 119
  %v213 = vpop.permute.xlu0 %212
  %vm214 = vcmask 973824
  %v215 = vsel %vm214, %v211, %v213
  %v217 = vadd.f32 %v180, %v215
  %v218 = vunpack.c.l.bf16 %v47
  %v220 = vpack.i.b16 %v38, %v38
  %v222 = vlaneseq
  %v223 = vshrl.u32 %v222, 7
  %v224 = vsub.s32 0, %v223
  %v225 = vrot.slane %v220, %v224
  %v227 = vunpack.c.l.b16 %v225
  %v228 = vpack.c.b16 %v227, %v227
  %229 = vrot.lane.b32.xlu0 %v228, 10
  %v230 = vpop.permute.xlu0 %229
  %v231 = vrot.slane %v230, 4
  %vm232 = vcmask 80896
  %v233 = vsel %vm232, %v231, %v230
  %v235 = vmul.bf16 %v69, %v233
  %v236 = vunpack.c.l.bf16 %v235
  %v237 = vunpack.c.h.bf16 %v235
  %239 = vset.pattern.permute.xlu0 0
  %240 = vperm.xlu0 %239, %v218
  %v241 = vpop.permute.xlu0 %240
  %v243 = vmul.f32 %v241, %v236
  %v244 = vmul.f32 %v241, %v237
  %247 = vrot.lane.b32.xlu0 %v243, 118
  %v248 = vpop.permute.xlu0 %247
  %249 = vrot.lane.b32.xlu0 %v244, 118
  %v250 = vpop.permute.xlu0 %249
  %vm251 = vcmask 965632
  %v252 = vsel %vm251, %v248, %v250
  %v254 = vadd.f32 %v217, %v252
  %v255 = vunpack.c.l.bf16 %v48
  %v257 = vpack.i.b16 %v39, %v39
  %v259 = vlaneseq
  %v260 = vshrl.u32 %v259, 7
  %v261 = vsub.s32 0, %v260
  %v262 = vrot.slane %v257, %v261
  %v264 = vunpack.c.l.b16 %v262
  %v265 = vpack.c.b16 %v264, %v264
  %266 = vrot.lane.b32.xlu0 %v265, 16
  %v267 = vpop.permute.xlu0 %266
  %v268 = vrot.slane %v267, 4
  %vm269 = vcmask 130048
  %v270 = vsel %vm269, %v268, %v267
  %v272 = vmul.bf16 %v69, %v270
  %v273 = vunpack.c.l.bf16 %v272
  %v274 = vunpack.c.h.bf16 %v272
  %276 = vset.pattern.permute.xlu0 0
  %277 = vperm.xlu0 %276, %v255
  %v278 = vpop.permute.xlu0 %277
  %v280 = vmul.f32 %v278, %v273
  %v281 = vmul.f32 %v278, %v274
  %284 = vrot.lane.b32.xlu0 %v280, 112
  %v285 = vpop.permute.xlu0 %284
  %286 = vrot.lane.b32.xlu0 %v281, 112
  %v287 = vpop.permute.xlu0 %286
  %vm288 = vcmask 916480
  %v289 = vsel %vm288, %v285, %v287
  %v291 = vadd.f32 %v254, %v289
  %v292 = vunpack.c.l.bf16 %v49
  %v294 = vpack.i.b16 %v40, %v40
  %v296 = vlaneseq
  %v297 = vshrl.u32 %v296, 7
  %v298 = vsub.s32 0, %v297
  %v299 = vrot.slane %v294, %v298
  %v301 = vunpack.c.l.b16 %v299
  %v302 = vpack.c.b16 %v301, %v301
  %303 = vrot.lane.b32.xlu0 %v302, 17
  %v304 = vpop.permute.xlu0 %303
  %v305 = vrot.slane %v304, 4
  %vm306 = vcmask 138240
  %v307 = vsel %vm306, %v305, %v304
  %v309 = vmul.bf16 %v69, %v307
  %v310 = vunpack.c.l.bf16 %v309
  %v311 = vunpack.c.h.bf16 %v309
  %313 = vset.pattern.permute.xlu0 0
  %314 = vperm.xlu0 %313, %v292
  %v315 = vpop.permute.xlu0 %314
  %v317 = vmul.f32 %v315, %v310
  %v318 = vmul.f32 %v315, %v311
  %321 = vrot.lane.b32.xlu0 %v317, 111
  %v322 = vpop.permute.xlu0 %321
  %323 = vrot.lane.b32.xlu0 %v318, 111
  %v324 = vpop.permute.xlu0 %323
  %vm325 = vcmask 908288
  %v326 = vsel %vm325, %v322, %v324
  %v328 = vadd.f32 %v291, %v326
  %v329 = vunpack.c.l.bf16 %v50
  %v331 = vpack.i.b16 %v41, %v41
  %v333 = vlaneseq
  %v334 = vshrl.u32 %v333, 7
  %v335 = vsub.s32 0, %v334
  %v336 = vrot.slane %v331, %v335
  %v338 = vunpack.c.l.b16 %v336
  %v339 = vpack.c.b16 %v338, %v338
  %340 = vrot.lane.b32.xlu0 %v339, 18
  %v341 = vpop.permute.xlu0 %340
  %v342 = vrot.slane %v341, 4
  %vm343 = vcmask 146432
  %v344 = vsel %vm343, %v342, %v341
  %v346 = vmul.bf16 %v69, %v344
  %v347 = vunpack.c.l.bf16 %v346
  %v348 = vunpack.c.h.bf16 %v346
  %350 = vset.pattern.permute.xlu0 0
  %351 = vperm.xlu0 %350, %v329
  %v352 = vpop.permute.xlu0 %351
  %v354 = vmul.f32 %v352, %v347
  %v355 = vmul.f32 %v352, %v348
  %358 = vrot.lane.b32.xlu0 %v354, 110
  %v359 = vpop.permute.xlu0 %358
  %360 = vrot.lane.b32.xlu0 %v355, 110
  %v361 = vpop.permute.xlu0 %360
  %vm362 = vcmask 900096
  %v363 = vsel %vm362, %v359, %v361
  %v365 = vadd.f32 %v328, %v363
  %v366 = vld [vmem:[%s4] sm:$0xff]
  %368 = vset.pattern.permute.xlu0 0
  %369 = vperm.xlu0 %368, %v366
  %v370 = vpop.permute.xlu0 %369
  %v372 = vadd.f32 %v365, %v370
  %v373 = vpack.c.bf16 %v372, %v372
  %v374 = vld [vmem:[%s5] sm:$0xf]
  %v375 = vld [vmem:[%s6] sm:$0xff]
  %377 = vset.pattern.permute.xlu0 0
  %378 = vperm.xlu0 %377, %v375
  %v379 = vpop.permute.xlu0 %378
  %vm381 = vcmask 64512
  %v383 = vsel %vm381, %v374, 0
  %vm385 = vcmask 1043456
  %v387 = vsel %vm385, %v373, 0
  %389 = vmatprep.subr.bf16.mxu0 0
  %390 = vmatpush1.bf16.msra.mxu0 0
  %391 = vmatprep.subr.bf16.mxu0 0
  %392 = vmatpush1.bf16.msra.mxu0 0
  %393 = vmatprep.subr.bf16.mxu0 0
  %394 = vmatpush1.bf16.msra.mxu0 0
  %395 = vmatprep.subr.bf16.mxu0 0
  %396 = vmatpush1.bf16.msra.mxu0 0
  %397 = vmatprep.subr.bf16.mxu0 0
  %398 = vmatpush1.bf16.msra.mxu0 0
  %399 = vmatprep.subr.bf16.mxu0 0
  %400 = vmatpush1.bf16.msra.mxu0 0
  %401 = vmatprep.subr.bf16.mxu0 0
  %402 = vmatpush1.bf16.msra.mxu0 0
  %403 = vmatprep.subr.bf16.mxu0 0
  %404 = vmatpush1.bf16.msra.mxu0 %v387
  %405 = vmatprep.subr.bf16.mxu0 0
  %406 = vmatpush2.bf16.msra.mxu0 0
  %407 = vmatprep.subr.bf16.mxu0 0
  %408 = vmatpush2.bf16.msra.mxu0 0
  %409 = vmatprep.subr.bf16.mxu0 0
  %410 = vmatpush2.bf16.msra.mxu0 0
  %411 = vmatprep.subr.bf16.mxu0 0
  %412 = vmatpush2.bf16.msra.mxu0 0
  %413 = vmatprep.subr.bf16.mxu0 0
  %414 = vmatpush2.bf16.msra.mxu0 0
  %415 = vmatprep.subr.bf16.mxu0 0
  %416 = vmatpush2.bf16.msra.mxu0 0
  %417 = vmatprep.subr.bf16.mxu0 0
  %418 = vmatpush2.bf16.msra.mxu0 0
  %419 = vmatprep.subr.bf16.mxu0 0
  %420 = vmatpush2.bf16.msra.mxu0 0
  %421 = vmatprep.mubr.bf16.mxu0 0
  %422 = vmatmul.mubr.bf16.gmra.mxu0 %v383
  %v423 = vpop.f32.mrf.mxu0
  %v424 = vadd.f32 %v379, %v423
  %v425 = vpop.f32.mrf.mxu0
  %v426 = vpop.f32.mrf.mxu0
  %v427 = vpop.f32.mrf.mxu0
  %428 = vdwg.mxu0
  %v429 = vld [vmem:[%s7] sm:$0xf]
  %v430 = vld [vmem:[%s1] sm:$0x3]
  %vm431 = vcmask 31744
  %v433 = vsel %vm431, %v429, 0
  %vm435 = vcmask 1041408
  %v437 = vsel %vm435, %v430, 0
  %439 = vmatprep.subr.bf16.mxu0 0
  %440 = vmatpush1.bf16.msra.mxu0 0
  %441 = vmatprep.subr.bf16.mxu0 0
  %442 = vmatpush1.bf16.msra.mxu0 0
  %443 = vmatprep.subr.bf16.mxu0 0
  %444 = vmatpush1.bf16.msra.mxu0 0
  %445 = vmatprep.subr.bf16.mxu0 0
  %446 = vmatpush1.bf16.msra.mxu0 0
  %447 = vmatprep.subr.bf16.mxu0 0
  %448 = vmatpush1.bf16.msra.mxu0 0
  %449 = vmatprep.subr.bf16.mxu0 0
  %450 = vmatpush1.bf16.msra.mxu0 0
  %451 = vmatprep.subr.bf16.mxu0 0
  %452 = vmatpush1.bf16.msra.mxu0 0
  %453 = vmatprep.subr.bf16.mxu0 0
  %454 = vmatpush1.bf16.msra.mxu0 %v437
  %455 = vmatprep.subr.bf16.mxu0 0
  %456 = vmatpush2.bf16.msra.mxu0 0
  %457 = vmatprep.subr.bf16.mxu0 0
  %458 = vmatpush2.bf16.msra.mxu0 0
  %459 = vmatprep.subr.bf16.mxu0 0
  %460 = vmatpush2.bf16.msra.mxu0 0
  %461 = vmatprep.subr.bf16.mxu0 0
  %462 = vmatpush2.bf16.msra.mxu0 0
  %463 = vmatprep.subr.bf16.mxu0 0
  %464 = vmatpush2.bf16.msra.mxu0 0
  %465 = vmatprep.subr.bf16.mxu0 0
  %466 = vmatpush2.bf16.msra.mxu0 0
  %467 = vmatprep.subr.bf16.mxu0 0
  %468 = vmatpush2.bf16.msra.mxu0 0
  %469 = vmatprep.subr.bf16.mxu0 0
  %470 = vmatpush2.bf16.msra.mxu0 0
  %471 = vmatprep.mubr.bf16.mxu0 0
  %472 = vmatmul.mubr.bf16.gmra.mxu0 %v433
  %v473 = vpop.f32.mrf.mxu0
  %v474 = vadd.f32 0.0, %v473
  %v475 = vpop.f32.mrf.mxu0
  %v476 = vpop.f32.mrf.mxu0
  %v477 = vpop.f32.mrf.mxu0
  %478 = vdwg.mxu0
  %v479 = vadd.f32 %v424, %v474
  %v480 = vld [vmem:[%s8] sm:$0xff]
  %482 = vset.pattern.permute.xlu0 0
  %483 = vperm.xlu0 %482, %v480
  %v484 = vpop.permute.xlu0 %483
  %v486 = vadd.f32 %v479, %v484
  %487 = vst [vmem:[%s9] sm:$0xff] %v486
  // Predicated region
  $region38: #{dpblock_forward.11} parent=0 // pred_check
    _
  $region39: #{dpblock_forward.11} parent=0 // pred_check_branch
    %489 = sbr.rel (0) target = $region41
  $region40: #{dpblock_forward.11} parent=0 // pred_region
    _
  $region41: #{dpblock_forward.11} parent=0 // pred_fallthru
    _
  // Predicated region
  $region42: #{dpblock_forward.11} parent=0 // pred_check
    _
  $region43: #{dpblock_forward.11} parent=0 // pred_check_branch
    %491 = sbr.rel (0) target = $region45
  $region44: #{dpblock_forward.11} parent=0 // pred_region
    _
  $region45: #{dpblock_forward.11} parent=0 // pred_fallthru
    _

// kernel: dpblock_forward.8
$region0: #{dpblock_forward.8}
  #allocation0 [shape = 'u32[]', space=smem, size = 0x4, offset = 0x4, fixed_abs, tag = 'smem constant byte address 0x4 - core index']
  #allocation1 [shape = 'u32[144,128]{1,0:T(1,128)}', space=vmem, size = 0x12000, scoped, tag = 'internal scratch']
  %s0 = inlined_call_operand.vmem [shape: bf16[4,682], index: 0, kind: input, shape index: {}]
  %s1 = inlined_call_operand.vmem [shape: bf16[3,9,4,4], index: 1, kind: input, shape index: {}]
  %s2 = inlined_call_operand.vmem [shape: bf16[3,9,1,512], index: 2, kind: input, shape index: {}]
  %s3 = inlined_call_operand.vmem [shape: f32[3,4,1], index: 3, kind: input, shape index: {}]
  %s4 = inlined_call_operand.vmem [shape: f32[3,4,1], index: 4, kind: input, shape index: {}]
  %s5 = inlined_call_operand.vmem [shape: bf16[12,512], index: 5, kind: output, shape index: {}]
  %s6 = sld [smem:[#allocation0]]
  $region30: #{dpblock_forward.8} parent=0
    _
  %s8 = ssub.s32 1, %s6
  %s9 = scalar_select 0, %s8, %s6
  // Predicated region
  $region2: #{dpblock_forward.8} parent=0 // pred_check
    _
  $region3: #{dpblock_forward.8} parent=0 // pred_check_branch
    %11 = sbr.rel (0) target = $region5
  $region4: #{dpblock_forward.8} parent=0 // pred_region
    _
  $region5: #{dpblock_forward.8} parent=0 // pred_fallthru
    _
  // Predicated region
  $region6: #{dpblock_forward.8} parent=0 // pred_check
    _
  $region7: #{dpblock_forward.8} parent=0 // pred_check_branch
    %13 = sbr.rel (0) target = $region9
  $region8: #{dpblock_forward.8} parent=0 // pred_region
    _
  $region9: #{dpblock_forward.8} parent=0 // pred_fallthru
    _
  // Predicated region
  $region10: #{dpblock_forward.8} parent=0 // pred_check
    _
  $region11: #{dpblock_forward.8} parent=0 // pred_check_branch
    %15 = sbr.rel (0) target = $region13
  $region12: #{dpblock_forward.8} parent=0 // pred_region
    _
  $region13: #{dpblock_forward.8} parent=0 // pred_fallthru
    _
  // Predicated region
  $region14: #{dpblock_forward.8} parent=0 // pred_check
    _
  $region15: #{dpblock_forward.8} parent=0 // pred_check_branch
    %17 = sbr.rel (0) target = $region17
  $region16: #{dpblock_forward.8} parent=0 // pred_region
    _
  $region17: #{dpblock_forward.8} parent=0 // pred_fallthru
    _
  // Predicated region
  $region18: #{dpblock_forward.8} parent=0 // pred_check
    _
  $region19: #{dpblock_forward.8} parent=0 // pred_check_branch
    %19 = sbr.rel (0) target = $region21
  $region20: #{dpblock_forward.8} parent=0 // pred_region
    _
  $region21: #{dpblock_forward.8} parent=0 // pred_fallthru
    _
  %v21 = vld [vmem:[%s1] sm:$0x3]
  %v22 = vld [vmem:[%s1 + $0x2] sm:$0x3]
  %v23 = vld [vmem:[%s1 + $0x4] sm:$0x3]
  %v24 = vld [vmem:[%s1 + $0x6] sm:$0x3]
  %v25 = vld [vmem:[%s1 + $0x8] sm:$0x3]
  %v26 = vld [vmem:[%s1 + $0xa] sm:$0x3]
  %v27 = vld [vmem:[%s1 + $0xc] sm:$0x3]
  %v28 = vld [vmem:[%s1 + $0xe] sm:$0x3]
  %v29 = vld [vmem:[%s1 + $0x10] sm:$0x3]
  %v30 = vld [vmem:[%s1 + $0x12] sm:$0x3]
  %v31 = vld [vmem:[%s1 + $0x14] sm:$0x3]
  %v32 = vld [vmem:[%s1 + $0x16] sm:$0x3]
  %v33 = vld [vmem:[%s1 + $0x18] sm:$0x3]
  %v34 = vld [vmem:[%s1 + $0x1a] sm:$0x3]
  %v35 = vld [vmem:[%s1 + $0x1c] sm:$0x3]
  %v36 = vld [vmem:[%s1 + $0x1e] sm:$0x3]
  %v37 = vld [vmem:[%s1 + $0x20] sm:$0x3]
  %v38 = vld [vmem:[%s1 + $0x22] sm:$0x3]
  %v39 = vld [vmem:[%s1 + $0x24] sm:$0x3]
  %v40 = vld [vmem:[%s1 + $0x26] sm:$0x3]
  %v41 = vld [vmem:[%s1 + $0x28] sm:$0x3]
  %v42 = vld [vmem:[%s1 + $0x2a] sm:$0x3]
  %v43 = vld [vmem:[%s1 + $0x2c] sm:$0x3]
  %v44 = vld [vmem:[%s1 + $0x2e] sm:$0x3]
  %v45 = vld [vmem:[%s1 + $0x30] sm:$0x3]
  %v46 = vld [vmem:[%s1 + $0x32] sm:$0x3]
  %v47 = vld [vmem:[%s1 + $0x34] sm:$0x3]
  %v48 = vld [vmem:[%s2] sm:$0xf]
  %v49 = vld [vmem:[%s2 + $0x4] sm:$0xf]
  %v50 = vld [vmem:[%s2 + $0x8] sm:$0xf]
  %v51 = vld [vmem:[%s2 + $0xc] sm:$0xf]
  %v52 = vld [vmem:[%s2 + $0x10] sm:$0xf]
  %v53 = vld [vmem:[%s2 + $0x14] sm:$0xf]
  %v54 = vld [vmem:[%s2 + $0x18] sm:$0xf]
  %v55 = vld [vmem:[%s2 + $0x1c] sm:$0xf]
  %v56 = vld [vmem:[%s2 + $0x20] sm:$0xf]
  %v57 = vld [vmem:[%s2 + $0x24] sm:$0xf]
  %v58 = vld [vmem:[%s2 + $0x28] sm:$0xf]
  %v59 = vld [vmem:[%s2 + $0x2c] sm:$0xf]
  %v60 = vld [vmem:[%s2 + $0x30] sm:$0xf]
  %v61 = vld [vmem:[%s2 + $0x34] sm:$0xf]
  %v62 = vld [vmem:[%s2 + $0x38] sm:$0xf]
  %v63 = vld [vmem:[%s2 + $0x3c] sm:$0xf]
  %v64 = vld [vmem:[%s2 + $0x40] sm:$0xf]
  %v65 = vld [vmem:[%s2 + $0x44] sm:$0xf]
  %v66 = vld [vmem:[%s2 + $0x48] sm:$0xf]
  %v67 = vld [vmem:[%s2 + $0x4c] sm:$0xf]
  %v68 = vld [vmem:[%s2 + $0x50] sm:$0xf]
  %v69 = vld [vmem:[%s2 + $0x54] sm:$0xf]
  %v70 = vld [vmem:[%s2 + $0x58] sm:$0xf]
  %v71 = vld [vmem:[%s2 + $0x5c] sm:$0xf]
  %v72 = vld [vmem:[%s2 + $0x60] sm:$0xf]
  %v73 = vld [vmem:[%s2 + $0x64] sm:$0xf]
  %v74 = vld [vmem:[%s2 + $0x68] sm:$0xf]
  %v75 = vld [vmem:[%s0] sm:$0xff]
  %v76 = vld [vmem:[%s0 + $0x8] sm:$0x3]
  %v79 = vunpack.c.l.s4 1966171168
  %v80 = vunpack.c.0.s8 %v79
  %v81 = vlaneseq
  %v82 = vshrl.u32 %v81, 7
  %v83 = vsub.s32 %v80, %v82
  %v84 = vrot.slane %v48, %v83
  %v85 = vcombine.high %v84, %v84
  %v87 = vunpack.c.l.s4 1966171168
  %v88 = vunpack.c.0.s8 %v87
  %v89 = vlaneseq
  %v90 = vshrl.u32 %v89, 7
  %v91 = vsub.s32 %v88, %v90
  %v92 = vrot.slane %v84, %v91
  %v94 = vunpack.c.l.s4 1966171168
  %v95 = vunpack.c.0.s8 %v94
  %v96 = vlaneseq
  %v97 = vshrl.u32 %v96, 7
  %v98 = vsub.s32 %v95, %v97
  %v99 = vrot.slane %v85, %v98
  %v100 = vcombine.high %v92, %v92
  %v101 = vcombine.high %v99, %v99
  %v103 = vpack.i.b16 %v92, %v92
  %v105 = vlaneseq
  %v106 = vshrl.u32 %v105, 7
  %v107 = vsub.s32 0, %v106
  %v108 = vrot.slane %v103, %v107
  %v110 = vpack.i.b16 %v99, %v99
  %v112 = vlaneseq
  %v113 = vshrl.u32 %v112, 7
  %v114 = vsub.s32 0, %v113
  %v115 = vrot.slane %v110, %v114
  %v117 = vpack.i.b16 %v100, %v100
  %v119 = vlaneseq
  %v120 = vshrl.u32 %v119, 7
  %v121 = vsub.s32 0, %v120
  %v122 = vrot.slane %v117, %v121
  %v124 = vpack.i.b16 %v101, %v101
  %v126 = vlaneseq
  %v127 = vshrl.u32 %v126, 7
  %v128 = vsub.s32 0, %v127
  %v129 = vrot.slane %v124, %v128
  %v134 = vcombine.low %v108, %v115
  %v135 = vcombine.low %v122, %v129
  %v137 = vunpack.c.l.s4 1983009808
  %v138 = vunpack.c.0.s8 %v137
  %v139 = vlaneseq
  %v140 = vshrl.u32 %v139, 7
  %v141 = vsub.s32 %v138, %v140
  %v142 = vrot.slane %v134, %v141
  %v144 = vunpack.c.l.s4 1983009808
  %v145 = vunpack.c.0.s8 %v144
  %v146 = vlaneseq
  %v147 = vshrl.u32 %v146, 7
  %v148 = vsub.s32 %v145, %v147
  %v149 = vrot.slane %v135, %v148
  %v150 = vcombine.low %v142, %v149
  %151 = vrot.lane.b32.xlu0 %v150, 68
  %v152 = vpop.permute.xlu0 %151
  %v153 = vrot.slane %v152, 6
  %vm154 = vcmask 556032
  %v155 = vsel %vm154, %v153, %v152
  %v158 = vmul.bf16 %v75, %v155
  %v159 = vmul.bf16 %v76, %v153
  %v162 = vunpack.c.l.s4 1966171168
  %v163 = vunpack.c.0.s8 %v162
  %v164 = vlaneseq
  %v165 = vshrl.u32 %v164, 7
  %v166 = vsub.s32 %v163, %v165
  %v167 = vrot.slane %v49, %v166
  %v168 = vcombine.high %v167, %v167
  %v170 = vunpack.c.l.s4 1966171168
  %v171 = vunpack.c.0.s8 %v170
  %v172 = vlaneseq
  %v173 = vshrl.u32 %v172, 7
  %v174 = vsub.s32 %v171, %v173
  %v175 = vrot.slane %v167, %v174
  %v177 = vunpack.c.l.s4 1966171168
  %v178 = vunpack.c.0.s8 %v177
  %v179 = vlaneseq
  %v180 = vshrl.u32 %v179, 7
  %v181 = vsub.s32 %v178, %v180
  %v182 = vrot.slane %v168, %v181
  %v183 = vcombine.high %v175, %v175
  %v184 = vcombine.high %v182, %v182
  %v186 = vpack.i.b16 %v175, %v175
  %v188 = vlaneseq
  %v189 = vshrl.u32 %v188, 7
  %v190 = vsub.s32 0, %v189
  %v191 = vrot.slane %v186, %v190
  %v193 = vpack.i.b16 %v182, %v182
  %v195 = vlaneseq
  %v196 = vshrl.u32 %v195, 7
  %v197 = vsub.s32 0, %v196
  %v198 = vrot.slane %v193, %v197
  %v200 = vpack.i.b16 %v183, %v183
  %v202 = vlaneseq
  %v203 = vshrl.u32 %v202, 7
  %v204 = vsub.s32 0, %v203
  %v205 = vrot.slane %v200, %v204
  %v207 = vpack.i.b16 %v184, %v184
  %v209 = vlaneseq
  %v210 = vshrl.u32 %v209, 7
  %v211 = vsub.s32 0, %v210
  %v212 = vrot.slane %v207, %v211
  %v217 = vcombine.low %v191, %v198
  %v218 = vcombine.low %v205, %v212
  %v220 = vunpack.c.l.s4 1983009808
  %v221 = vunpack.c.0.s8 %v220
  %v222 = vlaneseq
  %v223 = vshrl.u32 %v222, 7
  %v224 = vsub.s32 %v221, %v223
  %v225 = vrot.slane %v217, %v224
  %v227 = vunpack.c.l.s4 1983009808
  %v228 = vunpack.c.0.s8 %v227
  %v229 = vlaneseq
  %v230 = vshrl.u32 %v229, 7
  %v231 = vsub.s32 %v228, %v230
  %v232 = vrot.slane %v218, %v231
  %v233 = vcombine.low %v225, %v232
  %234 = vrot.lane.b32.xlu0 %v233, 69
  %v235 = vpop.permute.xlu0 %234
  %v236 = vrot.slane %v235, 6
  %vm237 = vcmask 564224
  %v238 = vsel %vm237, %v236, %v235
  %v241 = vmul.bf16 %v75, %v238
  %v242 = vmul.bf16 %v76, %v236
  %v245 = vcombine.high %v241, %v241
  %v247 = vunpack.c.l.s4 1983009808
  %v248 = vunpack.c.0.s8 %v247
  %v249 = vlaneseq
  %v250 = vshrl.u32 %v249, 7
  %v251 = vsub.s32 %v248, %v250
  %v252 = vrot.slane %v241, %v251
  %v254 = vunpack.c.l.s4 1983009808
  %v255 = vunpack.c.0.s8 %v254
  %v256 = vlaneseq
  %v257 = vshrl.u32 %v256, 7
  %v258 = vsub.s32 %v255, %v257
  %v259 = vrot.slane %v245, %v258
  %v260 = vcombine.high %v252, %v252
  %v261 = vcombine.high %v259, %v259
  %v263 = vunpack.c.l.s4 1983009808
  %v264 = vunpack.c.0.s8 %v263
  %v265 = vlaneseq
  %v266 = vshrl.u32 %v265, 7
  %v267 = vsub.s32 %v264, %v266
  %v268 = vrot.slane %v242, %v267
  %269 = vrot.lane.b32.xlu0 %v252, 59
  %v270 = vpop.permute.xlu0 %269
  %271 = vrot.lane.b32.xlu0 %v260, 59
  %v272 = vpop.permute.xlu0 %271
  %273 = vrot.lane.b32.xlu0 %v259, 59
  %v274 = vpop.permute.xlu0 %273
  %275 = vrot.lane.b32.xlu0 %v261, 59
  %v276 = vpop.permute.xlu0 %275
  %277 = vrot.lane.b32.xlu0 %v268, 59
  %v278 = vpop.permute.xlu0 %277
  %vm279 = vcmask 482304
  %v280 = vsel %vm279, %v270, %v272
  %v281 = vsel %vm279, %v272, %v274
  %v282 = vsel %vm279, %v274, %v276
  %v283 = vsel %vm279, %v276, %v278
  %vm284 = vcmask 31744
  %v286 = vsel %vm284, %v22, 0
  %vm288 = vcmask 1041408
  %v290 = vsel %vm288, %v280, 0
  %v293 = vsel %vm288, %v281, 0
  %v296 = vsel %vm288, %v282, 0
  %v299 = vsel %vm288, %v283, 0
  %301 = vmatprep.subr.bf16.mxu0 0
  %302 = vmatpush1.bf16.msra.mxu0 0
  %303 = vmatprep.subr.bf16.mxu0 0
  %304 = vmatpush1.bf16.msra.mxu0 0
  %305 = vmatprep.subr.bf16.mxu0 0
  %306 = vmatpush1.bf16.msra.mxu0 0
  %307 = vmatprep.subr.bf16.mxu0 0
  %308 = vmatpush1.bf16.msra.mxu0 0
  %309 = vmatprep.subr.bf16.mxu0 0
  %310 = vmatpush1.bf16.msra.mxu0 0
  %311 = vmatprep.subr.bf16.mxu0 0
  %312 = vmatpush1.bf16.msra.mxu0 0
  %313 = vmatprep.subr.bf16.mxu0 0
  %314 = vmatpush1.bf16.msra.mxu0 0
  %315 = vmatprep.subr.bf16.mxu0 %v293
  %316 = vmatpush1.bf16.msra.mxu0 %v290
  %317 = vmatprep.subr.bf16.mxu0 0
  %318 = vmatpush2.bf16.msra.mxu0 0
  %319 = vmatprep.subr.bf16.mxu0 0
  %320 = vmatpush2.bf16.msra.mxu0 0
  %321 = vmatprep.subr.bf16.mxu0 0
  %322 = vmatpush2.bf16.msra.mxu0 0
  %323 = vmatprep.subr.bf16.mxu0 0
  %324 = vmatpush2.bf16.msra.mxu0 0
  %325 = vmatprep.subr.bf16.mxu0 0
  %326 = vmatpush2.bf16.msra.mxu0 0
  %327 = vmatprep.subr.bf16.mxu0 0
  %328 = vmatpush2.bf16.msra.mxu0 0
  %329 = vmatprep.subr.bf16.mxu0 0
  %330 = vmatpush2.bf16.msra.mxu0 0
  %331 = vmatprep.subr.bf16.mxu0 0
  %332 = vmatpush2.bf16.msra.mxu0 0
  %333 = vmatprep.mubr.bf16.mxu0 0
  %334 = vmatmul.mubr.bf16.gmra.mxu0 %v286
  %v335 = vpop.f32.mrf.mxu0
  %v336 = vadd.f32 0.0, %v335
  %v337 = vpop.f32.mrf.mxu0
  %v338 = vadd.f32 0.0, %v337
  %v339 = vpop.f32.mrf.mxu0
  %v340 = vpop.f32.mrf.mxu0
  %341 = vdwg.mxu0
  %342 = vmatprep.subr.bf16.mxu0 0
  %343 = vmatpush1.bf16.msra.mxu0 0
  %344 = vmatprep.subr.bf16.mxu0 0
  %345 = vmatpush1.bf16.msra.mxu0 0
  %346 = vmatprep.subr.bf16.mxu0 0
  %347 = vmatpush1.bf16.msra.mxu0 0
  %348 = vmatprep.subr.bf16.mxu0 0
  %349 = vmatpush1.bf16.msra.mxu0 0
  %350 = vmatprep.subr.bf16.mxu0 0
  %351 = vmatpush1.bf16.msra.mxu0 0
  %352 = vmatprep.subr.bf16.mxu0 0
  %353 = vmatpush1.bf16.msra.mxu0 0
  %354 = vmatprep.subr.bf16.mxu0 0
  %355 = vmatpush1.bf16.msra.mxu0 0
  %356 = vmatprep.subr.bf16.mxu0 %v299
  %357 = vmatpush1.bf16.msra.mxu0 %v296
  %358 = vmatprep.subr.bf16.mxu0 0
  %359 = vmatpush2.bf16.msra.mxu0 0
  %360 = vmatprep.subr.bf16.mxu0 0
  %361 = vmatpush2.bf16.msra.mxu0 0
  %362 = vmatprep.subr.bf16.mxu0 0
  %363 = vmatpush2.bf16.msra.mxu0 0
  %364 = vmatprep.subr.bf16.mxu0 0
  %365 = vmatpush2.bf16.msra.mxu0 0
  %366 = vmatprep.subr.bf16.mxu0 0
  %367 = vmatpush2.bf16.msra.mxu0 0
  %368 = vmatprep.subr.bf16.mxu0 0
  %369 = vmatpush2.bf16.msra.mxu0 0
  %370 = vmatprep.subr.bf16.mxu0 0
  %371 = vmatpush2.bf16.msra.mxu0 0
  %372 = vmatprep.subr.bf16.mxu0 0
  %373 = vmatpush2.bf16.msra.mxu0 0
  %374 = vmatprep.mubr.bf16.mxu0 0
  %375 = vmatmul.mubr.bf16.gmra.mxu0 %v286
  %v376 = vpop.f32.mrf.mxu0
  %v377 = vadd.f32 0.0, %v376
  %v378 = vpop.f32.mrf.mxu0
  %v379 = vadd.f32 0.0, %v378
  %v380 = vpop.f32.mrf.mxu0
  %v381 = vpop.f32.mrf.mxu0
  %382 = vdwg.mxu0
  %v385 = vcombine.high %v158, %v158
  %v387 = vunpack.c.l.s4 1983009808
  %v388 = vunpack.c.0.s8 %v387
  %v389 = vlaneseq
  %v390 = vshrl.u32 %v389, 7
  %v391 = vsub.s32 %v388, %v390
  %v392 = vrot.slane %v158, %v391
  %v394 = vunpack.c.l.s4 1983009808
  %v395 = vunpack.c.0.s8 %v394
  %v396 = vlaneseq
  %v397 = vshrl.u32 %v396, 7
  %v398 = vsub.s32 %v395, %v397
  %v399 = vrot.slane %v385, %v398
  %v400 = vcombine.high %v392, %v392
  %v401 = vcombine.high %v399, %v399
  %v403 = vunpack.c.l.s4 1983009808
  %v404 = vunpack.c.0.s8 %v403
  %v405 = vlaneseq
  %v406 = vshrl.u32 %v405, 7
  %v407 = vsub.s32 %v404, %v406
  %v408 = vrot.slane %v159, %v407
  %409 = vrot.lane.b32.xlu0 %v392, 60
  %v410 = vpop.permute.xlu0 %409
  %411 = vrot.lane.b32.xlu0 %v400, 60
  %v412 = vpop.permute.xlu0 %411
  %413 = vrot.lane.b32.xlu0 %v399, 60
  %v414 = vpop.permute.xlu0 %413
  %415 = vrot.lane.b32.xlu0 %v401, 60
  %v416 = vpop.permute.xlu0 %415
  %417 = vrot.lane.b32.xlu0 %v408, 60
  %v418 = vpop.permute.xlu0 %417
  %vm419 = vcmask 490496
  %v420 = vsel %vm419, %v410, %v412
  %v421 = vsel %vm419, %v412, %v414
  %v422 = vsel %vm419, %v414, %v416
  %v423 = vsel %vm419, %v416, %v418
  %v425 = vsel %vm284, %v21, 0
  %v428 = vsel %vm288, %v420, 0
  %v431 = vsel %vm288, %v421, 0
  %v434 = vsel %vm288, %v422, 0
  %v437 = vsel %vm288, %v423, 0
  %439 = vmatprep.subr.bf16.mxu0 0
  %440 = vmatpush1.bf16.msra.mxu0 0
  %441 = vmatprep.subr.bf16.mxu0 0
  %442 = vmatpush1.bf16.msra.mxu0 0
  %443 = vmatprep.subr.bf16.mxu0 0
  %444 = vmatpush1.bf16.msra.mxu0 0
  %445 = vmatprep.subr.bf16.mxu0 0
  %446 = vmatpush1.bf16.msra.mxu0 0
  %447 = vmatprep.subr.bf16.mxu0 0
  %448 = vmatpush1.bf16.msra.mxu0 0
  %449 = vmatprep.subr.bf16.mxu0 0
  %450 = vmatpush1.bf16.msra.mxu0 0
  %451 = vmatprep.subr.bf16.mxu0 0
  %452 = vmatpush1.bf16.msra.mxu0 0
  %453 = vmatprep.subr.bf16.mxu0 %v431
  %454 = vmatpush1.bf16.msra.mxu0 %v428
  %455 = vmatprep.subr.bf16.mxu0 0
  %456 = vmatpush2.bf16.msra.mxu0 0
  %457 = vmatprep.subr.bf16.mxu0 0
  %458 = vmatpush2.bf16.msra.mxu0 0
  %459 = vmatprep.subr.bf16.mxu0 0
  %460 = vmatpush2.bf16.msra.mxu0 0
  %461 = vmatprep.subr.bf16.mxu0 0
  %462 = vmatpush2.bf16.msra.mxu0 0
  %463 = vmatprep.subr.bf16.mxu0 0
  %464 = vmatpush2.bf16.msra.mxu0 0
  %465 = vmatprep.subr.bf16.mxu0 0
  %466 = vmatpush2.bf16.msra.mxu0 0
  %467 = vmatprep.subr.bf16.mxu0 0
  %468 = vmatpush2.bf16.msra.mxu0 0
  %469 = vmatprep.subr.bf16.mxu0 0
  %470 = vmatpush2.bf16.msra.mxu0 0
  %471 = vmatprep.mubr.bf16.mxu0 0
  %472 = vmatmul.mubr.bf16.gmra.mxu0 %v425
  %v473 = vpop.f32.mrf.mxu0
  %v474 = vadd.f32 %v336, %v473
  %v475 = vpop.f32.mrf.mxu0
  %v476 = vadd.f32 %v338, %v475
  %v477 = vpop.f32.mrf.mxu0
  %v478 = vpop.f32.mrf.mxu0
  %479 = vdwg.mxu0
  %480 = vmatprep.subr.bf16.mxu0 0
  %481 = vmatpush1.bf16.msra.mxu0 0
  %482 = vmatprep.subr.bf16.mxu0 0
  %483 = vmatpush1.bf16.msra.mxu0 0
  %484 = vmatprep.subr.bf16.mxu0 0
  %485 = vmatpush1.bf16.msra.mxu0 0
  %486 = vmatprep.subr.bf16.mxu0 0
  %487 = vmatpush1.bf16.msra.mxu0 0
  %488 = vmatprep.subr.bf16.mxu0 0
  %489 = vmatpush1.bf16.msra.mxu0 0
  %490 = vmatprep.subr.bf16.mxu0 0
  %491 = vmatpush1.bf16.msra.mxu0 0
  %492 = vmatprep.subr.bf16.mxu0 0
  %493 = vmatpush1.bf16.msra.mxu0 0
  %494 = vmatprep.subr.bf16.mxu0 %v437
  %495 = vmatpush1.bf16.msra.mxu0 %v434
  %496 = vmatprep.subr.bf16.mxu0 0
  %497 = vmatpush2.bf16.msra.mxu0 0
  %498 = vmatprep.subr.bf16.mxu0 0
  %499 = vmatpush2.bf16.msra.mxu0 0
  %500 = vmatprep.subr.bf16.mxu0 0
  %501 = vmatpush2.bf16.msra.mxu0 0
  %502 = vmatprep.subr.bf16.mxu0 0
  %503 = vmatpush2.bf16.msra.mxu0 0
  %504 = vmatprep.subr.bf16.mxu0 0
  %505 = vmatpush2.bf16.msra.mxu0 0
  %506 = vmatprep.subr.bf16.mxu0 0
  %507 = vmatpush2.bf16.msra.mxu0 0
  %508 = vmatprep.subr.bf16.mxu0 0
  %509 = vmatpush2.bf16.msra.mxu0 0
  %510 = vmatprep.subr.bf16.mxu0 0
  %511 = vmatpush2.bf16.msra.mxu0 0
  %512 = vmatprep.mubr.bf16.mxu0 0
  %513 = vmatmul.mubr.bf16.gmra.mxu0 %v425
  %v514 = vpop.f32.mrf.mxu0
  %v515 = vadd.f32 %v377, %v514
  %v516 = vpop.f32.mrf.mxu0
  %v517 = vadd.f32 %v379, %v516
  %v518 = vpop.f32.mrf.mxu0
  %v519 = vpop.f32.mrf.mxu0
  %520 = vdwg.mxu0
  %v521 = vld [vmem:[%s0] sm:$0xff]
  %v522 = vld [vmem:[%s0 + $0x8] sm:$0x3]
  %v525 = vunpack.c.l.s4 1966171168
  %v526 = vunpack.c.0.s8 %v525
  %v527 = vlaneseq
  %v528 = vshrl.u32 %v527, 7
  %v529 = vsub.s32 %v526, %v528
  %v530 = vrot.slane %v50, %v529
  %v531 = vcombine.high %v530, %v530
  %v533 = vunpack.c.l.s4 1966171168
  %v534 = vunpack.c.0.s8 %v533
  %v535 = vlaneseq
  %v536 = vshrl.u32 %v535, 7
  %v537 = vsub.s32 %v534, %v536
  %v538 = vrot.slane %v530, %v537
  %v540 = vunpack.c.l.s4 1966171168
  %v541 = vunpack.c.0.s8 %v540
  %v542 = vlaneseq
  %v543 = vshrl.u32 %v542, 7
  %v544 = vsub.s32 %v541, %v543
  %v545 = vrot.slane %v531, %v544
  %v546 = vcombine.high %v538, %v538
  %v547 = vcombine.high %v545, %v545
  %v549 = vpack.i.b16 %v538, %v538
  %v551 = vlaneseq
  %v552 = vshrl.u32 %v551, 7
  %v553 = vsub.s32 0, %v552
  %v554 = vrot.slane %v549, %v553
  %v556 = vpack.i.b16 %v545, %v545
  %v558 = vlaneseq
  %v559 = vshrl.u32 %v558, 7
  %v560 = vsub.s32 0, %v559
  %v561 = vrot.slane %v556, %v560
  %v563 = vpack.i.b16 %v546, %v546
  %v565 = vlaneseq
  %v566 = vshrl.u32 %v565, 7
  %v567 = vsub.s32 0, %v566
  %v568 = vrot.slane %v563, %v567
  %v570 = vpack.i.b16 %v547, %v547
  %v572 = vlaneseq
  %v573 = vshrl.u32 %v572, 7
  %v574 = vsub.s32 0, %v573
  %v575 = vrot.slane %v570, %v574
  %v580 = vcombine.low %v554, %v561
  %v581 = vcombine.low %v568, %v575
  %v583 = vunpack.c.l.s4 1983009808
  %v584 = vunpack.c.0.s8 %v583
  %v585 = vlaneseq
  %v586 = vshrl.u32 %v585, 7
  %v587 = vsub.s32 %v584, %v586
  %v588 = vrot.slane %v580, %v587
  %v590 = vunpack.c.l.s4 1983009808
  %v591 = vunpack.c.0.s8 %v590
  %v592 = vlaneseq
  %v593 = vshrl.u32 %v592, 7
  %v594 = vsub.s32 %v591, %v593
  %v595 = vrot.slane %v581, %v594
  %v596 = vcombine.low %v588, %v595
  %597 = vrot.lane.b32.xlu0 %v596, 70
  %v598 = vpop.permute.xlu0 %597
  %v599 = vrot.slane %v598, 6
  %vm600 = vcmask 572416
  %v601 = vsel %vm600, %v599, %v598
  %v604 = vmul.bf16 %v521, %v601
  %v605 = vmul.bf16 %v522, %v599
  %v608 = vcombine.high %v604, %v604
  %v610 = vunpack.c.l.s4 1983009808
  %v611 = vunpack.c.0.s8 %v610
  %v612 = vlaneseq
  %v613 = vshrl.u32 %v612, 7
  %v614 = vsub.s32 %v611, %v613
  %v615 = vrot.slane %v604, %v614
  %v617 = vunpack.c.l.s4 1983009808
  %v618 = vunpack.c.0.s8 %v617
  %v619 = vlaneseq
  %v620 = vshrl.u32 %v619, 7
  %v621 = vsub.s32 %v618, %v620
  %v622 = vrot.slane %v608, %v621
  %v623 = vcombine.high %v615, %v615
  %v624 = vcombine.high %v622, %v622
  %v626 = vunpack.c.l.s4 1983009808
  %v627 = vunpack.c.0.s8 %v626
  %v628 = vlaneseq
  %v629 = vshrl.u32 %v628, 7
  %v630 = vsub.s32 %v627, %v629
  %v631 = vrot.slane %v605, %v630
  %632 = vrot.lane.b32.xlu0 %v615, 58
  %v633 = vpop.permute.xlu0 %632
  %634 = vrot.lane.b32.xlu0 %v623, 58
  %v635 = vpop.permute.xlu0 %634
  %636 = vrot.lane.b32.xlu0 %v622, 58
  %v637 = vpop.permute.xlu0 %636
  %638 = vrot.lane.b32.xlu0 %v624, 58
  %v639 = vpop.permute.xlu0 %638
  %640 = vrot.lane.b32.xlu0 %v631, 58
  %v641 = vpop.permute.xlu0 %640
  %vm642 = vcmask 474112
  %v643 = vsel %vm642, %v633, %v635
  %v644 = vsel %vm642, %v635, %v637
  %v645 = vsel %vm642, %v637, %v639
  %v646 = vsel %vm642, %v639, %v641
  %v648 = vsel %vm284, %v23, 0
  %v651 = vsel %vm288, %v643, 0
  %v654 = vsel %vm288, %v644, 0
  %v657 = vsel %vm288, %v645, 0
  %v660 = vsel %vm288, %v646, 0
  %662 = vmatprep.subr.bf16.mxu0 0
  %663 = vmatpush1.bf16.msra.mxu0 0
  %664 = vmatprep.subr.bf16.mxu0 0
  %665 = vmatpush1.bf16.msra.mxu0 0
  %666 = vmatprep.subr.bf16.mxu0 0
  %667 = vmatpush1.bf16.msra.mxu0 0
  %668 = vmatprep.subr.bf16.mxu0 0
  %669 = vmatpush1.bf16.msra.mxu0 0
  %670 = vmatprep.subr.bf16.mxu0 0
  %671 = vmatpush1.bf16.msra.mxu0 0
  %672 = vmatprep.subr.bf16.mxu0 0
  %673 = vmatpush1.bf16.msra.mxu0 0
  %674 = vmatprep.subr.bf16.mxu0 0
  %675 = vmatpush1.bf16.msra.mxu0 0
  %676 = vmatprep.subr.bf16.mxu0 %v654
  %677 = vmatpush1.bf16.msra.mxu0 %v651
  %678 = vmatprep.subr.bf16.mxu0 0
  %679 = vmatpush2.bf16.msra.mxu0 0
  %680 = vmatprep.subr.bf16.mxu0 0
  %681 = vmatpush2.bf16.msra.mxu0 0
  %682 = vmatprep.subr.bf16.mxu0 0
  %683 = vmatpush2.bf16.msra.mxu0 0
  %684 = vmatprep.subr.bf16.mxu0 0
  %685 = vmatpush2.bf16.msra.mxu0 0
  %686 = vmatprep.subr.bf16.mxu0 0
  %687 = vmatpush2.bf16.msra.mxu0 0
  %688 = vmatprep.subr.bf16.mxu0 0
  %689 = vmatpush2.bf16.msra.mxu0 0
  %690 = vmatprep.subr.bf16.mxu0 0
  %691 = vmatpush2.bf16.msra.mxu0 0
  %692 = vmatprep.subr.bf16.mxu0 0
  %693 = vmatpush2.bf16.msra.mxu0 0
  %694 = vmatprep.mubr.bf16.mxu0 0
  %695 = vmatmul.mubr.bf16.gmra.mxu0 %v648
  %v696 = vpop.f32.mrf.mxu0
  %v697 = vadd.f32 0.0, %v696
  %v698 = vpop.f32.mrf.mxu0
  %v699 = vadd.f32 0.0, %v698
  %v700 = vpop.f32.mrf.mxu0
  %v701 = vpop.f32.mrf.mxu0
  %702 = vdwg.mxu0
  %703 = vmatprep.subr.bf16.mxu0 0
  %704 = vmatpush1.bf16.msra.mxu0 0
  %705 = vmatprep.subr.bf16.mxu0 0
  %706 = vmatpush1.bf16.msra.mxu0 0
  %707 = vmatprep.subr.bf16.mxu0 0
  %708 = vmatpush1.bf16.msra.mxu0 0
  %709 = vmatprep.subr.bf16.mxu0 0
  %710 = vmatpush1.bf16.msra.mxu0 0
  %711 = vmatprep.subr.bf16.mxu0 0
  %712 = vmatpush1.bf16.msra.mxu0 0
  %713 = vmatprep.subr.bf16.mxu0 0
  %714 = vmatpush1.bf16.msra.mxu0 0
  %715 = vmatprep.subr.bf16.mxu0 0
  %716 = vmatpush1.bf16.msra.mxu0 0
  %717 = vmatprep.subr.bf16.mxu0 %v660
  %718 = vmatpush1.bf16.msra.mxu0 %v657
  %719 = vmatprep.subr.bf16.mxu0 0
  %720 = vmatpush2.bf16.msra.mxu0 0
  %721 = vmatprep.subr.bf16.mxu0 0
  %722 = vmatpush2.bf16.msra.mxu0 0
  %723 = vmatprep.subr.bf16.mxu0 0
  %724 = vmatpush2.bf16.msra.mxu0 0
  %725 = vmatprep.subr.bf16.mxu0 0
  %726 = vmatpush2.bf16.msra.mxu0 0
  %727 = vmatprep.subr.bf16.mxu0 0
  %728 = vmatpush2.bf16.msra.mxu0 0
  %729 = vmatprep.subr.bf16.mxu0 0
  %730 = vmatpush2.bf16.msra.mxu0 0
  %731 = vmatprep.subr.bf16.mxu0 0
  %732 = vmatpush2.bf16.msra.mxu0 0
  %733 = vmatprep.subr.bf16.mxu0 0
  %734 = vmatpush2.bf16.msra.mxu0 0
  %735 = vmatprep.mubr.bf16.mxu0 0
  %736 = vmatmul.mubr.bf16.gmra.mxu0 %v648
  %v737 = vpop.f32.mrf.mxu0
  %v738 = vadd.f32 0.0, %v737
  %v739 = vpop.f32.mrf.mxu0
  %v740 = vadd.f32 0.0, %v739
  %v741 = vpop.f32.mrf.mxu0
  %v742 = vpop.f32.mrf.mxu0
  %743 = vdwg.mxu0
  %v744 = vadd.f32 %v474, %v697
  %v745 = vadd.f32 %v476, %v699
  %v746 = vadd.f32 %v515, %v738
  %v747 = vadd.f32 %v517, %v740
  %v748 = vld [vmem:[%s0] sm:$0xff]
  %v749 = vld [vmem:[%s0 + $0x8] sm:$0x3]
  %v752 = vunpack.c.l.s4 1966171168
  %v753 = vunpack.c.0.s8 %v752
  %v754 = vlaneseq
  %v755 = vshrl.u32 %v754, 7
  %v756 = vsub.s32 %v753, %v755
  %v757 = vrot.slane %v51, %v756
  %v758 = vcombine.high %v757, %v757
  %v760 = vunpack.c.l.s4 1966171168
  %v761 = vunpack.c.0.s8 %v760
  %v762 = vlaneseq
  %v763 = vshrl.u32 %v762, 7
  %v764 = vsub.s32 %v761, %v763
  %v765 = vrot.slane %v757, %v764
  %v767 = vunpack.c.l.s4 1966171168
  %v768 = vunpack.c.0.s8 %v767
  %v769 = vlaneseq
  %v770 = vshrl.u32 %v769, 7
  %v771 = vsub.s32 %v768, %v770
  %v772 = vrot.slane %v758, %v771
  %v773 = vcombine.high %v765, %v765
  %v774 = vcombine.high %v772, %v772
  %v776 = vpack.i.b16 %v765, %v765
  %v778 = vlaneseq
  %v779 = vshrl.u32 %v778, 7
  %v780 = vsub.s32 0, %v779
  %v781 = vrot.slane %v776, %v780
  %v783 = vpack.i.b16 %v772, %v772
  %v785 = vlaneseq
  %v786 = vshrl.u32 %v785, 7
  %v787 = vsub.s32 0, %v786
  %v788 = vrot.slane %v783, %v787
  %v790 = vpack.i.b16 %v773, %v773
  %v792 = vlaneseq
  %v793 = vshrl.u32 %v792, 7
  %v794 = vsub.s32 0, %v793
  %v795 = vrot.slane %v790, %v794
  %v797 = vpack.i.b16 %v774, %v774
  %v799 = vlaneseq
  %v800 = vshrl.u32 %v799, 7
  %v801 = vsub.s32 0, %v800
  %v802 = vrot.slane %v797, %v801
  %v807 = vcombine.low %v781, %v788
  %v808 = vcombine.low %v795, %v802
  %v810 = vunpack.c.l.s4 1983009808
  %v811 = vunpack.c.0.s8 %v810
  %v812 = vlaneseq
  %v813 = vshrl.u32 %v812, 7
  %v814 = vsub.s32 %v811, %v813
  %v815 = vrot.slane %v807, %v814
  %v817 = vunpack.c.l.s4 1983009808
  %v818 = vunpack.c.0.s8 %v817
  %v819 = vlaneseq
  %v820 = vshrl.u32 %v819, 7
  %v821 = vsub.s32 %v818, %v820
  %v822 = vrot.slane %v808, %v821
  %v823 = vcombine.low %v815, %v822
  %824 = vrot.lane.b32.xlu0 %v823, 84
  %v825 = vpop.permute.xlu0 %824
  %v826 = vrot.slane %v825, 6
  %vm827 = vcmask 687104
  %v828 = vsel %vm827, %v826, %v825
  %v831 = vmul.bf16 %v748, %v828
  %v832 = vmul.bf16 %v749, %v826
  %v835 = vcombine.high %v831, %v831
  %v837 = vunpack.c.l.s4 1983009808
  %v838 = vunpack.c.0.s8 %v837
  %v839 = vlaneseq
  %v840 = vshrl.u32 %v839, 7
  %v841 = vsub.s32 %v838, %v840
  %v842 = vrot.slane %v831, %v841
  %v844 = vunpack.c.l.s4 1983009808
  %v845 = vunpack.c.0.s8 %v844
  %v846 = vlaneseq
  %v847 = vshrl.u32 %v846, 7
  %v848 = vsub.s32 %v845, %v847
  %v849 = vrot.slane %v835, %v848
  %v850 = vcombine.high %v842, %v842
  %v851 = vcombine.high %v849, %v849
  %v853 = vunpack.c.l.s4 1983009808
  %v854 = vunpack.c.0.s8 %v853
  %v855 = vlaneseq
  %v856 = vshrl.u32 %v855, 7
  %v857 = vsub.s32 %v854, %v856
  %v858 = vrot.slane %v832, %v857
  %859 = vrot.lane.b32.xlu0 %v842, 44
  %v860 = vpop.permute.xlu0 %859
  %861 = vrot.lane.b32.xlu0 %v850, 44
  %v862 = vpop.permute.xlu0 %861
  %863 = vrot.lane.b32.xlu0 %v849, 44
  %v864 = vpop.permute.xlu0 %863
  %865 = vrot.lane.b32.xlu0 %v851, 44
  %v866 = vpop.permute.xlu0 %865
  %867 = vrot.lane.b32.xlu0 %v858, 44
  %v868 = vpop.permute.xlu0 %867
  %vm869 = vcmask 359424
  %v870 = vsel %vm869, %v860, %v862
  %v871 = vsel %vm869, %v862, %v864
  %v872 = vsel %vm869, %v864, %v866
  %v873 = vsel %vm869, %v866, %v868
  %v875 = vsel %vm284, %v24, 0
  %v878 = vsel %vm288, %v870, 0
  %v881 = vsel %vm288, %v871, 0
  %v884 = vsel %vm288, %v872, 0
  %v887 = vsel %vm288, %v873, 0
  %889 = vmatprep.subr.bf16.mxu0 0
  %890 = vmatpush1.bf16.msra.mxu0 0
  %891 = vmatprep.subr.bf16.mxu0 0
  %892 = vmatpush1.bf16.msra.mxu0 0
  %893 = vmatprep.subr.bf16.mxu0 0
  %894 = vmatpush1.bf16.msra.mxu0 0
  %895 = vmatprep.subr.bf16.mxu0 0
  %896 = vmatpush1.bf16.msra.mxu0 0
  %897 = vmatprep.subr.bf16.mxu0 0
  %898 = vmatpush1.bf16.msra.mxu0 0
  %899 = vmatprep.subr.bf16.mxu0 0
  %900 = vmatpush1.bf16.msra.mxu0 0
  %901 = vmatprep.subr.bf16.mxu0 0
  %902 = vmatpush1.bf16.msra.mxu0 0
  %903 = vmatprep.subr.bf16.mxu0 %v881
  %904 = vmatpush1.bf16.msra.mxu0 %v878
  %905 = vmatprep.subr.bf16.mxu0 0
  %906 = vmatpush2.bf16.msra.mxu0 0
  %907 = vmatprep.subr.bf16.mxu0 0
  %908 = vmatpush2.bf16.msra.mxu0 0
  %909 = vmatprep.subr.bf16.mxu0 0
  %910 = vmatpush2.bf16.msra.mxu0 0
  %911 = vmatprep.subr.bf16.mxu0 0
  %912 = vmatpush2.bf16.msra.mxu0 0
  %913 = vmatprep.subr.bf16.mxu0 0
  %914 = vmatpush2.bf16.msra.mxu0 0
  %915 = vmatprep.subr.bf16.mxu0 0
  %916 = vmatpush2.bf16.msra.mxu0 0
  %917 = vmatprep.subr.bf16.mxu0 0
  %918 = vmatpush2.bf16.msra.mxu0 0
  %919 = vmatprep.subr.bf16.mxu0 0
  %920 = vmatpush2.bf16.msra.mxu0 0
  %921 = vmatprep.mubr.bf16.mxu0 0
  %922 = vmatmul.mubr.bf16.gmra.mxu0 %v875
  %v923 = vpop.f32.mrf.mxu0
  %v924 = vadd.f32 0.0, %v923
  %v925 = vpop.f32.mrf.mxu0
  %v926 = vadd.f32 0.0, %v925
  %v927 = vpop.f32.mrf.mxu0
  %v928 = vpop.f32.mrf.mxu0
  %929 = vdwg.mxu0
  %930 = vmatprep.subr.bf16.mxu0 0
  %931 = vmatpush1.bf16.msra.mxu0 0
  %932 = vmatprep.subr.bf16.mxu0 0
  %933 = vmatpush1.bf16.msra.mxu0 0
  %934 = vmatprep.subr.bf16.mxu0 0
  %935 = vmatpush1.bf16.msra.mxu0 0
  %936 = vmatprep.subr.bf16.mxu0 0
  %937 = vmatpush1.bf16.msra.mxu0 0
  %938 = vmatprep.subr.bf16.mxu0 0
  %939 = vmatpush1.bf16.msra.mxu0 0
  %940 = vmatprep.subr.bf16.mxu0 0
  %941 = vmatpush1.bf16.msra.mxu0 0
  %942 = vmatprep.subr.bf16.mxu0 0
  %943 = vmatpush1.bf16.msra.mxu0 0
  %944 = vmatprep.subr.bf16.mxu0 %v887
  %945 = vmatpush1.bf16.msra.mxu0 %v884
  %946 = vmatprep.subr.bf16.mxu0 0
  %947 = vmatpush2.bf16.msra.mxu0 0
  %948 = vmatprep.subr.bf16.mxu0 0
  %949 = vmatpush2.bf16.msra.mxu0 0
  %950 = vmatprep.subr.bf16.mxu0 0
  %951 = vmatpush2.bf16.msra.mxu0 0
  %952 = vmatprep.subr.bf16.mxu0 0
  %953 = vmatpush2.bf16.msra.mxu0 0
  %954 = vmatprep.subr.bf16.mxu0 0
  %955 = vmatpush2.bf16.msra.mxu0 0
  %956 = vmatprep.subr.bf16.mxu0 0
  %957 = vmatpush2.bf16.msra.mxu0 0
  %958 = vmatprep.subr.bf16.mxu0 0
  %959 = vmatpush2.bf16.msra.mxu0 0
  %960 = vmatprep.subr.bf16.mxu0 0
  %961 = vmatpush2.bf16.msra.mxu0 0
  %962 = vmatprep.mubr.bf16.mxu0 0
  %963 = vmatmul.mubr.bf16.gmra.mxu0 %v875
  %v964 = vpop.f32.mrf.mxu0
  %v965 = vadd.f32 0.0, %v964
  %v966 = vpop.f32.mrf.mxu0
  %v967 = vadd.f32 0.0, %v966
  %v968 = vpop.f32.mrf.mxu0
  %v969 = vpop.f32.mrf.mxu0
  %970 = vdwg.mxu0
  %v971 = vadd.f32 %v744, %v924
  %v972 = vadd.f32 %v745, %v926
  %v973 = vadd.f32 %v746, %v965
  %v974 = vadd.f32 %v747, %v967
  %v975 = vld [vmem:[%s0] sm:$0xff]
  %v976 = vld [vmem:[%s0 + $0x8] sm:$0x3]
  %v979 = vunpack.c.l.s4 1966171168
  %v980 = vunpack.c.0.s8 %v979
  %v981 = vlaneseq
  %v982 = vshrl.u32 %v981, 7
  %v983 = vsub.s32 %v980, %v982
  %v984 = vrot.slane %v52, %v983
  %v985 = vcombine.high %v984, %v984
  %v987 = vunpack.c.l.s4 1966171168
  %v988 = vunpack.c.0.s8 %v987
  %v989 = vlaneseq
  %v990 = vshrl.u32 %v989, 7
  %v991 = vsub.s32 %v988, %v990
  %v992 = vrot.slane %v984, %v991
  %v994 = vunpack.c.l.s4 1966171168
  %v995 = vunpack.c.0.s8 %v994
  %v996 = vlaneseq
  %v997 = vshrl.u32 %v996, 7
  %v998 = vsub.s32 %v995, %v997
  %v999 = vrot.slane %v985, %v998
  %v1000 = vcombine.high %v992, %v992
  %v1001 = vcombine.high %v999, %v999
  %v1003 = vpack.i.b16 %v992, %v992
  %v1005 = vlaneseq
  %v1006 = vshrl.u32 %v1005, 7
  %v1007 = vsub.s32 0, %v1006
  %v1008 = vrot.slane %v1003, %v1007
  %v1010 = vpack.i.b16 %v999, %v999
  %v1012 = vlaneseq
  %v1013 = vshrl.u32 %v1012, 7
  %v1014 = vsub.s32 0, %v1013
  %v1015 = vrot.slane %v1010, %v1014
  %v1017 = vpack.i.b16 %v1000, %v1000
  %v1019 = vlaneseq
  %v1020 = vshrl.u32 %v1019, 7
  %v1021 = vsub.s32 0, %v1020
  %v1022 = vrot.slane %v1017, %v1021
  %v1024 = vpack.i.b16 %v1001, %v1001
  %v1026 = vlaneseq
  %v1027 = vshrl.u32 %v1026, 7
  %v1028 = vsub.s32 0, %v1027
  %v1029 = vrot.slane %v1024, %v1028
  %v1034 = vcombine.low %v1008, %v1015
  %v1035 = vcombine.low %v1022, %v1029
  %v1037 = vunpack.c.l.s4 1983009808
  %v1038 = vunpack.c.0.s8 %v1037
  %v1039 = vlaneseq
  %v1040 = vshrl.u32 %v1039, 7
  %v1041 = vsub.s32 %v1038, %v1040
  %v1042 = vrot.slane %v1034, %v1041
  %v1044 = vunpack.c.l.s4 1983009808
  %v1045 = vunpack.c.0.s8 %v1044
  %v1046 = vlaneseq
  %v1047 = vshrl.u32 %v1046, 7
  %v1048 = vsub.s32 %v1045, %v1047
  %v1049 = vrot.slane %v1035, %v1048
  %v1050 = vcombine.low %v1042, %v1049
  %1051 = vrot.lane.b32.xlu0 %v1050, 85
  %v1052 = vpop.permute.xlu0 %1051
  %v1053 = vrot.slane %v1052, 6
  %vm1054 = vcmask 695296
  %v1055 = vsel %vm1054, %v1053, %v1052
  %v1058 = vmul.bf16 %v975, %v1055
  %v1059 = vmul.bf16 %v976, %v1053
  %v1062 = vcombine.high %v1058, %v1058
  %v1064 = vunpack.c.l.s4 1983009808
  %v1065 = vunpack.c.0.s8 %v1064
  %v1066 = vlaneseq
  %v1067 = vshrl.u32 %v1066, 7
  %v1068 = vsub.s32 %v1065, %v1067
  %v1069 = vrot.slane %v1058, %v1068
  %v1071 = vunpack.c.l.s4 1983009808
  %v1072 = vunpack.c.0.s8 %v1071
  %v1073 = vlaneseq
  %v1074 = vshrl.u32 %v1073, 7
  %v1075 = vsub.s32 %v1072, %v1074
  %v1076 = vrot.slane %v1062, %v1075
  %v1077 = vcombine.high %v1069, %v1069
  %v1078 = vcombine.high %v1076, %v1076
  %v1080 = vunpack.c.l.s4 1983009808
  %v1081 = vunpack.c.0.s8 %v1080
  %v1082 = vlaneseq
  %v1083 = vshrl.u32 %v1082, 7
  %v1084 = vsub.s32 %v1081, %v1083
  %v1085 = vrot.slane %v1059, %v1084
  %1086 = vrot.lane.b32.xlu0 %v1069, 43
  %v1087 = vpop.permute.xlu0 %1086
  %1088 = vrot.lane.b32.xlu0 %v1077, 43
  %v1089 = vpop.permute.xlu0 %1088
  %1090 = vrot.lane.b32.xlu0 %v1076, 43
  %v1091 = vpop.permute.xlu0 %1090
  %1092 = vrot.lane.b32.xlu0 %v1078, 43
  %v1093 = vpop.permute.xlu0 %1092
  %1094 = vrot.lane.b32.xlu0 %v1085, 43
  %v1095 = vpop.permute.xlu0 %1094
  %vm1096 = vcmask 351232
  %v1097 = vsel %vm1096, %v1087, %v1089
  %v1098 = vsel %vm1096, %v1089, %v1091
  %v1099 = vsel %vm1096, %v1091, %v1093
  %v1100 = vsel %vm1096, %v1093, %v1095
  %v1102 = vsel %vm284, %v25, 0
  %v1105 = vsel %vm288, %v1097, 0
  %v1108 = vsel %vm288, %v1098, 0
  %v1111 = vsel %vm288, %v1099, 0
  %v1114 = vsel %vm288, %v1100, 0
  %1116 = vmatprep.subr.bf16.mxu0 0
  %1117 = vmatpush1.bf16.msra.mxu0 0
  %1118 = vmatprep.subr.bf16.mxu0 0
  %1119 = vmatpush1.bf16.msra.mxu0 0
  %1120 = vmatprep.subr.bf16.mxu0 0
  %1121 = vmatpush1.bf16.msra.mxu0 0
  %1122 = vmatprep.subr.bf16.mxu0 0
  %1123 = vmatpush1.bf16.msra.mxu0 0
  %1124 = vmatprep.subr.bf16.mxu0 0
  %1125 = vmatpush1.bf16.msra.mxu0 0
  %1126 = vmatprep.subr.bf16.mxu0 0
  %1127 = vmatpush1.bf16.msra.mxu0 0
  %1128 = vmatprep.subr.bf16.mxu0 0
  %1129 = vmatpush1.bf16.msra.mxu0 0
  %1130 = vmatprep.subr.bf16.mxu0 %v1108
  %1131 = vmatpush1.bf16.msra.mxu0 %v1105
  %1132 = vmatprep.subr.bf16.mxu0 0
  %1133 = vmatpush2.bf16.msra.mxu0 0
  %1134 = vmatprep.subr.bf16.mxu0 0
  %1135 = vmatpush2.bf16.msra.mxu0 0
  %1136 = vmatprep.subr.bf16.mxu0 0
  %1137 = vmatpush2.bf16.msra.mxu0 0
  %1138 = vmatprep.subr.bf16.mxu0 0
  %1139 = vmatpush2.bf16.msra.mxu0 0
  %1140 = vmatprep.subr.bf16.mxu0 0
  %1141 = vmatpush2.bf16.msra.mxu0 0
  %1142 = vmatprep.subr.bf16.mxu0 0
  %1143 = vmatpush2.bf16.msra.mxu0 0
  %1144 = vmatprep.subr.bf16.mxu0 0
  %1145 = vmatpush2.bf16.msra.mxu0 0
  %1146 = vmatprep.subr.bf16.mxu0 0
  %1147 = vmatpush2.bf16.msra.mxu0 0
  %1148 = vmatprep.mubr.bf16.mxu0 0
  %1149 = vmatmul.mubr.bf16.gmra.mxu0 %v1102
  %v1150 = vpop.f32.mrf.mxu0
  %v1151 = vadd.f32 0.0, %v1150
  %v1152 = vpop.f32.mrf.mxu0
  %v1153 = vadd.f32 0.0, %v1152
  %v1154 = vpop.f32.mrf.mxu0
  %v1155 = vpop.f32.mrf.mxu0
  %1156 = vdwg.mxu0
  %1157 = vmatprep.subr.bf16.mxu0 0
  %1158 = vmatpush1.bf16.msra.mxu0 0
  %1159 = vmatprep.subr.bf16.mxu0 0
  %1160 = vmatpush1.bf16.msra.mxu0 0
  %1161 = vmatprep.subr.bf16.mxu0 0
  %1162 = vmatpush1.bf16.msra.mxu0 0
  %1163 = vmatprep.subr.bf16.mxu0 0
  %1164 = vmatpush1.bf16.msra.mxu0 0
  %1165 = vmatprep.subr.bf16.mxu0 0
  %1166 = vmatpush1.bf16.msra.mxu0 0
  %1167 = vmatprep.subr.bf16.mxu0 0
  %1168 = vmatpush1.bf16.msra.mxu0 0
  %1169 = vmatprep.subr.bf16.mxu0 0
  %1170 = vmatpush1.bf16.msra.mxu0 0
  %1171 = vmatprep.subr.bf16.mxu0 %v1114
  %1172 = vmatpush1.bf16.msra.mxu0 %v1111
  %1173 = vmatprep.subr.bf16.mxu0 0
  %1174 = vmatpush2.bf16.msra.mxu0 0
  %1175 = vmatprep.subr.bf16.mxu0 0
  %1176 = vmatpush2.bf16.msra.mxu0 0
  %1177 = vmatprep.subr.bf16.mxu0 0
  %1178 = vmatpush2.bf16.msra.mxu0 0
  %1179 = vmatprep.subr.bf16.mxu0 0
  %1180 = vmatpush2.bf16.msra.mxu0 0
  %1181 = vmatprep.subr.bf16.mxu0 0
  %1182 = vmatpush2.bf16.msra.mxu0 0
  %1183 = vmatprep.subr.bf16.mxu0 0
  %1184 = vmatpush2.bf16.msra.mxu0 0
  %1185 = vmatprep.subr.bf16.mxu0 0
  %1186 = vmatpush2.bf16.msra.mxu0 0
  %1187 = vmatprep.subr.bf16.mxu0 0
  %1188 = vmatpush2.bf16.msra.mxu0 0
  %1189 = vmatprep.mubr.bf16.mxu0 0
  %1190 = vmatmul.mubr.bf16.gmra.mxu0 %v1102
  %v1191 = vpop.f32.mrf.mxu0
  %v1192 = vadd.f32 0.0, %v1191
  %v1193 = vpop.f32.mrf.mxu0
  %v1194 = vadd.f32 0.0, %v1193
  %v1195 = vpop.f32.mrf.mxu0
  %v1196 = vpop.f32.mrf.mxu0
  %1197 = vdwg.mxu0
  %v1198 = vadd.f32 %v971, %v1151
  %v1199 = vadd.f32 %v972, %v1153
  %v1200 = vadd.f32 %v973, %v1192
  %v1201 = vadd.f32 %v974, %v1194
  %v1202 = vld [vmem:[%s0] sm:$0xff]
  %v1203 = vld [vmem:[%s0 + $0x8] sm:$0x3]
  %v1206 = vunpack.c.l.s4 1966171168
  %v1207 = vunpack.c.0.s8 %v1206
  %v1208 = vlaneseq
  %v1209 = vshrl.u32 %v1208, 7
  %v1210 = vsub.s32 %v1207, %v1209
  %v1211 = vrot.slane %v53, %v1210
  %v1212 = vcombine.high %v1211, %v1211
  %v1214 = vunpack.c.l.s4 1966171168
  %v1215 = vunpack.c.0.s8 %v1214
  %v1216 = vlaneseq
  %v1217 = vshrl.u32 %v1216, 7
  %v1218 = vsub.s32 %v1215, %v1217
  %v1219 = vrot.slane %v1211, %v1218
  %v1221 = vunpack.c.l.s4 1966171168
  %v1222 = vunpack.c.0.s8 %v1221
  %v1223 = vlaneseq
  %v1224 = vshrl.u32 %v1223, 7
  %v1225 = vsub.s32 %v1222, %v1224
  %v1226 = vrot.slane %v1212, %v1225
  %v1227 = vcombine.high %v1219, %v1219
  %v1228 = vcombine.high %v1226, %v1226
  %v1230 = vpack.i.b16 %v1219, %v1219
  %v1232 = vlaneseq
  %v1233 = vshrl.u32 %v1232, 7
  %v1234 = vsub.s32 0, %v1233
  %v1235 = vrot.slane %v1230, %v1234
  %v1237 = vpack.i.b16 %v1226, %v1226
  %v1239 = vlaneseq
  %v1240 = vshrl.u32 %v1239, 7
  %v1241 = vsub.s32 0, %v1240
  %v1242 = vrot.slane %v1237, %v1241
  %v1244 = vpack.i.b16 %v1227, %v1227
  %v1246 = vlaneseq
  %v1247 = vshrl.u32 %v1246, 7
  %v1248 = vsub.s32 0, %v1247
  %v1249 = vrot.slane %v1244, %v1248
  %v1251 = vpack.i.b16 %v1228, %v1228
  %v1253 = vlaneseq
  %v1254 = vshrl.u32 %v1253, 7
  %v1255 = vsub.s32 0, %v1254
  %v1256 = vrot.slane %v1251, %v1255
  %v1261 = vcombine.low %v1235, %v1242
  %v1262 = vcombine.low %v1249, %v1256
  %v1264 = vunpack.c.l.s4 1983009808
  %v1265 = vunpack.c.0.s8 %v1264
  %v1266 = vlaneseq
  %v1267 = vshrl.u32 %v1266, 7
  %v1268 = vsub.s32 %v1265, %v1267
  %v1269 = vrot.slane %v1261, %v1268
  %v1271 = vunpack.c.l.s4 1983009808
  %v1272 = vunpack.c.0.s8 %v1271
  %v1273 = vlaneseq
  %v1274 = vshrl.u32 %v1273, 7
  %v1275 = vsub.s32 %v1272, %v1274
  %v1276 = vrot.slane %v1262, %v1275
  %v1277 = vcombine.low %v1269, %v1276
  %1278 = vrot.lane.b32.xlu0 %v1277, 86
  %v1279 = vpop.permute.xlu0 %1278
  %v1280 = vrot.slane %v1279, 6
  %vm1281 = vcmask 703488
  %v1282 = vsel %vm1281, %v1280, %v1279
  %v1285 = vmul.bf16 %v1202, %v1282
  %v1286 = vmul.bf16 %v1203, %v1280
  %v1289 = vcombine.high %v1285, %v1285
  %v1291 = vunpack.c.l.s4 1983009808
  %v1292 = vunpack.c.0.s8 %v1291
  %v1293 = vlaneseq
  %v1294 = vshrl.u32 %v1293, 7
  %v1295 = vsub.s32 %v1292, %v1294
  %v1296 = vrot.slane %v1285, %v1295
  %v1298 = vunpack.c.l.s4 1983009808
  %v1299 = vunpack.c.0.s8 %v1298
  %v1300 = vlaneseq
  %v1301 = vshrl.u32 %v1300, 7
  %v1302 = vsub.s32 %v1299, %v1301
  %v1303 = vrot.slane %v1289, %v1302
  %v1304 = vcombine.high %v1296, %v1296
  %v1305 = vcombine.high %v1303, %v1303
  %v1307 = vunpack.c.l.s4 1983009808
  %v1308 = vunpack.c.0.s8 %v1307
  %v1309 = vlaneseq
  %v1310 = vshrl.u32 %v1309, 7
  %v1311 = vsub.s32 %v1308, %v1310
  %v1312 = vrot.slane %v1286, %v1311
  %1313 = vrot.lane.b32.xlu0 %v1296, 42
  %v1314 = vpop.permute.xlu0 %1313
  %1315 = vrot.lane.b32.xlu0 %v1304, 42
  %v1316 = vpop.permute.xlu0 %1315
  %1317 = vrot.lane.b32.xlu0 %v1303, 42
  %v1318 = vpop.permute.xlu0 %1317
  %1319 = vrot.lane.b32.xlu0 %v1305, 42
  %v1320 = vpop.permute.xlu0 %1319
  %1321 = vrot.lane.b32.xlu0 %v1312, 42
  %v1322 = vpop.permute.xlu0 %1321
  %vm1323 = vcmask 343040
  %v1324 = vsel %vm1323, %v1314, %v1316
  %v1325 = vsel %vm1323, %v1316, %v1318
  %v1326 = vsel %vm1323, %v1318, %v1320
  %v1327 = vsel %vm1323, %v1320, %v1322
  %v1329 = vsel %vm284, %v26, 0
  %v1332 = vsel %vm288, %v1324, 0
  %v1335 = vsel %vm288, %v1325, 0
  %v1338 = vsel %vm288, %v1326, 0
  %v1341 = vsel %vm288, %v1327, 0
  %1343 = vmatprep.subr.bf16.mxu0 0
  %1344 = vmatpush1.bf16.msra.mxu0 0
  %1345 = vmatprep.subr.bf16.mxu0 0
  %1346 = vmatpush1.bf16.msra.mxu0 0
  %1347 = vmatprep.subr.bf16.mxu0 0
  %1348 = vmatpush1.bf16.msra.mxu0 0
  %1349 = vmatprep.subr.bf16.mxu0 0
  %1350 = vmatpush1.bf16.msra.mxu0 0
  %1351 = vmatprep.subr.bf16.mxu0 0
  %1352 = vmatpush1.bf16.msra.mxu0 0
  %1353 = vmatprep.subr.bf16.mxu0 0
  %1354 = vmatpush1.bf16.msra.mxu0 0
  %1355 = vmatprep.subr.bf16.mxu0 0
  %1356 = vmatpush1.bf16.msra.mxu0 0
  %1357 = vmatprep.subr.bf16.mxu0 %v1335
  %1358 = vmatpush1.bf16.msra.mxu0 %v1332
  %1359 = vmatprep.subr.bf16.mxu0 0
  %1360 = vmatpush2.bf16.msra.mxu0 0
  %1361 = vmatprep.subr.bf16.mxu0 0
  %1362 = vmatpush2.bf16.msra.mxu0 0
  %1363 = vmatprep.subr.bf16.mxu0 0
  %1364 = vmatpush2.bf16.msra.mxu0 0
  %1365 = vmatprep.subr.bf16.mxu0 0
  %1366 = vmatpush2.bf16.msra.mxu0 0
  %1367 = vmatprep.subr.bf16.mxu0 0
  %1368 = vmatpush2.bf16.msra.mxu0 0
  %1369 = vmatprep.subr.bf16.mxu0 0
  %1370 = vmatpush2.bf16.msra.mxu0 0
  %1371 = vmatprep.subr.bf16.mxu0 0
  %1372 = vmatpush2.bf16.msra.mxu0 0
  %1373 = vmatprep.subr.bf16.mxu0 0
  %1374 = vmatpush2.bf16.msra.mxu0 0
  %1375 = vmatprep.mubr.bf16.mxu0 0
  %1376 = vmatmul.mubr.bf16.gmra.mxu0 %v1329
  %v1377 = vpop.f32.mrf.mxu0
  %v1378 = vadd.f32 0.0, %v1377
  %v1379 = vpop.f32.mrf.mxu0
  %v1380 = vadd.f32 0.0, %v1379
  %v1381 = vpop.f32.mrf.mxu0
  %v1382 = vpop.f32.mrf.mxu0
  %1383 = vdwg.mxu0
  %1384 = vmatprep.subr.bf16.mxu0 0
  %1385 = vmatpush1.bf16.msra.mxu0 0
  %1386 = vmatprep.subr.bf16.mxu0 0
  %1387 = vmatpush1.bf16.msra.mxu0 0
  %1388 = vmatprep.subr.bf16.mxu0 0
  %1389 = vmatpush1.bf16.msra.mxu0 0
  %1390 = vmatprep.subr.bf16.mxu0 0
  %1391 = vmatpush1.bf16.msra.mxu0 0
  %1392 = vmatprep.subr.bf16.mxu0 0
  %1393 = vmatpush1.bf16.msra.mxu0 0
  %1394 = vmatprep.subr.bf16.mxu0 0
  %1395 = vmatpush1.bf16.msra.mxu0 0
  %1396 = vmatprep.subr.bf16.mxu0 0
  %1397 = vmatpush1.bf16.msra.mxu0 0
  %1398 = vmatprep.subr.bf16.mxu0 %v1341
  %1399 = vmatpush1.bf16.msra.mxu0 %v1338
  %1400 = vmatprep.subr.bf16.mxu0 0
  %1401 = vmatpush2.bf16.msra.mxu0 0
  %1402 = vmatprep.subr.bf16.mxu0 0
  %1403 = vmatpush2.bf16.msra.mxu0 0
  %1404 = vmatprep.subr.bf16.mxu0 0
  %1405 = vmatpush2.bf16.msra.mxu0 0
  %1406 = vmatprep.subr.bf16.mxu0 0
  %1407 = vmatpush2.bf16.msra.mxu0 0
  %1408 = vmatprep.subr.bf16.mxu0 0
  %1409 = vmatpush2.bf16.msra.mxu0 0
  %1410 = vmatprep.subr.bf16.mxu0 0
  %1411 = vmatpush2.bf16.msra.mxu0 0
  %1412 = vmatprep.subr.bf16.mxu0 0
  %1413 = vmatpush2.bf16.msra.mxu0 0
  %1414 = vmatprep.subr.bf16.mxu0 0
  %1415 = vmatpush2.bf16.msra.mxu0 0
  %1416 = vmatprep.mubr.bf16.mxu0 0
  %1417 = vmatmul.mubr.bf16.gmra.mxu0 %v1329
  %v1418 = vpop.f32.mrf.mxu0
  %v1419 = vadd.f32 0.0, %v1418
  %v1420 = vpop.f32.mrf.mxu0
  %v1421 = vadd.f32 0.0, %v1420
  %v1422 = vpop.f32.mrf.mxu0
  %v1423 = vpop.f32.mrf.mxu0
  %1424 = vdwg.mxu0
  %v1425 = vadd.f32 %v1198, %v1378
  %v1426 = vadd.f32 %v1199, %v1380
  %v1427 = vadd.f32 %v1200, %v1419
  %v1428 = vadd.f32 %v1201, %v1421
  %v1429 = vld [vmem:[%s0] sm:$0xff]
  %v1430 = vld [vmem:[%s0 + $0x8] sm:$0x3]
  %v1433 = vunpack.c.l.s4 1966171168
  %v1434 = vunpack.c.0.s8 %v1433
  %v1435 = vlaneseq
  %v1436 = vshrl.u32 %v1435, 7
  %v1437 = vsub.s32 %v1434, %v1436
  %v1438 = vrot.slane %v54, %v1437
  %v1439 = vcombine.high %v1438, %v1438
  %v1441 = vunpack.c.l.s4 1966171168
  %v1442 = vunpack.c.0.s8 %v1441
  %v1443 = vlaneseq
  %v1444 = vshrl.u32 %v1443, 7
  %v1445 = vsub.s32 %v1442, %v1444
  %v1446 = vrot.slane %v1438, %v1445
  %v1448 = vunpack.c.l.s4 1966171168
  %v1449 = vunpack.c.0.s8 %v1448
  %v1450 = vlaneseq
  %v1451 = vshrl.u32 %v1450, 7
  %v1452 = vsub.s32 %v1449, %v1451
  %v1453 = vrot.slane %v1439, %v1452
  %v1454 = vcombine.high %v1446, %v1446
  %v1455 = vcombine.high %v1453, %v1453
  %v1457 = vpack.i.b16 %v1446, %v1446
  %v1459 = vlaneseq
  %v1460 = vshrl.u32 %v1459, 7
  %v1461 = vsub.s32 0, %v1460
  %v1462 = vrot.slane %v1457, %v1461
  %v1464 = vpack.i.b16 %v1453, %v1453
  %v1466 = vlaneseq
  %v1467 = vshrl.u32 %v1466, 7
  %v1468 = vsub.s32 0, %v1467
  %v1469 = vrot.slane %v1464, %v1468
  %v1471 = vpack.i.b16 %v1454, %v1454
  %v1473 = vlaneseq
  %v1474 = vshrl.u32 %v1473, 7
  %v1475 = vsub.s32 0, %v1474
  %v1476 = vrot.slane %v1471, %v1475
  %v1478 = vpack.i.b16 %v1455, %v1455
  %v1480 = vlaneseq
  %v1481 = vshrl.u32 %v1480, 7
  %v1482 = vsub.s32 0, %v1481
  %v1483 = vrot.slane %v1478, %v1482
  %v1488 = vcombine.low %v1462, %v1469
  %v1489 = vcombine.low %v1476, %v1483
  %v1491 = vunpack.c.l.s4 1983009808
  %v1492 = vunpack.c.0.s8 %v1491
  %v1493 = vlaneseq
  %v1494 = vshrl.u32 %v1493, 7
  %v1495 = vsub.s32 %v1492, %v1494
  %v1496 = vrot.slane %v1488, %v1495
  %v1498 = vunpack.c.l.s4 1983009808
  %v1499 = vunpack.c.0.s8 %v1498
  %v1500 = vlaneseq
  %v1501 = vshrl.u32 %v1500, 7
  %v1502 = vsub.s32 %v1499, %v1501
  %v1503 = vrot.slane %v1489, %v1502
  %v1504 = vcombine.low %v1496, %v1503
  %1505 = vrot.lane.b32.xlu0 %v1504, 100
  %v1506 = vpop.permute.xlu0 %1505
  %v1507 = vrot.slane %v1506, 6
  %vm1508 = vcmask 818176
  %v1509 = vsel %vm1508, %v1507, %v1506
  %v1512 = vmul.bf16 %v1429, %v1509
  %v1513 = vmul.bf16 %v1430, %v1507
  %v1516 = vcombine.high %v1512, %v1512
  %v1518 = vunpack.c.l.s4 1983009808
  %v1519 = vunpack.c.0.s8 %v1518
  %v1520 = vlaneseq
  %v1521 = vshrl.u32 %v1520, 7
  %v1522 = vsub.s32 %v1519, %v1521
  %v1523 = vrot.slane %v1512, %v1522
  %v1525 = vunpack.c.l.s4 1983009808
  %v1526 = vunpack.c.0.s8 %v1525
  %v1527 = vlaneseq
  %v1528 = vshrl.u32 %v1527, 7
  %v1529 = vsub.s32 %v1526, %v1528
  %v1530 = vrot.slane %v1516, %v1529
  %v1531 = vcombine.high %v1523, %v1523
  %v1532 = vcombine.high %v1530, %v1530
  %v1534 = vunpack.c.l.s4 1983009808
  %v1535 = vunpack.c.0.s8 %v1534
  %v1536 = vlaneseq
  %v1537 = vshrl.u32 %v1536, 7
  %v1538 = vsub.s32 %v1535, %v1537
  %v1539 = vrot.slane %v1513, %v1538
  %1540 = vrot.lane.b32.xlu0 %v1523, 28
  %v1541 = vpop.permute.xlu0 %1540
  %1542 = vrot.lane.b32.xlu0 %v1531, 28
  %v1543 = vpop.permute.xlu0 %1542
  %1544 = vrot.lane.b32.xlu0 %v1530, 28
  %v1545 = vpop.permute.xlu0 %1544
  %1546 = vrot.lane.b32.xlu0 %v1532, 28
  %v1547 = vpop.permute.xlu0 %1546
  %1548 = vrot.lane.b32.xlu0 %v1539, 28
  %v1549 = vpop.permute.xlu0 %1548
  %vm1550 = vcmask 228352
  %v1551 = vsel %vm1550, %v1541, %v1543
  %v1552 = vsel %vm1550, %v1543, %v1545
  %v1553 = vsel %vm1550, %v1545, %v1547
  %v1554 = vsel %vm1550, %v1547, %v1549
  %v1556 = vsel %vm284, %v27, 0
  %v1559 = vsel %vm288, %v1551, 0
  %v1562 = vsel %vm288, %v1552, 0
  %v1565 = vsel %vm288, %v1553, 0
  %v1568 = vsel %vm288, %v1554, 0
  %1570 = vmatprep.subr.bf16.mxu0 0
  %1571 = vmatpush1.bf16.msra.mxu0 0
  %1572 = vmatprep.subr.bf16.mxu0 0
  %1573 = vmatpush1.bf16.msra.mxu0 0
  %1574 = vmatprep.subr.bf16.mxu0 0
  %1575 = vmatpush1.bf16.msra.mxu0 0
  %1576 = vmatprep.subr.bf16.mxu0 0
  %1577 = vmatpush1.bf16.msra.mxu0 0
  %1578 = vmatprep.subr.bf16.mxu0 0
  %1579 = vmatpush1.bf16.msra.mxu0 0
  %1580 = vmatprep.subr.bf16.mxu0 0
  %1581 = vmatpush1.bf16.msra.mxu0 0
  %1582 = vmatprep.subr.bf16.mxu0 0
  %1583 = vmatpush1.bf16.msra.mxu0 0
  %1584 = vmatprep.subr.bf16.mxu0 %v1562
  %1585 = vmatpush1.bf16.msra.mxu0 %v1559
  %1586 = vmatprep.subr.bf16.mxu0 0
  %1587 = vmatpush2.bf16.msra.mxu0 0
  %1588 = vmatprep.subr.bf16.mxu0 0
  %1589 = vmatpush2.bf16.msra.mxu0 0
  %1590 = vmatprep.subr.bf16.mxu0 0
  %1591 = vmatpush2.bf16.msra.mxu0 0
  %1592 = vmatprep.subr.bf16.mxu0 0
  %1593 = vmatpush2.bf16.msra.mxu0 0
  %1594 = vmatprep.subr.bf16.mxu0 0
  %1595 = vmatpush2.bf16.msra.mxu0 0
  %1596 = vmatprep.subr.bf16.mxu0 0
  %1597 = vmatpush2.bf16.msra.mxu0 0
  %1598 = vmatprep.subr.bf16.mxu0 0
  %1599 = vmatpush2.bf16.msra.mxu0 0
  %1600 = vmatprep.subr.bf16.mxu0 0
  %1601 = vmatpush2.bf16.msra.mxu0 0
  %1602 = vmatprep.mubr.bf16.mxu0 0
  %1603 = vmatmul.mubr.bf16.gmra.mxu0 %v1556
  %v1604 = vpop.f32.mrf.mxu0
  %v1605 = vadd.f32 0.0, %v1604
  %v1606 = vpop.f32.mrf.mxu0
  %v1607 = vadd.f32 0.0, %v1606
  %v1608 = vpop.f32.mrf.mxu0
  %v1609 = vpop.f32.mrf.mxu0
  %1610 = vdwg.mxu0
  %1611 = vmatprep.subr.bf16.mxu0 0
  %1612 = vmatpush1.bf16.msra.mxu0 0
  %1613 = vmatprep.subr.bf16.mxu0 0
  %1614 = vmatpush1.bf16.msra.mxu0 0
  %1615 = vmatprep.subr.bf16.mxu0 0
  %1616 = vmatpush1.bf16.msra.mxu0 0
  %1617 = vmatprep.subr.bf16.mxu0 0
  %1618 = vmatpush1.bf16.msra.mxu0 0
  %1619 = vmatprep.subr.bf16.mxu0 0
  %1620 = vmatpush1.bf16.msra.mxu0 0
  %1621 = vmatprep.subr.bf16.mxu0 0
  %1622 = vmatpush1.bf16.msra.mxu0 0
  %1623 = vmatprep.subr.bf16.mxu0 0
  %1624 = vmatpush1.bf16.msra.mxu0 0
  %1625 = vmatprep.subr.bf16.mxu0 %v1568
  %1626 = vmatpush1.bf16.msra.mxu0 %v1565
  %1627 = vmatprep.subr.bf16.mxu0 0
  %1628 = vmatpush2.bf16.msra.mxu0 0
  %1629 = vmatprep.subr.bf16.mxu0 0
  %1630 = vmatpush2.bf16.msra.mxu0 0
  %1631 = vmatprep.subr.bf16.mxu0 0
  %1632 = vmatpush2.bf16.msra.mxu0 0
  %1633 = vmatprep.subr.bf16.mxu0 0
  %1634 = vmatpush2.bf16.msra.mxu0 0
  %1635 = vmatprep.subr.bf16.mxu0 0
  %1636 = vmatpush2.bf16.msra.mxu0 0
  %1637 = vmatprep.subr.bf16.mxu0 0
  %1638 = vmatpush2.bf16.msra.mxu0 0
  %1639 = vmatprep.subr.bf16.mxu0 0
  %1640 = vmatpush2.bf16.msra.mxu0 0
  %1641 = vmatprep.subr.bf16.mxu0 0
  %1642 = vmatpush2.bf16.msra.mxu0 0
  %1643 = vmatprep.mubr.bf16.mxu0 0
  %1644 = vmatmul.mubr.bf16.gmra.mxu0 %v1556
  %v1645 = vpop.f32.mrf.mxu0
  %v1646 = vadd.f32 0.0, %v1645
  %v1647 = vpop.f32.mrf.mxu0
  %v1648 = vadd.f32 0.0, %v1647
  %v1649 = vpop.f32.mrf.mxu0
  %v1650 = vpop.f32.mrf.mxu0
  %1651 = vdwg.mxu0
  %v1652 = vadd.f32 %v1425, %v1605
  %v1653 = vadd.f32 %v1426, %v1607
  %v1654 = vadd.f32 %v1427, %v1646
  %v1655 = vadd.f32 %v1428, %v1648
  %v1656 = vld [vmem:[%s0] sm:$0xff]
  %v1657 = vld [vmem:[%s0 + $0x8] sm:$0x3]
  %v1660 = vunpack.c.l.s4 1966171168
  %v1661 = vunpack.c.0.s8 %v1660
  %v1662 = vlaneseq
  %v1663 = vshrl.u32 %v1662, 7
  %v1664 = vsub.s32 %v1661, %v1663
  %v1665 = vrot.slane %v55, %v1664
  %v1666 = vcombine.high %v1665, %v1665
  %v1668 = vunpack.c.l.s4 1966171168
  %v1669 = vunpack.c.0.s8 %v1668
  %v1670 = vlaneseq
  %v1671 = vshrl.u32 %v1670, 7
  %v1672 = vsub.s32 %v1669, %v1671
  %v1673 = vrot.slane %v1665, %v1672
  %v1675 = vunpack.c.l.s4 1966171168
  %v1676 = vunpack.c.0.s8 %v1675
  %v1677 = vlaneseq
  %v1678 = vshrl.u32 %v1677, 7
  %v1679 = vsub.s32 %v1676, %v1678
  %v1680 = vrot.slane %v1666, %v1679
  %v1681 = vcombine.high %v1673, %v1673
  %v1682 = vcombine.high %v1680, %v1680
  %v1684 = vpack.i.b16 %v1673, %v1673
  %v1686 = vlaneseq
  %v1687 = vshrl.u32 %v1686, 7
  %v1688 = vsub.s32 0, %v1687
  %v1689 = vrot.slane %v1684, %v1688
  %v1691 = vpack.i.b16 %v1680, %v1680
  %v1693 = vlaneseq
  %v1694 = vshrl.u32 %v1693, 7
  %v1695 = vsub.s32 0, %v1694
  %v1696 = vrot.slane %v1691, %v1695
  %v1698 = vpack.i.b16 %v1681, %v1681
  %v1700 = vlaneseq
  %v1701 = vshrl.u32 %v1700, 7
  %v1702 = vsub.s32 0, %v1701
  %v1703 = vrot.slane %v1698, %v1702
  %v1705 = vpack.i.b16 %v1682, %v1682
  %v1707 = vlaneseq
  %v1708 = vshrl.u32 %v1707, 7
  %v1709 = vsub.s32 0, %v1708
  %v1710 = vrot.slane %v1705, %v1709
  %v1715 = vcombine.low %v1689, %v1696
  %v1716 = vcombine.low %v1703, %v1710
  %v1718 = vunpack.c.l.s4 1983009808
  %v1719 = vunpack.c.0.s8 %v1718
  %v1720 = vlaneseq
  %v1721 = vshrl.u32 %v1720, 7
  %v1722 = vsub.s32 %v1719, %v1721
  %v1723 = vrot.slane %v1715, %v1722
  %v1725 = vunpack.c.l.s4 1983009808
  %v1726 = vunpack.c.0.s8 %v1725
  %v1727 = vlaneseq
  %v1728 = vshrl.u32 %v1727, 7
  %v1729 = vsub.s32 %v1726, %v1728
  %v1730 = vrot.slane %v1716, %v1729
  %v1731 = vcombine.low %v1723, %v1730
  %1732 = vrot.lane.b32.xlu0 %v1731, 101
  %v1733 = vpop.permute.xlu0 %1732
  %v1734 = vrot.slane %v1733, 6
  %vm1735 = vcmask 826368
  %v1736 = vsel %vm1735, %v1734, %v1733
  %v1739 = vmul.bf16 %v1656, %v1736
  %v1740 = vmul.bf16 %v1657, %v1734
  %v1743 = vcombine.high %v1739, %v1739
  %v1745 = vunpack.c.l.s4 1983009808
  %v1746 = vunpack.c.0.s8 %v1745
  %v1747 = vlaneseq
  %v1748 = vshrl.u32 %v1747, 7
  %v1749 = vsub.s32 %v1746, %v1748
  %v1750 = vrot.slane %v1739, %v1749
  %v1752 = vunpack.c.l.s4 1983009808
  %v1753 = vunpack.c.0.s8 %v1752
  %v1754 = vlaneseq
  %v1755 = vshrl.u32 %v1754, 7
  %v1756 = vsub.s32 %v1753, %v1755
  %v1757 = vrot.slane %v1743, %v1756
  %v1758 = vcombine.high %v1750, %v1750
  %v1759 = vcombine.high %v1757, %v1757
  %v1761 = vunpack.c.l.s4 1983009808
  %v1762 = vunpack.c.0.s8 %v1761
  %v1763 = vlaneseq
  %v1764 = vshrl.u32 %v1763, 7
  %v1765 = vsub.s32 %v1762, %v1764
  %v1766 = vrot.slane %v1740, %v1765
  %1767 = vrot.lane.b32.xlu0 %v1750, 27
  %v1768 = vpop.permute.xlu0 %1767
  %1769 = vrot.lane.b32.xlu0 %v1758, 27
  %v1770 = vpop.permute.xlu0 %1769
  %1771 = vrot.lane.b32.xlu0 %v1757, 27
  %v1772 = vpop.permute.xlu0 %1771
  %1773 = vrot.lane.b32.xlu0 %v1759, 27
  %v1774 = vpop.permute.xlu0 %1773
  %1775 = vrot.lane.b32.xlu0 %v1766, 27
  %v1776 = vpop.permute.xlu0 %1775
  %vm1777 = vcmask 220160
  %v1778 = vsel %vm1777, %v1768, %v1770
  %v1779 = vsel %vm1777, %v1770, %v1772
  %v1780 = vsel %vm1777, %v1772, %v1774
  %v1781 = vsel %vm1777, %v1774, %v1776
  %v1783 = vsel %vm284, %v28, 0
  %v1786 = vsel %vm288, %v1778, 0
  %v1789 = vsel %vm288, %v1779, 0
  %v1792 = vsel %vm288, %v1780, 0
  %v1795 = vsel %vm288, %v1781, 0
  %1797 = vmatprep.subr.bf16.mxu0 0
  %1798 = vmatpush1.bf16.msra.mxu0 0
  %1799 = vmatprep.subr.bf16.mxu0 0
  %1800 = vmatpush1.bf16.msra.mxu0 0
  %1801 = vmatprep.subr.bf16.mxu0 0
  %1802 = vmatpush1.bf16.msra.mxu0 0
  %1803 = vmatprep.subr.bf16.mxu0 0
  %1804 = vmatpush1.bf16.msra.mxu0 0
  %1805 = vmatprep.subr.bf16.mxu0 0
  %1806 = vmatpush1.bf16.msra.mxu0 0
  %1807 = vmatprep.subr.bf16.mxu0 0
  %1808 = vmatpush1.bf16.msra.mxu0 0
  %1809 = vmatprep.subr.bf16.mxu0 0
  %1810 = vmatpush1.bf16.msra.mxu0 0
  %1811 = vmatprep.subr.bf16.mxu0 %v1789
  %1812 = vmatpush1.bf16.msra.mxu0 %v1786
  %1813 = vmatprep.subr.bf16.mxu0 0
  %1814 = vmatpush2.bf16.msra.mxu0 0
  %1815 = vmatprep.subr.bf16.mxu0 0
  %1816 = vmatpush2.bf16.msra.mxu0 0
  %1817 = vmatprep.subr.bf16.mxu0 0
  %1818 = vmatpush2.bf16.msra.mxu0 0
  %1819 = vmatprep.subr.bf16.mxu0 0
  %1820 = vmatpush2.bf16.msra.mxu0 0
  %1821 = vmatprep.subr.bf16.mxu0 0
  %1822 = vmatpush2.bf16.msra.mxu0 0
  %1823 = vmatprep.subr.bf16.mxu0 0
  %1824 = vmatpush2.bf16.msra.mxu0 0
  %1825 = vmatprep.subr.bf16.mxu0 0
  %1826 = vmatpush2.bf16.msra.mxu0 0
  %1827 = vmatprep.subr.bf16.mxu0 0
  %1828 = vmatpush2.bf16.msra.mxu0 0
  %1829 = vmatprep.mubr.bf16.mxu0 0
  %1830 = vmatmul.mubr.bf16.gmra.mxu0 %v1783
  %v1831 = vpop.f32.mrf.mxu0
  %v1832 = vadd.f32 0.0, %v1831
  %v1833 = vpop.f32.mrf.mxu0
  %v1834 = vadd.f32 0.0, %v1833
  %v1835 = vpop.f32.mrf.mxu0
  %v1836 = vpop.f32.mrf.mxu0
  %1837 = vdwg.mxu0
  %1838 = vmatprep.subr.bf16.mxu0 0
  %1839 = vmatpush1.bf16.msra.mxu0 0
  %1840 = vmatprep.subr.bf16.mxu0 0
  %1841 = vmatpush1.bf16.msra.mxu0 0
  %1842 = vmatprep.subr.bf16.mxu0 0
  %1843 = vmatpush1.bf16.msra.mxu0 0
  %1844 = vmatprep.subr.bf16.mxu0 0
  %1845 = vmatpush1.bf16.msra.mxu0 0
  %1846 = vmatprep.subr.bf16.mxu0 0
  %1847 = vmatpush1.bf16.msra.mxu0 0
  %1848 = vmatprep.subr.bf16.mxu0 0
  %1849 = vmatpush1.bf16.msra.mxu0 0
  %1850 = vmatprep.subr.bf16.mxu0 0
  %1851 = vmatpush1.bf16.msra.mxu0 0
  %1852 = vmatprep.subr.bf16.mxu0 %v1795
  %1853 = vmatpush1.bf16.msra.mxu0 %v1792
  %1854 = vmatprep.subr.bf16.mxu0 0
  %1855 = vmatpush2.bf16.msra.mxu0 0
  %1856 = vmatprep.subr.bf16.mxu0 0
  %1857 = vmatpush2.bf16.msra.mxu0 0
  %1858 = vmatprep.subr.bf16.mxu0 0
  %1859 = vmatpush2.bf16.msra.mxu0 0
  %1860 = vmatprep.subr.bf16.mxu0 0
  %1861 = vmatpush2.bf16.msra.mxu0 0
  %1862 = vmatprep.subr.bf16.mxu0 0
  %1863 = vmatpush2.bf16.msra.mxu0 0
  %1864 = vmatprep.subr.bf16.mxu0 0
  %1865 = vmatpush2.bf16.msra.mxu0 0
  %1866 = vmatprep.subr.bf16.mxu0 0
  %1867 = vmatpush2.bf16.msra.mxu0 0
  %1868 = vmatprep.subr.bf16.mxu0 0
  %1869 = vmatpush2.bf16.msra.mxu0 0
  %1870 = vmatprep.mubr.bf16.mxu0 0
  %1871 = vmatmul.mubr.bf16.gmra.mxu0 %v1783
  %v1872 = vpop.f32.mrf.mxu0
  %v1873 = vadd.f32 0.0, %v1872
  %v1874 = vpop.f32.mrf.mxu0
  %v1875 = vadd.f32 0.0, %v1874
  %v1876 = vpop.f32.mrf.mxu0
  %v1877 = vpop.f32.mrf.mxu0
  %1878 = vdwg.mxu0
  %v1879 = vadd.f32 %v1652, %v1832
  %v1880 = vadd.f32 %v1653, %v1834
  %v1881 = vadd.f32 %v1654, %v1873
  %v1882 = vadd.f32 %v1655, %v1875
  %v1883 = vld [vmem:[%s0] sm:$0xff]
  %v1884 = vld [vmem:[%s0 + $0x8] sm:$0x3]
  %v1887 = vunpack.c.l.s4 1966171168
  %v1888 = vunpack.c.0.s8 %v1887
  %v1889 = vlaneseq
  %v1890 = vshrl.u32 %v1889, 7
  %v1891 = vsub.s32 %v1888, %v1890
  %v1892 = vrot.slane %v56, %v1891
  %v1893 = vcombine.high %v1892, %v1892
  %v1895 = vunpack.c.l.s4 1966171168
  %v1896 = vunpack.c.0.s8 %v1895
  %v1897 = vlaneseq
  %v1898 = vshrl.u32 %v1897, 7
  %v1899 = vsub.s32 %v1896, %v1898
  %v1900 = vrot.slane %v1892, %v1899
  %v1902 = vunpack.c.l.s4 1966171168
  %v1903 = vunpack.c.0.s8 %v1902
  %v1904 = vlaneseq
  %v1905 = vshrl.u32 %v1904, 7
  %v1906 = vsub.s32 %v1903, %v1905
  %v1907 = vrot.slane %v1893, %v1906
  %v1908 = vcombine.high %v1900, %v1900
  %v1909 = vcombine.high %v1907, %v1907
  %v1911 = vpack.i.b16 %v1900, %v1900
  %v1913 = vlaneseq
  %v1914 = vshrl.u32 %v1913, 7
  %v1915 = vsub.s32 0, %v1914
  %v1916 = vrot.slane %v1911, %v1915
  %v1918 = vpack.i.b16 %v1907, %v1907
  %v1920 = vlaneseq
  %v1921 = vshrl.u32 %v1920, 7
  %v1922 = vsub.s32 0, %v1921
  %v1923 = vrot.slane %v1918, %v1922
  %v1925 = vpack.i.b16 %v1908, %v1908
  %v1927 = vlaneseq
  %v1928 = vshrl.u32 %v1927, 7
  %v1929 = vsub.s32 0, %v1928
  %v1930 = vrot.slane %v1925, %v1929
  %v1932 = vpack.i.b16 %v1909, %v1909
  %v1934 = vlaneseq
  %v1935 = vshrl.u32 %v1934, 7
  %v1936 = vsub.s32 0, %v1935
  %v1937 = vrot.slane %v1932, %v1936
  %v1942 = vcombine.low %v1916, %v1923
  %v1943 = vcombine.low %v1930, %v1937
  %v1945 = vunpack.c.l.s4 1983009808
  %v1946 = vunpack.c.0.s8 %v1945
  %v1947 = vlaneseq
  %v1948 = vshrl.u32 %v1947, 7
  %v1949 = vsub.s32 %v1946, %v1948
  %v1950 = vrot.slane %v1942, %v1949
  %v1952 = vunpack.c.l.s4 1983009808
  %v1953 = vunpack.c.0.s8 %v1952
  %v1954 = vlaneseq
  %v1955 = vshrl.u32 %v1954, 7
  %v1956 = vsub.s32 %v1953, %v1955
  %v1957 = vrot.slane %v1943, %v1956
  %v1958 = vcombine.low %v1950, %v1957
  %1959 = vrot.lane.b32.xlu0 %v1958, 102
  %v1960 = vpop.permute.xlu0 %1959
  %v1961 = vrot.slane %v1960, 6
  %vm1962 = vcmask 834560
  %v1963 = vsel %vm1962, %v1961, %v1960
  %v1966 = vmul.bf16 %v1883, %v1963
  %v1967 = vmul.bf16 %v1884, %v1961
  %v1970 = vcombine.high %v1966, %v1966
  %v1972 = vunpack.c.l.s4 1983009808
  %v1973 = vunpack.c.0.s8 %v1972
  %v1974 = vlaneseq
  %v1975 = vshrl.u32 %v1974, 7
  %v1976 = vsub.s32 %v1973, %v1975
  %v1977 = vrot.slane %v1966, %v1976
  %v1979 = vunpack.c.l.s4 1983009808
  %v1980 = vunpack.c.0.s8 %v1979
  %v1981 = vlaneseq
  %v1982 = vshrl.u32 %v1981, 7
  %v1983 = vsub.s32 %v1980, %v1982
  %v1984 = vrot.slane %v1970, %v1983
  %v1985 = vcombine.high %v1977, %v1977
  %v1986 = vcombine.high %v1984, %v1984
  %v1988 = vunpack.c.l.s4 1983009808
  %v1989 = vunpack.c.0.s8 %v1988
  %v1990 = vlaneseq
  %v1991 = vshrl.u32 %v1990, 7
  %v1992 = vsub.s32 %v1989, %v1991
  %v1993 = vrot.slane %v1967, %v1992
  %1994 = vrot.lane.b32.xlu0 %v1977, 26
  %v1995 = vpop.permute.xlu0 %1994
  %1996 = vrot.lane.b32.xlu0 %v1985, 26
  %v1997 = vpop.permute.xlu0 %1996
  %1998 = vrot.lane.b32.xlu0 %v1984, 26
  %v1999 = vpop.permute.xlu0 %1998
  %2000 = vrot.lane.b32.xlu0 %v1986, 26
  %v2001 = vpop.permute.xlu0 %2000
  %2002 = vrot.lane.b32.xlu0 %v1993, 26
  %v2003 = vpop.permute.xlu0 %2002
  %vm2004 = vcmask 211968
  %v2005 = vsel %vm2004, %v1995, %v1997
  %v2006 = vsel %vm2004, %v1997, %v1999
  %v2007 = vsel %vm2004, %v1999, %v2001
  %v2008 = vsel %vm2004, %v2001, %v2003
  %v2010 = vsel %vm284, %v29, 0
  %v2013 = vsel %vm288, %v2005, 0
  %v2016 = vsel %vm288, %v2006, 0
  %v2019 = vsel %vm288, %v2007, 0
  %v2022 = vsel %vm288, %v2008, 0
  %2024 = vmatprep.subr.bf16.mxu0 0
  %2025 = vmatpush1.bf16.msra.mxu0 0
  %2026 = vmatprep.subr.bf16.mxu0 0
  %2027 = vmatpush1.bf16.msra.mxu0 0
  %2028 = vmatprep.subr.bf16.mxu0 0
  %2029 = vmatpush1.bf16.msra.mxu0 0
  %2030 = vmatprep.subr.bf16.mxu0 0
  %2031 = vmatpush1.bf16.msra.mxu0 0
  %2032 = vmatprep.subr.bf16.mxu0 0
  %2033 = vmatpush1.bf16.msra.mxu0 0
  %2034 = vmatprep.subr.bf16.mxu0 0
  %2035 = vmatpush1.bf16.msra.mxu0 0
  %2036 = vmatprep.subr.bf16.mxu0 0
  %2037 = vmatpush1.bf16.msra.mxu0 0
  %2038 = vmatprep.subr.bf16.mxu0 %v2016
  %2039 = vmatpush1.bf16.msra.mxu0 %v2013
  %2040 = vmatprep.subr.bf16.mxu0 0
  %2041 = vmatpush2.bf16.msra.mxu0 0
  %2042 = vmatprep.subr.bf16.mxu0 0
  %2043 = vmatpush2.bf16.msra.mxu0 0
  %2044 = vmatprep.subr.bf16.mxu0 0
  %2045 = vmatpush2.bf16.msra.mxu0 0
  %2046 = vmatprep.subr.bf16.mxu0 0
  %2047 = vmatpush2.bf16.msra.mxu0 0
  %2048 = vmatprep.subr.bf16.mxu0 0
  %2049 = vmatpush2.bf16.msra.mxu0 0
  %2050 = vmatprep.subr.bf16.mxu0 0
  %2051 = vmatpush2.bf16.msra.mxu0 0
  %2052 = vmatprep.subr.bf16.mxu0 0
  %2053 = vmatpush2.bf16.msra.mxu0 0
  %2054 = vmatprep.subr.bf16.mxu0 0
  %2055 = vmatpush2.bf16.msra.mxu0 0
  %2056 = vmatprep.mubr.bf16.mxu0 0
  %2057 = vmatmul.mubr.bf16.gmra.mxu0 %v2010
  %v2058 = vpop.f32.mrf.mxu0
  %v2059 = vadd.f32 0.0, %v2058
  %v2060 = vpop.f32.mrf.mxu0
  %v2061 = vadd.f32 0.0, %v2060
  %v2062 = vpop.f32.mrf.mxu0
  %v2063 = vpop.f32.mrf.mxu0
  %2064 = vdwg.mxu0
  %2065 = vmatprep.subr.bf16.mxu0 0
  %2066 = vmatpush1.bf16.msra.mxu0 0
  %2067 = vmatprep.subr.bf16.mxu0 0
  %2068 = vmatpush1.bf16.msra.mxu0 0
  %2069 = vmatprep.subr.bf16.mxu0 0
  %2070 = vmatpush1.bf16.msra.mxu0 0
  %2071 = vmatprep.subr.bf16.mxu0 0
  %2072 = vmatpush1.bf16.msra.mxu0 0
  %2073 = vmatprep.subr.bf16.mxu0 0
  %2074 = vmatpush1.bf16.msra.mxu0 0
  %2075 = vmatprep.subr.bf16.mxu0 0
  %2076 = vmatpush1.bf16.msra.mxu0 0
  %2077 = vmatprep.subr.bf16.mxu0 0
  %2078 = vmatpush1.bf16.msra.mxu0 0
  %2079 = vmatprep.subr.bf16.mxu0 %v2022
  %2080 = vmatpush1.bf16.msra.mxu0 %v2019
  %2081 = vmatprep.subr.bf16.mxu0 0
  %2082 = vmatpush2.bf16.msra.mxu0 0
  %2083 = vmatprep.subr.bf16.mxu0 0
  %2084 = vmatpush2.bf16.msra.mxu0 0
  %2085 = vmatprep.subr.bf16.mxu0 0
  %2086 = vmatpush2.bf16.msra.mxu0 0
  %2087 = vmatprep.subr.bf16.mxu0 0
  %2088 = vmatpush2.bf16.msra.mxu0 0
  %2089 = vmatprep.subr.bf16.mxu0 0
  %2090 = vmatpush2.bf16.msra.mxu0 0
  %2091 = vmatprep.subr.bf16.mxu0 0
  %2092 = vmatpush2.bf16.msra.mxu0 0
  %2093 = vmatprep.subr.bf16.mxu0 0
  %2094 = vmatpush2.bf16.msra.mxu0 0
  %2095 = vmatprep.subr.bf16.mxu0 0
  %2096 = vmatpush2.bf16.msra.mxu0 0
  %2097 = vmatprep.mubr.bf16.mxu0 0
  %2098 = vmatmul.mubr.bf16.gmra.mxu0 %v2010
  %v2099 = vpop.f32.mrf.mxu0
  %v2100 = vadd.f32 0.0, %v2099
  %v2101 = vpop.f32.mrf.mxu0
  %v2102 = vadd.f32 0.0, %v2101
  %v2103 = vpop.f32.mrf.mxu0
  %v2104 = vpop.f32.mrf.mxu0
  %2105 = vdwg.mxu0
  %v2106 = vadd.f32 %v1879, %v2059
  %v2107 = vadd.f32 %v1880, %v2061
  %v2108 = vadd.f32 %v1881, %v2100
  %v2109 = vadd.f32 %v1882, %v2102
  %v2110 = vld [vmem:[%s3] sm:$0xf]
  %2112 = vset.pattern.permute.xlu0 0
  %2113 = vperm.xlu0 %2112, %v2110
  %v2114 = vpop.permute.xlu0 %2113
  %v2116 = vmul.f32 %v2106, %v2114
  %v2117 = vmul.f32 %v2107, %v2114
  %v2118 = vmul.f32 %v2108, %v2114
  %v2119 = vmul.f32 %v2109, %v2114
  %v2120 = vld [vmem:[%s4] sm:$0xf]
  %2122 = vset.pattern.permute.xlu0 0
  %2123 = vperm.xlu0 %2122, %v2120
  %v2124 = vpop.permute.xlu0 %2123
  %v2126 = vadd.f32 %v2116, %v2124
  %v2127 = vadd.f32 %v2117, %v2124
  %v2128 = vadd.f32 %v2118, %v2124
  %v2129 = vadd.f32 %v2119, %v2124
  %v2130 = vld [vmem:[%s0] sm:$0xff]
  %v2131 = vld [vmem:[%s0 + $0x8] sm:$0x3]
  %v2134 = vunpack.c.l.s4 1966171168
  %v2135 = vunpack.c.0.s8 %v2134
  %v2136 = vlaneseq
  %v2137 = vshrl.u32 %v2136, 7
  %v2138 = vsub.s32 %v2135, %v2137
  %v2139 = vrot.slane %v57, %v2138
  %v2140 = vcombine.high %v2139, %v2139
  %v2142 = vunpack.c.l.s4 1966171168
  %v2143 = vunpack.c.0.s8 %v2142
  %v2144 = vlaneseq
  %v2145 = vshrl.u32 %v2144, 7
  %v2146 = vsub.s32 %v2143, %v2145
  %v2147 = vrot.slane %v2139, %v2146
  %v2149 = vunpack.c.l.s4 1966171168
  %v2150 = vunpack.c.0.s8 %v2149
  %v2151 = vlaneseq
  %v2152 = vshrl.u32 %v2151, 7
  %v2153 = vsub.s32 %v2150, %v2152
  %v2154 = vrot.slane %v2140, %v2153
  %v2155 = vcombine.high %v2147, %v2147
  %v2156 = vcombine.high %v2154, %v2154
  %v2158 = vpack.i.b16 %v2147, %v2147
  %v2160 = vlaneseq
  %v2161 = vshrl.u32 %v2160, 7
  %v2162 = vsub.s32 0, %v2161
  %v2163 = vrot.slane %v2158, %v2162
  %v2165 = vpack.i.b16 %v2154, %v2154
  %v2167 = vlaneseq
  %v2168 = vshrl.u32 %v2167, 7
  %v2169 = vsub.s32 0, %v2168
  %v2170 = vrot.slane %v2165, %v2169
  %v2172 = vpack.i.b16 %v2155, %v2155
  %v2174 = vlaneseq
  %v2175 = vshrl.u32 %v2174, 7
  %v2176 = vsub.s32 0, %v2175
  %v2177 = vrot.slane %v2172, %v2176
  %v2179 = vpack.i.b16 %v2156, %v2156
  %v2181 = vlaneseq
  %v2182 = vshrl.u32 %v2181, 7
  %v2183 = vsub.s32 0, %v2182
  %v2184 = vrot.slane %v2179, %v2183
  %v2189 = vcombine.low %v2163, %v2170
  %v2190 = vcombine.low %v2177, %v2184
  %v2192 = vunpack.c.l.s4 1983009808
  %v2193 = vunpack.c.0.s8 %v2192
  %v2194 = vlaneseq
  %v2195 = vshrl.u32 %v2194, 7
  %v2196 = vsub.s32 %v2193, %v2195
  %v2197 = vrot.slane %v2189, %v2196
  %v2199 = vunpack.c.l.s4 1983009808
  %v2200 = vunpack.c.0.s8 %v2199
  %v2201 = vlaneseq
  %v2202 = vshrl.u32 %v2201, 7
  %v2203 = vsub.s32 %v2200, %v2202
  %v2204 = vrot.slane %v2190, %v2203
  %v2205 = vcombine.low %v2197, %v2204
  %2206 = vrot.lane.b32.xlu0 %v2205, 34
  %v2207 = vpop.permute.xlu0 %2206
  %v2208 = vrot.slane %v2207, 6
  %vm2209 = vcmask 277504
  %v2210 = vsel %vm2209, %v2208, %v2207
  %v2213 = vmul.bf16 %v2130, %v2210
  %v2214 = vmul.bf16 %v2131, %v2208
  %v2217 = vunpack.c.l.s4 1966171168
  %v2218 = vunpack.c.0.s8 %v2217
  %v2219 = vlaneseq
  %v2220 = vshrl.u32 %v2219, 7
  %v2221 = vsub.s32 %v2218, %v2220
  %v2222 = vrot.slane %v58, %v2221
  %v2223 = vcombine.high %v2222, %v2222
  %v2225 = vunpack.c.l.s4 1966171168
  %v2226 = vunpack.c.0.s8 %v2225
  %v2227 = vlaneseq
  %v2228 = vshrl.u32 %v2227, 7
  %v2229 = vsub.s32 %v2226, %v2228
  %v2230 = vrot.slane %v2222, %v2229
  %v2232 = vunpack.c.l.s4 1966171168
  %v2233 = vunpack.c.0.s8 %v2232
  %v2234 = vlaneseq
  %v2235 = vshrl.u32 %v2234, 7
  %v2236 = vsub.s32 %v2233, %v2235
  %v2237 = vrot.slane %v2223, %v2236
  %v2238 = vcombine.high %v2230, %v2230
  %v2239 = vcombine.high %v2237, %v2237
  %v2241 = vpack.i.b16 %v2230, %v2230
  %v2243 = vlaneseq
  %v2244 = vshrl.u32 %v2243, 7
  %v2245 = vsub.s32 0, %v2244
  %v2246 = vrot.slane %v2241, %v2245
  %v2248 = vpack.i.b16 %v2237, %v2237
  %v2250 = vlaneseq
  %v2251 = vshrl.u32 %v2250, 7
  %v2252 = vsub.s32 0, %v2251
  %v2253 = vrot.slane %v2248, %v2252
  %v2255 = vpack.i.b16 %v2238, %v2238
  %v2257 = vlaneseq
  %v2258 = vshrl.u32 %v2257, 7
  %v2259 = vsub.s32 0, %v2258
  %v2260 = vrot.slane %v2255, %v2259
  %v2262 = vpack.i.b16 %v2239, %v2239
  %v2264 = vlaneseq
  %v2265 = vshrl.u32 %v2264, 7
  %v2266 = vsub.s32 0, %v2265
  %v2267 = vrot.slane %v2262, %v2266
  %v2272 = vcombine.low %v2246, %v2253
  %v2273 = vcombine.low %v2260, %v2267
  %v2275 = vunpack.c.l.s4 1983009808
  %v2276 = vunpack.c.0.s8 %v2275
  %v2277 = vlaneseq
  %v2278 = vshrl.u32 %v2277, 7
  %v2279 = vsub.s32 %v2276, %v2278
  %v2280 = vrot.slane %v2272, %v2279
  %v2282 = vunpack.c.l.s4 1983009808
  %v2283 = vunpack.c.0.s8 %v2282
  %v2284 = vlaneseq
  %v2285 = vshrl.u32 %v2284, 7
  %v2286 = vsub.s32 %v2283, %v2285
  %v2287 = vrot.slane %v2273, %v2286
  %v2288 = vcombine.low %v2280, %v2287
  %2289 = vrot.lane.b32.xlu0 %v2288, 37
  %v2290 = vpop.permute.xlu0 %2289
  %v2291 = vrot.slane %v2290, 6
  %vm2292 = vcmask 302080
  %v2293 = vsel %vm2292, %v2291, %v2290
  %v2296 = vmul.bf16 %v2130, %v2293
  %v2297 = vmul.bf16 %v2131, %v2291
  %v2300 = vcombine.high %v2296, %v2296
  %v2302 = vunpack.c.l.s4 1983009808
  %v2303 = vunpack.c.0.s8 %v2302
  %v2304 = vlaneseq
  %v2305 = vshrl.u32 %v2304, 7
  %v2306 = vsub.s32 %v2303, %v2305
  %v2307 = vrot.slane %v2296, %v2306
  %v2309 = vunpack.c.l.s4 1983009808
  %v2310 = vunpack.c.0.s8 %v2309
  %v2311 = vlaneseq
  %v2312 = vshrl.u32 %v2311, 7
  %v2313 = vsub.s32 %v2310, %v2312
  %v2314 = vrot.slane %v2300, %v2313
  %v2315 = vcombine.high %v2307, %v2307
  %v2316 = vcombine.high %v2314, %v2314
  %v2318 = vunpack.c.l.s4 1983009808
  %v2319 = vunpack.c.0.s8 %v2318
  %v2320 = vlaneseq
  %v2321 = vshrl.u32 %v2320, 7
  %v2322 = vsub.s32 %v2319, %v2321
  %v2323 = vrot.slane %v2297, %v2322
  %2324 = vrot.lane.b32.xlu0 %v2307, 91
  %v2325 = vpop.permute.xlu0 %2324
  %2326 = vrot.lane.b32.xlu0 %v2315, 91
  %v2327 = vpop.permute.xlu0 %2326
  %2328 = vrot.lane.b32.xlu0 %v2314, 91
  %v2329 = vpop.permute.xlu0 %2328
  %2330 = vrot.lane.b32.xlu0 %v2316, 91
  %v2331 = vpop.permute.xlu0 %2330
  %2332 = vrot.lane.b32.xlu0 %v2323, 91
  %v2333 = vpop.permute.xlu0 %2332
  %vm2334 = vcmask 744448
  %v2335 = vsel %vm2334, %v2325, %v2327
  %v2336 = vsel %vm2334, %v2327, %v2329
  %v2337 = vsel %vm2334, %v2329, %v2331
  %v2338 = vsel %vm2334, %v2331, %v2333
  %v2340 = vsel %vm284, %v31, 0
  %v2343 = vsel %vm288, %v2335, 0
  %v2346 = vsel %vm288, %v2336, 0
  %v2349 = vsel %vm288, %v2337, 0
  %v2352 = vsel %vm288, %v2338, 0
  %2354 = vmatprep.subr.bf16.mxu0 0
  %2355 = vmatpush1.bf16.msra.mxu0 0
  %2356 = vmatprep.subr.bf16.mxu0 0
  %2357 = vmatpush1.bf16.msra.mxu0 0
  %2358 = vmatprep.subr.bf16.mxu0 0
  %2359 = vmatpush1.bf16.msra.mxu0 0
  %2360 = vmatprep.subr.bf16.mxu0 0
  %2361 = vmatpush1.bf16.msra.mxu0 0
  %2362 = vmatprep.subr.bf16.mxu0 0
  %2363 = vmatpush1.bf16.msra.mxu0 0
  %2364 = vmatprep.subr.bf16.mxu0 0
  %2365 = vmatpush1.bf16.msra.mxu0 0
  %2366 = vmatprep.subr.bf16.mxu0 0
  %2367 = vmatpush1.bf16.msra.mxu0 0
  %2368 = vmatprep.subr.bf16.mxu0 %v2346
  %2369 = vmatpush1.bf16.msra.mxu0 %v2343
  %2370 = vmatprep.subr.bf16.mxu0 0
  %2371 = vmatpush2.bf16.msra.mxu0 0
  %2372 = vmatprep.subr.bf16.mxu0 0
  %2373 = vmatpush2.bf16.msra.mxu0 0
  %2374 = vmatprep.subr.bf16.mxu0 0
  %2375 = vmatpush2.bf16.msra.mxu0 0
  %2376 = vmatprep.subr.bf16.mxu0 0
  %2377 = vmatpush2.bf16.msra.mxu0 0
  %2378 = vmatprep.subr.bf16.mxu0 0
  %2379 = vmatpush2.bf16.msra.mxu0 0
  %2380 = vmatprep.subr.bf16.mxu0 0
  %2381 = vmatpush2.bf16.msra.mxu0 0
  %2382 = vmatprep.subr.bf16.mxu0 0
  %2383 = vmatpush2.bf16.msra.mxu0 0
  %2384 = vmatprep.subr.bf16.mxu0 0
  %2385 = vmatpush2.bf16.msra.mxu0 0
  %2386 = vmatprep.mubr.bf16.mxu0 0
  %2387 = vmatmul.mubr.bf16.gmra.mxu0 %v2340
  %v2388 = vpop.f32.mrf.mxu0
  %v2389 = vadd.f32 0.0, %v2388
  %v2390 = vpop.f32.mrf.mxu0
  %v2391 = vadd.f32 0.0, %v2390
  %v2392 = vpop.f32.mrf.mxu0
  %v2393 = vpop.f32.mrf.mxu0
  %2394 = vdwg.mxu0
  %2395 = vmatprep.subr.bf16.mxu0 0
  %2396 = vmatpush1.bf16.msra.mxu0 0
  %2397 = vmatprep.subr.bf16.mxu0 0
  %2398 = vmatpush1.bf16.msra.mxu0 0
  %2399 = vmatprep.subr.bf16.mxu0 0
  %2400 = vmatpush1.bf16.msra.mxu0 0
  %2401 = vmatprep.subr.bf16.mxu0 0
  %2402 = vmatpush1.bf16.msra.mxu0 0
  %2403 = vmatprep.subr.bf16.mxu0 0
  %2404 = vmatpush1.bf16.msra.mxu0 0
  %2405 = vmatprep.subr.bf16.mxu0 0
  %2406 = vmatpush1.bf16.msra.mxu0 0
  %2407 = vmatprep.subr.bf16.mxu0 0
  %2408 = vmatpush1.bf16.msra.mxu0 0
  %2409 = vmatprep.subr.bf16.mxu0 %v2352
  %2410 = vmatpush1.bf16.msra.mxu0 %v2349
  %2411 = vmatprep.subr.bf16.mxu0 0
  %2412 = vmatpush2.bf16.msra.mxu0 0
  %2413 = vmatprep.subr.bf16.mxu0 0
  %2414 = vmatpush2.bf16.msra.mxu0 0
  %2415 = vmatprep.subr.bf16.mxu0 0
  %2416 = vmatpush2.bf16.msra.mxu0 0
  %2417 = vmatprep.subr.bf16.mxu0 0
  %2418 = vmatpush2.bf16.msra.mxu0 0
  %2419 = vmatprep.subr.bf16.mxu0 0
  %2420 = vmatpush2.bf16.msra.mxu0 0
  %2421 = vmatprep.subr.bf16.mxu0 0
  %2422 = vmatpush2.bf16.msra.mxu0 0
  %2423 = vmatprep.subr.bf16.mxu0 0
  %2424 = vmatpush2.bf16.msra.mxu0 0
  %2425 = vmatprep.subr.bf16.mxu0 0
  %2426 = vmatpush2.bf16.msra.mxu0 0
  %2427 = vmatprep.mubr.bf16.mxu0 0
  %2428 = vmatmul.mubr.bf16.gmra.mxu0 %v2340
  %v2429 = vpop.f32.mrf.mxu0
  %v2430 = vadd.f32 0.0, %v2429
  %v2431 = vpop.f32.mrf.mxu0
  %v2432 = vadd.f32 0.0, %v2431
  %v2433 = vpop.f32.mrf.mxu0
  %v2434 = vpop.f32.mrf.mxu0
  %2435 = vdwg.mxu0
  %v2438 = vcombine.high %v2213, %v2213
  %v2440 = vunpack.c.l.s4 1983009808
  %v2441 = vunpack.c.0.s8 %v2440
  %v2442 = vlaneseq
  %v2443 = vshrl.u32 %v2442, 7
  %v2444 = vsub.s32 %v2441, %v2443
  %v2445 = vrot.slane %v2213, %v2444
  %v2447 = vunpack.c.l.s4 1983009808
  %v2448 = vunpack.c.0.s8 %v2447
  %v2449 = vlaneseq
  %v2450 = vshrl.u32 %v2449, 7
  %v2451 = vsub.s32 %v2448, %v2450
  %v2452 = vrot.slane %v2438, %v2451
  %v2453 = vcombine.high %v2445, %v2445
  %v2454 = vcombine.high %v2452, %v2452
  %v2456 = vunpack.c.l.s4 1983009808
  %v2457 = vunpack.c.0.s8 %v2456
  %v2458 = vlaneseq
  %v2459 = vshrl.u32 %v2458, 7
  %v2460 = vsub.s32 %v2457, %v2459
  %v2461 = vrot.slane %v2214, %v2460
  %2462 = vrot.lane.b32.xlu0 %v2445, 94
  %v2463 = vpop.permute.xlu0 %2462
  %2464 = vrot.lane.b32.xlu0 %v2453, 94
  %v2465 = vpop.permute.xlu0 %2464
  %2466 = vrot.lane.b32.xlu0 %v2452, 94
  %v2467 = vpop.permute.xlu0 %2466
  %2468 = vrot.lane.b32.xlu0 %v2454, 94
  %v2469 = vpop.permute.xlu0 %2468
  %2470 = vrot.lane.b32.xlu0 %v2461, 94
  %v2471 = vpop.permute.xlu0 %2470
  %vm2472 = vcmask 769024
  %v2473 = vsel %vm2472, %v2463, %v2465
  %v2474 = vsel %vm2472, %v2465, %v2467
  %v2475 = vsel %vm2472, %v2467, %v2469
  %v2476 = vsel %vm2472, %v2469, %v2471
  %v2478 = vsel %vm284, %v30, 0
  %v2481 = vsel %vm288, %v2473, 0
  %v2484 = vsel %vm288, %v2474, 0
  %v2487 = vsel %vm288, %v2475, 0
  %v2490 = vsel %vm288, %v2476, 0
  %2492 = vmatprep.subr.bf16.mxu0 0
  %2493 = vmatpush1.bf16.msra.mxu0 0
  %2494 = vmatprep.subr.bf16.mxu0 0
  %2495 = vmatpush1.bf16.msra.mxu0 0
  %2496 = vmatprep.subr.bf16.mxu0 0
  %2497 = vmatpush1.bf16.msra.mxu0 0
  %2498 = vmatprep.subr.bf16.mxu0 0
  %2499 = vmatpush1.bf16.msra.mxu0 0
  %2500 = vmatprep.subr.bf16.mxu0 0
  %2501 = vmatpush1.bf16.msra.mxu0 0
  %2502 = vmatprep.subr.bf16.mxu0 0
  %2503 = vmatpush1.bf16.msra.mxu0 0
  %2504 = vmatprep.subr.bf16.mxu0 0
  %2505 = vmatpush1.bf16.msra.mxu0 0
  %2506 = vmatprep.subr.bf16.mxu0 %v2484
  %2507 = vmatpush1.bf16.msra.mxu0 %v2481
  %2508 = vmatprep.subr.bf16.mxu0 0
  %2509 = vmatpush2.bf16.msra.mxu0 0
  %2510 = vmatprep.subr.bf16.mxu0 0
  %2511 = vmatpush2.bf16.msra.mxu0 0
  %2512 = vmatprep.subr.bf16.mxu0 0
  %2513 = vmatpush2.bf16.msra.mxu0 0
  %2514 = vmatprep.subr.bf16.mxu0 0
  %2515 = vmatpush2.bf16.msra.mxu0 0
  %2516 = vmatprep.subr.bf16.mxu0 0
  %2517 = vmatpush2.bf16.msra.mxu0 0
  %2518 = vmatprep.subr.bf16.mxu0 0
  %2519 = vmatpush2.bf16.msra.mxu0 0
  %2520 = vmatprep.subr.bf16.mxu0 0
  %2521 = vmatpush2.bf16.msra.mxu0 0
  %2522 = vmatprep.subr.bf16.mxu0 0
  %2523 = vmatpush2.bf16.msra.mxu0 0
  %2524 = vmatprep.mubr.bf16.mxu0 0
  %2525 = vmatmul.mubr.bf16.gmra.mxu0 %v2478
  %v2526 = vpop.f32.mrf.mxu0
  %v2527 = vadd.f32 %v2389, %v2526
  %v2528 = vpop.f32.mrf.mxu0
  %v2529 = vadd.f32 %v2391, %v2528
  %v2530 = vpop.f32.mrf.mxu0
  %v2531 = vpop.f32.mrf.mxu0
  %2532 = vdwg.mxu0
  %2533 = vmatprep.subr.bf16.mxu0 0
  %2534 = vmatpush1.bf16.msra.mxu0 0
  %2535 = vmatprep.subr.bf16.mxu0 0
  %2536 = vmatpush1.bf16.msra.mxu0 0
  %2537 = vmatprep.subr.bf16.mxu0 0
  %2538 = vmatpush1.bf16.msra.mxu0 0
  %2539 = vmatprep.subr.bf16.mxu0 0
  %2540 = vmatpush1.bf16.msra.mxu0 0
  %2541 = vmatprep.subr.bf16.mxu0 0
  %2542 = vmatpush1.bf16.msra.mxu0 0
  %2543 = vmatprep.subr.bf16.mxu0 0
  %2544 = vmatpush1.bf16.msra.mxu0 0
  %2545 = vmatprep.subr.bf16.mxu0 0
  %2546 = vmatpush1.bf16.msra.mxu0 0
  %2547 = vmatprep.subr.bf16.mxu0 %v2490
  %2548 = vmatpush1.bf16.msra.mxu0 %v2487
  %2549 = vmatprep.subr.bf16.mxu0 0
  %2550 = vmatpush2.bf16.msra.mxu0 0
  %2551 = vmatprep.subr.bf16.mxu0 0
  %2552 = vmatpush2.bf16.msra.mxu0 0
  %2553 = vmatprep.subr.bf16.mxu0 0
  %2554 = vmatpush2.bf16.msra.mxu0 0
  %2555 = vmatprep.subr.bf16.mxu0 0
  %2556 = vmatpush2.bf16.msra.mxu0 0
  %2557 = vmatprep.subr.bf16.mxu0 0
  %2558 = vmatpush2.bf16.msra.mxu0 0
  %2559 = vmatprep.subr.bf16.mxu0 0
  %2560 = vmatpush2.bf16.msra.mxu0 0
  %2561 = vmatprep.subr.bf16.mxu0 0
  %2562 = vmatpush2.bf16.msra.mxu0 0
  %2563 = vmatprep.subr.bf16.mxu0 0
  %2564 = vmatpush2.bf16.msra.mxu0 0
  %2565 = vmatprep.mubr.bf16.mxu0 0
  %2566 = vmatmul.mubr.bf16.gmra.mxu0 %v2478
  %v2567 = vpop.f32.mrf.mxu0
  %v2568 = vadd.f32 %v2430, %v2567
  %v2569 = vpop.f32.mrf.mxu0
  %v2570 = vadd.f32 %v2432, %v2569
  %v2571 = vpop.f32.mrf.mxu0
  %v2572 = vpop.f32.mrf.mxu0
  %2573 = vdwg.mxu0
  %v2574 = vld [vmem:[%s0] sm:$0xff]
  %v2575 = vld [vmem:[%s0 + $0x8] sm:$0x3]
  %v2578 = vunpack.c.l.s4 1966171168
  %v2579 = vunpack.c.0.s8 %v2578
  %v2580 = vlaneseq
  %v2581 = vshrl.u32 %v2580, 7
  %v2582 = vsub.s32 %v2579, %v2581
  %v2583 = vrot.slane %v59, %v2582
  %v2584 = vcombine.high %v2583, %v2583
  %v2586 = vunpack.c.l.s4 1966171168
  %v2587 = vunpack.c.0.s8 %v2586
  %v2588 = vlaneseq
  %v2589 = vshrl.u32 %v2588, 7
  %v2590 = vsub.s32 %v2587, %v2589
  %v2591 = vrot.slane %v2583, %v2590
  %v2593 = vunpack.c.l.s4 1966171168
  %v2594 = vunpack.c.0.s8 %v2593
  %v2595 = vlaneseq
  %v2596 = vshrl.u32 %v2595, 7
  %v2597 = vsub.s32 %v2594, %v2596
  %v2598 = vrot.slane %v2584, %v2597
  %v2599 = vcombine.high %v2591, %v2591
  %v2600 = vcombine.high %v2598, %v2598
  %v2602 = vpack.i.b16 %v2591, %v2591
  %v2604 = vlaneseq
  %v2605 = vshrl.u32 %v2604, 7
  %v2606 = vsub.s32 0, %v2605
  %v2607 = vrot.slane %v2602, %v2606
  %v2609 = vpack.i.b16 %v2598, %v2598
  %v2611 = vlaneseq
  %v2612 = vshrl.u32 %v2611, 7
  %v2613 = vsub.s32 0, %v2612
  %v2614 = vrot.slane %v2609, %v2613
  %v2616 = vpack.i.b16 %v2599, %v2599
  %v2618 = vlaneseq
  %v2619 = vshrl.u32 %v2618, 7
  %v2620 = vsub.s32 0, %v2619
  %v2621 = vrot.slane %v2616, %v2620
  %v2623 = vpack.i.b16 %v2600, %v2600
  %v2625 = vlaneseq
  %v2626 = vshrl.u32 %v2625, 7
  %v2627 = vsub.s32 0, %v2626
  %v2628 = vrot.slane %v2623, %v2627
  %v2633 = vcombine.low %v2607, %v2614
  %v2634 = vcombine.low %v2621, %v2628
  %v2636 = vunpack.c.l.s4 1983009808
  %v2637 = vunpack.c.0.s8 %v2636
  %v2638 = vlaneseq
  %v2639 = vshrl.u32 %v2638, 7
  %v2640 = vsub.s32 %v2637, %v2639
  %v2641 = vrot.slane %v2633, %v2640
  %v2643 = vunpack.c.l.s4 1983009808
  %v2644 = vunpack.c.0.s8 %v2643
  %v2645 = vlaneseq
  %v2646 = vshrl.u32 %v2645, 7
  %v2647 = vsub.s32 %v2644, %v2646
  %v2648 = vrot.slane %v2634, %v2647
  %v2649 = vcombine.low %v2641, %v2648
  %2650 = vrot.lane.b32.xlu0 %v2649, 40
  %v2651 = vpop.permute.xlu0 %2650
  %v2652 = vrot.slane %v2651, 6
  %vm2653 = vcmask 326656
  %v2654 = vsel %vm2653, %v2652, %v2651
  %v2657 = vmul.bf16 %v2574, %v2654
  %v2658 = vmul.bf16 %v2575, %v2652
  %v2661 = vcombine.high %v2657, %v2657
  %v2663 = vunpack.c.l.s4 1983009808
  %v2664 = vunpack.c.0.s8 %v2663
  %v2665 = vlaneseq
  %v2666 = vshrl.u32 %v2665, 7
  %v2667 = vsub.s32 %v2664, %v2666
  %v2668 = vrot.slane %v2657, %v2667
  %v2670 = vunpack.c.l.s4 1983009808
  %v2671 = vunpack.c.0.s8 %v2670
  %v2672 = vlaneseq
  %v2673 = vshrl.u32 %v2672, 7
  %v2674 = vsub.s32 %v2671, %v2673
  %v2675 = vrot.slane %v2661, %v2674
  %v2676 = vcombine.high %v2668, %v2668
  %v2677 = vcombine.high %v2675, %v2675
  %v2679 = vunpack.c.l.s4 1983009808
  %v2680 = vunpack.c.0.s8 %v2679
  %v2681 = vlaneseq
  %v2682 = vshrl.u32 %v2681, 7
  %v2683 = vsub.s32 %v2680, %v2682
  %v2684 = vrot.slane %v2658, %v2683
  %2685 = vrot.lane.b32.xlu0 %v2668, 88
  %v2686 = vpop.permute.xlu0 %2685
  %2687 = vrot.lane.b32.xlu0 %v2676, 88
  %v2688 = vpop.permute.xlu0 %2687
  %2689 = vrot.lane.b32.xlu0 %v2675, 88
  %v2690 = vpop.permute.xlu0 %2689
  %2691 = vrot.lane.b32.xlu0 %v2677, 88
  %v2692 = vpop.permute.xlu0 %2691
  %2693 = vrot.lane.b32.xlu0 %v2684, 88
  %v2694 = vpop.permute.xlu0 %2693
  %vm2695 = vcmask 719872
  %v2696 = vsel %vm2695, %v2686, %v2688
  %v2697 = vsel %vm2695, %v2688, %v2690
  %v2698 = vsel %vm2695, %v2690, %v2692
  %v2699 = vsel %vm2695, %v2692, %v2694
  %v2701 = vsel %vm284, %v32, 0
  %v2704 = vsel %vm288, %v2696, 0
  %v2707 = vsel %vm288, %v2697, 0
  %v2710 = vsel %vm288, %v2698, 0
  %v2713 = vsel %vm288, %v2699, 0
  %2715 = vmatprep.subr.bf16.mxu0 0
  %2716 = vmatpush1.bf16.msra.mxu0 0
  %2717 = vmatprep.subr.bf16.mxu0 0
  %2718 = vmatpush1.bf16.msra.mxu0 0
  %2719 = vmatprep.subr.bf16.mxu0 0
  %2720 = vmatpush1.bf16.msra.mxu0 0
  %2721 = vmatprep.subr.bf16.mxu0 0
  %2722 = vmatpush1.bf16.msra.mxu0 0
  %2723 = vmatprep.subr.bf16.mxu0 0
  %2724 = vmatpush1.bf16.msra.mxu0 0
  %2725 = vmatprep.subr.bf16.mxu0 0
  %2726 = vmatpush1.bf16.msra.mxu0 0
  %2727 = vmatprep.subr.bf16.mxu0 0
  %2728 = vmatpush1.bf16.msra.mxu0 0
  %2729 = vmatprep.subr.bf16.mxu0 %v2707
  %2730 = vmatpush1.bf16.msra.mxu0 %v2704
  %2731 = vmatprep.subr.bf16.mxu0 0
  %2732 = vmatpush2.bf16.msra.mxu0 0
  %2733 = vmatprep.subr.bf16.mxu0 0
  %2734 = vmatpush2.bf16.msra.mxu0 0
  %2735 = vmatprep.subr.bf16.mxu0 0
  %2736 = vmatpush2.bf16.msra.mxu0 0
  %2737 = vmatprep.subr.bf16.mxu0 0
  %2738 = vmatpush2.bf16.msra.mxu0 0
  %2739 = vmatprep.subr.bf16.mxu0 0
  %2740 = vmatpush2.bf16.msra.mxu0 0
  %2741 = vmatprep.subr.bf16.mxu0 0
  %2742 = vmatpush2.bf16.msra.mxu0 0
  %2743 = vmatprep.subr.bf16.mxu0 0
  %2744 = vmatpush2.bf16.msra.mxu0 0
  %2745 = vmatprep.subr.bf16.mxu0 0
  %2746 = vmatpush2.bf16.msra.mxu0 0
  %2747 = vmatprep.mubr.bf16.mxu0 0
  %2748 = vmatmul.mubr.bf16.gmra.mxu0 %v2701
  %v2749 = vpop.f32.mrf.mxu0
  %v2750 = vadd.f32 0.0, %v2749
  %v2751 = vpop.f32.mrf.mxu0
  %v2752 = vadd.f32 0.0, %v2751
  %v2753 = vpop.f32.mrf.mxu0
  %v2754 = vpop.f32.mrf.mxu0
  %2755 = vdwg.mxu0
  %2756 = vmatprep.subr.bf16.mxu0 0
  %2757 = vmatpush1.bf16.msra.mxu0 0
  %2758 = vmatprep.subr.bf16.mxu0 0
  %2759 = vmatpush1.bf16.msra.mxu0 0
  %2760 = vmatprep.subr.bf16.mxu0 0
  %2761 = vmatpush1.bf16.msra.mxu0 0
  %2762 = vmatprep.subr.bf16.mxu0 0
  %2763 = vmatpush1.bf16.msra.mxu0 0
  %2764 = vmatprep.subr.bf16.mxu0 0
  %2765 = vmatpush1.bf16.msra.mxu0 0
  %2766 = vmatprep.subr.bf16.mxu0 0
  %2767 = vmatpush1.bf16.msra.mxu0 0
  %2768 = vmatprep.subr.bf16.mxu0 0
  %2769 = vmatpush1.bf16.msra.mxu0 0
  %2770 = vmatprep.subr.bf16.mxu0 %v2713
  %2771 = vmatpush1.bf16.msra.mxu0 %v2710
  %2772 = vmatprep.subr.bf16.mxu0 0
  %2773 = vmatpush2.bf16.msra.mxu0 0
  %2774 = vmatprep.subr.bf16.mxu0 0
  %2775 = vmatpush2.bf16.msra.mxu0 0
  %2776 = vmatprep.subr.bf16.mxu0 0
  %2777 = vmatpush2.bf16.msra.mxu0 0
  %2778 = vmatprep.subr.bf16.mxu0 0
  %2779 = vmatpush2.bf16.msra.mxu0 0
  %2780 = vmatprep.subr.bf16.mxu0 0
  %2781 = vmatpush2.bf16.msra.mxu0 0
  %2782 = vmatprep.subr.bf16.mxu0 0
  %2783 = vmatpush2.bf16.msra.mxu0 0
  %2784 = vmatprep.subr.bf16.mxu0 0
  %2785 = vmatpush2.bf16.msra.mxu0 0
  %2786 = vmatprep.subr.bf16.mxu0 0
  %2787 = vmatpush2.bf16.msra.mxu0 0
  %2788 = vmatprep.mubr.bf16.mxu0 0
  %2789 = vmatmul.mubr.bf16.gmra.mxu0 %v2701
  %v2790 = vpop.f32.mrf.mxu0
  %v2791 = vadd.f32 0.0, %v2790
  %v2792 = vpop.f32.mrf.mxu0
  %v2793 = vadd.f32 0.0, %v2792
  %v2794 = vpop.f32.mrf.mxu0
  %v2795 = vpop.f32.mrf.mxu0
  %2796 = vdwg.mxu0
  %v2797 = vadd.f32 %v2527, %v2750
  %v2798 = vadd.f32 %v2529, %v2752
  %v2799 = vadd.f32 %v2568, %v2791
  %v2800 = vadd.f32 %v2570, %v2793
  %v2801 = vld [vmem:[%s0] sm:$0xff]
  %v2802 = vld [vmem:[%s0 + $0x8] sm:$0x3]
  %v2805 = vunpack.c.l.s4 1966171168
  %v2806 = vunpack.c.0.s8 %v2805
  %v2807 = vlaneseq
  %v2808 = vshrl.u32 %v2807, 7
  %v2809 = vsub.s32 %v2806, %v2808
  %v2810 = vrot.slane %v60, %v2809
  %v2811 = vcombine.high %v2810, %v2810
  %v2813 = vunpack.c.l.s4 1966171168
  %v2814 = vunpack.c.0.s8 %v2813
  %v2815 = vlaneseq
  %v2816 = vshrl.u32 %v2815, 7
  %v2817 = vsub.s32 %v2814, %v2816
  %v2818 = vrot.slane %v2810, %v2817
  %v2820 = vunpack.c.l.s4 1966171168
  %v2821 = vunpack.c.0.s8 %v2820
  %v2822 = vlaneseq
  %v2823 = vshrl.u32 %v2822, 7
  %v2824 = vsub.s32 %v2821, %v2823
  %v2825 = vrot.slane %v2811, %v2824
  %v2826 = vcombine.high %v2818, %v2818
  %v2827 = vcombine.high %v2825, %v2825
  %v2829 = vpack.i.b16 %v2818, %v2818
  %v2831 = vlaneseq
  %v2832 = vshrl.u32 %v2831, 7
  %v2833 = vsub.s32 0, %v2832
  %v2834 = vrot.slane %v2829, %v2833
  %v2836 = vpack.i.b16 %v2825, %v2825
  %v2838 = vlaneseq
  %v2839 = vshrl.u32 %v2838, 7
  %v2840 = vsub.s32 0, %v2839
  %v2841 = vrot.slane %v2836, %v2840
  %v2843 = vpack.i.b16 %v2826, %v2826
  %v2845 = vlaneseq
  %v2846 = vshrl.u32 %v2845, 7
  %v2847 = vsub.s32 0, %v2846
  %v2848 = vrot.slane %v2843, %v2847
  %v2850 = vpack.i.b16 %v2827, %v2827
  %v2852 = vlaneseq
  %v2853 = vshrl.u32 %v2852, 7
  %v2854 = vsub.s32 0, %v2853
  %v2855 = vrot.slane %v2850, %v2854
  %v2860 = vcombine.low %v2834, %v2841
  %v2861 = vcombine.low %v2848, %v2855
  %v2863 = vunpack.c.l.s4 1983009808
  %v2864 = vunpack.c.0.s8 %v2863
  %v2865 = vlaneseq
  %v2866 = vshrl.u32 %v2865, 7
  %v2867 = vsub.s32 %v2864, %v2866
  %v2868 = vrot.slane %v2860, %v2867
  %v2870 = vunpack.c.l.s4 1983009808
  %v2871 = vunpack.c.0.s8 %v2870
  %v2872 = vlaneseq
  %v2873 = vshrl.u32 %v2872, 7
  %v2874 = vsub.s32 %v2871, %v2873
  %v2875 = vrot.slane %v2861, %v2874
  %v2876 = vcombine.low %v2868, %v2875
  %2877 = vrot.lane.b32.xlu0 %v2876, 82
  %v2878 = vpop.permute.xlu0 %2877
  %v2879 = vrot.slane %v2878, 6
  %vm2880 = vcmask 670720
  %v2881 = vsel %vm2880, %v2879, %v2878
  %v2884 = vmul.bf16 %v2801, %v2881
  %v2885 = vmul.bf16 %v2802, %v2879
  %v2888 = vcombine.high %v2884, %v2884
  %v2890 = vunpack.c.l.s4 1983009808
  %v2891 = vunpack.c.0.s8 %v2890
  %v2892 = vlaneseq
  %v2893 = vshrl.u32 %v2892, 7
  %v2894 = vsub.s32 %v2891, %v2893
  %v2895 = vrot.slane %v2884, %v2894
  %v2897 = vunpack.c.l.s4 1983009808
  %v2898 = vunpack.c.0.s8 %v2897
  %v2899 = vlaneseq
  %v2900 = vshrl.u32 %v2899, 7
  %v2901 = vsub.s32 %v2898, %v2900
  %v2902 = vrot.slane %v2888, %v2901
  %v2903 = vcombine.high %v2895, %v2895
  %v2904 = vcombine.high %v2902, %v2902
  %v2906 = vunpack.c.l.s4 1983009808
  %v2907 = vunpack.c.0.s8 %v2906
  %v2908 = vlaneseq
  %v2909 = vshrl.u32 %v2908, 7
  %v2910 = vsub.s32 %v2907, %v2909
  %v2911 = vrot.slane %v2885, %v2910
  %2912 = vrot.lane.b32.xlu0 %v2895, 46
  %v2913 = vpop.permute.xlu0 %2912
  %2914 = vrot.lane.b32.xlu0 %v2903, 46
  %v2915 = vpop.permute.xlu0 %2914
  %2916 = vrot.lane.b32.xlu0 %v2902, 46
  %v2917 = vpop.permute.xlu0 %2916
  %2918 = vrot.lane.b32.xlu0 %v2904, 46
  %v2919 = vpop.permute.xlu0 %2918
  %2920 = vrot.lane.b32.xlu0 %v2911, 46
  %v2921 = vpop.permute.xlu0 %2920
  %vm2922 = vcmask 375808
  %v2923 = vsel %vm2922, %v2913, %v2915
  %v2924 = vsel %vm2922, %v2915, %v2917
  %v2925 = vsel %vm2922, %v2917, %v2919
  %v2926 = vsel %vm2922, %v2919, %v2921
  %v2928 = vsel %vm284, %v33, 0
  %v2931 = vsel %vm288, %v2923, 0
  %v2934 = vsel %vm288, %v2924, 0
  %v2937 = vsel %vm288, %v2925, 0
  %v2940 = vsel %vm288, %v2926, 0
  %2942 = vmatprep.subr.bf16.mxu0 0
  %2943 = vmatpush1.bf16.msra.mxu0 0
  %2944 = vmatprep.subr.bf16.mxu0 0
  %2945 = vmatpush1.bf16.msra.mxu0 0
  %2946 = vmatprep.subr.bf16.mxu0 0
  %2947 = vmatpush1.bf16.msra.mxu0 0
  %2948 = vmatprep.subr.bf16.mxu0 0
  %2949 = vmatpush1.bf16.msra.mxu0 0
  %2950 = vmatprep.subr.bf16.mxu0 0
  %2951 = vmatpush1.bf16.msra.mxu0 0
  %2952 = vmatprep.subr.bf16.mxu0 0
  %2953 = vmatpush1.bf16.msra.mxu0 0
  %2954 = vmatprep.subr.bf16.mxu0 0
  %2955 = vmatpush1.bf16.msra.mxu0 0
  %2956 = vmatprep.subr.bf16.mxu0 %v2934
  %2957 = vmatpush1.bf16.msra.mxu0 %v2931
  %2958 = vmatprep.subr.bf16.mxu0 0
  %2959 = vmatpush2.bf16.msra.mxu0 0
  %2960 = vmatprep.subr.bf16.mxu0 0
  %2961 = vmatpush2.bf16.msra.mxu0 0
  %2962 = vmatprep.subr.bf16.mxu0 0
  %2963 = vmatpush2.bf16.msra.mxu0 0
  %2964 = vmatprep.subr.bf16.mxu0 0
  %2965 = vmatpush2.bf16.msra.mxu0 0
  %2966 = vmatprep.subr.bf16.mxu0 0
  %2967 = vmatpush2.bf16.msra.mxu0 0
  %2968 = vmatprep.subr.bf16.mxu0 0
  %2969 = vmatpush2.bf16.msra.mxu0 0
  %2970 = vmatprep.subr.bf16.mxu0 0
  %2971 = vmatpush2.bf16.msra.mxu0 0
  %2972 = vmatprep.subr.bf16.mxu0 0
  %2973 = vmatpush2.bf16.msra.mxu0 0
  %2974 = vmatprep.mubr.bf16.mxu0 0
  %2975 = vmatmul.mubr.bf16.gmra.mxu0 %v2928
  %v2976 = vpop.f32.mrf.mxu0
  %v2977 = vadd.f32 0.0, %v2976
  %v2978 = vpop.f32.mrf.mxu0
  %v2979 = vadd.f32 0.0, %v2978
  %v2980 = vpop.f32.mrf.mxu0
  %v2981 = vpop.f32.mrf.mxu0
  %2982 = vdwg.mxu0
  %2983 = vmatprep.subr.bf16.mxu0 0
  %2984 = vmatpush1.bf16.msra.mxu0 0
  %2985 = vmatprep.subr.bf16.mxu0 0
  %2986 = vmatpush1.bf16.msra.mxu0 0
  %2987 = vmatprep.subr.bf16.mxu0 0
  %2988 = vmatpush1.bf16.msra.mxu0 0
  %2989 = vmatprep.subr.bf16.mxu0 0
  %2990 = vmatpush1.bf16.msra.mxu0 0
  %2991 = vmatprep.subr.bf16.mxu0 0
  %2992 = vmatpush1.bf16.msra.mxu0 0
  %2993 = vmatprep.subr.bf16.mxu0 0
  %2994 = vmatpush1.bf16.msra.mxu0 0
  %2995 = vmatprep.subr.bf16.mxu0 0
  %2996 = vmatpush1.bf16.msra.mxu0 0
  %2997 = vmatprep.subr.bf16.mxu0 %v2940
  %2998 = vmatpush1.bf16.msra.mxu0 %v2937
  %2999 = vmatprep.subr.bf16.mxu0 0
  %3000 = vmatpush2.bf16.msra.mxu0 0
  %3001 = vmatprep.subr.bf16.mxu0 0
  %3002 = vmatpush2.bf16.msra.mxu0 0
  %3003 = vmatprep.subr.bf16.mxu0 0
  %3004 = vmatpush2.bf16.msra.mxu0 0
  %3005 = vmatprep.subr.bf16.mxu0 0
  %3006 = vmatpush2.bf16.msra.mxu0 0
  %3007 = vmatprep.subr.bf16.mxu0 0
  %3008 = vmatpush2.bf16.msra.mxu0 0
  %3009 = vmatprep.subr.bf16.mxu0 0
  %3010 = vmatpush2.bf16.msra.mxu0 0
  %3011 = vmatprep.subr.bf16.mxu0 0
  %3012 = vmatpush2.bf16.msra.mxu0 0
  %3013 = vmatprep.subr.bf16.mxu0 0
  %3014 = vmatpush2.bf16.msra.mxu0 0
  %3015 = vmatprep.mubr.bf16.mxu0 0
  %3016 = vmatmul.mubr.bf16.gmra.mxu0 %v2928
  %v3017 = vpop.f32.mrf.mxu0
  %v3018 = vadd.f32 0.0, %v3017
  %v3019 = vpop.f32.mrf.mxu0
  %v3020 = vadd.f32 0.0, %v3019
  %v3021 = vpop.f32.mrf.mxu0
  %v3022 = vpop.f32.mrf.mxu0
  %3023 = vdwg.mxu0
  %v3024 = vadd.f32 %v2797, %v2977
  %v3025 = vadd.f32 %v2798, %v2979
  %v3026 = vadd.f32 %v2799, %v3018
  %v3027 = vadd.f32 %v2800, %v3020
  %v3030 = vunpack.c.l.s4 1966171168
  %v3031 = vunpack.c.0.s8 %v3030
  %v3032 = vlaneseq
  %v3033 = vshrl.u32 %v3032, 7
  %v3034 = vsub.s32 %v3031, %v3033
  %v3035 = vrot.slane %v61, %v3034
  %v3036 = vcombine.high %v3035, %v3035
  %v3038 = vunpack.c.l.s4 1966171168
  %v3039 = vunpack.c.0.s8 %v3038
  %v3040 = vlaneseq
  %v3041 = vshrl.u32 %v3040, 7
  %v3042 = vsub.s32 %v3039, %v3041
  %v3043 = vrot.slane %v3035, %v3042
  %v3045 = vunpack.c.l.s4 1966171168
  %v3046 = vunpack.c.0.s8 %v3045
  %v3047 = vlaneseq
  %v3048 = vshrl.u32 %v3047, 7
  %v3049 = vsub.s32 %v3046, %v3048
  %v3050 = vrot.slane %v3036, %v3049
  %v3051 = vcombine.high %v3043, %v3043
  %v3052 = vcombine.high %v3050, %v3050
  %v3054 = vpack.i.b16 %v3043, %v3043
  %v3056 = vlaneseq
  %v3057 = vshrl.u32 %v3056, 7
  %v3058 = vsub.s32 0, %v3057
  %v3059 = vrot.slane %v3054, %v3058
  %v3061 = vpack.i.b16 %v3050, %v3050
  %v3063 = vlaneseq
  %v3064 = vshrl.u32 %v3063, 7
  %v3065 = vsub.s32 0, %v3064
  %v3066 = vrot.slane %v3061, %v3065
  %v3068 = vpack.i.b16 %v3051, %v3051
  %v3070 = vlaneseq
  %v3071 = vshrl.u32 %v3070, 7
  %v3072 = vsub.s32 0, %v3071
  %v3073 = vrot.slane %v3068, %v3072
  %v3075 = vpack.i.b16 %v3052, %v3052
  %v3077 = vlaneseq
  %v3078 = vshrl.u32 %v3077, 7
  %v3079 = vsub.s32 0, %v3078
  %v3080 = vrot.slane %v3075, %v3079
  %v3085 = vcombine.low %v3059, %v3066
  %v3086 = vcombine.low %v3073, %v3080
  %v3088 = vunpack.c.l.s4 1983009808
  %v3089 = vunpack.c.0.s8 %v3088
  %v3090 = vlaneseq
  %v3091 = vshrl.u32 %v3090, 7
  %v3092 = vsub.s32 %v3089, %v3091
  %v3093 = vrot.slane %v3085, %v3092
  %v3095 = vunpack.c.l.s4 1983009808
  %v3096 = vunpack.c.0.s8 %v3095
  %v3097 = vlaneseq
  %v3098 = vshrl.u32 %v3097, 7
  %v3099 = vsub.s32 %v3096, %v3098
  %v3100 = vrot.slane %v3086, %v3099
  %v3101 = vcombine.low %v3093, %v3100
  %3102 = vrot.lane.b32.xlu0 %v3101, 85
  %v3103 = vpop.permute.xlu0 %3102
  %v3104 = vrot.slane %v3103, 6
  %v3105 = vsel %vm1054, %v3104, %v3103
  %v3108 = vmul.bf16 %v975, %v3105
  %v3109 = vmul.bf16 %v976, %v3104
  %v3112 = vcombine.high %v3108, %v3108
  %v3114 = vunpack.c.l.s4 1983009808
  %v3115 = vunpack.c.0.s8 %v3114
  %v3116 = vlaneseq
  %v3117 = vshrl.u32 %v3116, 7
  %v3118 = vsub.s32 %v3115, %v3117
  %v3119 = vrot.slane %v3108, %v3118
  %v3121 = vunpack.c.l.s4 1983009808
  %v3122 = vunpack.c.0.s8 %v3121
  %v3123 = vlaneseq
  %v3124 = vshrl.u32 %v3123, 7
  %v3125 = vsub.s32 %v3122, %v3124
  %v3126 = vrot.slane %v3112, %v3125
  %v3127 = vcombine.high %v3119, %v3119
  %v3128 = vcombine.high %v3126, %v3126
  %v3130 = vunpack.c.l.s4 1983009808
  %v3131 = vunpack.c.0.s8 %v3130
  %v3132 = vlaneseq
  %v3133 = vshrl.u32 %v3132, 7
  %v3134 = vsub.s32 %v3131, %v3133
  %v3135 = vrot.slane %v3109, %v3134
  %3136 = vrot.lane.b32.xlu0 %v3119, 43
  %v3137 = vpop.permute.xlu0 %3136
  %3138 = vrot.lane.b32.xlu0 %v3127, 43
  %v3139 = vpop.permute.xlu0 %3138
  %3140 = vrot.lane.b32.xlu0 %v3126, 43
  %v3141 = vpop.permute.xlu0 %3140
  %3142 = vrot.lane.b32.xlu0 %v3128, 43
  %v3143 = vpop.permute.xlu0 %3142
  %3144 = vrot.lane.b32.xlu0 %v3135, 43
  %v3145 = vpop.permute.xlu0 %3144
  %v3146 = vsel %vm1096, %v3137, %v3139
  %v3147 = vsel %vm1096, %v3139, %v3141
  %v3148 = vsel %vm1096, %v3141, %v3143
  %v3149 = vsel %vm1096, %v3143, %v3145
  %v3151 = vsel %vm284, %v34, 0
  %v3154 = vsel %vm288, %v3146, 0
  %v3157 = vsel %vm288, %v3147, 0
  %v3160 = vsel %vm288, %v3148, 0
  %v3163 = vsel %vm288, %v3149, 0
  %3165 = vmatprep.subr.bf16.mxu0 0
  %3166 = vmatpush1.bf16.msra.mxu0 0
  %3167 = vmatprep.subr.bf16.mxu0 0
  %3168 = vmatpush1.bf16.msra.mxu0 0
  %3169 = vmatprep.subr.bf16.mxu0 0
  %3170 = vmatpush1.bf16.msra.mxu0 0
  %3171 = vmatprep.subr.bf16.mxu0 0
  %3172 = vmatpush1.bf16.msra.mxu0 0
  %3173 = vmatprep.subr.bf16.mxu0 0
  %3174 = vmatpush1.bf16.msra.mxu0 0
  %3175 = vmatprep.subr.bf16.mxu0 0
  %3176 = vmatpush1.bf16.msra.mxu0 0
  %3177 = vmatprep.subr.bf16.mxu0 0
  %3178 = vmatpush1.bf16.msra.mxu0 0
  %3179 = vmatprep.subr.bf16.mxu0 %v3157
  %3180 = vmatpush1.bf16.msra.mxu0 %v3154
  %3181 = vmatprep.subr.bf16.mxu0 0
  %3182 = vmatpush2.bf16.msra.mxu0 0
  %3183 = vmatprep.subr.bf16.mxu0 0
  %3184 = vmatpush2.bf16.msra.mxu0 0
  %3185 = vmatprep.subr.bf16.mxu0 0
  %3186 = vmatpush2.bf16.msra.mxu0 0
  %3187 = vmatprep.subr.bf16.mxu0 0
  %3188 = vmatpush2.bf16.msra.mxu0 0
  %3189 = vmatprep.subr.bf16.mxu0 0
  %3190 = vmatpush2.bf16.msra.mxu0 0
  %3191 = vmatprep.subr.bf16.mxu0 0
  %3192 = vmatpush2.bf16.msra.mxu0 0
  %3193 = vmatprep.subr.bf16.mxu0 0
  %3194 = vmatpush2.bf16.msra.mxu0 0
  %3195 = vmatprep.subr.bf16.mxu0 0
  %3196 = vmatpush2.bf16.msra.mxu0 0
  %3197 = vmatprep.mubr.bf16.mxu0 0
  %3198 = vmatmul.mubr.bf16.gmra.mxu0 %v3151
  %v3199 = vpop.f32.mrf.mxu0
  %v3200 = vadd.f32 0.0, %v3199
  %v3201 = vpop.f32.mrf.mxu0
  %v3202 = vadd.f32 0.0, %v3201
  %v3203 = vpop.f32.mrf.mxu0
  %v3204 = vpop.f32.mrf.mxu0
  %3205 = vdwg.mxu0
  %3206 = vmatprep.subr.bf16.mxu0 0
  %3207 = vmatpush1.bf16.msra.mxu0 0
  %3208 = vmatprep.subr.bf16.mxu0 0
  %3209 = vmatpush1.bf16.msra.mxu0 0
  %3210 = vmatprep.subr.bf16.mxu0 0
  %3211 = vmatpush1.bf16.msra.mxu0 0
  %3212 = vmatprep.subr.bf16.mxu0 0
  %3213 = vmatpush1.bf16.msra.mxu0 0
  %3214 = vmatprep.subr.bf16.mxu0 0
  %3215 = vmatpush1.bf16.msra.mxu0 0
  %3216 = vmatprep.subr.bf16.mxu0 0
  %3217 = vmatpush1.bf16.msra.mxu0 0
  %3218 = vmatprep.subr.bf16.mxu0 0
  %3219 = vmatpush1.bf16.msra.mxu0 0
  %3220 = vmatprep.subr.bf16.mxu0 %v3163
  %3221 = vmatpush1.bf16.msra.mxu0 %v3160
  %3222 = vmatprep.subr.bf16.mxu0 0
  %3223 = vmatpush2.bf16.msra.mxu0 0
  %3224 = vmatprep.subr.bf16.mxu0 0
  %3225 = vmatpush2.bf16.msra.mxu0 0
  %3226 = vmatprep.subr.bf16.mxu0 0
  %3227 = vmatpush2.bf16.msra.mxu0 0
  %3228 = vmatprep.subr.bf16.mxu0 0
  %3229 = vmatpush2.bf16.msra.mxu0 0
  %3230 = vmatprep.subr.bf16.mxu0 0
  %3231 = vmatpush2.bf16.msra.mxu0 0
  %3232 = vmatprep.subr.bf16.mxu0 0
  %3233 = vmatpush2.bf16.msra.mxu0 0
  %3234 = vmatprep.subr.bf16.mxu0 0
  %3235 = vmatpush2.bf16.msra.mxu0 0
  %3236 = vmatprep.subr.bf16.mxu0 0
  %3237 = vmatpush2.bf16.msra.mxu0 0
  %3238 = vmatprep.mubr.bf16.mxu0 0
  %3239 = vmatmul.mubr.bf16.gmra.mxu0 %v3151
  %v3240 = vpop.f32.mrf.mxu0
  %v3241 = vadd.f32 0.0, %v3240
  %v3242 = vpop.f32.mrf.mxu0
  %v3243 = vadd.f32 0.0, %v3242
  %v3244 = vpop.f32.mrf.mxu0
  %v3245 = vpop.f32.mrf.mxu0
  %3246 = vdwg.mxu0
  %v3247 = vadd.f32 %v3024, %v3200
  %v3248 = vadd.f32 %v3025, %v3202
  %v3249 = vadd.f32 %v3026, %v3241
  %v3250 = vadd.f32 %v3027, %v3243
  %v3251 = vld [vmem:[%s0] sm:$0xff]
  %v3252 = vld [vmem:[%s0 + $0x8] sm:$0x3]
  %v3255 = vunpack.c.l.s4 1966171168
  %v3256 = vunpack.c.0.s8 %v3255
  %v3257 = vlaneseq
  %v3258 = vshrl.u32 %v3257, 7
  %v3259 = vsub.s32 %v3256, %v3258
  %v3260 = vrot.slane %v62, %v3259
  %v3261 = vcombine.high %v3260, %v3260
  %v3263 = vunpack.c.l.s4 1966171168
  %v3264 = vunpack.c.0.s8 %v3263
  %v3265 = vlaneseq
  %v3266 = vshrl.u32 %v3265, 7
  %v3267 = vsub.s32 %v3264, %v3266
  %v3268 = vrot.slane %v3260, %v3267
  %v3270 = vunpack.c.l.s4 1966171168
  %v3271 = vunpack.c.0.s8 %v3270
  %v3272 = vlaneseq
  %v3273 = vshrl.u32 %v3272, 7
  %v3274 = vsub.s32 %v3271, %v3273
  %v3275 = vrot.slane %v3261, %v3274
  %v3276 = vcombine.high %v3268, %v3268
  %v3277 = vcombine.high %v3275, %v3275
  %v3279 = vpack.i.b16 %v3268, %v3268
  %v3281 = vlaneseq
  %v3282 = vshrl.u32 %v3281, 7
  %v3283 = vsub.s32 0, %v3282
  %v3284 = vrot.slane %v3279, %v3283
  %v3286 = vpack.i.b16 %v3275, %v3275
  %v3288 = vlaneseq
  %v3289 = vshrl.u32 %v3288, 7
  %v3290 = vsub.s32 0, %v3289
  %v3291 = vrot.slane %v3286, %v3290
  %v3293 = vpack.i.b16 %v3276, %v3276
  %v3295 = vlaneseq
  %v3296 = vshrl.u32 %v3295, 7
  %v3297 = vsub.s32 0, %v3296
  %v3298 = vrot.slane %v3293, %v3297
  %v3300 = vpack.i.b16 %v3277, %v3277
  %v3302 = vlaneseq
  %v3303 = vshrl.u32 %v3302, 7
  %v3304 = vsub.s32 0, %v3303
  %v3305 = vrot.slane %v3300, %v3304
  %v3310 = vcombine.low %v3284, %v3291
  %v3311 = vcombine.low %v3298, %v3305
  %v3313 = vunpack.c.l.s4 1983009808
  %v3314 = vunpack.c.0.s8 %v3313
  %v3315 = vlaneseq
  %v3316 = vshrl.u32 %v3315, 7
  %v3317 = vsub.s32 %v3314, %v3316
  %v3318 = vrot.slane %v3310, %v3317
  %v3320 = vunpack.c.l.s4 1983009808
  %v3321 = vunpack.c.0.s8 %v3320
  %v3322 = vlaneseq
  %v3323 = vshrl.u32 %v3322, 7
  %v3324 = vsub.s32 %v3321, %v3323
  %v3325 = vrot.slane %v3311, %v3324
  %v3326 = vcombine.low %v3318, %v3325
  %3327 = vrot.lane.b32.xlu0 %v3326, 88
  %v3328 = vpop.permute.xlu0 %3327
  %v3329 = vrot.slane %v3328, 6
  %v3330 = vsel %vm2695, %v3329, %v3328
  %v3333 = vmul.bf16 %v3251, %v3330
  %v3334 = vmul.bf16 %v3252, %v3329
  %v3337 = vcombine.high %v3333, %v3333
  %v3339 = vunpack.c.l.s4 1983009808
  %v3340 = vunpack.c.0.s8 %v3339
  %v3341 = vlaneseq
  %v3342 = vshrl.u32 %v3341, 7
  %v3343 = vsub.s32 %v3340, %v3342
  %v3344 = vrot.slane %v3333, %v3343
  %v3346 = vunpack.c.l.s4 1983009808
  %v3347 = vunpack.c.0.s8 %v3346
  %v3348 = vlaneseq
  %v3349 = vshrl.u32 %v3348, 7
  %v3350 = vsub.s32 %v3347, %v3349
  %v3351 = vrot.slane %v3337, %v3350
  %v3352 = vcombine.high %v3344, %v3344
  %v3353 = vcombine.high %v3351, %v3351
  %v3355 = vunpack.c.l.s4 1983009808
  %v3356 = vunpack.c.0.s8 %v3355
  %v3357 = vlaneseq
  %v3358 = vshrl.u32 %v3357, 7
  %v3359 = vsub.s32 %v3356, %v3358
  %v3360 = vrot.slane %v3334, %v3359
  %3361 = vrot.lane.b32.xlu0 %v3344, 40
  %v3362 = vpop.permute.xlu0 %3361
  %3363 = vrot.lane.b32.xlu0 %v3352, 40
  %v3364 = vpop.permute.xlu0 %3363
  %3365 = vrot.lane.b32.xlu0 %v3351, 40
  %v3366 = vpop.permute.xlu0 %3365
  %3367 = vrot.lane.b32.xlu0 %v3353, 40
  %v3368 = vpop.permute.xlu0 %3367
  %3369 = vrot.lane.b32.xlu0 %v3360, 40
  %v3370 = vpop.permute.xlu0 %3369
  %v3371 = vsel %vm2653, %v3362, %v3364
  %v3372 = vsel %vm2653, %v3364, %v3366
  %v3373 = vsel %vm2653, %v3366, %v3368
  %v3374 = vsel %vm2653, %v3368, %v3370
  %v3376 = vsel %vm284, %v35, 0
  %v3379 = vsel %vm288, %v3371, 0
  %v3382 = vsel %vm288, %v3372, 0
  %v3385 = vsel %vm288, %v3373, 0
  %v3388 = vsel %vm288, %v3374, 0
  %3390 = vmatprep.subr.bf16.mxu0 0
  %3391 = vmatpush1.bf16.msra.mxu0 0
  %3392 = vmatprep.subr.bf16.mxu0 0
  %3393 = vmatpush1.bf16.msra.mxu0 0
  %3394 = vmatprep.subr.bf16.mxu0 0
  %3395 = vmatpush1.bf16.msra.mxu0 0
  %3396 = vmatprep.subr.bf16.mxu0 0
  %3397 = vmatpush1.bf16.msra.mxu0 0
  %3398 = vmatprep.subr.bf16.mxu0 0
  %3399 = vmatpush1.bf16.msra.mxu0 0
  %3400 = vmatprep.subr.bf16.mxu0 0
  %3401 = vmatpush1.bf16.msra.mxu0 0
  %3402 = vmatprep.subr.bf16.mxu0 0
  %3403 = vmatpush1.bf16.msra.mxu0 0
  %3404 = vmatprep.subr.bf16.mxu0 %v3382
  %3405 = vmatpush1.bf16.msra.mxu0 %v3379
  %3406 = vmatprep.subr.bf16.mxu0 0
  %3407 = vmatpush2.bf16.msra.mxu0 0
  %3408 = vmatprep.subr.bf16.mxu0 0
  %3409 = vmatpush2.bf16.msra.mxu0 0
  %3410 = vmatprep.subr.bf16.mxu0 0
  %3411 = vmatpush2.bf16.msra.mxu0 0
  %3412 = vmatprep.subr.bf16.mxu0 0
  %3413 = vmatpush2.bf16.msra.mxu0 0
  %3414 = vmatprep.subr.bf16.mxu0 0
  %3415 = vmatpush2.bf16.msra.mxu0 0
  %3416 = vmatprep.subr.bf16.mxu0 0
  %3417 = vmatpush2.bf16.msra.mxu0 0
  %3418 = vmatprep.subr.bf16.mxu0 0
  %3419 = vmatpush2.bf16.msra.mxu0 0
  %3420 = vmatprep.subr.bf16.mxu0 0
  %3421 = vmatpush2.bf16.msra.mxu0 0
  %3422 = vmatprep.mubr.bf16.mxu0 0
  %3423 = vmatmul.mubr.bf16.gmra.mxu0 %v3376
  %v3424 = vpop.f32.mrf.mxu0
  %v3425 = vadd.f32 0.0, %v3424
  %v3426 = vpop.f32.mrf.mxu0
  %v3427 = vadd.f32 0.0, %v3426
  %v3428 = vpop.f32.mrf.mxu0
  %v3429 = vpop.f32.mrf.mxu0
  %3430 = vdwg.mxu0
  %3431 = vmatprep.subr.bf16.mxu0 0
  %3432 = vmatpush1.bf16.msra.mxu0 0
  %3433 = vmatprep.subr.bf16.mxu0 0
  %3434 = vmatpush1.bf16.msra.mxu0 0
  %3435 = vmatprep.subr.bf16.mxu0 0
  %3436 = vmatpush1.bf16.msra.mxu0 0
  %3437 = vmatprep.subr.bf16.mxu0 0
  %3438 = vmatpush1.bf16.msra.mxu0 0
  %3439 = vmatprep.subr.bf16.mxu0 0
  %3440 = vmatpush1.bf16.msra.mxu0 0
  %3441 = vmatprep.subr.bf16.mxu0 0
  %3442 = vmatpush1.bf16.msra.mxu0 0
  %3443 = vmatprep.subr.bf16.mxu0 0
  %3444 = vmatpush1.bf16.msra.mxu0 0
  %3445 = vmatprep.subr.bf16.mxu0 %v3388
  %3446 = vmatpush1.bf16.msra.mxu0 %v3385
  %3447 = vmatprep.subr.bf16.mxu0 0
  %3448 = vmatpush2.bf16.msra.mxu0 0
  %3449 = vmatprep.subr.bf16.mxu0 0
  %3450 = vmatpush2.bf16.msra.mxu0 0
  %3451 = vmatprep.subr.bf16.mxu0 0
  %3452 = vmatpush2.bf16.msra.mxu0 0
  %3453 = vmatprep.subr.bf16.mxu0 0
  %3454 = vmatpush2.bf16.msra.mxu0 0
  %3455 = vmatprep.subr.bf16.mxu0 0
  %3456 = vmatpush2.bf16.msra.mxu0 0
  %3457 = vmatprep.subr.bf16.mxu0 0
  %3458 = vmatpush2.bf16.msra.mxu0 0
  %3459 = vmatprep.subr.bf16.mxu0 0
  %3460 = vmatpush2.bf16.msra.mxu0 0
  %3461 = vmatprep.subr.bf16.mxu0 0
  %3462 = vmatpush2.bf16.msra.mxu0 0
  %3463 = vmatprep.mubr.bf16.mxu0 0
  %3464 = vmatmul.mubr.bf16.gmra.mxu0 %v3376
  %v3465 = vpop.f32.mrf.mxu0
  %v3466 = vadd.f32 0.0, %v3465
  %v3467 = vpop.f32.mrf.mxu0
  %v3468 = vadd.f32 0.0, %v3467
  %v3469 = vpop.f32.mrf.mxu0
  %v3470 = vpop.f32.mrf.mxu0
  %3471 = vdwg.mxu0
  %v3472 = vadd.f32 %v3247, %v3425
  %v3473 = vadd.f32 %v3248, %v3427
  %v3474 = vadd.f32 %v3249, %v3466
  %v3475 = vadd.f32 %v3250, %v3468
  %v3476 = vld [vmem:[%s0 + $0x2] sm:$0xff]
  %v3477 = vld [vmem:[%s0 + $0xa] sm:$0x3]
  %v3480 = vunpack.c.l.s4 1966171168
  %v3481 = vunpack.c.0.s8 %v3480
  %v3482 = vlaneseq
  %v3483 = vshrl.u32 %v3482, 7
  %v3484 = vsub.s32 %v3481, %v3483
  %v3485 = vrot.slane %v63, %v3484
  %v3486 = vcombine.high %v3485, %v3485
  %v3488 = vunpack.c.l.s4 1966171168
  %v3489 = vunpack.c.0.s8 %v3488
  %v3490 = vlaneseq
  %v3491 = vshrl.u32 %v3490, 7
  %v3492 = vsub.s32 %v3489, %v3491
  %v3493 = vrot.slane %v3485, %v3492
  %v3495 = vunpack.c.l.s4 1966171168
  %v3496 = vunpack.c.0.s8 %v3495
  %v3497 = vlaneseq
  %v3498 = vshrl.u32 %v3497, 7
  %v3499 = vsub.s32 %v3496, %v3498
  %v3500 = vrot.slane %v3486, %v3499
  %v3501 = vcombine.high %v3493, %v3493
  %v3502 = vcombine.high %v3500, %v3500
  %v3504 = vpack.i.b16 %v3493, %v3493
  %v3506 = vlaneseq
  %v3507 = vshrl.u32 %v3506, 7
  %v3508 = vsub.s32 0, %v3507
  %v3509 = vrot.slane %v3504, %v3508
  %v3511 = vpack.i.b16 %v3500, %v3500
  %v3513 = vlaneseq
  %v3514 = vshrl.u32 %v3513, 7
  %v3515 = vsub.s32 0, %v3514
  %v3516 = vrot.slane %v3511, %v3515
  %v3518 = vpack.i.b16 %v3501, %v3501
  %v3520 = vlaneseq
  %v3521 = vshrl.u32 %v3520, 7
  %v3522 = vsub.s32 0, %v3521
  %v3523 = vrot.slane %v3518, %v3522
  %v3525 = vpack.i.b16 %v3502, %v3502
  %v3527 = vlaneseq
  %v3528 = vshrl.u32 %v3527, 7
  %v3529 = vsub.s32 0, %v3528
  %v3530 = vrot.slane %v3525, %v3529
  %v3535 = vcombine.low %v3509, %v3516
  %v3536 = vcombine.low %v3523, %v3530
  %v3538 = vunpack.c.l.s4 1983009808
  %v3539 = vunpack.c.0.s8 %v3538
  %v3540 = vlaneseq
  %v3541 = vshrl.u32 %v3540, 7
  %v3542 = vsub.s32 %v3539, %v3541
  %v3543 = vrot.slane %v3535, %v3542
  %v3545 = vunpack.c.l.s4 1983009808
  %v3546 = vunpack.c.0.s8 %v3545
  %v3547 = vlaneseq
  %v3548 = vshrl.u32 %v3547, 7
  %v3549 = vsub.s32 %v3546, %v3548
  %v3550 = vrot.slane %v3536, %v3549
  %v3551 = vcombine.low %v3543, %v3550
  %3552 = vrot.lane.b32.xlu0 %v3551, 2
  %v3553 = vpop.permute.xlu0 %3552
  %v3554 = vrot.slane %v3553, 6
  %vm3555 = vcmask 15360
  %v3556 = vsel %vm3555, %v3554, %v3553
  %v3559 = vmul.bf16 %v3476, %v3556
  %v3560 = vmul.bf16 %v3477, %v3554
  %v3563 = vcombine.high %v3559, %v3559
  %v3565 = vunpack.c.l.s4 1983009808
  %v3566 = vunpack.c.0.s8 %v3565
  %v3567 = vlaneseq
  %v3568 = vshrl.u32 %v3567, 7
  %v3569 = vsub.s32 %v3566, %v3568
  %v3570 = vrot.slane %v3559, %v3569
  %v3572 = vunpack.c.l.s4 1983009808
  %v3573 = vunpack.c.0.s8 %v3572
  %v3574 = vlaneseq
  %v3575 = vshrl.u32 %v3574, 7
  %v3576 = vsub.s32 %v3573, %v3575
  %v3577 = vrot.slane %v3563, %v3576
  %v3578 = vcombine.high %v3570, %v3570
  %v3579 = vcombine.high %v3577, %v3577
  %v3581 = vunpack.c.l.s4 1983009808
  %v3582 = vunpack.c.0.s8 %v3581
  %v3583 = vlaneseq
  %v3584 = vshrl.u32 %v3583, 7
  %v3585 = vsub.s32 %v3582, %v3584
  %v3586 = vrot.slane %v3560, %v3585
  %3587 = vrot.lane.b32.xlu0 %v3570, 126
  %v3588 = vpop.permute.xlu0 %3587
  %3589 = vrot.lane.b32.xlu0 %v3578, 126
  %v3590 = vpop.permute.xlu0 %3589
  %3591 = vrot.lane.b32.xlu0 %v3577, 126
  %v3592 = vpop.permute.xlu0 %3591
  %3593 = vrot.lane.b32.xlu0 %v3579, 126
  %v3594 = vpop.permute.xlu0 %3593
  %3595 = vrot.lane.b32.xlu0 %v3586, 126
  %v3596 = vpop.permute.xlu0 %3595
  %vm3597 = vcmask 1031168
  %v3598 = vsel %vm3597, %v3588, %v3590
  %v3599 = vsel %vm3597, %v3590, %v3592
  %v3600 = vsel %vm3597, %v3592, %v3594
  %v3601 = vsel %vm3597, %v3594, %v3596
  %v3603 = vsel %vm284, %v36, 0
  %v3606 = vsel %vm288, %v3598, 0
  %v3609 = vsel %vm288, %v3599, 0
  %v3612 = vsel %vm288, %v3600, 0
  %v3615 = vsel %vm288, %v3601, 0
  %3617 = vmatprep.subr.bf16.mxu0 0
  %3618 = vmatpush1.bf16.msra.mxu0 0
  %3619 = vmatprep.subr.bf16.mxu0 0
  %3620 = vmatpush1.bf16.msra.mxu0 0
  %3621 = vmatprep.subr.bf16.mxu0 0
  %3622 = vmatpush1.bf16.msra.mxu0 0
  %3623 = vmatprep.subr.bf16.mxu0 0
  %3624 = vmatpush1.bf16.msra.mxu0 0
  %3625 = vmatprep.subr.bf16.mxu0 0
  %3626 = vmatpush1.bf16.msra.mxu0 0
  %3627 = vmatprep.subr.bf16.mxu0 0
  %3628 = vmatpush1.bf16.msra.mxu0 0
  %3629 = vmatprep.subr.bf16.mxu0 0
  %3630 = vmatpush1.bf16.msra.mxu0 0
  %3631 = vmatprep.subr.bf16.mxu0 %v3609
  %3632 = vmatpush1.bf16.msra.mxu0 %v3606
  %3633 = vmatprep.subr.bf16.mxu0 0
  %3634 = vmatpush2.bf16.msra.mxu0 0
  %3635 = vmatprep.subr.bf16.mxu0 0
  %3636 = vmatpush2.bf16.msra.mxu0 0
  %3637 = vmatprep.subr.bf16.mxu0 0
  %3638 = vmatpush2.bf16.msra.mxu0 0
  %3639 = vmatprep.subr.bf16.mxu0 0
  %3640 = vmatpush2.bf16.msra.mxu0 0
  %3641 = vmatprep.subr.bf16.mxu0 0
  %3642 = vmatpush2.bf16.msra.mxu0 0
  %3643 = vmatprep.subr.bf16.mxu0 0
  %3644 = vmatpush2.bf16.msra.mxu0 0
  %3645 = vmatprep.subr.bf16.mxu0 0
  %3646 = vmatpush2.bf16.msra.mxu0 0
  %3647 = vmatprep.subr.bf16.mxu0 0
  %3648 = vmatpush2.bf16.msra.mxu0 0
  %3649 = vmatprep.mubr.bf16.mxu0 0
  %3650 = vmatmul.mubr.bf16.gmra.mxu0 %v3603
  %v3651 = vpop.f32.mrf.mxu0
  %v3652 = vadd.f32 0.0, %v3651
  %v3653 = vpop.f32.mrf.mxu0
  %v3654 = vadd.f32 0.0, %v3653
  %v3655 = vpop.f32.mrf.mxu0
  %v3656 = vpop.f32.mrf.mxu0
  %3657 = vdwg.mxu0
  %3658 = vmatprep.subr.bf16.mxu0 0
  %3659 = vmatpush1.bf16.msra.mxu0 0
  %3660 = vmatprep.subr.bf16.mxu0 0
  %3661 = vmatpush1.bf16.msra.mxu0 0
  %3662 = vmatprep.subr.bf16.mxu0 0
  %3663 = vmatpush1.bf16.msra.mxu0 0
  %3664 = vmatprep.subr.bf16.mxu0 0
  %3665 = vmatpush1.bf16.msra.mxu0 0
  %3666 = vmatprep.subr.bf16.mxu0 0
  %3667 = vmatpush1.bf16.msra.mxu0 0
  %3668 = vmatprep.subr.bf16.mxu0 0
  %3669 = vmatpush1.bf16.msra.mxu0 0
  %3670 = vmatprep.subr.bf16.mxu0 0
  %3671 = vmatpush1.bf16.msra.mxu0 0
  %3672 = vmatprep.subr.bf16.mxu0 %v3615
  %3673 = vmatpush1.bf16.msra.mxu0 %v3612
  %3674 = vmatprep.subr.bf16.mxu0 0
  %3675 = vmatpush2.bf16.msra.mxu0 0
  %3676 = vmatprep.subr.bf16.mxu0 0
  %3677 = vmatpush2.bf16.msra.mxu0 0
  %3678 = vmatprep.subr.bf16.mxu0 0
  %3679 = vmatpush2.bf16.msra.mxu0 0
  %3680 = vmatprep.subr.bf16.mxu0 0
  %3681 = vmatpush2.bf16.msra.mxu0 0
  %3682 = vmatprep.subr.bf16.mxu0 0
  %3683 = vmatpush2.bf16.msra.mxu0 0
  %3684 = vmatprep.subr.bf16.mxu0 0
  %3685 = vmatpush2.bf16.msra.mxu0 0
  %3686 = vmatprep.subr.bf16.mxu0 0
  %3687 = vmatpush2.bf16.msra.mxu0 0
  %3688 = vmatprep.subr.bf16.mxu0 0
  %3689 = vmatpush2.bf16.msra.mxu0 0
  %3690 = vmatprep.mubr.bf16.mxu0 0
  %3691 = vmatmul.mubr.bf16.gmra.mxu0 %v3603
  %v3692 = vpop.f32.mrf.mxu0
  %v3693 = vadd.f32 0.0, %v3692
  %v3694 = vpop.f32.mrf.mxu0
  %v3695 = vadd.f32 0.0, %v3694
  %v3696 = vpop.f32.mrf.mxu0
  %v3697 = vpop.f32.mrf.mxu0
  %3698 = vdwg.mxu0
  %v3699 = vadd.f32 %v3472, %v3652
  %v3700 = vadd.f32 %v3473, %v3654
  %v3701 = vadd.f32 %v3474, %v3693
  %v3702 = vadd.f32 %v3475, %v3695
  %v3703 = vld [vmem:[%s0 + $0x2] sm:$0xff]
  %v3704 = vld [vmem:[%s0 + $0xa] sm:$0x3]
  %v3707 = vunpack.c.l.s4 1966171168
  %v3708 = vunpack.c.0.s8 %v3707
  %v3709 = vlaneseq
  %v3710 = vshrl.u32 %v3709, 7
  %v3711 = vsub.s32 %v3708, %v3710
  %v3712 = vrot.slane %v64, %v3711
  %v3713 = vcombine.high %v3712, %v3712
  %v3715 = vunpack.c.l.s4 1966171168
  %v3716 = vunpack.c.0.s8 %v3715
  %v3717 = vlaneseq
  %v3718 = vshrl.u32 %v3717, 7
  %v3719 = vsub.s32 %v3716, %v3718
  %v3720 = vrot.slane %v3712, %v3719
  %v3722 = vunpack.c.l.s4 1966171168
  %v3723 = vunpack.c.0.s8 %v3722
  %v3724 = vlaneseq
  %v3725 = vshrl.u32 %v3724, 7
  %v3726 = vsub.s32 %v3723, %v3725
  %v3727 = vrot.slane %v3713, %v3726
  %v3728 = vcombine.high %v3720, %v3720
  %v3729 = vcombine.high %v3727, %v3727
  %v3731 = vpack.i.b16 %v3720, %v3720
  %v3733 = vlaneseq
  %v3734 = vshrl.u32 %v3733, 7
  %v3735 = vsub.s32 0, %v3734
  %v3736 = vrot.slane %v3731, %v3735
  %v3738 = vpack.i.b16 %v3727, %v3727
  %v3740 = vlaneseq
  %v3741 = vshrl.u32 %v3740, 7
  %v3742 = vsub.s32 0, %v3741
  %v3743 = vrot.slane %v3738, %v3742
  %v3745 = vpack.i.b16 %v3728, %v3728
  %v3747 = vlaneseq
  %v3748 = vshrl.u32 %v3747, 7
  %v3749 = vsub.s32 0, %v3748
  %v3750 = vrot.slane %v3745, %v3749
  %v3752 = vpack.i.b16 %v3729, %v3729
  %v3754 = vlaneseq
  %v3755 = vshrl.u32 %v3754, 7
  %v3756 = vsub.s32 0, %v3755
  %v3757 = vrot.slane %v3752, %v3756
  %v3762 = vcombine.low %v3736, %v3743
  %v3763 = vcombine.low %v3750, %v3757
  %v3765 = vunpack.c.l.s4 1983009808
  %v3766 = vunpack.c.0.s8 %v3765
  %v3767 = vlaneseq
  %v3768 = vshrl.u32 %v3767, 7
  %v3769 = vsub.s32 %v3766, %v3768
  %v3770 = vrot.slane %v3762, %v3769
  %v3772 = vunpack.c.l.s4 1983009808
  %v3773 = vunpack.c.0.s8 %v3772
  %v3774 = vlaneseq
  %v3775 = vshrl.u32 %v3774, 7
  %v3776 = vsub.s32 %v3773, %v3775
  %v3777 = vrot.slane %v3763, %v3776
  %v3778 = vcombine.low %v3770, %v3777
  %3779 = vrot.lane.b32.xlu0 %v3778, 5
  %v3780 = vpop.permute.xlu0 %3779
  %v3781 = vrot.slane %v3780, 6
  %vm3782 = vcmask 39936
  %v3783 = vsel %vm3782, %v3781, %v3780
  %v3786 = vmul.bf16 %v3703, %v3783
  %v3787 = vmul.bf16 %v3704, %v3781
  %v3790 = vcombine.high %v3786, %v3786
  %v3792 = vunpack.c.l.s4 1983009808
  %v3793 = vunpack.c.0.s8 %v3792
  %v3794 = vlaneseq
  %v3795 = vshrl.u32 %v3794, 7
  %v3796 = vsub.s32 %v3793, %v3795
  %v3797 = vrot.slane %v3786, %v3796
  %v3799 = vunpack.c.l.s4 1983009808
  %v3800 = vunpack.c.0.s8 %v3799
  %v3801 = vlaneseq
  %v3802 = vshrl.u32 %v3801, 7
  %v3803 = vsub.s32 %v3800, %v3802
  %v3804 = vrot.slane %v3790, %v3803
  %v3805 = vcombine.high %v3797, %v3797
  %v3806 = vcombine.high %v3804, %v3804
  %v3808 = vunpack.c.l.s4 1983009808
  %v3809 = vunpack.c.0.s8 %v3808
  %v3810 = vlaneseq
  %v3811 = vshrl.u32 %v3810, 7
  %v3812 = vsub.s32 %v3809, %v3811
  %v3813 = vrot.slane %v3787, %v3812
  %3814 = vrot.lane.b32.xlu0 %v3797, 123
  %v3815 = vpop.permute.xlu0 %3814
  %3816 = vrot.lane.b32.xlu0 %v3805, 123
  %v3817 = vpop.permute.xlu0 %3816
  %3818 = vrot.lane.b32.xlu0 %v3804, 123
  %v3819 = vpop.permute.xlu0 %3818
  %3820 = vrot.lane.b32.xlu0 %v3806, 123
  %v3821 = vpop.permute.xlu0 %3820
  %3822 = vrot.lane.b32.xlu0 %v3813, 123
  %v3823 = vpop.permute.xlu0 %3822
  %vm3824 = vcmask 1006592
  %v3825 = vsel %vm3824, %v3815, %v3817
  %v3826 = vsel %vm3824, %v3817, %v3819
  %v3827 = vsel %vm3824, %v3819, %v3821
  %v3828 = vsel %vm3824, %v3821, %v3823
  %v3830 = vsel %vm284, %v37, 0
  %v3833 = vsel %vm288, %v3825, 0
  %v3836 = vsel %vm288, %v3826, 0
  %v3839 = vsel %vm288, %v3827, 0
  %v3842 = vsel %vm288, %v3828, 0
  %3844 = vmatprep.subr.bf16.mxu0 0
  %3845 = vmatpush1.bf16.msra.mxu0 0
  %3846 = vmatprep.subr.bf16.mxu0 0
  %3847 = vmatpush1.bf16.msra.mxu0 0
  %3848 = vmatprep.subr.bf16.mxu0 0
  %3849 = vmatpush1.bf16.msra.mxu0 0
  %3850 = vmatprep.subr.bf16.mxu0 0
  %3851 = vmatpush1.bf16.msra.mxu0 0
  %3852 = vmatprep.subr.bf16.mxu0 0
  %3853 = vmatpush1.bf16.msra.mxu0 0
  %3854 = vmatprep.subr.bf16.mxu0 0
  %3855 = vmatpush1.bf16.msra.mxu0 0
  %3856 = vmatprep.subr.bf16.mxu0 0
  %3857 = vmatpush1.bf16.msra.mxu0 0
  %3858 = vmatprep.subr.bf16.mxu0 %v3836
  %3859 = vmatpush1.bf16.msra.mxu0 %v3833
  %3860 = vmatprep.subr.bf16.mxu0 0
  %3861 = vmatpush2.bf16.msra.mxu0 0
  %3862 = vmatprep.subr.bf16.mxu0 0
  %3863 = vmatpush2.bf16.msra.mxu0 0
  %3864 = vmatprep.subr.bf16.mxu0 0
  %3865 = vmatpush2.bf16.msra.mxu0 0
  %3866 = vmatprep.subr.bf16.mxu0 0
  %3867 = vmatpush2.bf16.msra.mxu0 0
  %3868 = vmatprep.subr.bf16.mxu0 0
  %3869 = vmatpush2.bf16.msra.mxu0 0
  %3870 = vmatprep.subr.bf16.mxu0 0
  %3871 = vmatpush2.bf16.msra.mxu0 0
  %3872 = vmatprep.subr.bf16.mxu0 0
  %3873 = vmatpush2.bf16.msra.mxu0 0
  %3874 = vmatprep.subr.bf16.mxu0 0
  %3875 = vmatpush2.bf16.msra.mxu0 0
  %3876 = vmatprep.mubr.bf16.mxu0 0
  %3877 = vmatmul.mubr.bf16.gmra.mxu0 %v3830
  %v3878 = vpop.f32.mrf.mxu0
  %v3879 = vadd.f32 0.0, %v3878
  %v3880 = vpop.f32.mrf.mxu0
  %v3881 = vadd.f32 0.0, %v3880
  %v3882 = vpop.f32.mrf.mxu0
  %v3883 = vpop.f32.mrf.mxu0
  %3884 = vdwg.mxu0
  %3885 = vmatprep.subr.bf16.mxu0 0
  %3886 = vmatpush1.bf16.msra.mxu0 0
  %3887 = vmatprep.subr.bf16.mxu0 0
  %3888 = vmatpush1.bf16.msra.mxu0 0
  %3889 = vmatprep.subr.bf16.mxu0 0
  %3890 = vmatpush1.bf16.msra.mxu0 0
  %3891 = vmatprep.subr.bf16.mxu0 0
  %3892 = vmatpush1.bf16.msra.mxu0 0
  %3893 = vmatprep.subr.bf16.mxu0 0
  %3894 = vmatpush1.bf16.msra.mxu0 0
  %3895 = vmatprep.subr.bf16.mxu0 0
  %3896 = vmatpush1.bf16.msra.mxu0 0
  %3897 = vmatprep.subr.bf16.mxu0 0
  %3898 = vmatpush1.bf16.msra.mxu0 0
  %3899 = vmatprep.subr.bf16.mxu0 %v3842
  %3900 = vmatpush1.bf16.msra.mxu0 %v3839
  %3901 = vmatprep.subr.bf16.mxu0 0
  %3902 = vmatpush2.bf16.msra.mxu0 0
  %3903 = vmatprep.subr.bf16.mxu0 0
  %3904 = vmatpush2.bf16.msra.mxu0 0
  %3905 = vmatprep.subr.bf16.mxu0 0
  %3906 = vmatpush2.bf16.msra.mxu0 0
  %3907 = vmatprep.subr.bf16.mxu0 0
  %3908 = vmatpush2.bf16.msra.mxu0 0
  %3909 = vmatprep.subr.bf16.mxu0 0
  %3910 = vmatpush2.bf16.msra.mxu0 0
  %3911 = vmatprep.subr.bf16.mxu0 0
  %3912 = vmatpush2.bf16.msra.mxu0 0
  %3913 = vmatprep.subr.bf16.mxu0 0
  %3914 = vmatpush2.bf16.msra.mxu0 0
  %3915 = vmatprep.subr.bf16.mxu0 0
  %3916 = vmatpush2.bf16.msra.mxu0 0
  %3917 = vmatprep.mubr.bf16.mxu0 0
  %3918 = vmatmul.mubr.bf16.gmra.mxu0 %v3830
  %v3919 = vpop.f32.mrf.mxu0
  %v3920 = vadd.f32 0.0, %v3919
  %v3921 = vpop.f32.mrf.mxu0
  %v3922 = vadd.f32 0.0, %v3921
  %v3923 = vpop.f32.mrf.mxu0
  %v3924 = vpop.f32.mrf.mxu0
  %3925 = vdwg.mxu0
  %v3926 = vadd.f32 %v3699, %v3879
  %v3927 = vadd.f32 %v3700, %v3881
  %v3928 = vadd.f32 %v3701, %v3920
  %v3929 = vadd.f32 %v3702, %v3922
  %v3930 = vld [vmem:[%s0 + $0x2] sm:$0xff]
  %v3931 = vld [vmem:[%s0 + $0xa] sm:$0x3]
  %v3934 = vunpack.c.l.s4 1966171168
  %v3935 = vunpack.c.0.s8 %v3934
  %v3936 = vlaneseq
  %v3937 = vshrl.u32 %v3936, 7
  %v3938 = vsub.s32 %v3935, %v3937
  %v3939 = vrot.slane %v65, %v3938
  %v3940 = vcombine.high %v3939, %v3939
  %v3942 = vunpack.c.l.s4 1966171168
  %v3943 = vunpack.c.0.s8 %v3942
  %v3944 = vlaneseq
  %v3945 = vshrl.u32 %v3944, 7
  %v3946 = vsub.s32 %v3943, %v3945
  %v3947 = vrot.slane %v3939, %v3946
  %v3949 = vunpack.c.l.s4 1966171168
  %v3950 = vunpack.c.0.s8 %v3949
  %v3951 = vlaneseq
  %v3952 = vshrl.u32 %v3951, 7
  %v3953 = vsub.s32 %v3950, %v3952
  %v3954 = vrot.slane %v3940, %v3953
  %v3955 = vcombine.high %v3947, %v3947
  %v3956 = vcombine.high %v3954, %v3954
  %v3958 = vpack.i.b16 %v3947, %v3947
  %v3960 = vlaneseq
  %v3961 = vshrl.u32 %v3960, 7
  %v3962 = vsub.s32 0, %v3961
  %v3963 = vrot.slane %v3958, %v3962
  %v3965 = vpack.i.b16 %v3954, %v3954
  %v3967 = vlaneseq
  %v3968 = vshrl.u32 %v3967, 7
  %v3969 = vsub.s32 0, %v3968
  %v3970 = vrot.slane %v3965, %v3969
  %v3972 = vpack.i.b16 %v3955, %v3955
  %v3974 = vlaneseq
  %v3975 = vshrl.u32 %v3974, 7
  %v3976 = vsub.s32 0, %v3975
  %v3977 = vrot.slane %v3972, %v3976
  %v3979 = vpack.i.b16 %v3956, %v3956
  %v3981 = vlaneseq
  %v3982 = vshrl.u32 %v3981, 7
  %v3983 = vsub.s32 0, %v3982
  %v3984 = vrot.slane %v3979, %v3983
  %v3989 = vcombine.low %v3963, %v3970
  %v3990 = vcombine.low %v3977, %v3984
  %v3992 = vunpack.c.l.s4 1983009808
  %v3993 = vunpack.c.0.s8 %v3992
  %v3994 = vlaneseq
  %v3995 = vshrl.u32 %v3994, 7
  %v3996 = vsub.s32 %v3993, %v3995
  %v3997 = vrot.slane %v3989, %v3996
  %v3999 = vunpack.c.l.s4 1983009808
  %v4000 = vunpack.c.0.s8 %v3999
  %v4001 = vlaneseq
  %v4002 = vshrl.u32 %v4001, 7
  %v4003 = vsub.s32 %v4000, %v4002
  %v4004 = vrot.slane %v3990, %v4003
  %v4005 = vcombine.low %v3997, %v4004
  %4006 = vrot.lane.b32.xlu0 %v4005, 8
  %v4007 = vpop.permute.xlu0 %4006
  %v4008 = vrot.slane %v4007, 6
  %vm4009 = vcmask 64512
  %v4010 = vsel %vm4009, %v4008, %v4007
  %v4013 = vmul.bf16 %v3930, %v4010
  %v4014 = vmul.bf16 %v3931, %v4008
  %v4017 = vcombine.high %v4013, %v4013
  %v4019 = vunpack.c.l.s4 1983009808
  %v4020 = vunpack.c.0.s8 %v4019
  %v4021 = vlaneseq
  %v4022 = vshrl.u32 %v4021, 7
  %v4023 = vsub.s32 %v4020, %v4022
  %v4024 = vrot.slane %v4013, %v4023
  %v4026 = vunpack.c.l.s4 1983009808
  %v4027 = vunpack.c.0.s8 %v4026
  %v4028 = vlaneseq
  %v4029 = vshrl.u32 %v4028, 7
  %v4030 = vsub.s32 %v4027, %v4029
  %v4031 = vrot.slane %v4017, %v4030
  %v4032 = vcombine.high %v4024, %v4024
  %v4033 = vcombine.high %v4031, %v4031
  %v4035 = vunpack.c.l.s4 1983009808
  %v4036 = vunpack.c.0.s8 %v4035
  %v4037 = vlaneseq
  %v4038 = vshrl.u32 %v4037, 7
  %v4039 = vsub.s32 %v4036, %v4038
  %v4040 = vrot.slane %v4014, %v4039
  %4041 = vrot.lane.b32.xlu0 %v4024, 120
  %v4042 = vpop.permute.xlu0 %4041
  %4043 = vrot.lane.b32.xlu0 %v4032, 120
  %v4044 = vpop.permute.xlu0 %4043
  %4045 = vrot.lane.b32.xlu0 %v4031, 120
  %v4046 = vpop.permute.xlu0 %4045
  %4047 = vrot.lane.b32.xlu0 %v4033, 120
  %v4048 = vpop.permute.xlu0 %4047
  %4049 = vrot.lane.b32.xlu0 %v4040, 120
  %v4050 = vpop.permute.xlu0 %4049
  %vm4051 = vcmask 982016
  %v4052 = vsel %vm4051, %v4042, %v4044
  %v4053 = vsel %vm4051, %v4044, %v4046
  %v4054 = vsel %vm4051, %v4046, %v4048
  %v4055 = vsel %vm4051, %v4048, %v4050
  %v4057 = vsel %vm284, %v38, 0
  %v4060 = vsel %vm288, %v4052, 0
  %v4063 = vsel %vm288, %v4053, 0
  %v4066 = vsel %vm288, %v4054, 0
  %v4069 = vsel %vm288, %v4055, 0
  %4071 = vmatprep.subr.bf16.mxu0 0
  %4072 = vmatpush1.bf16.msra.mxu0 0
  %4073 = vmatprep.subr.bf16.mxu0 0
  %4074 = vmatpush1.bf16.msra.mxu0 0
  %4075 = vmatprep.subr.bf16.mxu0 0
  %4076 = vmatpush1.bf16.msra.mxu0 0
  %4077 = vmatprep.subr.bf16.mxu0 0
  %4078 = vmatpush1.bf16.msra.mxu0 0
  %4079 = vmatprep.subr.bf16.mxu0 0
  %4080 = vmatpush1.bf16.msra.mxu0 0
  %4081 = vmatprep.subr.bf16.mxu0 0
  %4082 = vmatpush1.bf16.msra.mxu0 0
  %4083 = vmatprep.subr.bf16.mxu0 0
  %4084 = vmatpush1.bf16.msra.mxu0 0
  %4085 = vmatprep.subr.bf16.mxu0 %v4063
  %4086 = vmatpush1.bf16.msra.mxu0 %v4060
  %4087 = vmatprep.subr.bf16.mxu0 0
  %4088 = vmatpush2.bf16.msra.mxu0 0
  %4089 = vmatprep.subr.bf16.mxu0 0
  %4090 = vmatpush2.bf16.msra.mxu0 0
  %4091 = vmatprep.subr.bf16.mxu0 0
  %4092 = vmatpush2.bf16.msra.mxu0 0
  %4093 = vmatprep.subr.bf16.mxu0 0
  %4094 = vmatpush2.bf16.msra.mxu0 0
  %4095 = vmatprep.subr.bf16.mxu0 0
  %4096 = vmatpush2.bf16.msra.mxu0 0
  %4097 = vmatprep.subr.bf16.mxu0 0
  %4098 = vmatpush2.bf16.msra.mxu0 0
  %4099 = vmatprep.subr.bf16.mxu0 0
  %4100 = vmatpush2.bf16.msra.mxu0 0
  %4101 = vmatprep.subr.bf16.mxu0 0
  %4102 = vmatpush2.bf16.msra.mxu0 0
  %4103 = vmatprep.mubr.bf16.mxu0 0
  %4104 = vmatmul.mubr.bf16.gmra.mxu0 %v4057
  %v4105 = vpop.f32.mrf.mxu0
  %v4106 = vadd.f32 0.0, %v4105
  %v4107 = vpop.f32.mrf.mxu0
  %v4108 = vadd.f32 0.0, %v4107
  %v4109 = vpop.f32.mrf.mxu0
  %v4110 = vpop.f32.mrf.mxu0
  %4111 = vdwg.mxu0
  %4112 = vmatprep.subr.bf16.mxu0 0
  %4113 = vmatpush1.bf16.msra.mxu0 0
  %4114 = vmatprep.subr.bf16.mxu0 0
  %4115 = vmatpush1.bf16.msra.mxu0 0
  %4116 = vmatprep.subr.bf16.mxu0 0
  %4117 = vmatpush1.bf16.msra.mxu0 0
  %4118 = vmatprep.subr.bf16.mxu0 0
  %4119 = vmatpush1.bf16.msra.mxu0 0
  %4120 = vmatprep.subr.bf16.mxu0 0
  %4121 = vmatpush1.bf16.msra.mxu0 0
  %4122 = vmatprep.subr.bf16.mxu0 0
  %4123 = vmatpush1.bf16.msra.mxu0 0
  %4124 = vmatprep.subr.bf16.mxu0 0
  %4125 = vmatpush1.bf16.msra.mxu0 0
  %4126 = vmatprep.subr.bf16.mxu0 %v4069
  %4127 = vmatpush1.bf16.msra.mxu0 %v4066
  %4128 = vmatprep.subr.bf16.mxu0 0
  %4129 = vmatpush2.bf16.msra.mxu0 0
  %4130 = vmatprep.subr.bf16.mxu0 0
  %4131 = vmatpush2.bf16.msra.mxu0 0
  %4132 = vmatprep.subr.bf16.mxu0 0
  %4133 = vmatpush2.bf16.msra.mxu0 0
  %4134 = vmatprep.subr.bf16.mxu0 0
  %4135 = vmatpush2.bf16.msra.mxu0 0
  %4136 = vmatprep.subr.bf16.mxu0 0
  %4137 = vmatpush2.bf16.msra.mxu0 0
  %4138 = vmatprep.subr.bf16.mxu0 0
  %4139 = vmatpush2.bf16.msra.mxu0 0
  %4140 = vmatprep.subr.bf16.mxu0 0
  %4141 = vmatpush2.bf16.msra.mxu0 0
  %4142 = vmatprep.subr.bf16.mxu0 0
  %4143 = vmatpush2.bf16.msra.mxu0 0
  %4144 = vmatprep.mubr.bf16.mxu0 0
  %4145 = vmatmul.mubr.bf16.gmra.mxu0 %v4057
  %v4146 = vpop.f32.mrf.mxu0
  %v4147 = vadd.f32 0.0, %v4146
  %v4148 = vpop.f32.mrf.mxu0
  %v4149 = vadd.f32 0.0, %v4148
  %v4150 = vpop.f32.mrf.mxu0
  %v4151 = vpop.f32.mrf.mxu0
  %4152 = vdwg.mxu0
  %v4153 = vadd.f32 %v3926, %v4106
  %v4154 = vadd.f32 %v3927, %v4108
  %v4155 = vadd.f32 %v3928, %v4147
  %v4156 = vadd.f32 %v3929, %v4149
  %s4157 = scalar_lea.vmem %s3, 4
  %v4158 = vld [vmem:[%s4157] sm:$0xf]
  %4160 = vset.pattern.permute.xlu0 0
  %4161 = vperm.xlu0 %4160, %v4158
  %v4162 = vpop.permute.xlu0 %4161
  %v4164 = vmul.f32 %v4153, %v4162
  %v4165 = vmul.f32 %v4154, %v4162
  %v4166 = vmul.f32 %v4155, %v4162
  %v4167 = vmul.f32 %v4156, %v4162
  %s4168 = scalar_lea.vmem %s4, 4
  %v4169 = vld [vmem:[%s4168] sm:$0xf]
  %4171 = vset.pattern.permute.xlu0 0
  %4172 = vperm.xlu0 %4171, %v4169
  %v4173 = vpop.permute.xlu0 %4172
  %v4175 = vadd.f32 %v4164, %v4173
  %v4176 = vadd.f32 %v4165, %v4173
  %v4177 = vadd.f32 %v4166, %v4173
  %v4178 = vadd.f32 %v4167, %v4173
  %v4179 = vld [vmem:[%s0] sm:$0xff]
  %v4182 = vunpack.c.l.s4 1966171168
  %v4183 = vunpack.c.0.s8 %v4182
  %v4184 = vlaneseq
  %v4185 = vshrl.u32 %v4184, 7
  %v4186 = vsub.s32 %v4183, %v4185
  %v4187 = vrot.slane %v66, %v4186
  %v4188 = vcombine.high %v4187, %v4187
  %v4190 = vunpack.c.l.s4 1966171168
  %v4191 = vunpack.c.0.s8 %v4190
  %v4192 = vlaneseq
  %v4193 = vshrl.u32 %v4192, 7
  %v4194 = vsub.s32 %v4191, %v4193
  %v4195 = vrot.slane %v4187, %v4194
  %v4197 = vunpack.c.l.s4 1966171168
  %v4198 = vunpack.c.0.s8 %v4197
  %v4199 = vlaneseq
  %v4200 = vshrl.u32 %v4199, 7
  %v4201 = vsub.s32 %v4198, %v4200
  %v4202 = vrot.slane %v4188, %v4201
  %v4203 = vcombine.high %v4195, %v4195
  %v4204 = vcombine.high %v4202, %v4202
  %v4206 = vpack.i.b16 %v4195, %v4195
  %v4208 = vlaneseq
  %v4209 = vshrl.u32 %v4208, 7
  %v4210 = vsub.s32 0, %v4209
  %v4211 = vrot.slane %v4206, %v4210
  %v4213 = vpack.i.b16 %v4202, %v4202
  %v4215 = vlaneseq
  %v4216 = vshrl.u32 %v4215, 7
  %v4217 = vsub.s32 0, %v4216
  %v4218 = vrot.slane %v4213, %v4217
  %v4220 = vpack.i.b16 %v4203, %v4203
  %v4222 = vlaneseq
  %v4223 = vshrl.u32 %v4222, 7
  %v4224 = vsub.s32 0, %v4223
  %v4225 = vrot.slane %v4220, %v4224
  %v4227 = vpack.i.b16 %v4204, %v4204
  %v4229 = vlaneseq
  %v4230 = vshrl.u32 %v4229, 7
  %v4231 = vsub.s32 0, %v4230
  %v4232 = vrot.slane %v4227, %v4231
  %v4237 = vcombine.low %v4211, %v4218
  %v4238 = vcombine.low %v4225, %v4232
  %v4240 = vunpack.c.l.s4 1983009808
  %v4241 = vunpack.c.0.s8 %v4240
  %v4242 = vlaneseq
  %v4243 = vshrl.u32 %v4242, 7
  %v4244 = vsub.s32 %v4241, %v4243
  %v4245 = vrot.slane %v4237, %v4244
  %v4247 = vunpack.c.l.s4 1983009808
  %v4248 = vunpack.c.0.s8 %v4247
  %v4249 = vlaneseq
  %v4250 = vshrl.u32 %v4249, 7
  %v4251 = vsub.s32 %v4248, %v4250
  %v4252 = vrot.slane %v4238, %v4251
  %v4253 = vcombine.low %v4245, %v4252
  %v4255 = vmul.bf16 %v4179, %v4253
  %v4256 = vld [vmem:[%s0 + $0x8] sm:$0x3]
  %v4259 = vunpack.c.l.s4 1966171168
  %v4260 = vunpack.c.0.s8 %v4259
  %v4261 = vlaneseq
  %v4262 = vshrl.u32 %v4261, 7
  %v4263 = vsub.s32 %v4260, %v4262
  %v4264 = vrot.slane %v67, %v4263
  %v4265 = vcombine.high %v4264, %v4264
  %v4267 = vunpack.c.l.s4 1966171168
  %v4268 = vunpack.c.0.s8 %v4267
  %v4269 = vlaneseq
  %v4270 = vshrl.u32 %v4269, 7
  %v4271 = vsub.s32 %v4268, %v4270
  %v4272 = vrot.slane %v4264, %v4271
  %v4274 = vunpack.c.l.s4 1966171168
  %v4275 = vunpack.c.0.s8 %v4274
  %v4276 = vlaneseq
  %v4277 = vshrl.u32 %v4276, 7
  %v4278 = vsub.s32 %v4275, %v4277
  %v4279 = vrot.slane %v4265, %v4278
  %v4280 = vcombine.high %v4272, %v4272
  %v4281 = vcombine.high %v4279, %v4279
  %v4283 = vpack.i.b16 %v4272, %v4272
  %v4285 = vlaneseq
  %v4286 = vshrl.u32 %v4285, 7
  %v4287 = vsub.s32 0, %v4286
  %v4288 = vrot.slane %v4283, %v4287
  %v4290 = vpack.i.b16 %v4279, %v4279
  %v4292 = vlaneseq
  %v4293 = vshrl.u32 %v4292, 7
  %v4294 = vsub.s32 0, %v4293
  %v4295 = vrot.slane %v4290, %v4294
  %v4297 = vpack.i.b16 %v4280, %v4280
  %v4299 = vlaneseq
  %v4300 = vshrl.u32 %v4299, 7
  %v4301 = vsub.s32 0, %v4300
  %v4302 = vrot.slane %v4297, %v4301
  %v4304 = vpack.i.b16 %v4281, %v4281
  %v4306 = vlaneseq
  %v4307 = vshrl.u32 %v4306, 7
  %v4308 = vsub.s32 0, %v4307
  %v4309 = vrot.slane %v4304, %v4308
  %v4314 = vcombine.low %v4288, %v4295
  %v4315 = vcombine.low %v4302, %v4309
  %v4317 = vunpack.c.l.s4 1983009808
  %v4318 = vunpack.c.0.s8 %v4317
  %v4319 = vlaneseq
  %v4320 = vshrl.u32 %v4319, 7
  %v4321 = vsub.s32 %v4318, %v4320
  %v4322 = vrot.slane %v4314, %v4321
  %v4324 = vunpack.c.l.s4 1983009808
  %v4325 = vunpack.c.0.s8 %v4324
  %v4326 = vlaneseq
  %v4327 = vshrl.u32 %v4326, 7
  %v4328 = vsub.s32 %v4325, %v4327
  %v4329 = vrot.slane %v4315, %v4328
  %v4330 = vcombine.low %v4322, %v4329
  %4331 = vrot.lane.b32.xlu0 %v4330, 5
  %v4332 = vpop.permute.xlu0 %4331
  %v4333 = vrot.slane %v4332, 6
  %v4334 = vsel %vm3782, %v4333, %v4332
  %v4337 = vmul.bf16 %v4179, %v4334
  %v4338 = vmul.bf16 %v4256, %v4333
  %v4341 = vcombine.high %v4337, %v4337
  %v4343 = vunpack.c.l.s4 1983009808
  %v4344 = vunpack.c.0.s8 %v4343
  %v4345 = vlaneseq
  %v4346 = vshrl.u32 %v4345, 7
  %v4347 = vsub.s32 %v4344, %v4346
  %v4348 = vrot.slane %v4337, %v4347
  %v4350 = vunpack.c.l.s4 1983009808
  %v4351 = vunpack.c.0.s8 %v4350
  %v4352 = vlaneseq
  %v4353 = vshrl.u32 %v4352, 7
  %v4354 = vsub.s32 %v4351, %v4353
  %v4355 = vrot.slane %v4341, %v4354
  %v4356 = vcombine.high %v4348, %v4348
  %v4357 = vcombine.high %v4355, %v4355
  %v4359 = vunpack.c.l.s4 1983009808
  %v4360 = vunpack.c.0.s8 %v4359
  %v4361 = vlaneseq
  %v4362 = vshrl.u32 %v4361, 7
  %v4363 = vsub.s32 %v4360, %v4362
  %v4364 = vrot.slane %v4338, %v4363
  %4365 = vrot.lane.b32.xlu0 %v4348, 123
  %v4366 = vpop.permute.xlu0 %4365
  %4367 = vrot.lane.b32.xlu0 %v4356, 123
  %v4368 = vpop.permute.xlu0 %4367
  %4369 = vrot.lane.b32.xlu0 %v4355, 123
  %v4370 = vpop.permute.xlu0 %4369
  %4371 = vrot.lane.b32.xlu0 %v4357, 123
  %v4372 = vpop.permute.xlu0 %4371
  %4373 = vrot.lane.b32.xlu0 %v4364, 123
  %v4374 = vpop.permute.xlu0 %4373
  %v4375 = vsel %vm3824, %v4366, %v4368
  %v4376 = vsel %vm3824, %v4368, %v4370
  %v4377 = vsel %vm3824, %v4370, %v4372
  %v4378 = vsel %vm3824, %v4372, %v4374
  %v4380 = vsel %vm284, %v40, 0
  %v4383 = vsel %vm288, %v4375, 0
  %v4386 = vsel %vm288, %v4376, 0
  %v4389 = vsel %vm288, %v4377, 0
  %v4392 = vsel %vm288, %v4378, 0
  %4394 = vmatprep.subr.bf16.mxu0 0
  %4395 = vmatpush1.bf16.msra.mxu0 0
  %4396 = vmatprep.subr.bf16.mxu0 0
  %4397 = vmatpush1.bf16.msra.mxu0 0
  %4398 = vmatprep.subr.bf16.mxu0 0
  %4399 = vmatpush1.bf16.msra.mxu0 0
  %4400 = vmatprep.subr.bf16.mxu0 0
  %4401 = vmatpush1.bf16.msra.mxu0 0
  %4402 = vmatprep.subr.bf16.mxu0 0
  %4403 = vmatpush1.bf16.msra.mxu0 0
  %4404 = vmatprep.subr.bf16.mxu0 0
  %4405 = vmatpush1.bf16.msra.mxu0 0
  %4406 = vmatprep.subr.bf16.mxu0 0
  %4407 = vmatpush1.bf16.msra.mxu0 0
  %4408 = vmatprep.subr.bf16.mxu0 %v4386
  %4409 = vmatpush1.bf16.msra.mxu0 %v4383
  %4410 = vmatprep.subr.bf16.mxu0 0
  %4411 = vmatpush2.bf16.msra.mxu0 0
  %4412 = vmatprep.subr.bf16.mxu0 0
  %4413 = vmatpush2.bf16.msra.mxu0 0
  %4414 = vmatprep.subr.bf16.mxu0 0
  %4415 = vmatpush2.bf16.msra.mxu0 0
  %4416 = vmatprep.subr.bf16.mxu0 0
  %4417 = vmatpush2.bf16.msra.mxu0 0
  %4418 = vmatprep.subr.bf16.mxu0 0
  %4419 = vmatpush2.bf16.msra.mxu0 0
  %4420 = vmatprep.subr.bf16.mxu0 0
  %4421 = vmatpush2.bf16.msra.mxu0 0
  %4422 = vmatprep.subr.bf16.mxu0 0
  %4423 = vmatpush2.bf16.msra.mxu0 0
  %4424 = vmatprep.subr.bf16.mxu0 0
  %4425 = vmatpush2.bf16.msra.mxu0 0
  %4426 = vmatprep.mubr.bf16.mxu0 0
  %4427 = vmatmul.mubr.bf16.gmra.mxu0 %v4380
  %v4428 = vpop.f32.mrf.mxu0
  %v4429 = vadd.f32 0.0, %v4428
  %v4430 = vpop.f32.mrf.mxu0
  %v4431 = vadd.f32 0.0, %v4430
  %v4432 = vpop.f32.mrf.mxu0
  %v4433 = vpop.f32.mrf.mxu0
  %4434 = vdwg.mxu0
  %4435 = vmatprep.subr.bf16.mxu0 0
  %4436 = vmatpush1.bf16.msra.mxu0 0
  %4437 = vmatprep.subr.bf16.mxu0 0
  %4438 = vmatpush1.bf16.msra.mxu0 0
  %4439 = vmatprep.subr.bf16.mxu0 0
  %4440 = vmatpush1.bf16.msra.mxu0 0
  %4441 = vmatprep.subr.bf16.mxu0 0
  %4442 = vmatpush1.bf16.msra.mxu0 0
  %4443 = vmatprep.subr.bf16.mxu0 0
  %4444 = vmatpush1.bf16.msra.mxu0 0
  %4445 = vmatprep.subr.bf16.mxu0 0
  %4446 = vmatpush1.bf16.msra.mxu0 0
  %4447 = vmatprep.subr.bf16.mxu0 0
  %4448 = vmatpush1.bf16.msra.mxu0 0
  %4449 = vmatprep.subr.bf16.mxu0 %v4392
  %4450 = vmatpush1.bf16.msra.mxu0 %v4389
  %4451 = vmatprep.subr.bf16.mxu0 0
  %4452 = vmatpush2.bf16.msra.mxu0 0
  %4453 = vmatprep.subr.bf16.mxu0 0
  %4454 = vmatpush2.bf16.msra.mxu0 0
  %4455 = vmatprep.subr.bf16.mxu0 0
  %4456 = vmatpush2.bf16.msra.mxu0 0
  %4457 = vmatprep.subr.bf16.mxu0 0
  %4458 = vmatpush2.bf16.msra.mxu0 0
  %4459 = vmatprep.subr.bf16.mxu0 0
  %4460 = vmatpush2.bf16.msra.mxu0 0
  %4461 = vmatprep.subr.bf16.mxu0 0
  %4462 = vmatpush2.bf16.msra.mxu0 0
  %4463 = vmatprep.subr.bf16.mxu0 0
  %4464 = vmatpush2.bf16.msra.mxu0 0
  %4465 = vmatprep.subr.bf16.mxu0 0
  %4466 = vmatpush2.bf16.msra.mxu0 0
  %4467 = vmatprep.mubr.bf16.mxu0 0
  %4468 = vmatmul.mubr.bf16.gmra.mxu0 %v4380
  %v4469 = vpop.f32.mrf.mxu0
  %v4470 = vadd.f32 0.0, %v4469
  %v4471 = vpop.f32.mrf.mxu0
  %v4472 = vadd.f32 0.0, %v4471
  %v4473 = vpop.f32.mrf.mxu0
  %v4474 = vpop.f32.mrf.mxu0
  %4475 = vdwg.mxu0
  %v4477 = vcombine.high %v4255, %v4255
  %v4479 = vunpack.c.l.s4 1983009808
  %v4480 = vunpack.c.0.s8 %v4479
  %v4481 = vlaneseq
  %v4482 = vshrl.u32 %v4481, 7
  %v4483 = vsub.s32 %v4480, %v4482
  %v4484 = vrot.slane %v4255, %v4483
  %v4486 = vunpack.c.l.s4 1983009808
  %v4487 = vunpack.c.0.s8 %v4486
  %v4488 = vlaneseq
  %v4489 = vshrl.u32 %v4488, 7
  %v4490 = vsub.s32 %v4487, %v4489
  %v4491 = vrot.slane %v4477, %v4490
  %v4492 = vcombine.high %v4484, %v4484
  %v4493 = vcombine.high %v4491, %v4491
  %v4495 = vsel %vm284, %v39, 0
  %v4498 = vsel %vm288, %v4484, 0
  %v4501 = vsel %vm288, %v4492, 0
  %v4504 = vsel %vm288, %v4491, 0
  %v4507 = vsel %vm288, %v4493, 0
  %4509 = vmatprep.subr.bf16.mxu0 0
  %4510 = vmatpush1.bf16.msra.mxu0 0
  %4511 = vmatprep.subr.bf16.mxu0 0
  %4512 = vmatpush1.bf16.msra.mxu0 0
  %4513 = vmatprep.subr.bf16.mxu0 0
  %4514 = vmatpush1.bf16.msra.mxu0 0
  %4515 = vmatprep.subr.bf16.mxu0 0
  %4516 = vmatpush1.bf16.msra.mxu0 0
  %4517 = vmatprep.subr.bf16.mxu0 0
  %4518 = vmatpush1.bf16.msra.mxu0 0
  %4519 = vmatprep.subr.bf16.mxu0 0
  %4520 = vmatpush1.bf16.msra.mxu0 0
  %4521 = vmatprep.subr.bf16.mxu0 0
  %4522 = vmatpush1.bf16.msra.mxu0 0
  %4523 = vmatprep.subr.bf16.mxu0 %v4501
  %4524 = vmatpush1.bf16.msra.mxu0 %v4498
  %4525 = vmatprep.subr.bf16.mxu0 0
  %4526 = vmatpush2.bf16.msra.mxu0 0
  %4527 = vmatprep.subr.bf16.mxu0 0
  %4528 = vmatpush2.bf16.msra.mxu0 0
  %4529 = vmatprep.subr.bf16.mxu0 0
  %4530 = vmatpush2.bf16.msra.mxu0 0
  %4531 = vmatprep.subr.bf16.mxu0 0
  %4532 = vmatpush2.bf16.msra.mxu0 0
  %4533 = vmatprep.subr.bf16.mxu0 0
  %4534 = vmatpush2.bf16.msra.mxu0 0
  %4535 = vmatprep.subr.bf16.mxu0 0
  %4536 = vmatpush2.bf16.msra.mxu0 0
  %4537 = vmatprep.subr.bf16.mxu0 0
  %4538 = vmatpush2.bf16.msra.mxu0 0
  %4539 = vmatprep.subr.bf16.mxu0 0
  %4540 = vmatpush2.bf16.msra.mxu0 0
  %4541 = vmatprep.mubr.bf16.mxu0 0
  %4542 = vmatmul.mubr.bf16.gmra.mxu0 %v4495
  %v4543 = vpop.f32.mrf.mxu0
  %v4544 = vadd.f32 %v4429, %v4543
  %v4545 = vpop.f32.mrf.mxu0
  %v4546 = vadd.f32 %v4431, %v4545
  %v4547 = vpop.f32.mrf.mxu0
  %v4548 = vpop.f32.mrf.mxu0
  %4549 = vdwg.mxu0
  %4550 = vmatprep.subr.bf16.mxu0 0
  %4551 = vmatpush1.bf16.msra.mxu0 0
  %4552 = vmatprep.subr.bf16.mxu0 0
  %4553 = vmatpush1.bf16.msra.mxu0 0
  %4554 = vmatprep.subr.bf16.mxu0 0
  %4555 = vmatpush1.bf16.msra.mxu0 0
  %4556 = vmatprep.subr.bf16.mxu0 0
  %4557 = vmatpush1.bf16.msra.mxu0 0
  %4558 = vmatprep.subr.bf16.mxu0 0
  %4559 = vmatpush1.bf16.msra.mxu0 0
  %4560 = vmatprep.subr.bf16.mxu0 0
  %4561 = vmatpush1.bf16.msra.mxu0 0
  %4562 = vmatprep.subr.bf16.mxu0 0
  %4563 = vmatpush1.bf16.msra.mxu0 0
  %4564 = vmatprep.subr.bf16.mxu0 %v4507
  %4565 = vmatpush1.bf16.msra.mxu0 %v4504
  %4566 = vmatprep.subr.bf16.mxu0 0
  %4567 = vmatpush2.bf16.msra.mxu0 0
  %4568 = vmatprep.subr.bf16.mxu0 0
  %4569 = vmatpush2.bf16.msra.mxu0 0
  %4570 = vmatprep.subr.bf16.mxu0 0
  %4571 = vmatpush2.bf16.msra.mxu0 0
  %4572 = vmatprep.subr.bf16.mxu0 0
  %4573 = vmatpush2.bf16.msra.mxu0 0
  %4574 = vmatprep.subr.bf16.mxu0 0
  %4575 = vmatpush2.bf16.msra.mxu0 0
  %4576 = vmatprep.subr.bf16.mxu0 0
  %4577 = vmatpush2.bf16.msra.mxu0 0
  %4578 = vmatprep.subr.bf16.mxu0 0
  %4579 = vmatpush2.bf16.msra.mxu0 0
  %4580 = vmatprep.subr.bf16.mxu0 0
  %4581 = vmatpush2.bf16.msra.mxu0 0
  %4582 = vmatprep.mubr.bf16.mxu0 0
  %4583 = vmatmul.mubr.bf16.gmra.mxu0 %v4495
  %v4584 = vpop.f32.mrf.mxu0
  %v4585 = vadd.f32 %v4470, %v4584
  %v4586 = vpop.f32.mrf.mxu0
  %v4587 = vadd.f32 %v4472, %v4586
  %v4588 = vpop.f32.mrf.mxu0
  %v4589 = vpop.f32.mrf.mxu0
  %4590 = vdwg.mxu0
  %v4591 = vld [vmem:[%s0] sm:$0xff]
  %v4592 = vld [vmem:[%s0 + $0x8] sm:$0x3]
  %v4595 = vunpack.c.l.s4 1966171168
  %v4596 = vunpack.c.0.s8 %v4595
  %v4597 = vlaneseq
  %v4598 = vshrl.u32 %v4597, 7
  %v4599 = vsub.s32 %v4596, %v4598
  %v4600 = vrot.slane %v68, %v4599
  %v4601 = vcombine.high %v4600, %v4600
  %v4603 = vunpack.c.l.s4 1966171168
  %v4604 = vunpack.c.0.s8 %v4603
  %v4605 = vlaneseq
  %v4606 = vshrl.u32 %v4605, 7
  %v4607 = vsub.s32 %v4604, %v4606
  %v4608 = vrot.slane %v4600, %v4607
  %v4610 = vunpack.c.l.s4 1966171168
  %v4611 = vunpack.c.0.s8 %v4610
  %v4612 = vlaneseq
  %v4613 = vshrl.u32 %v4612, 7
  %v4614 = vsub.s32 %v4611, %v4613
  %v4615 = vrot.slane %v4601, %v4614
  %v4616 = vcombine.high %v4608, %v4608
  %v4617 = vcombine.high %v4615, %v4615
  %v4619 = vpack.i.b16 %v4608, %v4608
  %v4621 = vlaneseq
  %v4622 = vshrl.u32 %v4621, 7
  %v4623 = vsub.s32 0, %v4622
  %v4624 = vrot.slane %v4619, %v4623
  %v4626 = vpack.i.b16 %v4615, %v4615
  %v4628 = vlaneseq
  %v4629 = vshrl.u32 %v4628, 7
  %v4630 = vsub.s32 0, %v4629
  %v4631 = vrot.slane %v4626, %v4630
  %v4633 = vpack.i.b16 %v4616, %v4616
  %v4635 = vlaneseq
  %v4636 = vshrl.u32 %v4635, 7
  %v4637 = vsub.s32 0, %v4636
  %v4638 = vrot.slane %v4633, %v4637
  %v4640 = vpack.i.b16 %v4617, %v4617
  %v4642 = vlaneseq
  %v4643 = vshrl.u32 %v4642, 7
  %v4644 = vsub.s32 0, %v4643
  %v4645 = vrot.slane %v4640, %v4644
  %v4650 = vcombine.low %v4624, %v4631
  %v4651 = vcombine.low %v4638, %v4645
  %v4653 = vunpack.c.l.s4 1983009808
  %v4654 = vunpack.c.0.s8 %v4653
  %v4655 = vlaneseq
  %v4656 = vshrl.u32 %v4655, 7
  %v4657 = vsub.s32 %v4654, %v4656
  %v4658 = vrot.slane %v4650, %v4657
  %v4660 = vunpack.c.l.s4 1983009808
  %v4661 = vunpack.c.0.s8 %v4660
  %v4662 = vlaneseq
  %v4663 = vshrl.u32 %v4662, 7
  %v4664 = vsub.s32 %v4661, %v4663
  %v4665 = vrot.slane %v4651, %v4664
  %v4666 = vcombine.low %v4658, %v4665
  %4667 = vrot.lane.b32.xlu0 %v4666, 10
  %v4668 = vpop.permute.xlu0 %4667
  %v4669 = vrot.slane %v4668, 6
  %vm4670 = vcmask 80896
  %v4671 = vsel %vm4670, %v4669, %v4668
  %v4674 = vmul.bf16 %v4591, %v4671
  %v4675 = vmul.bf16 %v4592, %v4669
  %v4678 = vcombine.high %v4674, %v4674
  %v4680 = vunpack.c.l.s4 1983009808
  %v4681 = vunpack.c.0.s8 %v4680
  %v4682 = vlaneseq
  %v4683 = vshrl.u32 %v4682, 7
  %v4684 = vsub.s32 %v4681, %v4683
  %v4685 = vrot.slane %v4674, %v4684
  %v4687 = vunpack.c.l.s4 1983009808
  %v4688 = vunpack.c.0.s8 %v4687
  %v4689 = vlaneseq
  %v4690 = vshrl.u32 %v4689, 7
  %v4691 = vsub.s32 %v4688, %v4690
  %v4692 = vrot.slane %v4678, %v4691
  %v4693 = vcombine.high %v4685, %v4685
  %v4694 = vcombine.high %v4692, %v4692
  %v4696 = vunpack.c.l.s4 1983009808
  %v4697 = vunpack.c.0.s8 %v4696
  %v4698 = vlaneseq
  %v4699 = vshrl.u32 %v4698, 7
  %v4700 = vsub.s32 %v4697, %v4699
  %v4701 = vrot.slane %v4675, %v4700
  %4702 = vrot.lane.b32.xlu0 %v4685, 118
  %v4703 = vpop.permute.xlu0 %4702
  %4704 = vrot.lane.b32.xlu0 %v4693, 118
  %v4705 = vpop.permute.xlu0 %4704
  %4706 = vrot.lane.b32.xlu0 %v4692, 118
  %v4707 = vpop.permute.xlu0 %4706
  %4708 = vrot.lane.b32.xlu0 %v4694, 118
  %v4709 = vpop.permute.xlu0 %4708
  %4710 = vrot.lane.b32.xlu0 %v4701, 118
  %v4711 = vpop.permute.xlu0 %4710
  %vm4712 = vcmask 965632
  %v4713 = vsel %vm4712, %v4703, %v4705
  %v4714 = vsel %vm4712, %v4705, %v4707
  %v4715 = vsel %vm4712, %v4707, %v4709
  %v4716 = vsel %vm4712, %v4709, %v4711
  %v4718 = vsel %vm284, %v41, 0
  %v4721 = vsel %vm288, %v4713, 0
  %v4724 = vsel %vm288, %v4714, 0
  %v4727 = vsel %vm288, %v4715, 0
  %v4730 = vsel %vm288, %v4716, 0
  %4732 = vmatprep.subr.bf16.mxu0 0
  %4733 = vmatpush1.bf16.msra.mxu0 0
  %4734 = vmatprep.subr.bf16.mxu0 0
  %4735 = vmatpush1.bf16.msra.mxu0 0
  %4736 = vmatprep.subr.bf16.mxu0 0
  %4737 = vmatpush1.bf16.msra.mxu0 0
  %4738 = vmatprep.subr.bf16.mxu0 0
  %4739 = vmatpush1.bf16.msra.mxu0 0
  %4740 = vmatprep.subr.bf16.mxu0 0
  %4741 = vmatpush1.bf16.msra.mxu0 0
  %4742 = vmatprep.subr.bf16.mxu0 0
  %4743 = vmatpush1.bf16.msra.mxu0 0
  %4744 = vmatprep.subr.bf16.mxu0 0
  %4745 = vmatpush1.bf16.msra.mxu0 0
  %4746 = vmatprep.subr.bf16.mxu0 %v4724
  %4747 = vmatpush1.bf16.msra.mxu0 %v4721
  %4748 = vmatprep.subr.bf16.mxu0 0
  %4749 = vmatpush2.bf16.msra.mxu0 0
  %4750 = vmatprep.subr.bf16.mxu0 0
  %4751 = vmatpush2.bf16.msra.mxu0 0
  %4752 = vmatprep.subr.bf16.mxu0 0
  %4753 = vmatpush2.bf16.msra.mxu0 0
  %4754 = vmatprep.subr.bf16.mxu0 0
  %4755 = vmatpush2.bf16.msra.mxu0 0
  %4756 = vmatprep.subr.bf16.mxu0 0
  %4757 = vmatpush2.bf16.msra.mxu0 0
  %4758 = vmatprep.subr.bf16.mxu0 0
  %4759 = vmatpush2.bf16.msra.mxu0 0
  %4760 = vmatprep.subr.bf16.mxu0 0
  %4761 = vmatpush2.bf16.msra.mxu0 0
  %4762 = vmatprep.subr.bf16.mxu0 0
  %4763 = vmatpush2.bf16.msra.mxu0 0
  %4764 = vmatprep.mubr.bf16.mxu0 0
  %4765 = vmatmul.mubr.bf16.gmra.mxu0 %v4718
  %v4766 = vpop.f32.mrf.mxu0
  %v4767 = vadd.f32 0.0, %v4766
  %v4768 = vpop.f32.mrf.mxu0
  %v4769 = vadd.f32 0.0, %v4768
  %v4770 = vpop.f32.mrf.mxu0
  %v4771 = vpop.f32.mrf.mxu0
  %4772 = vdwg.mxu0
  %4773 = vmatprep.subr.bf16.mxu0 0
  %4774 = vmatpush1.bf16.msra.mxu0 0
  %4775 = vmatprep.subr.bf16.mxu0 0
  %4776 = vmatpush1.bf16.msra.mxu0 0
  %4777 = vmatprep.subr.bf16.mxu0 0
  %4778 = vmatpush1.bf16.msra.mxu0 0
  %4779 = vmatprep.subr.bf16.mxu0 0
  %4780 = vmatpush1.bf16.msra.mxu0 0
  %4781 = vmatprep.subr.bf16.mxu0 0
  %4782 = vmatpush1.bf16.msra.mxu0 0
  %4783 = vmatprep.subr.bf16.mxu0 0
  %4784 = vmatpush1.bf16.msra.mxu0 0
  %4785 = vmatprep.subr.bf16.mxu0 0
  %4786 = vmatpush1.bf16.msra.mxu0 0
  %4787 = vmatprep.subr.bf16.mxu0 %v4730
  %4788 = vmatpush1.bf16.msra.mxu0 %v4727
  %4789 = vmatprep.subr.bf16.mxu0 0
  %4790 = vmatpush2.bf16.msra.mxu0 0
  %4791 = vmatprep.subr.bf16.mxu0 0
  %4792 = vmatpush2.bf16.msra.mxu0 0
  %4793 = vmatprep.subr.bf16.mxu0 0
  %4794 = vmatpush2.bf16.msra.mxu0 0
  %4795 = vmatprep.subr.bf16.mxu0 0
  %4796 = vmatpush2.bf16.msra.mxu0 0
  %4797 = vmatprep.subr.bf16.mxu0 0
  %4798 = vmatpush2.bf16.msra.mxu0 0
  %4799 = vmatprep.subr.bf16.mxu0 0
  %4800 = vmatpush2.bf16.msra.mxu0 0
  %4801 = vmatprep.subr.bf16.mxu0 0
  %4802 = vmatpush2.bf16.msra.mxu0 0
  %4803 = vmatprep.subr.bf16.mxu0 0
  %4804 = vmatpush2.bf16.msra.mxu0 0
  %4805 = vmatprep.mubr.bf16.mxu0 0
  %4806 = vmatmul.mubr.bf16.gmra.mxu0 %v4718
  %v4807 = vpop.f32.mrf.mxu0
  %v4808 = vadd.f32 0.0, %v4807
  %v4809 = vpop.f32.mrf.mxu0
  %v4810 = vadd.f32 0.0, %v4809
  %v4811 = vpop.f32.mrf.mxu0
  %v4812 = vpop.f32.mrf.mxu0
  %4813 = vdwg.mxu0
  %v4814 = vadd.f32 %v4544, %v4767
  %v4815 = vadd.f32 %v4546, %v4769
  %v4816 = vadd.f32 %v4585, %v4808
  %v4817 = vadd.f32 %v4587, %v4810
  %v4818 = vld [vmem:[%s0] sm:$0xff]
  %v4819 = vld [vmem:[%s0 + $0x8] sm:$0x3]
  %v4822 = vunpack.c.l.s4 1966171168
  %v4823 = vunpack.c.0.s8 %v4822
  %v4824 = vlaneseq
  %v4825 = vshrl.u32 %v4824, 7
  %v4826 = vsub.s32 %v4823, %v4825
  %v4827 = vrot.slane %v69, %v4826
  %v4828 = vcombine.high %v4827, %v4827
  %v4830 = vunpack.c.l.s4 1966171168
  %v4831 = vunpack.c.0.s8 %v4830
  %v4832 = vlaneseq
  %v4833 = vshrl.u32 %v4832, 7
  %v4834 = vsub.s32 %v4831, %v4833
  %v4835 = vrot.slane %v4827, %v4834
  %v4837 = vunpack.c.l.s4 1966171168
  %v4838 = vunpack.c.0.s8 %v4837
  %v4839 = vlaneseq
  %v4840 = vshrl.u32 %v4839, 7
  %v4841 = vsub.s32 %v4838, %v4840
  %v4842 = vrot.slane %v4828, %v4841
  %v4843 = vcombine.high %v4835, %v4835
  %v4844 = vcombine.high %v4842, %v4842
  %v4846 = vpack.i.b16 %v4835, %v4835
  %v4848 = vlaneseq
  %v4849 = vshrl.u32 %v4848, 7
  %v4850 = vsub.s32 0, %v4849
  %v4851 = vrot.slane %v4846, %v4850
  %v4853 = vpack.i.b16 %v4842, %v4842
  %v4855 = vlaneseq
  %v4856 = vshrl.u32 %v4855, 7
  %v4857 = vsub.s32 0, %v4856
  %v4858 = vrot.slane %v4853, %v4857
  %v4860 = vpack.i.b16 %v4843, %v4843
  %v4862 = vlaneseq
  %v4863 = vshrl.u32 %v4862, 7
  %v4864 = vsub.s32 0, %v4863
  %v4865 = vrot.slane %v4860, %v4864
  %v4867 = vpack.i.b16 %v4844, %v4844
  %v4869 = vlaneseq
  %v4870 = vshrl.u32 %v4869, 7
  %v4871 = vsub.s32 0, %v4870
  %v4872 = vrot.slane %v4867, %v4871
  %v4877 = vcombine.low %v4851, %v4858
  %v4878 = vcombine.low %v4865, %v4872
  %v4880 = vunpack.c.l.s4 1983009808
  %v4881 = vunpack.c.0.s8 %v4880
  %v4882 = vlaneseq
  %v4883 = vshrl.u32 %v4882, 7
  %v4884 = vsub.s32 %v4881, %v4883
  %v4885 = vrot.slane %v4877, %v4884
  %v4887 = vunpack.c.l.s4 1983009808
  %v4888 = vunpack.c.0.s8 %v4887
  %v4889 = vlaneseq
  %v4890 = vshrl.u32 %v4889, 7
  %v4891 = vsub.s32 %v4888, %v4890
  %v4892 = vrot.slane %v4878, %v4891
  %v4893 = vcombine.low %v4885, %v4892
  %4894 = vrot.lane.b32.xlu0 %v4893, 80
  %v4895 = vpop.permute.xlu0 %4894
  %v4896 = vrot.slane %v4895, 6
  %vm4897 = vcmask 654336
  %v4898 = vsel %vm4897, %v4896, %v4895
  %v4901 = vmul.bf16 %v4818, %v4898
  %v4902 = vmul.bf16 %v4819, %v4896
  %v4905 = vcombine.high %v4901, %v4901
  %v4907 = vunpack.c.l.s4 1983009808
  %v4908 = vunpack.c.0.s8 %v4907
  %v4909 = vlaneseq
  %v4910 = vshrl.u32 %v4909, 7
  %v4911 = vsub.s32 %v4908, %v4910
  %v4912 = vrot.slane %v4901, %v4911
  %v4914 = vunpack.c.l.s4 1983009808
  %v4915 = vunpack.c.0.s8 %v4914
  %v4916 = vlaneseq
  %v4917 = vshrl.u32 %v4916, 7
  %v4918 = vsub.s32 %v4915, %v4917
  %v4919 = vrot.slane %v4905, %v4918
  %v4920 = vcombine.high %v4912, %v4912
  %v4921 = vcombine.high %v4919, %v4919
  %v4923 = vunpack.c.l.s4 1983009808
  %v4924 = vunpack.c.0.s8 %v4923
  %v4925 = vlaneseq
  %v4926 = vshrl.u32 %v4925, 7
  %v4927 = vsub.s32 %v4924, %v4926
  %v4928 = vrot.slane %v4902, %v4927
  %4929 = vrot.lane.b32.xlu0 %v4912, 48
  %v4930 = vpop.permute.xlu0 %4929
  %4931 = vrot.lane.b32.xlu0 %v4920, 48
  %v4932 = vpop.permute.xlu0 %4931
  %4933 = vrot.lane.b32.xlu0 %v4919, 48
  %v4934 = vpop.permute.xlu0 %4933
  %4935 = vrot.lane.b32.xlu0 %v4921, 48
  %v4936 = vpop.permute.xlu0 %4935
  %4937 = vrot.lane.b32.xlu0 %v4928, 48
  %v4938 = vpop.permute.xlu0 %4937
  %vm4939 = vcmask 392192
  %v4940 = vsel %vm4939, %v4930, %v4932
  %v4941 = vsel %vm4939, %v4932, %v4934
  %v4942 = vsel %vm4939, %v4934, %v4936
  %v4943 = vsel %vm4939, %v4936, %v4938
  %v4945 = vsel %vm284, %v42, 0
  %v4948 = vsel %vm288, %v4940, 0
  %v4951 = vsel %vm288, %v4941, 0
  %v4954 = vsel %vm288, %v4942, 0
  %v4957 = vsel %vm288, %v4943, 0
  %4959 = vmatprep.subr.bf16.mxu0 0
  %4960 = vmatpush1.bf16.msra.mxu0 0
  %4961 = vmatprep.subr.bf16.mxu0 0
  %4962 = vmatpush1.bf16.msra.mxu0 0
  %4963 = vmatprep.subr.bf16.mxu0 0
  %4964 = vmatpush1.bf16.msra.mxu0 0
  %4965 = vmatprep.subr.bf16.mxu0 0
  %4966 = vmatpush1.bf16.msra.mxu0 0
  %4967 = vmatprep.subr.bf16.mxu0 0
  %4968 = vmatpush1.bf16.msra.mxu0 0
  %4969 = vmatprep.subr.bf16.mxu0 0
  %4970 = vmatpush1.bf16.msra.mxu0 0
  %4971 = vmatprep.subr.bf16.mxu0 0
  %4972 = vmatpush1.bf16.msra.mxu0 0
  %4973 = vmatprep.subr.bf16.mxu0 %v4951
  %4974 = vmatpush1.bf16.msra.mxu0 %v4948
  %4975 = vmatprep.subr.bf16.mxu0 0
  %4976 = vmatpush2.bf16.msra.mxu0 0
  %4977 = vmatprep.subr.bf16.mxu0 0
  %4978 = vmatpush2.bf16.msra.mxu0 0
  %4979 = vmatprep.subr.bf16.mxu0 0
  %4980 = vmatpush2.bf16.msra.mxu0 0
  %4981 = vmatprep.subr.bf16.mxu0 0
  %4982 = vmatpush2.bf16.msra.mxu0 0
  %4983 = vmatprep.subr.bf16.mxu0 0
  %4984 = vmatpush2.bf16.msra.mxu0 0
  %4985 = vmatprep.subr.bf16.mxu0 0
  %4986 = vmatpush2.bf16.msra.mxu0 0
  %4987 = vmatprep.subr.bf16.mxu0 0
  %4988 = vmatpush2.bf16.msra.mxu0 0
  %4989 = vmatprep.subr.bf16.mxu0 0
  %4990 = vmatpush2.bf16.msra.mxu0 0
  %4991 = vmatprep.mubr.bf16.mxu0 0
  %4992 = vmatmul.mubr.bf16.gmra.mxu0 %v4945
  %v4993 = vpop.f32.mrf.mxu0
  %v4994 = vadd.f32 0.0, %v4993
  %v4995 = vpop.f32.mrf.mxu0
  %v4996 = vadd.f32 0.0, %v4995
  %v4997 = vpop.f32.mrf.mxu0
  %v4998 = vpop.f32.mrf.mxu0
  %4999 = vdwg.mxu0
  %5000 = vmatprep.subr.bf16.mxu0 0
  %5001 = vmatpush1.bf16.msra.mxu0 0
  %5002 = vmatprep.subr.bf16.mxu0 0
  %5003 = vmatpush1.bf16.msra.mxu0 0
  %5004 = vmatprep.subr.bf16.mxu0 0
  %5005 = vmatpush1.bf16.msra.mxu0 0
  %5006 = vmatprep.subr.bf16.mxu0 0
  %5007 = vmatpush1.bf16.msra.mxu0 0
  %5008 = vmatprep.subr.bf16.mxu0 0
  %5009 = vmatpush1.bf16.msra.mxu0 0
  %5010 = vmatprep.subr.bf16.mxu0 0
  %5011 = vmatpush1.bf16.msra.mxu0 0
  %5012 = vmatprep.subr.bf16.mxu0 0
  %5013 = vmatpush1.bf16.msra.mxu0 0
  %5014 = vmatprep.subr.bf16.mxu0 %v4957
  %5015 = vmatpush1.bf16.msra.mxu0 %v4954
  %5016 = vmatprep.subr.bf16.mxu0 0
  %5017 = vmatpush2.bf16.msra.mxu0 0
  %5018 = vmatprep.subr.bf16.mxu0 0
  %5019 = vmatpush2.bf16.msra.mxu0 0
  %5020 = vmatprep.subr.bf16.mxu0 0
  %5021 = vmatpush2.bf16.msra.mxu0 0
  %5022 = vmatprep.subr.bf16.mxu0 0
  %5023 = vmatpush2.bf16.msra.mxu0 0
  %5024 = vmatprep.subr.bf16.mxu0 0
  %5025 = vmatpush2.bf16.msra.mxu0 0
  %5026 = vmatprep.subr.bf16.mxu0 0
  %5027 = vmatpush2.bf16.msra.mxu0 0
  %5028 = vmatprep.subr.bf16.mxu0 0
  %5029 = vmatpush2.bf16.msra.mxu0 0
  %5030 = vmatprep.subr.bf16.mxu0 0
  %5031 = vmatpush2.bf16.msra.mxu0 0
  %5032 = vmatprep.mubr.bf16.mxu0 0
  %5033 = vmatmul.mubr.bf16.gmra.mxu0 %v4945
  %v5034 = vpop.f32.mrf.mxu0
  %v5035 = vadd.f32 0.0, %v5034
  %v5036 = vpop.f32.mrf.mxu0
  %v5037 = vadd.f32 0.0, %v5036
  %v5038 = vpop.f32.mrf.mxu0
  %v5039 = vpop.f32.mrf.mxu0
  %5040 = vdwg.mxu0
  %v5041 = vadd.f32 %v4814, %v4994
  %v5042 = vadd.f32 %v4815, %v4996
  %v5043 = vadd.f32 %v4816, %v5035
  %v5044 = vadd.f32 %v4817, %v5037
  %v5047 = vunpack.c.l.s4 1966171168
  %v5048 = vunpack.c.0.s8 %v5047
  %v5049 = vlaneseq
  %v5050 = vshrl.u32 %v5049, 7
  %v5051 = vsub.s32 %v5048, %v5050
  %v5052 = vrot.slane %v70, %v5051
  %v5053 = vcombine.high %v5052, %v5052
  %v5055 = vunpack.c.l.s4 1966171168
  %v5056 = vunpack.c.0.s8 %v5055
  %v5057 = vlaneseq
  %v5058 = vshrl.u32 %v5057, 7
  %v5059 = vsub.s32 %v5056, %v5058
  %v5060 = vrot.slane %v5052, %v5059
  %v5062 = vunpack.c.l.s4 1966171168
  %v5063 = vunpack.c.0.s8 %v5062
  %v5064 = vlaneseq
  %v5065 = vshrl.u32 %v5064, 7
  %v5066 = vsub.s32 %v5063, %v5065
  %v5067 = vrot.slane %v5053, %v5066
  %v5068 = vcombine.high %v5060, %v5060
  %v5069 = vcombine.high %v5067, %v5067
  %v5071 = vpack.i.b16 %v5060, %v5060
  %v5073 = vlaneseq
  %v5074 = vshrl.u32 %v5073, 7
  %v5075 = vsub.s32 0, %v5074
  %v5076 = vrot.slane %v5071, %v5075
  %v5078 = vpack.i.b16 %v5067, %v5067
  %v5080 = vlaneseq
  %v5081 = vshrl.u32 %v5080, 7
  %v5082 = vsub.s32 0, %v5081
  %v5083 = vrot.slane %v5078, %v5082
  %v5085 = vpack.i.b16 %v5068, %v5068
  %v5087 = vlaneseq
  %v5088 = vshrl.u32 %v5087, 7
  %v5089 = vsub.s32 0, %v5088
  %v5090 = vrot.slane %v5085, %v5089
  %v5092 = vpack.i.b16 %v5069, %v5069
  %v5094 = vlaneseq
  %v5095 = vshrl.u32 %v5094, 7
  %v5096 = vsub.s32 0, %v5095
  %v5097 = vrot.slane %v5092, %v5096
  %v5102 = vcombine.low %v5076, %v5083
  %v5103 = vcombine.low %v5090, %v5097
  %v5105 = vunpack.c.l.s4 1983009808
  %v5106 = vunpack.c.0.s8 %v5105
  %v5107 = vlaneseq
  %v5108 = vshrl.u32 %v5107, 7
  %v5109 = vsub.s32 %v5106, %v5108
  %v5110 = vrot.slane %v5102, %v5109
  %v5112 = vunpack.c.l.s4 1983009808
  %v5113 = vunpack.c.0.s8 %v5112
  %v5114 = vlaneseq
  %v5115 = vshrl.u32 %v5114, 7
  %v5116 = vsub.s32 %v5113, %v5115
  %v5117 = vrot.slane %v5103, %v5116
  %v5118 = vcombine.low %v5110, %v5117
  %5119 = vrot.lane.b32.xlu0 %v5118, 85
  %v5120 = vpop.permute.xlu0 %5119
  %v5121 = vrot.slane %v5120, 6
  %v5122 = vsel %vm1054, %v5121, %v5120
  %v5125 = vmul.bf16 %v975, %v5122
  %v5126 = vmul.bf16 %v976, %v5121
  %v5129 = vcombine.high %v5125, %v5125
  %v5131 = vunpack.c.l.s4 1983009808
  %v5132 = vunpack.c.0.s8 %v5131
  %v5133 = vlaneseq
  %v5134 = vshrl.u32 %v5133, 7
  %v5135 = vsub.s32 %v5132, %v5134
  %v5136 = vrot.slane %v5125, %v5135
  %v5138 = vunpack.c.l.s4 1983009808
  %v5139 = vunpack.c.0.s8 %v5138
  %v5140 = vlaneseq
  %v5141 = vshrl.u32 %v5140, 7
  %v5142 = vsub.s32 %v5139, %v5141
  %v5143 = vrot.slane %v5129, %v5142
  %v5144 = vcombine.high %v5136, %v5136
  %v5145 = vcombine.high %v5143, %v5143
  %v5147 = vunpack.c.l.s4 1983009808
  %v5148 = vunpack.c.0.s8 %v5147
  %v5149 = vlaneseq
  %v5150 = vshrl.u32 %v5149, 7
  %v5151 = vsub.s32 %v5148, %v5150
  %v5152 = vrot.slane %v5126, %v5151
  %5153 = vrot.lane.b32.xlu0 %v5136, 43
  %v5154 = vpop.permute.xlu0 %5153
  %5155 = vrot.lane.b32.xlu0 %v5144, 43
  %v5156 = vpop.permute.xlu0 %5155
  %5157 = vrot.lane.b32.xlu0 %v5143, 43
  %v5158 = vpop.permute.xlu0 %5157
  %5159 = vrot.lane.b32.xlu0 %v5145, 43
  %v5160 = vpop.permute.xlu0 %5159
  %5161 = vrot.lane.b32.xlu0 %v5152, 43
  %v5162 = vpop.permute.xlu0 %5161
  %v5163 = vsel %vm1096, %v5154, %v5156
  %v5164 = vsel %vm1096, %v5156, %v5158
  %v5165 = vsel %vm1096, %v5158, %v5160
  %v5166 = vsel %vm1096, %v5160, %v5162
  %v5168 = vsel %vm284, %v43, 0
  %v5171 = vsel %vm288, %v5163, 0
  %v5174 = vsel %vm288, %v5164, 0
  %v5177 = vsel %vm288, %v5165, 0
  %v5180 = vsel %vm288, %v5166, 0
  %5182 = vmatprep.subr.bf16.mxu0 0
  %5183 = vmatpush1.bf16.msra.mxu0 0
  %5184 = vmatprep.subr.bf16.mxu0 0
  %5185 = vmatpush1.bf16.msra.mxu0 0
  %5186 = vmatprep.subr.bf16.mxu0 0
  %5187 = vmatpush1.bf16.msra.mxu0 0
  %5188 = vmatprep.subr.bf16.mxu0 0
  %5189 = vmatpush1.bf16.msra.mxu0 0
  %5190 = vmatprep.subr.bf16.mxu0 0
  %5191 = vmatpush1.bf16.msra.mxu0 0
  %5192 = vmatprep.subr.bf16.mxu0 0
  %5193 = vmatpush1.bf16.msra.mxu0 0
  %5194 = vmatprep.subr.bf16.mxu0 0
  %5195 = vmatpush1.bf16.msra.mxu0 0
  %5196 = vmatprep.subr.bf16.mxu0 %v5174
  %5197 = vmatpush1.bf16.msra.mxu0 %v5171
  %5198 = vmatprep.subr.bf16.mxu0 0
  %5199 = vmatpush2.bf16.msra.mxu0 0
  %5200 = vmatprep.subr.bf16.mxu0 0
  %5201 = vmatpush2.bf16.msra.mxu0 0
  %5202 = vmatprep.subr.bf16.mxu0 0
  %5203 = vmatpush2.bf16.msra.mxu0 0
  %5204 = vmatprep.subr.bf16.mxu0 0
  %5205 = vmatpush2.bf16.msra.mxu0 0
  %5206 = vmatprep.subr.bf16.mxu0 0
  %5207 = vmatpush2.bf16.msra.mxu0 0
  %5208 = vmatprep.subr.bf16.mxu0 0
  %5209 = vmatpush2.bf16.msra.mxu0 0
  %5210 = vmatprep.subr.bf16.mxu0 0
  %5211 = vmatpush2.bf16.msra.mxu0 0
  %5212 = vmatprep.subr.bf16.mxu0 0
  %5213 = vmatpush2.bf16.msra.mxu0 0
  %5214 = vmatprep.mubr.bf16.mxu0 0
  %5215 = vmatmul.mubr.bf16.gmra.mxu0 %v5168
  %v5216 = vpop.f32.mrf.mxu0
  %v5217 = vadd.f32 0.0, %v5216
  %v5218 = vpop.f32.mrf.mxu0
  %v5219 = vadd.f32 0.0, %v5218
  %v5220 = vpop.f32.mrf.mxu0
  %v5221 = vpop.f32.mrf.mxu0
  %5222 = vdwg.mxu0
  %5223 = vmatprep.subr.bf16.mxu0 0
  %5224 = vmatpush1.bf16.msra.mxu0 0
  %5225 = vmatprep.subr.bf16.mxu0 0
  %5226 = vmatpush1.bf16.msra.mxu0 0
  %5227 = vmatprep.subr.bf16.mxu0 0
  %5228 = vmatpush1.bf16.msra.mxu0 0
  %5229 = vmatprep.subr.bf16.mxu0 0
  %5230 = vmatpush1.bf16.msra.mxu0 0
  %5231 = vmatprep.subr.bf16.mxu0 0
  %5232 = vmatpush1.bf16.msra.mxu0 0
  %5233 = vmatprep.subr.bf16.mxu0 0
  %5234 = vmatpush1.bf16.msra.mxu0 0
  %5235 = vmatprep.subr.bf16.mxu0 0
  %5236 = vmatpush1.bf16.msra.mxu0 0
  %5237 = vmatprep.subr.bf16.mxu0 %v5180
  %5238 = vmatpush1.bf16.msra.mxu0 %v5177
  %5239 = vmatprep.subr.bf16.mxu0 0
  %5240 = vmatpush2.bf16.msra.mxu0 0
  %5241 = vmatprep.subr.bf16.mxu0 0
  %5242 = vmatpush2.bf16.msra.mxu0 0
  %5243 = vmatprep.subr.bf16.mxu0 0
  %5244 = vmatpush2.bf16.msra.mxu0 0
  %5245 = vmatprep.subr.bf16.mxu0 0
  %5246 = vmatpush2.bf16.msra.mxu0 0
  %5247 = vmatprep.subr.bf16.mxu0 0
  %5248 = vmatpush2.bf16.msra.mxu0 0
  %5249 = vmatprep.subr.bf16.mxu0 0
  %5250 = vmatpush2.bf16.msra.mxu0 0
  %5251 = vmatprep.subr.bf16.mxu0 0
  %5252 = vmatpush2.bf16.msra.mxu0 0
  %5253 = vmatprep.subr.bf16.mxu0 0
  %5254 = vmatpush2.bf16.msra.mxu0 0
  %5255 = vmatprep.mubr.bf16.mxu0 0
  %5256 = vmatmul.mubr.bf16.gmra.mxu0 %v5168
  %v5257 = vpop.f32.mrf.mxu0
  %v5258 = vadd.f32 0.0, %v5257
  %v5259 = vpop.f32.mrf.mxu0
  %v5260 = vadd.f32 0.0, %v5259
  %v5261 = vpop.f32.mrf.mxu0
  %v5262 = vpop.f32.mrf.mxu0
  %5263 = vdwg.mxu0
  %v5264 = vadd.f32 %v5041, %v5217
  %v5265 = vadd.f32 %v5042, %v5219
  %v5266 = vadd.f32 %v5043, %v5258
  %v5267 = vadd.f32 %v5044, %v5260
  %v5268 = vld [vmem:[%s0] sm:$0xff]
  %v5269 = vld [vmem:[%s0 + $0x8] sm:$0x3]
  %v5272 = vunpack.c.l.s4 1966171168
  %v5273 = vunpack.c.0.s8 %v5272
  %v5274 = vlaneseq
  %v5275 = vshrl.u32 %v5274, 7
  %v5276 = vsub.s32 %v5273, %v5275
  %v5277 = vrot.slane %v71, %v5276
  %v5278 = vcombine.high %v5277, %v5277
  %v5280 = vunpack.c.l.s4 1966171168
  %v5281 = vunpack.c.0.s8 %v5280
  %v5282 = vlaneseq
  %v5283 = vshrl.u32 %v5282, 7
  %v5284 = vsub.s32 %v5281, %v5283
  %v5285 = vrot.slane %v5277, %v5284
  %v5287 = vunpack.c.l.s4 1966171168
  %v5288 = vunpack.c.0.s8 %v5287
  %v5289 = vlaneseq
  %v5290 = vshrl.u32 %v5289, 7
  %v5291 = vsub.s32 %v5288, %v5290
  %v5292 = vrot.slane %v5278, %v5291
  %v5293 = vcombine.high %v5285, %v5285
  %v5294 = vcombine.high %v5292, %v5292
  %v5296 = vpack.i.b16 %v5285, %v5285
  %v5298 = vlaneseq
  %v5299 = vshrl.u32 %v5298, 7
  %v5300 = vsub.s32 0, %v5299
  %v5301 = vrot.slane %v5296, %v5300
  %v5303 = vpack.i.b16 %v5292, %v5292
  %v5305 = vlaneseq
  %v5306 = vshrl.u32 %v5305, 7
  %v5307 = vsub.s32 0, %v5306
  %v5308 = vrot.slane %v5303, %v5307
  %v5310 = vpack.i.b16 %v5293, %v5293
  %v5312 = vlaneseq
  %v5313 = vshrl.u32 %v5312, 7
  %v5314 = vsub.s32 0, %v5313
  %v5315 = vrot.slane %v5310, %v5314
  %v5317 = vpack.i.b16 %v5294, %v5294
  %v5319 = vlaneseq
  %v5320 = vshrl.u32 %v5319, 7
  %v5321 = vsub.s32 0, %v5320
  %v5322 = vrot.slane %v5317, %v5321
  %v5327 = vcombine.low %v5301, %v5308
  %v5328 = vcombine.low %v5315, %v5322
  %v5330 = vunpack.c.l.s4 1983009808
  %v5331 = vunpack.c.0.s8 %v5330
  %v5332 = vlaneseq
  %v5333 = vshrl.u32 %v5332, 7
  %v5334 = vsub.s32 %v5331, %v5333
  %v5335 = vrot.slane %v5327, %v5334
  %v5337 = vunpack.c.l.s4 1983009808
  %v5338 = vunpack.c.0.s8 %v5337
  %v5339 = vlaneseq
  %v5340 = vshrl.u32 %v5339, 7
  %v5341 = vsub.s32 %v5338, %v5340
  %v5342 = vrot.slane %v5328, %v5341
  %v5343 = vcombine.low %v5335, %v5342
  %5344 = vrot.lane.b32.xlu0 %v5343, 90
  %v5345 = vpop.permute.xlu0 %5344
  %v5346 = vrot.slane %v5345, 6
  %vm5347 = vcmask 736256
  %v5348 = vsel %vm5347, %v5346, %v5345
  %v5351 = vmul.bf16 %v5268, %v5348
  %v5352 = vmul.bf16 %v5269, %v5346
  %v5355 = vcombine.high %v5351, %v5351
  %v5357 = vunpack.c.l.s4 1983009808
  %v5358 = vunpack.c.0.s8 %v5357
  %v5359 = vlaneseq
  %v5360 = vshrl.u32 %v5359, 7
  %v5361 = vsub.s32 %v5358, %v5360
  %v5362 = vrot.slane %v5351, %v5361
  %v5364 = vunpack.c.l.s4 1983009808
  %v5365 = vunpack.c.0.s8 %v5364
  %v5366 = vlaneseq
  %v5367 = vshrl.u32 %v5366, 7
  %v5368 = vsub.s32 %v5365, %v5367
  %v5369 = vrot.slane %v5355, %v5368
  %v5370 = vcombine.high %v5362, %v5362
  %v5371 = vcombine.high %v5369, %v5369
  %v5373 = vunpack.c.l.s4 1983009808
  %v5374 = vunpack.c.0.s8 %v5373
  %v5375 = vlaneseq
  %v5376 = vshrl.u32 %v5375, 7
  %v5377 = vsub.s32 %v5374, %v5376
  %v5378 = vrot.slane %v5352, %v5377
  %5379 = vrot.lane.b32.xlu0 %v5362, 38
  %v5380 = vpop.permute.xlu0 %5379
  %5381 = vrot.lane.b32.xlu0 %v5370, 38
  %v5382 = vpop.permute.xlu0 %5381
  %5383 = vrot.lane.b32.xlu0 %v5369, 38
  %v5384 = vpop.permute.xlu0 %5383
  %5385 = vrot.lane.b32.xlu0 %v5371, 38
  %v5386 = vpop.permute.xlu0 %5385
  %5387 = vrot.lane.b32.xlu0 %v5378, 38
  %v5388 = vpop.permute.xlu0 %5387
  %vm5389 = vcmask 310272
  %v5390 = vsel %vm5389, %v5380, %v5382
  %v5391 = vsel %vm5389, %v5382, %v5384
  %v5392 = vsel %vm5389, %v5384, %v5386
  %v5393 = vsel %vm5389, %v5386, %v5388
  %v5395 = vsel %vm284, %v44, 0
  %v5398 = vsel %vm288, %v5390, 0
  %v5401 = vsel %vm288, %v5391, 0
  %v5404 = vsel %vm288, %v5392, 0
  %v5407 = vsel %vm288, %v5393, 0
  %5409 = vmatprep.subr.bf16.mxu0 0
  %5410 = vmatpush1.bf16.msra.mxu0 0
  %5411 = vmatprep.subr.bf16.mxu0 0
  %5412 = vmatpush1.bf16.msra.mxu0 0
  %5413 = vmatprep.subr.bf16.mxu0 0
  %5414 = vmatpush1.bf16.msra.mxu0 0
  %5415 = vmatprep.subr.bf16.mxu0 0
  %5416 = vmatpush1.bf16.msra.mxu0 0
  %5417 = vmatprep.subr.bf16.mxu0 0
  %5418 = vmatpush1.bf16.msra.mxu0 0
  %5419 = vmatprep.subr.bf16.mxu0 0
  %5420 = vmatpush1.bf16.msra.mxu0 0
  %5421 = vmatprep.subr.bf16.mxu0 0
  %5422 = vmatpush1.bf16.msra.mxu0 0
  %5423 = vmatprep.subr.bf16.mxu0 %v5401
  %5424 = vmatpush1.bf16.msra.mxu0 %v5398
  %5425 = vmatprep.subr.bf16.mxu0 0
  %5426 = vmatpush2.bf16.msra.mxu0 0
  %5427 = vmatprep.subr.bf16.mxu0 0
  %5428 = vmatpush2.bf16.msra.mxu0 0
  %5429 = vmatprep.subr.bf16.mxu0 0
  %5430 = vmatpush2.bf16.msra.mxu0 0
  %5431 = vmatprep.subr.bf16.mxu0 0
  %5432 = vmatpush2.bf16.msra.mxu0 0
  %5433 = vmatprep.subr.bf16.mxu0 0
  %5434 = vmatpush2.bf16.msra.mxu0 0
  %5435 = vmatprep.subr.bf16.mxu0 0
  %5436 = vmatpush2.bf16.msra.mxu0 0
  %5437 = vmatprep.subr.bf16.mxu0 0
  %5438 = vmatpush2.bf16.msra.mxu0 0
  %5439 = vmatprep.subr.bf16.mxu0 0
  %5440 = vmatpush2.bf16.msra.mxu0 0
  %5441 = vmatprep.mubr.bf16.mxu0 0
  %5442 = vmatmul.mubr.bf16.gmra.mxu0 %v5395
  %v5443 = vpop.f32.mrf.mxu0
  %v5444 = vadd.f32 0.0, %v5443
  %v5445 = vpop.f32.mrf.mxu0
  %v5446 = vadd.f32 0.0, %v5445
  %v5447 = vpop.f32.mrf.mxu0
  %v5448 = vpop.f32.mrf.mxu0
  %5449 = vdwg.mxu0
  %5450 = vmatprep.subr.bf16.mxu0 0
  %5451 = vmatpush1.bf16.msra.mxu0 0
  %5452 = vmatprep.subr.bf16.mxu0 0
  %5453 = vmatpush1.bf16.msra.mxu0 0
  %5454 = vmatprep.subr.bf16.mxu0 0
  %5455 = vmatpush1.bf16.msra.mxu0 0
  %5456 = vmatprep.subr.bf16.mxu0 0
  %5457 = vmatpush1.bf16.msra.mxu0 0
  %5458 = vmatprep.subr.bf16.mxu0 0
  %5459 = vmatpush1.bf16.msra.mxu0 0
  %5460 = vmatprep.subr.bf16.mxu0 0
  %5461 = vmatpush1.bf16.msra.mxu0 0
  %5462 = vmatprep.subr.bf16.mxu0 0
  %5463 = vmatpush1.bf16.msra.mxu0 0
  %5464 = vmatprep.subr.bf16.mxu0 %v5407
  %5465 = vmatpush1.bf16.msra.mxu0 %v5404
  %5466 = vmatprep.subr.bf16.mxu0 0
  %5467 = vmatpush2.bf16.msra.mxu0 0
  %5468 = vmatprep.subr.bf16.mxu0 0
  %5469 = vmatpush2.bf16.msra.mxu0 0
  %5470 = vmatprep.subr.bf16.mxu0 0
  %5471 = vmatpush2.bf16.msra.mxu0 0
  %5472 = vmatprep.subr.bf16.mxu0 0
  %5473 = vmatpush2.bf16.msra.mxu0 0
  %5474 = vmatprep.subr.bf16.mxu0 0
  %5475 = vmatpush2.bf16.msra.mxu0 0
  %5476 = vmatprep.subr.bf16.mxu0 0
  %5477 = vmatpush2.bf16.msra.mxu0 0
  %5478 = vmatprep.subr.bf16.mxu0 0
  %5479 = vmatpush2.bf16.msra.mxu0 0
  %5480 = vmatprep.subr.bf16.mxu0 0
  %5481 = vmatpush2.bf16.msra.mxu0 0
  %5482 = vmatprep.mubr.bf16.mxu0 0
  %5483 = vmatmul.mubr.bf16.gmra.mxu0 %v5395
  %v5484 = vpop.f32.mrf.mxu0
  %v5485 = vadd.f32 0.0, %v5484
  %v5486 = vpop.f32.mrf.mxu0
  %v5487 = vadd.f32 0.0, %v5486
  %v5488 = vpop.f32.mrf.mxu0
  %v5489 = vpop.f32.mrf.mxu0
  %5490 = vdwg.mxu0
  %v5491 = vadd.f32 %v5264, %v5444
  %v5492 = vadd.f32 %v5265, %v5446
  %v5493 = vadd.f32 %v5266, %v5485
  %v5494 = vadd.f32 %v5267, %v5487
  %v5495 = vld [vmem:[%s0 + $0x2] sm:$0xff]
  %v5496 = vld [vmem:[%s0 + $0xa] sm:$0x3]
  %v5499 = vunpack.c.l.s4 1966171168
  %v5500 = vunpack.c.0.s8 %v5499
  %v5501 = vlaneseq
  %v5502 = vshrl.u32 %v5501, 7
  %v5503 = vsub.s32 %v5500, %v5502
  %v5504 = vrot.slane %v72, %v5503
  %v5505 = vcombine.high %v5504, %v5504
  %v5507 = vunpack.c.l.s4 1966171168
  %v5508 = vunpack.c.0.s8 %v5507
  %v5509 = vlaneseq
  %v5510 = vshrl.u32 %v5509, 7
  %v5511 = vsub.s32 %v5508, %v5510
  %v5512 = vrot.slane %v5504, %v5511
  %v5514 = vunpack.c.l.s4 1966171168
  %v5515 = vunpack.c.0.s8 %v5514
  %v5516 = vlaneseq
  %v5517 = vshrl.u32 %v5516, 7
  %v5518 = vsub.s32 %v5515, %v5517
  %v5519 = vrot.slane %v5505, %v5518
  %v5520 = vcombine.high %v5512, %v5512
  %v5521 = vcombine.high %v5519, %v5519
  %v5523 = vpack.i.b16 %v5512, %v5512
  %v5525 = vlaneseq
  %v5526 = vshrl.u32 %v5525, 7
  %v5527 = vsub.s32 0, %v5526
  %v5528 = vrot.slane %v5523, %v5527
  %v5530 = vpack.i.b16 %v5519, %v5519
  %v5532 = vlaneseq
  %v5533 = vshrl.u32 %v5532, 7
  %v5534 = vsub.s32 0, %v5533
  %v5535 = vrot.slane %v5530, %v5534
  %v5537 = vpack.i.b16 %v5520, %v5520
  %v5539 = vlaneseq
  %v5540 = vshrl.u32 %v5539, 7
  %v5541 = vsub.s32 0, %v5540
  %v5542 = vrot.slane %v5537, %v5541
  %v5544 = vpack.i.b16 %v5521, %v5521
  %v5546 = vlaneseq
  %v5547 = vshrl.u32 %v5546, 7
  %v5548 = vsub.s32 0, %v5547
  %v5549 = vrot.slane %v5544, %v5548
  %v5554 = vcombine.low %v5528, %v5535
  %v5555 = vcombine.low %v5542, %v5549
  %v5557 = vunpack.c.l.s4 1983009808
  %v5558 = vunpack.c.0.s8 %v5557
  %v5559 = vlaneseq
  %v5560 = vshrl.u32 %v5559, 7
  %v5561 = vsub.s32 %v5558, %v5560
  %v5562 = vrot.slane %v5554, %v5561
  %v5564 = vunpack.c.l.s4 1983009808
  %v5565 = vunpack.c.0.s8 %v5564
  %v5566 = vlaneseq
  %v5567 = vshrl.u32 %v5566, 7
  %v5568 = vsub.s32 %v5565, %v5567
  %v5569 = vrot.slane %v5555, %v5568
  %v5570 = vcombine.low %v5562, %v5569
  %5571 = vrot.lane.b32.xlu0 %v5570, 32
  %v5572 = vpop.permute.xlu0 %5571
  %v5573 = vrot.slane %v5572, 6
  %vm5574 = vcmask 261120
  %v5575 = vsel %vm5574, %v5573, %v5572
  %v5578 = vmul.bf16 %v5495, %v5575
  %v5579 = vmul.bf16 %v5496, %v5573
  %v5582 = vcombine.high %v5578, %v5578
  %v5584 = vunpack.c.l.s4 1983009808
  %v5585 = vunpack.c.0.s8 %v5584
  %v5586 = vlaneseq
  %v5587 = vshrl.u32 %v5586, 7
  %v5588 = vsub.s32 %v5585, %v5587
  %v5589 = vrot.slane %v5578, %v5588
  %v5591 = vunpack.c.l.s4 1983009808
  %v5592 = vunpack.c.0.s8 %v5591
  %v5593 = vlaneseq
  %v5594 = vshrl.u32 %v5593, 7
  %v5595 = vsub.s32 %v5592, %v5594
  %v5596 = vrot.slane %v5582, %v5595
  %v5597 = vcombine.high %v5589, %v5589
  %v5598 = vcombine.high %v5596, %v5596
  %v5600 = vunpack.c.l.s4 1983009808
  %v5601 = vunpack.c.0.s8 %v5600
  %v5602 = vlaneseq
  %v5603 = vshrl.u32 %v5602, 7
  %v5604 = vsub.s32 %v5601, %v5603
  %v5605 = vrot.slane %v5579, %v5604
  %5606 = vrot.lane.b32.xlu0 %v5589, 96
  %v5607 = vpop.permute.xlu0 %5606
  %5608 = vrot.lane.b32.xlu0 %v5597, 96
  %v5609 = vpop.permute.xlu0 %5608
  %5610 = vrot.lane.b32.xlu0 %v5596, 96
  %v5611 = vpop.permute.xlu0 %5610
  %5612 = vrot.lane.b32.xlu0 %v5598, 96
  %v5613 = vpop.permute.xlu0 %5612
  %5614 = vrot.lane.b32.xlu0 %v5605, 96
  %v5615 = vpop.permute.xlu0 %5614
  %vm5616 = vcmask 785408
  %v5617 = vsel %vm5616, %v5607, %v5609
  %v5618 = vsel %vm5616, %v5609, %v5611
  %v5619 = vsel %vm5616, %v5611, %v5613
  %v5620 = vsel %vm5616, %v5613, %v5615
  %v5622 = vsel %vm284, %v45, 0
  %v5625 = vsel %vm288, %v5617, 0
  %v5628 = vsel %vm288, %v5618, 0
  %v5631 = vsel %vm288, %v5619, 0
  %v5634 = vsel %vm288, %v5620, 0
  %5636 = vmatprep.subr.bf16.mxu0 0
  %5637 = vmatpush1.bf16.msra.mxu0 0
  %5638 = vmatprep.subr.bf16.mxu0 0
  %5639 = vmatpush1.bf16.msra.mxu0 0
  %5640 = vmatprep.subr.bf16.mxu0 0
  %5641 = vmatpush1.bf16.msra.mxu0 0
  %5642 = vmatprep.subr.bf16.mxu0 0
  %5643 = vmatpush1.bf16.msra.mxu0 0
  %5644 = vmatprep.subr.bf16.mxu0 0
  %5645 = vmatpush1.bf16.msra.mxu0 0
  %5646 = vmatprep.subr.bf16.mxu0 0
  %5647 = vmatpush1.bf16.msra.mxu0 0
  %5648 = vmatprep.subr.bf16.mxu0 0
  %5649 = vmatpush1.bf16.msra.mxu0 0
  %5650 = vmatprep.subr.bf16.mxu0 %v5628
  %5651 = vmatpush1.bf16.msra.mxu0 %v5625
  %5652 = vmatprep.subr.bf16.mxu0 0
  %5653 = vmatpush2.bf16.msra.mxu0 0
  %5654 = vmatprep.subr.bf16.mxu0 0
  %5655 = vmatpush2.bf16.msra.mxu0 0
  %5656 = vmatprep.subr.bf16.mxu0 0
  %5657 = vmatpush2.bf16.msra.mxu0 0
  %5658 = vmatprep.subr.bf16.mxu0 0
  %5659 = vmatpush2.bf16.msra.mxu0 0
  %5660 = vmatprep.subr.bf16.mxu0 0
  %5661 = vmatpush2.bf16.msra.mxu0 0
  %5662 = vmatprep.subr.bf16.mxu0 0
  %5663 = vmatpush2.bf16.msra.mxu0 0
  %5664 = vmatprep.subr.bf16.mxu0 0
  %5665 = vmatpush2.bf16.msra.mxu0 0
  %5666 = vmatprep.subr.bf16.mxu0 0
  %5667 = vmatpush2.bf16.msra.mxu0 0
  %5668 = vmatprep.mubr.bf16.mxu0 0
  %5669 = vmatmul.mubr.bf16.gmra.mxu0 %v5622
  %v5670 = vpop.f32.mrf.mxu0
  %v5671 = vadd.f32 0.0, %v5670
  %v5672 = vpop.f32.mrf.mxu0
  %v5673 = vadd.f32 0.0, %v5672
  %v5674 = vpop.f32.mrf.mxu0
  %v5675 = vpop.f32.mrf.mxu0
  %5676 = vdwg.mxu0
  %5677 = vmatprep.subr.bf16.mxu0 0
  %5678 = vmatpush1.bf16.msra.mxu0 0
  %5679 = vmatprep.subr.bf16.mxu0 0
  %5680 = vmatpush1.bf16.msra.mxu0 0
  %5681 = vmatprep.subr.bf16.mxu0 0
  %5682 = vmatpush1.bf16.msra.mxu0 0
  %5683 = vmatprep.subr.bf16.mxu0 0
  %5684 = vmatpush1.bf16.msra.mxu0 0
  %5685 = vmatprep.subr.bf16.mxu0 0
  %5686 = vmatpush1.bf16.msra.mxu0 0
  %5687 = vmatprep.subr.bf16.mxu0 0
  %5688 = vmatpush1.bf16.msra.mxu0 0
  %5689 = vmatprep.subr.bf16.mxu0 0
  %5690 = vmatpush1.bf16.msra.mxu0 0
  %5691 = vmatprep.subr.bf16.mxu0 %v5634
  %5692 = vmatpush1.bf16.msra.mxu0 %v5631
  %5693 = vmatprep.subr.bf16.mxu0 0
  %5694 = vmatpush2.bf16.msra.mxu0 0
  %5695 = vmatprep.subr.bf16.mxu0 0
  %5696 = vmatpush2.bf16.msra.mxu0 0
  %5697 = vmatprep.subr.bf16.mxu0 0
  %5698 = vmatpush2.bf16.msra.mxu0 0
  %5699 = vmatprep.subr.bf16.mxu0 0
  %5700 = vmatpush2.bf16.msra.mxu0 0
  %5701 = vmatprep.subr.bf16.mxu0 0
  %5702 = vmatpush2.bf16.msra.mxu0 0
  %5703 = vmatprep.subr.bf16.mxu0 0
  %5704 = vmatpush2.bf16.msra.mxu0 0
  %5705 = vmatprep.subr.bf16.mxu0 0
  %5706 = vmatpush2.bf16.msra.mxu0 0
  %5707 = vmatprep.subr.bf16.mxu0 0
  %5708 = vmatpush2.bf16.msra.mxu0 0
  %5709 = vmatprep.mubr.bf16.mxu0 0
  %5710 = vmatmul.mubr.bf16.gmra.mxu0 %v5622
  %v5711 = vpop.f32.mrf.mxu0
  %v5712 = vadd.f32 0.0, %v5711
  %v5713 = vpop.f32.mrf.mxu0
  %v5714 = vadd.f32 0.0, %v5713
  %v5715 = vpop.f32.mrf.mxu0
  %v5716 = vpop.f32.mrf.mxu0
  %5717 = vdwg.mxu0
  %v5718 = vadd.f32 %v5491, %v5671
  %v5719 = vadd.f32 %v5492, %v5673
  %v5720 = vadd.f32 %v5493, %v5712
  %v5721 = vadd.f32 %v5494, %v5714
  %v5722 = vld [vmem:[%s0 + $0x2] sm:$0xff]
  %v5723 = vld [vmem:[%s0 + $0xa] sm:$0x3]
  %v5726 = vunpack.c.l.s4 1966171168
  %v5727 = vunpack.c.0.s8 %v5726
  %v5728 = vlaneseq
  %v5729 = vshrl.u32 %v5728, 7
  %v5730 = vsub.s32 %v5727, %v5729
  %v5731 = vrot.slane %v73, %v5730
  %v5732 = vcombine.high %v5731, %v5731
  %v5734 = vunpack.c.l.s4 1966171168
  %v5735 = vunpack.c.0.s8 %v5734
  %v5736 = vlaneseq
  %v5737 = vshrl.u32 %v5736, 7
  %v5738 = vsub.s32 %v5735, %v5737
  %v5739 = vrot.slane %v5731, %v5738
  %v5741 = vunpack.c.l.s4 1966171168
  %v5742 = vunpack.c.0.s8 %v5741
  %v5743 = vlaneseq
  %v5744 = vshrl.u32 %v5743, 7
  %v5745 = vsub.s32 %v5742, %v5744
  %v5746 = vrot.slane %v5732, %v5745
  %v5747 = vcombine.high %v5739, %v5739
  %v5748 = vcombine.high %v5746, %v5746
  %v5750 = vpack.i.b16 %v5739, %v5739
  %v5752 = vlaneseq
  %v5753 = vshrl.u32 %v5752, 7
  %v5754 = vsub.s32 0, %v5753
  %v5755 = vrot.slane %v5750, %v5754
  %v5757 = vpack.i.b16 %v5746, %v5746
  %v5759 = vlaneseq
  %v5760 = vshrl.u32 %v5759, 7
  %v5761 = vsub.s32 0, %v5760
  %v5762 = vrot.slane %v5757, %v5761
  %v5764 = vpack.i.b16 %v5747, %v5747
  %v5766 = vlaneseq
  %v5767 = vshrl.u32 %v5766, 7
  %v5768 = vsub.s32 0, %v5767
  %v5769 = vrot.slane %v5764, %v5768
  %v5771 = vpack.i.b16 %v5748, %v5748
  %v5773 = vlaneseq
  %v5774 = vshrl.u32 %v5773, 7
  %v5775 = vsub.s32 0, %v5774
  %v5776 = vrot.slane %v5771, %v5775
  %v5781 = vcombine.low %v5755, %v5762
  %v5782 = vcombine.low %v5769, %v5776
  %v5784 = vunpack.c.l.s4 1983009808
  %v5785 = vunpack.c.0.s8 %v5784
  %v5786 = vlaneseq
  %v5787 = vshrl.u32 %v5786, 7
  %v5788 = vsub.s32 %v5785, %v5787
  %v5789 = vrot.slane %v5781, %v5788
  %v5791 = vunpack.c.l.s4 1983009808
  %v5792 = vunpack.c.0.s8 %v5791
  %v5793 = vlaneseq
  %v5794 = vshrl.u32 %v5793, 7
  %v5795 = vsub.s32 %v5792, %v5794
  %v5796 = vrot.slane %v5782, %v5795
  %v5797 = vcombine.low %v5789, %v5796
  %5798 = vrot.lane.b32.xlu0 %v5797, 37
  %v5799 = vpop.permute.xlu0 %5798
  %v5800 = vrot.slane %v5799, 6
  %v5801 = vsel %vm2292, %v5800, %v5799
  %v5804 = vmul.bf16 %v5722, %v5801
  %v5805 = vmul.bf16 %v5723, %v5800
  %v5808 = vcombine.high %v5804, %v5804
  %v5810 = vunpack.c.l.s4 1983009808
  %v5811 = vunpack.c.0.s8 %v5810
  %v5812 = vlaneseq
  %v5813 = vshrl.u32 %v5812, 7
  %v5814 = vsub.s32 %v5811, %v5813
  %v5815 = vrot.slane %v5804, %v5814
  %v5817 = vunpack.c.l.s4 1983009808
  %v5818 = vunpack.c.0.s8 %v5817
  %v5819 = vlaneseq
  %v5820 = vshrl.u32 %v5819, 7
  %v5821 = vsub.s32 %v5818, %v5820
  %v5822 = vrot.slane %v5808, %v5821
  %v5823 = vcombine.high %v5815, %v5815
  %v5824 = vcombine.high %v5822, %v5822
  %v5826 = vunpack.c.l.s4 1983009808
  %v5827 = vunpack.c.0.s8 %v5826
  %v5828 = vlaneseq
  %v5829 = vshrl.u32 %v5828, 7
  %v5830 = vsub.s32 %v5827, %v5829
  %v5831 = vrot.slane %v5805, %v5830
  %5832 = vrot.lane.b32.xlu0 %v5815, 91
  %v5833 = vpop.permute.xlu0 %5832
  %5834 = vrot.lane.b32.xlu0 %v5823, 91
  %v5835 = vpop.permute.xlu0 %5834
  %5836 = vrot.lane.b32.xlu0 %v5822, 91
  %v5837 = vpop.permute.xlu0 %5836
  %5838 = vrot.lane.b32.xlu0 %v5824, 91
  %v5839 = vpop.permute.xlu0 %5838
  %5840 = vrot.lane.b32.xlu0 %v5831, 91
  %v5841 = vpop.permute.xlu0 %5840
  %v5842 = vsel %vm2334, %v5833, %v5835
  %v5843 = vsel %vm2334, %v5835, %v5837
  %v5844 = vsel %vm2334, %v5837, %v5839
  %v5845 = vsel %vm2334, %v5839, %v5841
  %v5847 = vsel %vm284, %v46, 0
  %v5850 = vsel %vm288, %v5842, 0
  %v5853 = vsel %vm288, %v5843, 0
  %v5856 = vsel %vm288, %v5844, 0
  %v5859 = vsel %vm288, %v5845, 0
  %5861 = vmatprep.subr.bf16.mxu0 0
  %5862 = vmatpush1.bf16.msra.mxu0 0
  %5863 = vmatprep.subr.bf16.mxu0 0
  %5864 = vmatpush1.bf16.msra.mxu0 0
  %5865 = vmatprep.subr.bf16.mxu0 0
  %5866 = vmatpush1.bf16.msra.mxu0 0
  %5867 = vmatprep.subr.bf16.mxu0 0
  %5868 = vmatpush1.bf16.msra.mxu0 0
  %5869 = vmatprep.subr.bf16.mxu0 0
  %5870 = vmatpush1.bf16.msra.mxu0 0
  %5871 = vmatprep.subr.bf16.mxu0 0
  %5872 = vmatpush1.bf16.msra.mxu0 0
  %5873 = vmatprep.subr.bf16.mxu0 0
  %5874 = vmatpush1.bf16.msra.mxu0 0
  %5875 = vmatprep.subr.bf16.mxu0 %v5853
  %5876 = vmatpush1.bf16.msra.mxu0 %v5850
  %5877 = vmatprep.subr.bf16.mxu0 0
  %5878 = vmatpush2.bf16.msra.mxu0 0
  %5879 = vmatprep.subr.bf16.mxu0 0
  %5880 = vmatpush2.bf16.msra.mxu0 0
  %5881 = vmatprep.subr.bf16.mxu0 0
  %5882 = vmatpush2.bf16.msra.mxu0 0
  %5883 = vmatprep.subr.bf16.mxu0 0
  %5884 = vmatpush2.bf16.msra.mxu0 0
  %5885 = vmatprep.subr.bf16.mxu0 0
  %5886 = vmatpush2.bf16.msra.mxu0 0
  %5887 = vmatprep.subr.bf16.mxu0 0
  %5888 = vmatpush2.bf16.msra.mxu0 0
  %5889 = vmatprep.subr.bf16.mxu0 0
  %5890 = vmatpush2.bf16.msra.mxu0 0
  %5891 = vmatprep.subr.bf16.mxu0 0
  %5892 = vmatpush2.bf16.msra.mxu0 0
  %5893 = vmatprep.mubr.bf16.mxu0 0
  %5894 = vmatmul.mubr.bf16.gmra.mxu0 %v5847
  %v5895 = vpop.f32.mrf.mxu0
  %v5896 = vadd.f32 0.0, %v5895
  %v5897 = vpop.f32.mrf.mxu0
  %v5898 = vadd.f32 0.0, %v5897
  %v5899 = vpop.f32.mrf.mxu0
  %v5900 = vpop.f32.mrf.mxu0
  %5901 = vdwg.mxu0
  %5902 = vmatprep.subr.bf16.mxu0 0
  %5903 = vmatpush1.bf16.msra.mxu0 0
  %5904 = vmatprep.subr.bf16.mxu0 0
  %5905 = vmatpush1.bf16.msra.mxu0 0
  %5906 = vmatprep.subr.bf16.mxu0 0
  %5907 = vmatpush1.bf16.msra.mxu0 0
  %5908 = vmatprep.subr.bf16.mxu0 0
  %5909 = vmatpush1.bf16.msra.mxu0 0
  %5910 = vmatprep.subr.bf16.mxu0 0
  %5911 = vmatpush1.bf16.msra.mxu0 0
  %5912 = vmatprep.subr.bf16.mxu0 0
  %5913 = vmatpush1.bf16.msra.mxu0 0
  %5914 = vmatprep.subr.bf16.mxu0 0
  %5915 = vmatpush1.bf16.msra.mxu0 0
  %5916 = vmatprep.subr.bf16.mxu0 %v5859
  %5917 = vmatpush1.bf16.msra.mxu0 %v5856
  %5918 = vmatprep.subr.bf16.mxu0 0
  %5919 = vmatpush2.bf16.msra.mxu0 0
  %5920 = vmatprep.subr.bf16.mxu0 0
  %5921 = vmatpush2.bf16.msra.mxu0 0
  %5922 = vmatprep.subr.bf16.mxu0 0
  %5923 = vmatpush2.bf16.msra.mxu0 0
  %5924 = vmatprep.subr.bf16.mxu0 0
  %5925 = vmatpush2.bf16.msra.mxu0 0
  %5926 = vmatprep.subr.bf16.mxu0 0
  %5927 = vmatpush2.bf16.msra.mxu0 0
  %5928 = vmatprep.subr.bf16.mxu0 0
  %5929 = vmatpush2.bf16.msra.mxu0 0
  %5930 = vmatprep.subr.bf16.mxu0 0
  %5931 = vmatpush2.bf16.msra.mxu0 0
  %5932 = vmatprep.subr.bf16.mxu0 0
  %5933 = vmatpush2.bf16.msra.mxu0 0
  %5934 = vmatprep.mubr.bf16.mxu0 0
  %5935 = vmatmul.mubr.bf16.gmra.mxu0 %v5847
  %v5936 = vpop.f32.mrf.mxu0
  %v5937 = vadd.f32 0.0, %v5936
  %v5938 = vpop.f32.mrf.mxu0
  %v5939 = vadd.f32 0.0, %v5938
  %v5940 = vpop.f32.mrf.mxu0
  %v5941 = vpop.f32.mrf.mxu0
  %5942 = vdwg.mxu0
  %v5943 = vadd.f32 %v5718, %v5896
  %v5944 = vadd.f32 %v5719, %v5898
  %v5945 = vadd.f32 %v5720, %v5937
  %v5946 = vadd.f32 %v5721, %v5939
  %v5947 = vld [vmem:[%s0 + $0x2] sm:$0xff]
  %v5948 = vld [vmem:[%s0 + $0xa] sm:$0x3]
  %v5951 = vunpack.c.l.s4 1966171168
  %v5952 = vunpack.c.0.s8 %v5951
  %v5953 = vlaneseq
  %v5954 = vshrl.u32 %v5953, 7
  %v5955 = vsub.s32 %v5952, %v5954
  %v5956 = vrot.slane %v74, %v5955
  %v5957 = vcombine.high %v5956, %v5956
  %v5959 = vunpack.c.l.s4 1966171168
  %v5960 = vunpack.c.0.s8 %v5959
  %v5961 = vlaneseq
  %v5962 = vshrl.u32 %v5961, 7
  %v5963 = vsub.s32 %v5960, %v5962
  %v5964 = vrot.slane %v5956, %v5963
  %v5966 = vunpack.c.l.s4 1966171168
  %v5967 = vunpack.c.0.s8 %v5966
  %v5968 = vlaneseq
  %v5969 = vshrl.u32 %v5968, 7
  %v5970 = vsub.s32 %v5967, %v5969
  %v5971 = vrot.slane %v5957, %v5970
  %v5972 = vcombine.high %v5964, %v5964
  %v5973 = vcombine.high %v5971, %v5971
  %v5975 = vpack.i.b16 %v5964, %v5964
  %v5977 = vlaneseq
  %v5978 = vshrl.u32 %v5977, 7
  %v5979 = vsub.s32 0, %v5978
  %v5980 = vrot.slane %v5975, %v5979
  %v5982 = vpack.i.b16 %v5971, %v5971
  %v5984 = vlaneseq
  %v5985 = vshrl.u32 %v5984, 7
  %v5986 = vsub.s32 0, %v5985
  %v5987 = vrot.slane %v5982, %v5986
  %v5989 = vpack.i.b16 %v5972, %v5972
  %v5991 = vlaneseq
  %v5992 = vshrl.u32 %v5991, 7
  %v5993 = vsub.s32 0, %v5992
  %v5994 = vrot.slane %v5989, %v5993
  %v5996 = vpack.i.b16 %v5973, %v5973
  %v5998 = vlaneseq
  %v5999 = vshrl.u32 %v5998, 7
  %v6000 = vsub.s32 0, %v5999
  %v6001 = vrot.slane %v5996, %v6000
  %v6006 = vcombine.low %v5980, %v5987
  %v6007 = vcombine.low %v5994, %v6001
  %v6009 = vunpack.c.l.s4 1983009808
  %v6010 = vunpack.c.0.s8 %v6009
  %v6011 = vlaneseq
  %v6012 = vshrl.u32 %v6011, 7
  %v6013 = vsub.s32 %v6010, %v6012
  %v6014 = vrot.slane %v6006, %v6013
  %v6016 = vunpack.c.l.s4 1983009808
  %v6017 = vunpack.c.0.s8 %v6016
  %v6018 = vlaneseq
  %v6019 = vshrl.u32 %v6018, 7
  %v6020 = vsub.s32 %v6017, %v6019
  %v6021 = vrot.slane %v6007, %v6020
  %v6022 = vcombine.low %v6014, %v6021
  %6023 = vrot.lane.b32.xlu0 %v6022, 42
  %v6024 = vpop.permute.xlu0 %6023
  %v6025 = vrot.slane %v6024, 6
  %v6026 = vsel %vm1323, %v6025, %v6024
  %v6029 = vmul.bf16 %v5947, %v6026
  %v6030 = vmul.bf16 %v5948, %v6025
  %v6033 = vcombine.high %v6029, %v6029
  %v6035 = vunpack.c.l.s4 1983009808
  %v6036 = vunpack.c.0.s8 %v6035
  %v6037 = vlaneseq
  %v6038 = vshrl.u32 %v6037, 7
  %v6039 = vsub.s32 %v6036, %v6038
  %v6040 = vrot.slane %v6029, %v6039
  %v6042 = vunpack.c.l.s4 1983009808
  %v6043 = vunpack.c.0.s8 %v6042
  %v6044 = vlaneseq
  %v6045 = vshrl.u32 %v6044, 7
  %v6046 = vsub.s32 %v6043, %v6045
  %v6047 = vrot.slane %v6033, %v6046
  %v6048 = vcombine.high %v6040, %v6040
  %v6049 = vcombine.high %v6047, %v6047
  %v6051 = vunpack.c.l.s4 1983009808
  %v6052 = vunpack.c.0.s8 %v6051
  %v6053 = vlaneseq
  %v6054 = vshrl.u32 %v6053, 7
  %v6055 = vsub.s32 %v6052, %v6054
  %v6056 = vrot.slane %v6030, %v6055
  %6057 = vrot.lane.b32.xlu0 %v6040, 86
  %v6058 = vpop.permute.xlu0 %6057
  %6059 = vrot.lane.b32.xlu0 %v6048, 86
  %v6060 = vpop.permute.xlu0 %6059
  %6061 = vrot.lane.b32.xlu0 %v6047, 86
  %v6062 = vpop.permute.xlu0 %6061
  %6063 = vrot.lane.b32.xlu0 %v6049, 86
  %v6064 = vpop.permute.xlu0 %6063
  %6065 = vrot.lane.b32.xlu0 %v6056, 86
  %v6066 = vpop.permute.xlu0 %6065
  %v6067 = vsel %vm1281, %v6058, %v6060
  %v6068 = vsel %vm1281, %v6060, %v6062
  %v6069 = vsel %vm1281, %v6062, %v6064
  %v6070 = vsel %vm1281, %v6064, %v6066
  %v6072 = vsel %vm284, %v47, 0
  %v6075 = vsel %vm288, %v6067, 0
  %v6078 = vsel %vm288, %v6068, 0
  %v6081 = vsel %vm288, %v6069, 0
  %v6084 = vsel %vm288, %v6070, 0
  %6086 = vmatprep.subr.bf16.mxu0 0
  %6087 = vmatpush1.bf16.msra.mxu0 0
  %6088 = vmatprep.subr.bf16.mxu0 0
  %6089 = vmatpush1.bf16.msra.mxu0 0
  %6090 = vmatprep.subr.bf16.mxu0 0
  %6091 = vmatpush1.bf16.msra.mxu0 0
  %6092 = vmatprep.subr.bf16.mxu0 0
  %6093 = vmatpush1.bf16.msra.mxu0 0
  %6094 = vmatprep.subr.bf16.mxu0 0
  %6095 = vmatpush1.bf16.msra.mxu0 0
  %6096 = vmatprep.subr.bf16.mxu0 0
  %6097 = vmatpush1.bf16.msra.mxu0 0
  %6098 = vmatprep.subr.bf16.mxu0 0
  %6099 = vmatpush1.bf16.msra.mxu0 0
  %6100 = vmatprep.subr.bf16.mxu0 %v6078
  %6101 = vmatpush1.bf16.msra.mxu0 %v6075
  %6102 = vmatprep.subr.bf16.mxu0 0
  %6103 = vmatpush2.bf16.msra.mxu0 0
  %6104 = vmatprep.subr.bf16.mxu0 0
  %6105 = vmatpush2.bf16.msra.mxu0 0
  %6106 = vmatprep.subr.bf16.mxu0 0
  %6107 = vmatpush2.bf16.msra.mxu0 0
  %6108 = vmatprep.subr.bf16.mxu0 0
  %6109 = vmatpush2.bf16.msra.mxu0 0
  %6110 = vmatprep.subr.bf16.mxu0 0
  %6111 = vmatpush2.bf16.msra.mxu0 0
  %6112 = vmatprep.subr.bf16.mxu0 0
  %6113 = vmatpush2.bf16.msra.mxu0 0
  %6114 = vmatprep.subr.bf16.mxu0 0
  %6115 = vmatpush2.bf16.msra.mxu0 0
  %6116 = vmatprep.subr.bf16.mxu0 0
  %6117 = vmatpush2.bf16.msra.mxu0 0
  %6118 = vmatprep.mubr.bf16.mxu0 0
  %6119 = vmatmul.mubr.bf16.gmra.mxu0 %v6072
  %v6120 = vpop.f32.mrf.mxu0
  %v6121 = vadd.f32 0.0, %v6120
  %v6122 = vpop.f32.mrf.mxu0
  %v6123 = vadd.f32 0.0, %v6122
  %v6124 = vpop.f32.mrf.mxu0
  %v6125 = vpop.f32.mrf.mxu0
  %6126 = vdwg.mxu0
  %6127 = vmatprep.subr.bf16.mxu0 0
  %6128 = vmatpush1.bf16.msra.mxu0 0
  %6129 = vmatprep.subr.bf16.mxu0 0
  %6130 = vmatpush1.bf16.msra.mxu0 0
  %6131 = vmatprep.subr.bf16.mxu0 0
  %6132 = vmatpush1.bf16.msra.mxu0 0
  %6133 = vmatprep.subr.bf16.mxu0 0
  %6134 = vmatpush1.bf16.msra.mxu0 0
  %6135 = vmatprep.subr.bf16.mxu0 0
  %6136 = vmatpush1.bf16.msra.mxu0 0
  %6137 = vmatprep.subr.bf16.mxu0 0
  %6138 = vmatpush1.bf16.msra.mxu0 0
  %6139 = vmatprep.subr.bf16.mxu0 0
  %6140 = vmatpush1.bf16.msra.mxu0 0
  %6141 = vmatprep.subr.bf16.mxu0 %v6084
  %6142 = vmatpush1.bf16.msra.mxu0 %v6081
  %6143 = vmatprep.subr.bf16.mxu0 0
  %6144 = vmatpush2.bf16.msra.mxu0 0
  %6145 = vmatprep.subr.bf16.mxu0 0
  %6146 = vmatpush2.bf16.msra.mxu0 0
  %6147 = vmatprep.subr.bf16.mxu0 0
  %6148 = vmatpush2.bf16.msra.mxu0 0
  %6149 = vmatprep.subr.bf16.mxu0 0
  %6150 = vmatpush2.bf16.msra.mxu0 0
  %6151 = vmatprep.subr.bf16.mxu0 0
  %6152 = vmatpush2.bf16.msra.mxu0 0
  %6153 = vmatprep.subr.bf16.mxu0 0
  %6154 = vmatpush2.bf16.msra.mxu0 0
  %6155 = vmatprep.subr.bf16.mxu0 0
  %6156 = vmatpush2.bf16.msra.mxu0 0
  %6157 = vmatprep.subr.bf16.mxu0 0
  %6158 = vmatpush2.bf16.msra.mxu0 0
  %6159 = vmatprep.mubr.bf16.mxu0 0
  %6160 = vmatmul.mubr.bf16.gmra.mxu0 %v6072
  %v6161 = vpop.f32.mrf.mxu0
  %v6162 = vadd.f32 0.0, %v6161
  %v6163 = vpop.f32.mrf.mxu0
  %v6164 = vadd.f32 0.0, %v6163
  %v6165 = vpop.f32.mrf.mxu0
  %v6166 = vpop.f32.mrf.mxu0
  %6167 = vdwg.mxu0
  %v6168 = vadd.f32 %v5943, %v6121
  %v6169 = vadd.f32 %v5944, %v6123
  %v6170 = vadd.f32 %v5945, %v6162
  %v6171 = vadd.f32 %v5946, %v6164
  %s6172 = scalar_lea.vmem %s3, 8
  %v6173 = vld [vmem:[%s6172] sm:$0xf]
  %6175 = vset.pattern.permute.xlu0 0
  %6176 = vperm.xlu0 %6175, %v6173
  %v6177 = vpop.permute.xlu0 %6176
  %v6179 = vmul.f32 %v6168, %v6177
  %v6180 = vmul.f32 %v6169, %v6177
  %v6181 = vmul.f32 %v6170, %v6177
  %v6182 = vmul.f32 %v6171, %v6177
  %s6183 = scalar_lea.vmem %s4, 8
  %v6184 = vld [vmem:[%s6183] sm:$0xf]
  %6186 = vset.pattern.permute.xlu0 0
  %6187 = vperm.xlu0 %6186, %v6184
  %v6188 = vpop.permute.xlu0 %6187
  %v6190 = vadd.f32 %v6179, %v6188
  %v6191 = vadd.f32 %v6180, %v6188
  %v6192 = vadd.f32 %v6181, %v6188
  %v6193 = vadd.f32 %v6182, %v6188
  %v6198 = vrot.slane %v4175, 4
  %v6199 = vrot.slane %v4176, 4
  %v6200 = vrot.slane %v4177, 4
  %v6201 = vrot.slane %v4178, 4
  %vm6206 = vcmask 1043456
  %v6207 = vsel %vm6206, %v2126, %v6198
  %v6208 = vsel %vm6206, %v2127, %v6199
  %v6209 = vsel %vm6206, %v2128, %v6200
  %v6210 = vsel %vm6206, %v2129, %v6201
  %v6211 = vpack.c.bf16 %v6190, %v6207
  %v6212 = vpack.c.bf16 %v6191, %v6208
  %v6213 = vpack.c.bf16 %v6192, %v6209
  %v6214 = vpack.c.bf16 %v6193, %v6210
  %v6219 = vunpack.c.l.b16 %v6211
  %v6220 = vunpack.c.l.b16 %v6212
  %v6221 = vunpack.c.l.b16 %v6213
  %v6222 = vunpack.c.l.b16 %v6214
  %v6223 = vunpack.c.h.b16 %v6211
  %v6224 = vunpack.c.h.b16 %v6212
  %v6225 = vunpack.c.h.b16 %v6213
  %v6226 = vunpack.c.h.b16 %v6214
  %v6227 = vpack.c.b16 %v6220, %v6219
  %v6228 = vpack.c.b16 %v6222, %v6221
  %v6229 = vpack.c.b16 %v6224, %v6223
  %v6230 = vpack.c.b16 %v6226, %v6225
  %6235 = vst [vmem:[%s5] sm:$0xff] %v6227
  %6236 = vst [vmem:[%s5 + $0x8] sm:$0xff] %v6228
  %6237 = vst [vmem:[%s5 + $0x10] sm:$0x33] %v6229
  %6238 = vst [vmem:[%s5 + $0x18] sm:$0x33] %v6230
  // Predicated region
  $region22: #{dpblock_forward.8} parent=0 // pred_check
    _
  $region23: #{dpblock_forward.8} parent=0 // pred_check_branch
    %6240 = sbr.rel (0) target = $region25
  $region24: #{dpblock_forward.8} parent=0 // pred_region
    _
  $region25: #{dpblock_forward.8} parent=0 // pred_fallthru
    _
  // Predicated region
  $region26: #{dpblock_forward.8} parent=0 // pred_check
    _
  $region27: #{dpblock_forward.8} parent=0 // pred_check_branch
    %6242 = sbr.rel (0) target = $region29
  $region28: #{dpblock_forward.8} parent=0 // pred_region
    _
  $region29: #{dpblock_forward.8} parent=0 // pred_fallthru
    _

</llo_original>
